<compile_context>
chip_gen: v7x
topology: tpu7x:2x2x1
jax: 0.10.0
libtpu: 0.0.40
codegen_flags: <defaults>
</compile_context>

<pallas_src>
import functools
import math

import numpy as np
import jax
import jax.numpy as jnp
from jax import lax
from jax.experimental import pallas as pl
from jax.experimental.pallas import tpu as pltpu

BN_EPS = 1e-5
GN_EPS = 1e-5


# ----------------------------- Pallas kernels -----------------------------

def _mm_bias_kernel(a_ref, w_ref, b_ref, o_ref, *, relu):
    """One (tm, K) x (K, N) tile: bf16 matmul + f32 bias (+ ReLU)."""
    y = jnp.dot(a_ref[...].astype(jnp.bfloat16), w_ref[...],
                preferred_element_type=jnp.float32)
    y = y + b_ref[...]
    if relu:
        y = jnp.maximum(y, 0.0)
    o_ref[...] = y


def _res_stack_kernel(h_ref, mask_ref, w1_ref, a1_ref, w2_ref, a2_ref,
                      o_ref, h_sc, *, W):
    """Grid = (batch, layer); one step == one residual layer of one sample.

    layer(h) = BN2(conv1x1(relu(BN1(conv3x3(relu(h)))))) ; h <- h + layer(h)

    The 3x3 pad-1 conv on the flattened (H*W, C) tile is built from 9 sublane
    rolls (one per tap, jnp.roll semantics) masked by a precomputed 0/1
    boundary mask, concatenated along lanes to (H*W, 9*C), and contracted with
    the layer's (9*C, cmid) weight in a single MXU matmul.  Conv biases and
    eval-mode BatchNorm are folded into per-layer affines.  All weights are
    VMEM-resident (constant index maps) and indexed by `l` in-kernel.
    """
    l = pl.program_id(1)

    @pl.when(l == 0)
    def _():
        h_sc[...] = h_ref[0]

    h = h_sc[...]                           # (n, C) f32
    t = jnp.maximum(h, 0.0)                 # leading ReLU of the branch
    n = t.shape[0]

    shifted = []
    for di in range(3):
        for dj in range(3):
            off = (di - 1) * W + (dj - 1)   # flat row offset of this tap
            if off == 0:
                shifted.append(t)
            else:
                # shifted[i] = t[(i + off) mod n]; boundary mask handles padding
                shifted.append(pltpu.roll(t, shift=(-off) % n, axis=0))
    cols = jnp.concatenate(shifted, axis=1) * mask_ref[...]        # (n, 9C)

    u = jnp.dot(cols.astype(jnp.bfloat16), w1_ref[l],
                preferred_element_type=jnp.float32)                # (n, cmid)
    a1 = a1_ref[l]                                                 # (2, cmid)
    u = jnp.maximum(u * a1[0:1, :] + a1[1:2, :], 0.0)              # bias+BN1+ReLU

    y = jnp.dot(u.astype(jnp.bfloat16), w2_ref[l],
                preferred_element_type=jnp.float32)                # 1x1 conv
    a2 = a2_ref[l]                                                 # (2, C)
    y = y * a2[0:1, :] + a2[1:2, :]                                # bias + BN2

    h_new = h + y
    h_sc[...] = h_new

    @pl.when(l == pl.num_programs(1) - 1)
    def _():
        o_ref[0] = h_new


def _attn_kernel(h_ref, wqkv_ref, wout_ref, bout_ref, gng_ref, gnb_ref,
                 o_ref, qkv_sc, ctx_sc, *, heads, dim_head, scale):
    """Per-sample linear attention + to_out conv1x1 + GroupNorm(1, C) + ReLU."""
    n = qkv_sc.shape[0]
    hidden = heads * dim_head

    # qkv projection (1x1 conv, no bias) -> lane-dense (n, 3*hidden) scratch
    qkv_sc[...] = jnp.dot(h_ref[0].astype(jnp.bfloat16), wqkv_ref[...],
                          preferred_element_type=jnp.float32)

    # torch: k.softmax(dim=-1) == softmax over the position axis, per column.
    # Vectorised over the whole (n, hidden) slab, exact divide.
    ks = qkv_sc[:, hidden:2 * hidden]
    ks = ks - jnp.max(ks, axis=0, keepdims=True)
    ke = jnp.exp(ks)
    qkv_sc[:, hidden:2 * hidden] = ke / jnp.sum(ke, axis=0, keepdims=True)

    # torch: q.softmax(dim=-2) == softmax over each head's dim_head channels.
    # Subtract a per-row global max (constant within every head's group) and
    # exponentiate over the whole slab; per-head sums are applied below.
    qs = qkv_sc[:, 0:hidden]
    qe = jnp.exp(qs - jnp.max(qs, axis=1, keepdims=True))
    qkv_sc[:, 0:hidden] = qe

    # Heads processed in pairs so every ref slice / scratch store is a
    # 128-lane-aligned (n, 2*dim_head) tile.
    for p in range(heads // 2):
        base = 2 * p * dim_head
        qe_pair = qkv_sc[:, base:base + 2 * dim_head]
        k_pair = qkv_sc[:, hidden + base:hidden + base + 2 * dim_head]
        v_pair = qkv_sc[:, 2 * hidden + base:2 * hidden + base + 2 * dim_head]
        outs = []
        for s in range(2):
            lo = s * dim_head
            qh = qe_pair[:, lo:lo + dim_head]
            qh = qh * (scale / jnp.sum(qh, axis=1, keepdims=True))   # softmax+scale
            kh = k_pair[:, lo:lo + dim_head]
            vh = v_pair[:, lo:lo + dim_head]
            # out = q @ (k^T v) == (q k^T) @ v   (associativity; n << dim_head)
            qk = lax.dot_general(qh.astype(jnp.bfloat16), kh.astype(jnp.bfloat16),
                                 (((1,), (1,)), ((), ())),
                                 preferred_element_type=jnp.float32)   # (n, n)
            outs.append(jnp.dot(qk.astype(jnp.bfloat16), vh.astype(jnp.bfloat16),
                                preferred_element_type=jnp.float32))   # (n, d)
        ctx_sc[:, base:base + 2 * dim_head] = jnp.concatenate(outs, axis=1)

    # single K=hidden output projection for all heads
    y = jnp.dot(ctx_sc[...].astype(jnp.bfloat16), wout_ref[...],
                preferred_element_type=jnp.float32) + bout_ref[...]

    # GroupNorm(num_groups=1): normalize over all (C, H, W) of this sample
    mean = jnp.mean(y, keepdims=True)
    var = jnp.mean(jnp.square(y - mean), keepdims=True)
    yhat = (y - mean) * lax.rsqrt(var + GN_EPS)
    o_ref[0] = jnp.maximum(yhat * gng_ref[...] + gnb_ref[...], 0.0)


# ----------------------------- wrappers (glue) -----------------------------

def _im2col(x, kh, kw, stride, pad):
    """x: NHWC -> (N*Ho*Wo, kh*kw*C) patch matrix, tap order (i, j, c)."""
    N, H, W, C = x.shape
    xp = jnp.pad(x, ((0, 0), (pad, pad), (pad, pad), (0, 0)))
    Ho = (H + 2 * pad - kh) // stride + 1
    Wo = (W + 2 * pad - kw) // stride + 1
    cols = []
    for i in range(kh):
        for j in range(kw):
            cols.append(xp[:, i:i + stride * Ho:stride, j:j + stride * Wo:stride, :])
    patches = jnp.concatenate(cols, axis=-1)
    return patches.reshape(N * Ho * Wo, kh * kw * C), Ho, Wo


def matmul_bias(a, w, b, relu=False, tm=256):
    """out = maybe_relu(a @ w + b), M-tiled and megacore-parallel (bf16 MXU)."""
    M, K = a.shape
    N = w.shape[1]
    tm = min(tm, M)
    while M % tm:
        tm //= 2
    return pl.pallas_call(
        functools.partial(_mm_bias_kernel, relu=relu),
        out_shape=jax.ShapeDtypeStruct((M, N), jnp.float32),
        grid=(M // tm,),
        in_specs=[pl.BlockSpec((tm, K), lambda i: (i, 0)),
                  pl.BlockSpec((K, N), lambda i: (0, 0)),
                  pl.BlockSpec((1, N), lambda i: (0, 0))],
        out_specs=pl.BlockSpec((tm, N), lambda i: (i, 0)),
        compiler_params=pltpu.CompilerParams(
            dimension_semantics=("parallel",)),
    )(a, w.astype(jnp.bfloat16), b.reshape(1, N).astype(jnp.float32))


def conv2d(x, w_hwio, b, stride=1, pad=0, relu=False):
    # TODO(synk): im2col for the downsampling convs stays as XLA glue; only the
    # matmul + bias + ReLU runs in Pallas.
    kh, kw, cin, cout = w_hwio.shape
    N = x.shape[0]
    patches, Ho, Wo = _im2col(x, kh, kw, stride, pad)
    out = matmul_bias(patches, w_hwio.reshape(kh * kw * cin, cout), b, relu=relu)
    return out.reshape(N, Ho, Wo, cout)


@functools.lru_cache(maxsize=None)
def _tap_mask(H, W, C):
    """(H*W, 9*C) 0/1 mask: zero where a 3x3 pad-1 tap falls outside the image."""
    n = H * W
    m = np.zeros((n, 9 * C), np.float32)
    for di in range(3):
        for dj in range(3):
            tap = di * 3 + dj
            for oh in range(H):
                for ow in range(W):
                    ih, iw = oh + di - 1, ow + dj - 1
                    if 0 <= ih < H and 0 <= iw < W:
                        m[oh * W + ow, tap * C:(tap + 1) * C] = 1.0
    return m


def residual_stack(h_bnc, res_params, B, H, W, C):
    L = len(res_params)
    n = H * W
    cmid = res_params[0]["w1"].shape[-1]

    def fold(p, which):
        # eval-mode BN with conv bias folded: z*s + ((b_conv - rm)*s + beta)
        s = p[f"bn{which}_g"] * lax.rsqrt(p[f"bn{which}_rv"] + BN_EPS)
        sh = (p[f"b{which}"] - p[f"bn{which}_rm"]) * s + p[f"bn{which}_b"]
        return jnp.stack([s, sh], axis=0)                         # (2, ch)

    w1 = jnp.stack([p["w1"].reshape(9 * C, cmid) for p in res_params]
                   ).astype(jnp.bfloat16)                         # (L, 9C, cmid)
    a1 = jnp.stack([fold(p, 1) for p in res_params])              # (L, 2, cmid)
    w2 = jnp.stack([p["w2"].reshape(cmid, C) for p in res_params]
                   ).astype(jnp.bfloat16)                         # (L, cmid, C)
    a2 = jnp.stack([fold(p, 2) for p in res_params])              # (L, 2, C)
    mask = jnp.asarray(_tap_mask(H, W, C))                        # (n, 9C)

    return pl.pallas_call(
        functools.partial(_res_stack_kernel, W=W),
        out_shape=jax.ShapeDtypeStruct((B, n, C), jnp.float32),
        grid=(B, L),
        in_specs=[pl.BlockSpec((1, n, C), lambda b, l: (b, 0, 0)),
                  pl.BlockSpec((n, 9 * C), lambda b, l: (0, 0)),
                  pl.BlockSpec((L, 9 * C, cmid), lambda b, l: (0, 0, 0)),
                  pl.BlockSpec((L, 2, cmid), lambda b, l: (0, 0, 0)),
                  pl.BlockSpec((L, cmid, C), lambda b, l: (0, 0, 0)),
                  pl.BlockSpec((L, 2, C), lambda b, l: (0, 0, 0))],
        out_specs=pl.BlockSpec((1, n, C), lambda b, l: (b, 0, 0)),
        scratch_shapes=[pltpu.VMEM((n, C), jnp.float32)],
        compiler_params=pltpu.CompilerParams(
            dimension_semantics=("parallel", "arbitrary")),
    )(h_bnc, mask, w1, a1, w2, a2)


def linear_attention_block(h_bnc, params, B, n, C, heads, dim_head):
    assert heads % 2 == 0, "heads are processed in 128-lane-aligned pairs"
    hidden = heads * dim_head
    kern = functools.partial(_attn_kernel, heads=heads, dim_head=dim_head,
                             scale=dim_head ** -0.5)
    return pl.pallas_call(
        kern,
        out_shape=jax.ShapeDtypeStruct((B, n, C), jnp.float32),
        grid=(B,),
        in_specs=[pl.BlockSpec((1, n, C), lambda b: (b, 0, 0)),
                  pl.BlockSpec((C, 3 * hidden), lambda b: (0, 0)),
                  pl.BlockSpec((hidden, C), lambda b: (0, 0)),
                  pl.BlockSpec((1, C), lambda b: (0, 0)),
                  pl.BlockSpec((1, C), lambda b: (0, 0)),
                  pl.BlockSpec((1, C), lambda b: (0, 0))],
        out_specs=pl.BlockSpec((1, n, C), lambda b: (b, 0, 0)),
        scratch_shapes=[pltpu.VMEM((n, 3 * hidden), jnp.float32),
                        pltpu.VMEM((n, hidden), jnp.float32)],
        compiler_params=pltpu.CompilerParams(
            dimension_semantics=("parallel",)),
    )(h_bnc, params["attn_wqkv"].astype(jnp.bfloat16),
      params["attn_wout"].astype(jnp.bfloat16),
      params["attn_bout"].reshape(1, C),
      params["gn_g"].reshape(1, C), params["gn_b"].reshape(1, C))


# ----------------------------- Encoder forward -----------------------------

def encoder_forward(params, x_nchw, heads=12, dim_head=64):
    x = jnp.transpose(x_nchw, (0, 2, 3, 1)).astype(jnp.float32)   # NCHW -> NHWC

    # downsampling stack: 3 x [Conv4x4 s2 p1 + ReLU], then Conv3x3 p1
    for l in range(3):
        x = conv2d(x, params[f"down{l}_w"], params[f"down{l}_b"],
                   stride=2, pad=1, relu=True)
    x = conv2d(x, params["final_w"], params["final_b"], stride=1, pad=1, relu=False)

    B, H, W, C = x.shape
    h = x.reshape(B, H * W, C)

    # fused residual stack (10 layers, one pallas_call, per-sample carry)
    h = residual_stack(h, params["res"], B, H, W, C)

    # fused linear attention + to_out + GroupNorm(1, C) + final ReLU
    out = linear_attention_block(h, params, B, H * W, C, heads, dim_head)

    out = out.reshape(B, H, W, C)
    return jnp.transpose(out, (0, 3, 1, 2))                        # NHWC -> NCHW


# ----------------------------- parameters -----------------------------

def init_params(key, in_channels=3, num_hiddens=32, num_downsampling_layers=3,
                num_residual_layers=10, num_residual_hiddens=64,
                heads=12, dim_head=64):
    keys = iter(jax.random.split(key, 8 + 8 * num_residual_layers + 8))

    def w_init(shape):
        fan_in = shape[0] * shape[1] * shape[2] if len(shape) == 4 else shape[0]
        return jax.random.normal(next(keys), shape, jnp.float32) / math.sqrt(fan_in)

    def b_init(shape):
        return 0.05 * jax.random.normal(next(keys), shape, jnp.float32)

    def g_init(shape):
        return 1.0 + 0.05 * jax.random.normal(next(keys), shape, jnp.float32)

    params = {}
    cin = in_channels
    for l in range(num_downsampling_layers):
        cout = num_hiddens // 2 if l == 0 else num_hiddens
        params[f"down{l}_w"] = w_init((4, 4, cin, cout))
        params[f"down{l}_b"] = b_init((cout,))
        cin = cout
    params["final_w"] = w_init((3, 3, num_hiddens, num_hiddens))
    params["final_b"] = b_init((num_hiddens,))

    res = []
    for _ in range(num_residual_layers):
        res.append({
            "w1": w_init((3, 3, num_hiddens, num_residual_hiddens)),
            "b1": b_init((num_residual_hiddens,)),
            "bn1_g": g_init((num_residual_hiddens,)),
            "bn1_b": b_init((num_residual_hiddens,)),
            "bn1_rm": jnp.zeros((num_residual_hiddens,), jnp.float32),
            "bn1_rv": jnp.ones((num_residual_hiddens,), jnp.float32),
            "w2": w_init((1, 1, num_residual_hiddens, num_hiddens)),
            "b2": b_init((num_hiddens,)),
            "bn2_g": g_init((num_hiddens,)),
            "bn2_b": b_init((num_hiddens,)),
            "bn2_rm": jnp.zeros((num_hiddens,), jnp.float32),
            "bn2_rv": jnp.ones((num_hiddens,), jnp.float32),
        })
    params["res"] = res

    hidden = heads * dim_head
    params["attn_wqkv"] = w_init((num_hiddens, 3 * hidden))
    params["attn_wout"] = w_init((hidden, num_hiddens))
    params["attn_bout"] = b_init((num_hiddens,))
    params["gn_g"] = g_init((num_hiddens,))
    params["gn_b"] = b_init((num_hiddens,))
    return params


# ----------------------------- main -----------------------------

if __name__ == "__main__":
    x = jax.random.normal(jax.random.PRNGKey(0), (2, 3, 32, 32), jnp.float32)
    params = init_params(jax.random.PRNGKey(1))

    fwd = jax.jit(encoder_forward)
    out = fwd(params, x)
    jax.block_until_ready(out)

    assert out.shape == (2, 32, 4, 4), out.shape   # 32x32 downsampled 3x -> 4x4
    assert out.dtype == jnp.float32
    assert bool(jnp.all(jnp.isfinite(out)))
    print("KERNEL_OK")
</pallas_src>

<mosaic_0001>
module attributes {stable_mosaic.version = 11 : i64} {
  func.func @_mm_bias_kernel(%arg0: i32, %arg1: memref<256x48xf32, #tpu.memory_space<vmem>>, %arg2: memref<48x16xbf16, #tpu.memory_space<vmem>>, %arg3: memref<1x16xf32, #tpu.memory_space<vmem>>, %arg4: memref<256x16xf32, #tpu.memory_space<vmem>>) attributes {dimension_semantics = [#tpu.dimension_semantics<parallel>], iteration_bounds = array<i64: 2>, scalar_prefetch = 0 : i64, scratch_operands = 0 : i64, tpu.core_type = #tpu.core_type<tc>, window_params = [{transform_indices = @transform_0, window_bounds = array<i64: 256, 48>}, {pipeline_mode = #tpu.pipeline_mode<synchronous>, transform_indices = @transform_1, window_bounds = array<i64: 48, 16>}, {pipeline_mode = #tpu.pipeline_mode<synchronous>, transform_indices = @transform_2, window_bounds = array<i64: 1, 16>}, {transform_indices = @transform_3, window_bounds = array<i64: 256, 16>}]} {
    %c0 = arith.constant 0 : index
    %c0_0 = arith.constant 0 : index
    %0 = vector.load %arg1[%c0, %c0_0] : memref<256x48xf32, #tpu.memory_space<vmem>>, vector<256x48xf32>
    %1 = arith.truncf %0 : vector<256x48xf32> to vector<256x48xbf16>
    %c0_1 = arith.constant 0 : index
    %c0_2 = arith.constant 0 : index
    %2 = vector.load %arg2[%c0_1, %c0_2] : memref<48x16xbf16, #tpu.memory_space<vmem>>, vector<48x16xbf16>
    %cst = arith.constant dense<0.000000e+00> : vector<256x16xf32>
    %3 = tpu.matmul %1, %2, %cst {dimension_numbers = #tpu.dot_dimension_numbers<[1], [0], [0], [1], [0, 0, 1, 1], [], []>} : vector<256x48xbf16>, vector<48x16xbf16>, vector<256x16xf32> -> vector<256x16xf32>
    %c0_3 = arith.constant 0 : index
    %c0_4 = arith.constant 0 : index
    %4 = vector.load %arg3[%c0_3, %c0_4] : memref<1x16xf32, #tpu.memory_space<vmem>>, vector<1x16xf32>
    %5 = vector.broadcast %4 : vector<1x16xf32> to vector<256x16xf32>
    %6 = arith.addf %3, %5 : vector<256x16xf32>
    %cst_5 = arith.constant 0.000000e+00 : f32
    %7 = vector.broadcast %cst_5 : f32 to vector<256x16xf32>
    %8 = arith.maximumf %6, %7 : vector<256x16xf32>
    %c0_6 = arith.constant 0 : index
    %c0_7 = arith.constant 0 : index
    %9 = vector.load %arg4[%c0_6, %c0_7] : memref<256x16xf32, #tpu.memory_space<vmem>>, vector<256x16xf32>
    tpu.vector_store %arg4[%c0_6, %c0_7], %8 {strides = array<i32>} : memref<256x16xf32, #tpu.memory_space<vmem>>, vector<256x16xf32>,
    return
  }
  func.func @transform_0(%arg0: i32) -> (i32, i32) {
    %c0_i32 = arith.constant 0 : i32
    %c0_i32_0 = arith.constant 0 : i32
    return %arg0, %c0_i32 : i32, i32
  }
  func.func @transform_1(%arg0: i32) -> (i32, i32) {
    %c0_i32 = arith.constant 0 : i32
    %c0_i32_0 = arith.constant 0 : i32
    %c0_i32_1 = arith.constant 0 : i32
    return %c0_i32, %c0_i32_0 : i32, i32
  }
  func.func @transform_2(%arg0: i32) -> (i32, i32) {
    %c0_i32 = arith.constant 0 : i32
    %c0_i32_0 = arith.constant 0 : i32
    %c0_i32_1 = arith.constant 0 : i32
    return %c0_i32, %c0_i32_0 : i32, i32
  }
  func.func @transform_3(%arg0: i32) -> (i32, i32) {
    %c0_i32 = arith.constant 0 : i32
    %c0_i32_0 = arith.constant 0 : i32
    return %arg0, %c0_i32 : i32, i32
  }
}

module attributes {stable_mosaic.version = 11 : i64} {
  func.func @_mm_bias_kernel(%arg0: i32, %arg1: memref<128x256xf32, #tpu.memory_space<vmem>>, %arg2: memref<256x32xbf16, #tpu.memory_space<vmem>>, %arg3: memref<1x32xf32, #tpu.memory_space<vmem>>, %arg4: memref<128x32xf32, #tpu.memory_space<vmem>>) attributes {dimension_semantics = [#tpu.dimension_semantics<parallel>], iteration_bounds = array<i64: 1>, scalar_prefetch = 0 : i64, scratch_operands = 0 : i64, tpu.core_type = #tpu.core_type<tc>, window_params = [{transform_indices = @transform_0, window_bounds = array<i64: 128, 256>}, {pipeline_mode = #tpu.pipeline_mode<synchronous>, transform_indices = @transform_1, window_bounds = array<i64: 256, 32>}, {pipeline_mode = #tpu.pipeline_mode<synchronous>, transform_indices = @transform_2, window_bounds = array<i64: 1, 32>}, {transform_indices = @transform_3, window_bounds = array<i64: 128, 32>}]} {
    %c0 = arith.constant 0 : index
    %c0_0 = arith.constant 0 : index
    %0 = vector.load %arg1[%c0, %c0_0] : memref<128x256xf32, #tpu.memory_space<vmem>>, vector<128x256xf32>
    %1 = arith.truncf %0 : vector<128x256xf32> to vector<128x256xbf16>
    %c0_1 = arith.constant 0 : index
    %c0_2 = arith.constant 0 : index
    %2 = vector.load %arg2[%c0_1, %c0_2] : memref<256x32xbf16, #tpu.memory_space<vmem>>, vector<256x32xbf16>
    %cst = arith.constant dense<0.000000e+00> : vector<128x32xf32>
    %3 = tpu.matmul %1, %2, %cst {dimension_numbers = #tpu.dot_dimension_numbers<[1], [0], [0], [1], [0, 0, 1, 1], [], []>} : vector<128x256xbf16>, vector<256x32xbf16>, vector<128x32xf32> -> vector<128x32xf32>
    %c0_3 = arith.constant 0 : index
    %c0_4 = arith.constant 0 : index
    %4 = vector.load %arg3[%c0_3, %c0_4] : memref<1x32xf32, #tpu.memory_space<vmem>>, vector<1x32xf32>
    %5 = vector.broadcast %4 : vector<1x32xf32> to vector<128x32xf32>
    %6 = arith.addf %3, %5 : vector<128x32xf32>
    %cst_5 = arith.constant 0.000000e+00 : f32
    %7 = vector.broadcast %cst_5 : f32 to vector<128x32xf32>
    %8 = arith.maximumf %6, %7 : vector<128x32xf32>
    %c0_6 = arith.constant 0 : index
    %c0_7 = arith.constant 0 : index
    %9 = vector.load %arg4[%c0_6, %c0_7] : memref<128x32xf32, #tpu.memory_space<vmem>>, vector<128x32xf32>
    tpu.vector_store %arg4[%c0_6, %c0_7], %8 {strides = array<i32>} : memref<128x32xf32, #tpu.memory_space<vmem>>, vector<128x32xf32>,
    return
  }
  func.func @transform_0(%arg0: i32) -> (i32, i32) {
    %c0_i32 = arith.constant 0 : i32
    %c0_i32_0 = arith.constant 0 : i32
    return %arg0, %c0_i32 : i32, i32
  }
  func.func @transform_1(%arg0: i32) -> (i32, i32) {
    %c0_i32 = arith.constant 0 : i32
    %c0_i32_0 = arith.constant 0 : i32
    %c0_i32_1 = arith.constant 0 : i32
    return %c0_i32, %c0_i32_0 : i32, i32
  }
  func.func @transform_2(%arg0: i32) -> (i32, i32) {
    %c0_i32 = arith.constant 0 : i32
    %c0_i32_0 = arith.constant 0 : i32
    %c0_i32_1 = arith.constant 0 : i32
    return %c0_i32, %c0_i32_0 : i32, i32
  }
  func.func @transform_3(%arg0: i32) -> (i32, i32) {
    %c0_i32 = arith.constant 0 : i32
    %c0_i32_0 = arith.constant 0 : i32
    return %arg0, %c0_i32 : i32, i32
  }
}

module attributes {stable_mosaic.version = 11 : i64} {
  func.func @_mm_bias_kernel(%arg0: i32, %arg1: memref<32x512xf32, #tpu.memory_space<vmem>>, %arg2: memref<512x32xbf16, #tpu.memory_space<vmem>>, %arg3: memref<1x32xf32, #tpu.memory_space<vmem>>, %arg4: memref<32x32xf32, #tpu.memory_space<vmem>>) attributes {dimension_semantics = [#tpu.dimension_semantics<parallel>], iteration_bounds = array<i64: 1>, scalar_prefetch = 0 : i64, scratch_operands = 0 : i64, tpu.core_type = #tpu.core_type<tc>, window_params = [{transform_indices = @transform_0, window_bounds = array<i64: 32, 512>}, {pipeline_mode = #tpu.pipeline_mode<synchronous>, transform_indices = @transform_1, window_bounds = array<i64: 512, 32>}, {pipeline_mode = #tpu.pipeline_mode<synchronous>, transform_indices = @transform_2, window_bounds = array<i64: 1, 32>}, {transform_indices = @transform_3, window_bounds = array<i64: 32, 32>}]} {
    %c0 = arith.constant 0 : index
    %c0_0 = arith.constant 0 : index
    %0 = vector.load %arg1[%c0, %c0_0] : memref<32x512xf32, #tpu.memory_space<vmem>>, vector<32x512xf32>
    %1 = arith.truncf %0 : vector<32x512xf32> to vector<32x512xbf16>
    %c0_1 = arith.constant 0 : index
    %c0_2 = arith.constant 0 : index
    %2 = vector.load %arg2[%c0_1, %c0_2] : memref<512x32xbf16, #tpu.memory_space<vmem>>, vector<512x32xbf16>
    %cst = arith.constant dense<0.000000e+00> : vector<32x32xf32>
    %3 = tpu.matmul %1, %2, %cst {dimension_numbers = #tpu.dot_dimension_numbers<[1], [0], [0], [1], [0, 0, 1, 1], [], []>} : vector<32x512xbf16>, vector<512x32xbf16>, vector<32x32xf32> -> vector<32x32xf32>
    %c0_3 = arith.constant 0 : index
    %c0_4 = arith.constant 0 : index
    %4 = vector.load %arg3[%c0_3, %c0_4] : memref<1x32xf32, #tpu.memory_space<vmem>>, vector<1x32xf32>
    %5 = vector.broadcast %4 : vector<1x32xf32> to vector<32x32xf32>
    %6 = arith.addf %3, %5 : vector<32x32xf32>
    %cst_5 = arith.constant 0.000000e+00 : f32
    %7 = vector.broadcast %cst_5 : f32 to vector<32x32xf32>
    %8 = arith.maximumf %6, %7 : vector<32x32xf32>
    %c0_6 = arith.constant 0 : index
    %c0_7 = arith.constant 0 : index
    %9 = vector.load %arg4[%c0_6, %c0_7] : memref<32x32xf32, #tpu.memory_space<vmem>>, vector<32x32xf32>
    tpu.vector_store %arg4[%c0_6, %c0_7], %8 {strides = array<i32>} : memref<32x32xf32, #tpu.memory_space<vmem>>, vector<32x32xf32>,
    return
  }
  func.func @transform_0(%arg0: i32) -> (i32, i32) {
    %c0_i32 = arith.constant 0 : i32
    %c0_i32_0 = arith.constant 0 : i32
    return %arg0, %c0_i32 : i32, i32
  }
  func.func @transform_1(%arg0: i32) -> (i32, i32) {
    %c0_i32 = arith.constant 0 : i32
    %c0_i32_0 = arith.constant 0 : i32
    %c0_i32_1 = arith.constant 0 : i32
    return %c0_i32, %c0_i32_0 : i32, i32
  }
  func.func @transform_2(%arg0: i32) -> (i32, i32) {
    %c0_i32 = arith.constant 0 : i32
    %c0_i32_0 = arith.constant 0 : i32
    %c0_i32_1 = arith.constant 0 : i32
    return %c0_i32, %c0_i32_0 : i32, i32
  }
  func.func @transform_3(%arg0: i32) -> (i32, i32) {
    %c0_i32 = arith.constant 0 : i32
    %c0_i32_0 = arith.constant 0 : i32
    return %arg0, %c0_i32 : i32, i32
  }
}

module attributes {stable_mosaic.version = 11 : i64} {
  func.func @_mm_bias_kernel(%arg0: i32, %arg1: memref<32x288xf32, #tpu.memory_space<vmem>>, %arg2: memref<288x32xbf16, #tpu.memory_space<vmem>>, %arg3: memref<1x32xf32, #tpu.memory_space<vmem>>, %arg4: memref<32x32xf32, #tpu.memory_space<vmem>>) attributes {dimension_semantics = [#tpu.dimension_semantics<parallel>], iteration_bounds = array<i64: 1>, scalar_prefetch = 0 : i64, scratch_operands = 0 : i64, tpu.core_type = #tpu.core_type<tc>, window_params = [{transform_indices = @transform_0, window_bounds = array<i64: 32, 288>}, {pipeline_mode = #tpu.pipeline_mode<synchronous>, transform_indices = @transform_1, window_bounds = array<i64: 288, 32>}, {pipeline_mode = #tpu.pipeline_mode<synchronous>, transform_indices = @transform_2, window_bounds = array<i64: 1, 32>}, {transform_indices = @transform_3, window_bounds = array<i64: 32, 32>}]} {
    %c0 = arith.constant 0 : index
    %c0_0 = arith.constant 0 : index
    %0 = vector.load %arg1[%c0, %c0_0] : memref<32x288xf32, #tpu.memory_space<vmem>>, vector<32x288xf32>
    %1 = arith.truncf %0 : vector<32x288xf32> to vector<32x288xbf16>
    %c0_1 = arith.constant 0 : index
    %c0_2 = arith.constant 0 : index
    %2 = vector.load %arg2[%c0_1, %c0_2] : memref<288x32xbf16, #tpu.memory_space<vmem>>, vector<288x32xbf16>
    %cst = arith.constant dense<0.000000e+00> : vector<32x32xf32>
    %3 = tpu.matmul %1, %2, %cst {dimension_numbers = #tpu.dot_dimension_numbers<[1], [0], [0], [1], [0, 0, 1, 1], [], []>} : vector<32x288xbf16>, vector<288x32xbf16>, vector<32x32xf32> -> vector<32x32xf32>
    %c0_3 = arith.constant 0 : index
    %c0_4 = arith.constant 0 : index
    %4 = vector.load %arg3[%c0_3, %c0_4] : memref<1x32xf32, #tpu.memory_space<vmem>>, vector<1x32xf32>
    %5 = vector.broadcast %4 : vector<1x32xf32> to vector<32x32xf32>
    %6 = arith.addf %3, %5 : vector<32x32xf32>
    %c0_5 = arith.constant 0 : index
    %c0_6 = arith.constant 0 : index
    %7 = vector.load %arg4[%c0_5, %c0_6] : memref<32x32xf32, #tpu.memory_space<vmem>>, vector<32x32xf32>
    tpu.vector_store %arg4[%c0_5, %c0_6], %6 {strides = array<i32>} : memref<32x32xf32, #tpu.memory_space<vmem>>, vector<32x32xf32>,
    return
  }
  func.func @transform_0(%arg0: i32) -> (i32, i32) {
    %c0_i32 = arith.constant 0 : i32
    %c0_i32_0 = arith.constant 0 : i32
    return %arg0, %c0_i32 : i32, i32
  }
  func.func @transform_1(%arg0: i32) -> (i32, i32) {
    %c0_i32 = arith.constant 0 : i32
    %c0_i32_0 = arith.constant 0 : i32
    %c0_i32_1 = arith.constant 0 : i32
    return %c0_i32, %c0_i32_0 : i32, i32
  }
  func.func @transform_2(%arg0: i32) -> (i32, i32) {
    %c0_i32 = arith.constant 0 : i32
    %c0_i32_0 = arith.constant 0 : i32
    %c0_i32_1 = arith.constant 0 : i32
    return %c0_i32, %c0_i32_0 : i32, i32
  }
  func.func @transform_3(%arg0: i32) -> (i32, i32) {
    %c0_i32 = arith.constant 0 : i32
    %c0_i32_0 = arith.constant 0 : i32
    return %arg0, %c0_i32 : i32, i32
  }
}

module attributes {stable_mosaic.version = 11 : i64} {
  func.func @_res_stack_kernel(%arg0: i32, %arg1: i32, %arg2: memref<1x16x32xf32, #tpu.memory_space<vmem>>, %arg3: memref<16x288xf32, #tpu.memory_space<vmem>>, %arg4: memref<10x288x64xbf16, #tpu.memory_space<vmem>>, %arg5: memref<10x2x64xf32, #tpu.memory_space<vmem>>, %arg6: memref<10x64x32xbf16, #tpu.memory_space<vmem>>, %arg7: memref<10x2x32xf32, #tpu.memory_space<vmem>>, %arg8: memref<1x16x32xf32, #tpu.memory_space<vmem>>, %arg9: memref<16x32xf32, #tpu.memory_space<vmem>>) attributes {dimension_semantics = [#tpu.dimension_semantics<parallel>, #tpu.dimension_semantics<arbitrary>], iteration_bounds = array<i64: 2, 10>, scalar_prefetch = 0 : i64, scratch_operands = 1 : i64, tpu.core_type = #tpu.core_type<tc>, window_params = [{transform_indices = @transform_0, window_bounds = array<i64: 1, 16, 32>}, {pipeline_mode = #tpu.pipeline_mode<synchronous>, transform_indices = @transform_1, window_bounds = array<i64: 16, 288>}, {pipeline_mode = #tpu.pipeline_mode<synchronous>, transform_indices = @transform_2, window_bounds = array<i64: 10, 288, 64>}, {pipeline_mode = #tpu.pipeline_mode<synchronous>, transform_indices = @transform_3, window_bounds = array<i64: 10, 2, 64>}, {pipeline_mode = #tpu.pipeline_mode<synchronous>, transform_indices = @transform_4, window_bounds = array<i64: 10, 64, 32>}, {pipeline_mode = #tpu.pipeline_mode<synchronous>, transform_indices = @transform_5, window_bounds = array<i64: 10, 2, 32>}, {transform_indices = @transform_6, window_bounds = array<i64: 1, 16, 32>}]} {
    %c0_i32 = arith.constant 0 : i32
    %0 = arith.cmpi eq, %arg1, %c0_i32 : i32
    %1 = arith.extui %0 : i1 to i32
    %c0_i32_0 = arith.constant 0 : i32
    %2 = arith.cmpi ne, %1, %c0_i32_0 : i32
    scf.if %2 {
      %c0_18 = arith.constant 0 : index
      %c0_19 = arith.constant 0 : index
      %c0_20 = arith.constant 0 : index
      %52 = vector.load %arg2[%c0_18, %c0_19, %c0_20] : memref<1x16x32xf32, #tpu.memory_space<vmem>>, vector<1x16x32xf32>
      %53 = vector.shape_cast %52 : vector<1x16x32xf32> to vector<16x32xf32>
      %c0_21 = arith.constant 0 : index
      %c0_22 = arith.constant 0 : index
      %54 = vector.load %arg9[%c0_21, %c0_22] : memref<16x32xf32, #tpu.memory_space<vmem>>, vector<16x32xf32>
      tpu.vector_store %arg9[%c0_21, %c0_22], %53 {strides = array<i32>} : memref<16x32xf32, #tpu.memory_space<vmem>>, vector<16x32xf32>,
    } else {
    }
    %c0 = arith.constant 0 : index
    %c0_1 = arith.constant 0 : index
    %3 = vector.load %arg9[%c0, %c0_1] : memref<16x32xf32, #tpu.memory_space<vmem>>, vector<16x32xf32>
    %cst = arith.constant 0.000000e+00 : f32
    %4 = vector.broadcast %cst : f32 to vector<16x32xf32>
    %5 = arith.maximumf %3, %4 : vector<16x32xf32>
    %c5_i32 = arith.constant 5 : i32
    %6 = tpu.dynamic_rotate %5 by %c5_i32 dim 0 : vector<16x32xf32>, i32 -> vector<16x32xf32>
    %c4_i32 = arith.constant 4 : i32
    %7 = tpu.dynamic_rotate %5 by %c4_i32 dim 0 : vector<16x32xf32>, i32 -> vector<16x32xf32>
    %c3_i32 = arith.constant 3 : i32
    %8 = tpu.dynamic_rotate %5 by %c3_i32 dim 0 : vector<16x32xf32>, i32 -> vector<16x32xf32>
    %c1_i32 = arith.constant 1 : i32
    %9 = tpu.dynamic_rotate %5 by %c1_i32 dim 0 : vector<16x32xf32>, i32 -> vector<16x32xf32>
    %c15_i32 = arith.constant 15 : i32
    %10 = tpu.dynamic_rotate %5 by %c15_i32 dim 0 : vector<16x32xf32>, i32 -> vector<16x32xf32>
    %c13_i32 = arith.constant 13 : i32
    %11 = tpu.dynamic_rotate %5 by %c13_i32 dim 0 : vector<16x32xf32>, i32 -> vector<16x32xf32>
    %c12_i32 = arith.constant 12 : i32
    %12 = tpu.dynamic_rotate %5 by %c12_i32 dim 0 : vector<16x32xf32>, i32 -> vector<16x32xf32>
    %c11_i32 = arith.constant 11 : i32
    %13 = tpu.dynamic_rotate %5 by %c11_i32 dim 0 : vector<16x32xf32>, i32 -> vector<16x32xf32>
    %14 = tpu.concatenate %6, %7, %8, %9, %5, %10, %11, %12, %13 in 1 : vector<16x32xf32>, vector<16x32xf32>, vector<16x32xf32>, vector<16x32xf32>, vector<16x32xf32>, vector<16x32xf32>, vector<16x32xf32>, vector<16x32xf32>, vector<16x32xf32> -> vector<16x288xf32>
    %c0_2 = arith.constant 0 : index
    %c0_3 = arith.constant 0 : index
    %15 = vector.load %arg3[%c0_2, %c0_3] : memref<16x288xf32, #tpu.memory_space<vmem>>, vector<16x288xf32>
    %16 = arith.mulf %14, %15 : vector<16x288xf32>
    %17 = arith.truncf %16 : vector<16x288xf32> to vector<16x288xbf16>
    %18 = arith.index_cast %arg1 : i32 to index
    %c0_4 = arith.constant 0 : index
    %c0_5 = arith.constant 0 : index
    %19 = vector.load %arg4[%18, %c0_4, %c0_5] : memref<10x288x64xbf16, #tpu.memory_space<vmem>>, vector<1x288x64xbf16>
    %20 = vector.shape_cast %19 : vector<1x288x64xbf16> to vector<288x64xbf16>
    %cst_6 = arith.constant dense<0.000000e+00> : vector<16x64xf32>
    %21 = tpu.matmul %17, %20, %cst_6 {dimension_numbers = #tpu.dot_dimension_numbers<[1], [0], [0], [1], [0, 0, 1, 1], [], []>} : vector<16x288xbf16>, vector<288x64xbf16>, vector<16x64xf32> -> vector<16x64xf32>
    %22 = arith.index_cast %arg1 : i32 to index
    %c0_7 = arith.constant 0 : index
    %c0_8 = arith.constant 0 : index
    %23 = vector.load %arg5[%22, %c0_7, %c0_8] : memref<10x2x64xf32, #tpu.memory_space<vmem>>, vector<1x2x64xf32>
    %24 = vector.shape_cast %23 : vector<1x2x64xf32> to vector<2x64xf32>
    %25 = vector.extract_strided_slice %24 {offsets = [0, 0], sizes = [1, 64], strides = [1, 1]} : vector<2x64xf32> to vector<1x64xf32>
    %26 = vector.broadcast %25 : vector<1x64xf32> to vector<16x64xf32>
    %27 = arith.mulf %21, %26 : vector<16x64xf32>
    %28 = vector.extract_strided_slice %24 {offsets = [1, 0], sizes = [1, 64], strides = [1, 1]} : vector<2x64xf32> to vector<1x64xf32>
    %29 = vector.broadcast %28 : vector<1x64xf32> to vector<16x64xf32>
    %30 = arith.addf %27, %29 : vector<16x64xf32>
    %cst_9 = arith.constant 0.000000e+00 : f32
    %31 = vector.broadcast %cst_9 : f32 to vector<16x64xf32>
    %32 = arith.maximumf %30, %31 : vector<16x64xf32>
    %33 = arith.truncf %32 : vector<16x64xf32> to vector<16x64xbf16>
    %34 = arith.index_cast %arg1 : i32 to index
    %c0_10 = arith.constant 0 : index
    %c0_11 = arith.constant 0 : index
    %35 = vector.load %arg6[%34, %c0_10, %c0_11] : memref<10x64x32xbf16, #tpu.memory_space<vmem>>, vector<1x64x32xbf16>
    %36 = vector.shape_cast %35 : vector<1x64x32xbf16> to vector<64x32xbf16>
    %cst_12 = arith.constant dense<0.000000e+00> : vector<16x32xf32>
    %37 = tpu.matmul %33, %36, %cst_12 {dimension_numbers = #tpu.dot_dimension_numbers<[1], [0], [0], [1], [0, 0, 1, 1], [], []>} : vector<16x64xbf16>, vector<64x32xbf16>, vector<16x32xf32> -> vector<16x32xf32>
    %38 = arith.index_cast %arg1 : i32 to index
    %c0_13 = arith.constant 0 : index
    %c0_14 = arith.constant 0 : index
    %39 = vector.load %arg7[%38, %c0_13, %c0_14] : memref<10x2x32xf32, #tpu.memory_space<vmem>>, vector<1x2x32xf32>
    %40 = vector.shape_cast %39 : vector<1x2x32xf32> to vector<2x32xf32>
    %41 = vector.extract_strided_slice %40 {offsets = [0, 0], sizes = [1, 32], strides = [1, 1]} : vector<2x32xf32> to vector<1x32xf32>
    %42 = vector.broadcast %41 : vector<1x32xf32> to vector<16x32xf32>
    %43 = arith.mulf %37, %42 : vector<16x32xf32>
    %44 = vector.extract_strided_slice %40 {offsets = [1, 0], sizes = [1, 32], strides = [1, 1]} : vector<2x32xf32> to vector<1x32xf32>
    %45 = vector.broadcast %44 : vector<1x32xf32> to vector<16x32xf32>
    %46 = arith.addf %43, %45 : vector<16x32xf32>
    %47 = arith.addf %3, %46 : vector<16x32xf32>
    %c0_15 = arith.constant 0 : index
    %c0_16 = arith.constant 0 : index
    %48 = vector.load %arg9[%c0_15, %c0_16] : memref<16x32xf32, #tpu.memory_space<vmem>>, vector<16x32xf32>
    tpu.vector_store %arg9[%c0_15, %c0_16], %47 {strides = array<i32>} : memref<16x32xf32, #tpu.memory_space<vmem>>, vector<16x32xf32>,
    %c9_i32 = arith.constant 9 : i32
    %49 = arith.cmpi eq, %arg1, %c9_i32 : i32
    %50 = arith.extui %49 : i1 to i32
    %c0_i32_17 = arith.constant 0 : i32
    %51 = arith.cmpi ne, %50, %c0_i32_17 : i32
    scf.if %51 {
      %c0_18 = arith.constant 0 : index
      %c0_19 = arith.constant 0 : index
      %c0_20 = arith.constant 0 : index
      %52 = vector.load %arg8[%c0_18, %c0_19, %c0_20] : memref<1x16x32xf32, #tpu.memory_space<vmem>>, vector<1x16x32xf32>
      %53 = vector.shape_cast %52 : vector<1x16x32xf32> to vector<16x32xf32>
      %54 = vector.shape_cast %47 : vector<16x32xf32> to vector<1x16x32xf32>
      tpu.vector_store %arg8[%c0_18, %c0_19, %c0_20], %54 {strides = array<i32>} : memref<1x16x32xf32, #tpu.memory_space<vmem>>, vector<1x16x32xf32>,
    } else {
    }
    return
  }
  func.func @transform_0(%arg0: i32, %arg1: i32) -> (i32, i32, i32) {
    %c0_i32 = arith.constant 0 : i32
    %c0_i32_0 = arith.constant 0 : i32
    %c0_i32_1 = arith.constant 0 : i32
    return %arg0, %c0_i32, %c0_i32_0 : i32, i32, i32
  }
  func.func @transform_1(%arg0: i32, %arg1: i32) -> (i32, i32) {
    %c0_i32 = arith.constant 0 : i32
    %c0_i32_0 = arith.constant 0 : i32
    %c0_i32_1 = arith.constant 0 : i32
    return %c0_i32, %c0_i32_0 : i32, i32
  }
  func.func @transform_2(%arg0: i32, %arg1: i32) -> (i32, i32, i32) {
    %c0_i32 = arith.constant 0 : i32
    %c0_i32_0 = arith.constant 0 : i32
    %c0_i32_1 = arith.constant 0 : i32
    %c0_i32_2 = arith.constant 0 : i32
    return %c0_i32, %c0_i32_0, %c0_i32_1 : i32, i32, i32
  }
  func.func @transform_3(%arg0: i32, %arg1: i32) -> (i32, i32, i32) {
    %c0_i32 = arith.constant 0 : i32
    %c0_i32_0 = arith.constant 0 : i32
    %c0_i32_1 = arith.constant 0 : i32
    %c0_i32_2 = arith.constant 0 : i32
    return %c0_i32, %c0_i32_0, %c0_i32_1 : i32, i32, i32
  }
  func.func @transform_4(%arg0: i32, %arg1: i32) -> (i32, i32, i32) {
    %c0_i32 = arith.constant 0 : i32
    %c0_i32_0 = arith.constant 0 : i32
    %c0_i32_1 = arith.constant 0 : i32
    %c0_i32_2 = arith.constant 0 : i32
    return %c0_i32, %c0_i32_0, %c0_i32_1 : i32, i32, i32
  }
  func.func @transform_5(%arg0: i32, %arg1: i32) -> (i32, i32, i32) {
    %c0_i32 = arith.constant 0 : i32
    %c0_i32_0 = arith.constant 0 : i32
    %c0_i32_1 = arith.constant 0 : i32
    %c0_i32_2 = arith.constant 0 : i32
    return %c0_i32, %c0_i32_0, %c0_i32_1 : i32, i32, i32
  }
  func.func @transform_6(%arg0: i32, %arg1: i32) -> (i32, i32, i32) {
    %c0_i32 = arith.constant 0 : i32
    %c0_i32_0 = arith.constant 0 : i32
    %c0_i32_1 = arith.constant 0 : i32
    return %arg0, %c0_i32, %c0_i32_0 : i32, i32, i32
  }
}

module attributes {stable_mosaic.version = 11 : i64} {
  func.func @_attn_kernel(%arg0: i32, %arg1: memref<1x16x32xf32, #tpu.memory_space<vmem>>, %arg2: memref<32x2304xbf16, #tpu.memory_space<vmem>>, %arg3: memref<768x32xbf16, #tpu.memory_space<vmem>>, %arg4: memref<1x32xf32, #tpu.memory_space<vmem>>, %arg5: memref<1x32xf32, #tpu.memory_space<vmem>>, %arg6: memref<1x32xf32, #tpu.memory_space<vmem>>, %arg7: memref<1x16x32xf32, #tpu.memory_space<vmem>>, %arg8: memref<16x2304xf32, #tpu.memory_space<vmem>>, %arg9: memref<16x768xf32, #tpu.memory_space<vmem>>) attributes {dimension_semantics = [#tpu.dimension_semantics<parallel>], iteration_bounds = array<i64: 2>, scalar_prefetch = 0 : i64, scratch_operands = 2 : i64, tpu.core_type = #tpu.core_type<tc>, window_params = [{transform_indices = @transform_0, window_bounds = array<i64: 1, 16, 32>}, {pipeline_mode = #tpu.pipeline_mode<synchronous>, transform_indices = @transform_1, window_bounds = array<i64: 32, 2304>}, {pipeline_mode = #tpu.pipeline_mode<synchronous>, transform_indices = @transform_2, window_bounds = array<i64: 768, 32>}, {pipeline_mode = #tpu.pipeline_mode<synchronous>, transform_indices = @transform_3, window_bounds = array<i64: 1, 32>}, {pipeline_mode = #tpu.pipeline_mode<synchronous>, transform_indices = @transform_4, window_bounds = array<i64: 1, 32>}, {pipeline_mode = #tpu.pipeline_mode<synchronous>, transform_indices = @transform_5, window_bounds = array<i64: 1, 32>}, {transform_indices = @transform_6, window_bounds = array<i64: 1, 16, 32>}]} {
    %c0 = arith.constant 0 : index
    %c0_0 = arith.constant 0 : index
    %c0_1 = arith.constant 0 : index
    %0 = vector.load %arg1[%c0, %c0_0, %c0_1] : memref<1x16x32xf32, #tpu.memory_space<vmem>>, vector<1x16x32xf32>
    %1 = vector.shape_cast %0 : vector<1x16x32xf32> to vector<16x32xf32>
    %2 = arith.truncf %1 : vector<16x32xf32> to vector<16x32xbf16>
    %c0_2 = arith.constant 0 : index
    %c0_3 = arith.constant 0 : index
    %3 = vector.load %arg2[%c0_2, %c0_3] : memref<32x2304xbf16, #tpu.memory_space<vmem>>, vector<32x2304xbf16>
    %cst = arith.constant dense<0.000000e+00> : vector<16x2304xf32>
    %4 = tpu.matmul %2, %3, %cst {dimension_numbers = #tpu.dot_dimension_numbers<[1], [0], [0], [1], [0, 0, 1, 1], [], []>} : vector<16x32xbf16>, vector<32x2304xbf16>, vector<16x2304xf32> -> vector<16x2304xf32>
    %c0_4 = arith.constant 0 : index
    %c0_5 = arith.constant 0 : index
    %5 = vector.load %arg8[%c0_4, %c0_5] : memref<16x2304xf32, #tpu.memory_space<vmem>>, vector<16x2304xf32>
    tpu.vector_store %arg8[%c0_4, %c0_5], %4 {strides = array<i32>} : memref<16x2304xf32, #tpu.memory_space<vmem>>, vector<16x2304xf32>,
    %c0_6 = arith.constant 0 : index
    %c768 = arith.constant 768 : index
    %6 = vector.load %arg8[%c0_6, %c768] : memref<16x2304xf32, #tpu.memory_space<vmem>>, vector<16x768xf32>
    %cst_7 = arith.constant dense<0xFF800000> : vector<768xf32>
    %7 = vector.multi_reduction <maximumf>, %6, %cst_7 [0] : vector<16x768xf32> to vector<768xf32>
    %8 = vector.shape_cast %7 : vector<768xf32> to vector<1x768xf32>
    %9 = vector.broadcast %8 : vector<1x768xf32> to vector<16x768xf32>
    %10 = arith.subf %6, %9 : vector<16x768xf32>
    %11 = math.exp %10 : vector<16x768xf32>
    %cst_8 = arith.constant dense<0.000000e+00> : vector<768xf32>
    %12 = vector.multi_reduction <add>, %11, %cst_8 [0] : vector<16x768xf32> to vector<768xf32>
    %13 = vector.shape_cast %12 : vector<768xf32> to vector<1x768xf32>
    %14 = vector.broadcast %13 : vector<1x768xf32> to vector<16x768xf32>
    %15 = arith.divf %11, %14 : vector<16x768xf32>
    %c0_9 = arith.constant 0 : index
    %c768_10 = arith.constant 768 : index
    %16 = vector.load %arg8[%c0_9, %c768_10] : memref<16x2304xf32, #tpu.memory_space<vmem>>, vector<16x768xf32>
    tpu.vector_store %arg8[%c0_9, %c768_10], %15 {strides = array<i32>} : memref<16x2304xf32, #tpu.memory_space<vmem>>, vector<16x768xf32>,
    %c0_11 = arith.constant 0 : index
    %c0_12 = arith.constant 0 : index
    %17 = vector.load %arg8[%c0_11, %c0_12] : memref<16x2304xf32, #tpu.memory_space<vmem>>, vector<16x768xf32>
    %cst_13 = arith.constant dense<0xFF800000> : vector<16xf32>
    %18 = vector.multi_reduction <maximumf>, %17, %cst_13 [1] : vector<16x768xf32> to vector<16xf32>
    %19 = vector.shape_cast %18 : vector<16xf32> to vector<16x1xf32>
    %20 = vector.broadcast %19 : vector<16x1xf32> to vector<16x768xf32>
    %21 = arith.subf %17, %20 : vector<16x768xf32>
    %22 = math.exp %21 : vector<16x768xf32>
    %c0_14 = arith.constant 0 : index
    %c0_15 = arith.constant 0 : index
    %23 = vector.load %arg8[%c0_14, %c0_15] : memref<16x2304xf32, #tpu.memory_space<vmem>>, vector<16x768xf32>
    tpu.vector_store %arg8[%c0_14, %c0_15], %22 {strides = array<i32>} : memref<16x2304xf32, #tpu.memory_space<vmem>>, vector<16x768xf32>,
    %c0_16 = arith.constant 0 : index
    %c0_17 = arith.constant 0 : index
    %24 = vector.load %arg8[%c0_16, %c0_17] : memref<16x2304xf32, #tpu.memory_space<vmem>>, vector<16x128xf32>
    %c0_18 = arith.constant 0 : index
    %c768_19 = arith.constant 768 : index
    %25 = vector.load %arg8[%c0_18, %c768_19] : memref<16x2304xf32, #tpu.memory_space<vmem>>, vector<16x128xf32>
    %c0_20 = arith.constant 0 : index
    %c1536 = arith.constant 1536 : index
    %26 = vector.load %arg8[%c0_20, %c1536] : memref<16x2304xf32, #tpu.memory_space<vmem>>, vector<16x128xf32>
    %27 = vector.extract_strided_slice %24 {offsets = [0, 0], sizes = [16, 64], strides = [1, 1]} : vector<16x128xf32> to vector<16x64xf32>
    %cst_21 = arith.constant dense<0.000000e+00> : vector<16xf32>
    %28 = vector.multi_reduction <add>, %27, %cst_21 [1] : vector<16x64xf32> to vector<16xf32>
    %29 = vector.shape_cast %28 : vector<16xf32> to vector<16x1xf32>
    %cst_22 = arith.constant 1.250000e-01 : f32
    %30 = vector.broadcast %cst_22 : f32 to vector<16x1xf32>
    %31 = arith.divf %30, %29 : vector<16x1xf32>
    %32 = vector.broadcast %31 : vector<16x1xf32> to vector<16x64xf32>
    %33 = arith.mulf %27, %32 : vector<16x64xf32>
    %34 = vector.extract_strided_slice %25 {offsets = [0, 0], sizes = [16, 64], strides = [1, 1]} : vector<16x128xf32> to vector<16x64xf32>
    %35 = vector.extract_strided_slice %26 {offsets = [0, 0], sizes = [16, 64], strides = [1, 1]} : vector<16x128xf32> to vector<16x64xf32>
    %36 = arith.truncf %33 : vector<16x64xf32> to vector<16x64xbf16>
    %37 = arith.truncf %34 : vector<16x64xf32> to vector<16x64xbf16>
    %cst_23 = arith.constant dense<0.000000e+00> : vector<16x16xf32>
    %38 = tpu.matmul %36, %37, %cst_23 {dimension_numbers = #tpu.dot_dimension_numbers<[1], [1], [0], [0], [0, 0, 1, 0], [], []>} : vector<16x64xbf16>, vector<16x64xbf16>, vector<16x16xf32> -> vector<16x16xf32>
    %39 = arith.truncf %38 : vector<16x16xf32> to vector<16x16xbf16>
    %40 = arith.truncf %35 : vector<16x64xf32> to vector<16x64xbf16>
    %cst_24 = arith.constant dense<0.000000e+00> : vector<16x64xf32>
    %41 = tpu.matmul %39, %40, %cst_24 {dimension_numbers = #tpu.dot_dimension_numbers<[1], [0], [0], [1], [0, 0, 1, 1], [], []>} : vector<16x16xbf16>, vector<16x64xbf16>, vector<16x64xf32> -> vector<16x64xf32>
    %42 = vector.extract_strided_slice %24 {offsets = [0, 64], sizes = [16, 64], strides = [1, 1]} : vector<16x128xf32> to vector<16x64xf32>
    %cst_25 = arith.constant dense<0.000000e+00> : vector<16xf32>
    %43 = vector.multi_reduction <add>, %42, %cst_25 [1] : vector<16x64xf32> to vector<16xf32>
    %44 = vector.shape_cast %43 : vector<16xf32> to vector<16x1xf32>
    %cst_26 = arith.constant 1.250000e-01 : f32
    %45 = vector.broadcast %cst_26 : f32 to vector<16x1xf32>
    %46 = arith.divf %45, %44 : vector<16x1xf32>
    %47 = vector.broadcast %46 : vector<16x1xf32> to vector<16x64xf32>
    %48 = arith.mulf %42, %47 : vector<16x64xf32>
    %49 = vector.extract_strided_slice %25 {offsets = [0, 64], sizes = [16, 64], strides = [1, 1]} : vector<16x128xf32> to vector<16x64xf32>
    %50 = vector.extract_strided_slice %26 {offsets = [0, 64], sizes = [16, 64], strides = [1, 1]} : vector<16x128xf32> to vector<16x64xf32>
    %51 = arith.truncf %48 : vector<16x64xf32> to vector<16x64xbf16>
    %52 = arith.truncf %49 : vector<16x64xf32> to vector<16x64xbf16>
    %cst_27 = arith.constant dense<0.000000e+00> : vector<16x16xf32>
    %53 = tpu.matmul %51, %52, %cst_27 {dimension_numbers = #tpu.dot_dimension_numbers<[1], [1], [0], [0], [0, 0, 1, 0], [], []>} : vector<16x64xbf16>, vector<16x64xbf16>, vector<16x16xf32> -> vector<16x16xf32>
    %54 = arith.truncf %53 : vector<16x16xf32> to vector<16x16xbf16>
    %55 = arith.truncf %50 : vector<16x64xf32> to vector<16x64xbf16>
    %cst_28 = arith.constant dense<0.000000e+00> : vector<16x64xf32>
    %56 = tpu.matmul %54, %55, %cst_28 {dimension_numbers = #tpu.dot_dimension_numbers<[1], [0], [0], [1], [0, 0, 1, 1], [], []>} : vector<16x16xbf16>, vector<16x64xbf16>, vector<16x64xf32> -> vector<16x64xf32>
    %57 = tpu.concatenate %41, %56 in 1 : vector<16x64xf32>, vector<16x64xf32> -> vector<16x128xf32>
    %c0_29 = arith.constant 0 : index
    %c0_30 = arith.constant 0 : index
    %58 = vector.load %arg9[%c0_29, %c0_30] : memref<16x768xf32, #tpu.memory_space<vmem>>, vector<16x128xf32>
    tpu.vector_store %arg9[%c0_29, %c0_30], %57 {strides = array<i32>} : memref<16x768xf32, #tpu.memory_space<vmem>>, vector<16x128xf32>,
    %c0_31 = arith.constant 0 : index
    %c128 = arith.constant 128 : index
    %59 = vector.load %arg8[%c0_31, %c128] : memref<16x2304xf32, #tpu.memory_space<vmem>>, vector<16x128xf32>
    %c0_32 = arith.constant 0 : index
    %c896 = arith.constant 896 : index
    %60 = vector.load %arg8[%c0_32, %c896] : memref<16x2304xf32, #tpu.memory_space<vmem>>, vector<16x128xf32>
    %c0_33 = arith.constant 0 : index
    %c1664 = arith.constant 1664 : index
    %61 = vector.load %arg8[%c0_33, %c1664] : memref<16x2304xf32, #tpu.memory_space<vmem>>, vector<16x128xf32>
    %62 = vector.extract_strided_slice %59 {offsets = [0, 0], sizes = [16, 64], strides = [1, 1]} : vector<16x128xf32> to vector<16x64xf32>
    %cst_34 = arith.constant dense<0.000000e+00> : vector<16xf32>
    %63 = vector.multi_reduction <add>, %62, %cst_34 [1] : vector<16x64xf32> to vector<16xf32>
    %64 = vector.shape_cast %63 : vector<16xf32> to vector<16x1xf32>
    %cst_35 = arith.constant 1.250000e-01 : f32
    %65 = vector.broadcast %cst_35 : f32 to vector<16x1xf32>
    %66 = arith.divf %65, %64 : vector<16x1xf32>
    %67 = vector.broadcast %66 : vector<16x1xf32> to vector<16x64xf32>
    %68 = arith.mulf %62, %67 : vector<16x64xf32>
    %69 = vector.extract_strided_slice %60 {offsets = [0, 0], sizes = [16, 64], strides = [1, 1]} : vector<16x128xf32> to vector<16x64xf32>
    %70 = vector.extract_strided_slice %61 {offsets = [0, 0], sizes = [16, 64], strides = [1, 1]} : vector<16x128xf32> to vector<16x64xf32>
    %71 = arith.truncf %68 : vector<16x64xf32> to vector<16x64xbf16>
    %72 = arith.truncf %69 : vector<16x64xf32> to vector<16x64xbf16>
    %cst_36 = arith.constant dense<0.000000e+00> : vector<16x16xf32>
    %73 = tpu.matmul %71, %72, %cst_36 {dimension_numbers = #tpu.dot_dimension_numbers<[1], [1], [0], [0], [0, 0, 1, 0], [], []>} : vector<16x64xbf16>, vector<16x64xbf16>, vector<16x16xf32> -> vector<16x16xf32>
    %74 = arith.truncf %73 : vector<16x16xf32> to vector<16x16xbf16>
    %75 = arith.truncf %70 : vector<16x64xf32> to vector<16x64xbf16>
    %cst_37 = arith.constant dense<0.000000e+00> : vector<16x64xf32>
    %76 = tpu.matmul %74, %75, %cst_37 {dimension_numbers = #tpu.dot_dimension_numbers<[1], [0], [0], [1], [0, 0, 1, 1], [], []>} : vector<16x16xbf16>, vector<16x64xbf16>, vector<16x64xf32> -> vector<16x64xf32>
    %77 = vector.extract_strided_slice %59 {offsets = [0, 64], sizes = [16, 64], strides = [1, 1]} : vector<16x128xf32> to vector<16x64xf32>
    %cst_38 = arith.constant dense<0.000000e+00> : vector<16xf32>
    %78 = vector.multi_reduction <add>, %77, %cst_38 [1] : vector<16x64xf32> to vector<16xf32>
    %79 = vector.shape_cast %78 : vector<16xf32> to vector<16x1xf32>
    %cst_39 = arith.constant 1.250000e-01 : f32
    %80 = vector.broadcast %cst_39 : f32 to vector<16x1xf32>
    %81 = arith.divf %80, %79 : vector<16x1xf32>
    %82 = vector.broadcast %81 : vector<16x1xf32> to vector<16x64xf32>
    %83 = arith.mulf %77, %82 : vector<16x64xf32>
    %84 = vector.extract_strided_slice %60 {offsets = [0, 64], sizes = [16, 64], strides = [1, 1]} : vector<16x128xf32> to vector<16x64xf32>
    %85 = vector.extract_strided_slice %61 {offsets = [0, 64], sizes = [16, 64], strides = [1, 1]} : vector<16x128xf32> to vector<16x64xf32>
    %86 = arith.truncf %83 : vector<16x64xf32> to vector<16x64xbf16>
    %87 = arith.truncf %84 : vector<16x64xf32> to vector<16x64xbf16>
    %cst_40 = arith.constant dense<0.000000e+00> : vector<16x16xf32>
    %88 = tpu.matmul %86, %87, %cst_40 {dimension_numbers = #tpu.dot_dimension_numbers<[1], [1], [0], [0], [0, 0, 1, 0], [], []>} : vector<16x64xbf16>, vector<16x64xbf16>, vector<16x16xf32> -> vector<16x16xf32>
    %89 = arith.truncf %88 : vector<16x16xf32> to vector<16x16xbf16>
    %90 = arith.truncf %85 : vector<16x64xf32> to vector<16x64xbf16>
    %cst_41 = arith.constant dense<0.000000e+00> : vector<16x64xf32>
    %91 = tpu.matmul %89, %90, %cst_41 {dimension_numbers = #tpu.dot_dimension_numbers<[1], [0], [0], [1], [0, 0, 1, 1], [], []>} : vector<16x16xbf16>, vector<16x64xbf16>, vector<16x64xf32> -> vector<16x64xf32>
    %92 = tpu.concatenate %76, %91 in 1 : vector<16x64xf32>, vector<16x64xf32> -> vector<16x128xf32>
    %c0_42 = arith.constant 0 : index
    %c128_43 = arith.constant 128 : index
    %93 = vector.load %arg9[%c0_42, %c128_43] : memref<16x768xf32, #tpu.memory_space<vmem>>, vector<16x128xf32>
    tpu.vector_store %arg9[%c0_42, %c128_43], %92 {strides = array<i32>} : memref<16x768xf32, #tpu.memory_space<vmem>>, vector<16x128xf32>,
    %c0_44 = arith.constant 0 : index
    %c256 = arith.constant 256 : index
    %94 = vector.load %arg8[%c0_44, %c256] : memref<16x2304xf32, #tpu.memory_space<vmem>>, vector<16x128xf32>
    %c0_45 = arith.constant 0 : index
    %c1024 = arith.constant 1024 : index
    %95 = vector.load %arg8[%c0_45, %c1024] : memref<16x2304xf32, #tpu.memory_space<vmem>>, vector<16x128xf32>
    %c0_46 = arith.constant 0 : index
    %c1792 = arith.constant 1792 : index
    %96 = vector.load %arg8[%c0_46, %c1792] : memref<16x2304xf32, #tpu.memory_space<vmem>>, vector<16x128xf32>
    %97 = vector.extract_strided_slice %94 {offsets = [0, 0], sizes = [16, 64], strides = [1, 1]} : vector<16x128xf32> to vector<16x64xf32>
    %cst_47 = arith.constant dense<0.000000e+00> : vector<16xf32>
    %98 = vector.multi_reduction <add>, %97, %cst_47 [1] : vector<16x64xf32> to vector<16xf32>
    %99 = vector.shape_cast %98 : vector<16xf32> to vector<16x1xf32>
    %cst_48 = arith.constant 1.250000e-01 : f32
    %100 = vector.broadcast %cst_48 : f32 to vector<16x1xf32>
    %101 = arith.divf %100, %99 : vector<16x1xf32>
    %102 = vector.broadcast %101 : vector<16x1xf32> to vector<16x64xf32>
    %103 = arith.mulf %97, %102 : vector<16x64xf32>
    %104 = vector.extract_strided_slice %95 {offsets = [0, 0], sizes = [16, 64], strides = [1, 1]} : vector<16x128xf32> to vector<16x64xf32>
    %105 = vector.extract_strided_slice %96 {offsets = [0, 0], sizes = [16, 64], strides = [1, 1]} : vector<16x128xf32> to vector<16x64xf32>
    %106 = arith.truncf %103 : vector<16x64xf32> to vector<16x64xbf16>
    %107 = arith.truncf %104 : vector<16x64xf32> to vector<16x64xbf16>
    %cst_49 = arith.constant dense<0.000000e+00> : vector<16x16xf32>
    %108 = tpu.matmul %106, %107, %cst_49 {dimension_numbers = #tpu.dot_dimension_numbers<[1], [1], [0], [0], [0, 0, 1, 0], [], []>} : vector<16x64xbf16>, vector<16x64xbf16>, vector<16x16xf32> -> vector<16x16xf32>
    %109 = arith.truncf %108 : vector<16x16xf32> to vector<16x16xbf16>
    %110 = arith.truncf %105 : vector<16x64xf32> to vector<16x64xbf16>
    %cst_50 = arith.constant dense<0.000000e+00> : vector<16x64xf32>
    %111 = tpu.matmul %109, %110, %cst_50 {dimension_numbers = #tpu.dot_dimension_numbers<[1], [0], [0], [1], [0, 0, 1, 1], [], []>} : vector<16x16xbf16>, vector<16x64xbf16>, vector<16x64xf32> -> vector<16x64xf32>
    %112 = vector.extract_strided_slice %94 {offsets = [0, 64], sizes = [16, 64], strides = [1, 1]} : vector<16x128xf32> to vector<16x64xf32>
    %cst_51 = arith.constant dense<0.000000e+00> : vector<16xf32>
    %113 = vector.multi_reduction <add>, %112, %cst_51 [1] : vector<16x64xf32> to vector<16xf32>
    %114 = vector.shape_cast %113 : vector<16xf32> to vector<16x1xf32>
    %cst_52 = arith.constant 1.250000e-01 : f32
    %115 = vector.broadcast %cst_52 : f32 to vector<16x1xf32>
    %116 = arith.divf %115, %114 : vector<16x1xf32>
    %117 = vector.broadcast %116 : vector<16x1xf32> to vector<16x64xf32>
    %118 = arith.mulf %112, %117 : vector<16x64xf32>
    %119 = vector.extract_strided_slice %95 {offsets = [0, 64], sizes = [16, 64], strides = [1, 1]} : vector<16x128xf32> to vector<16x64xf32>
    %120 = vector.extract_strided_slice %96 {offsets = [0, 64], sizes = [16, 64], strides = [1, 1]} : vector<16x128xf32> to vector<16x64xf32>
    %121 = arith.truncf %118 : vector<16x64xf32> to vector<16x64xbf16>
    %122 = arith.truncf %119 : vector<16x64xf32> to vector<16x64xbf16>
    %cst_53 = arith.constant dense<0.000000e+00> : vector<16x16xf32>
    %123 = tpu.matmul %121, %122, %cst_53 {dimension_numbers = #tpu.dot_dimension_numbers<[1], [1], [0], [0], [0, 0, 1, 0], [], []>} : vector<16x64xbf16>, vector<16x64xbf16>, vector<16x16xf32> -> vector<16x16xf32>
    %124 = arith.truncf %123 : vector<16x16xf32> to vector<16x16xbf16>
    %125 = arith.truncf %120 : vector<16x64xf32> to vector<16x64xbf16>
    %cst_54 = arith.constant dense<0.000000e+00> : vector<16x64xf32>
    %126 = tpu.matmul %124, %125, %cst_54 {dimension_numbers = #tpu.dot_dimension_numbers<[1], [0], [0], [1], [0, 0, 1, 1], [], []>} : vector<16x16xbf16>, vector<16x64xbf16>, vector<16x64xf32> -> vector<16x64xf32>
    %127 = tpu.concatenate %111, %126 in 1 : vector<16x64xf32>, vector<16x64xf32> -> vector<16x128xf32>
    %c0_55 = arith.constant 0 : index
    %c256_56 = arith.constant 256 : index
    %128 = vector.load %arg9[%c0_55, %c256_56] : memref<16x768xf32, #tpu.memory_space<vmem>>, vector<16x128xf32>
    tpu.vector_store %arg9[%c0_55, %c256_56], %127 {strides = array<i32>} : memref<16x768xf32, #tpu.memory_space<vmem>>, vector<16x128xf32>,
    %c0_57 = arith.constant 0 : index
    %c384 = arith.constant 384 : index
    %129 = vector.load %arg8[%c0_57, %c384] : memref<16x2304xf32, #tpu.memory_space<vmem>>, vector<16x128xf32>
    %c0_58 = arith.constant 0 : index
    %c1152 = arith.constant 1152 : index
    %130 = vector.load %arg8[%c0_58, %c1152] : memref<16x2304xf32, #tpu.memory_space<vmem>>, vector<16x128xf32>
    %c0_59 = arith.constant 0 : index
    %c1920 = arith.constant 1920 : index
    %131 = vector.load %arg8[%c0_59, %c1920] : memref<16x2304xf32, #tpu.memory_space<vmem>>, vector<16x128xf32>
    %132 = vector.extract_strided_slice %129 {offsets = [0, 0], sizes = [16, 64], strides = [1, 1]} : vector<16x128xf32> to vector<16x64xf32>
    %cst_60 = arith.constant dense<0.000000e+00> : vector<16xf32>
    %133 = vector.multi_reduction <add>, %132, %cst_60 [1] : vector<16x64xf32> to vector<16xf32>
    %134 = vector.shape_cast %133 : vector<16xf32> to vector<16x1xf32>
    %cst_61 = arith.constant 1.250000e-01 : f32
    %135 = vector.broadcast %cst_61 : f32 to vector<16x1xf32>
    %136 = arith.divf %135, %134 : vector<16x1xf32>
    %137 = vector.broadcast %136 : vector<16x1xf32> to vector<16x64xf32>
    %138 = arith.mulf %132, %137 : vector<16x64xf32>
    %139 = vector.extract_strided_slice %130 {offsets = [0, 0], sizes = [16, 64], strides = [1, 1]} : vector<16x128xf32> to vector<16x64xf32>
    %140 = vector.extract_strided_slice %131 {offsets = [0, 0], sizes = [16, 64], strides = [1, 1]} : vector<16x128xf32> to vector<16x64xf32>
    %141 = arith.truncf %138 : vector<16x64xf32> to vector<16x64xbf16>
    %142 = arith.truncf %139 : vector<16x64xf32> to vector<16x64xbf16>
    %cst_62 = arith.constant dense<0.000000e+00> : vector<16x16xf32>
    %143 = tpu.matmul %141, %142, %cst_62 {dimension_numbers = #tpu.dot_dimension_numbers<[1], [1], [0], [0], [0, 0, 1, 0], [], []>} : vector<16x64xbf16>, vector<16x64xbf16>, vector<16x16xf32> -> vector<16x16xf32>
    %144 = arith.truncf %143 : vector<16x16xf32> to vector<16x16xbf16>
    %145 = arith.truncf %140 : vector<16x64xf32> to vector<16x64xbf16>
    %cst_63 = arith.constant dense<0.000000e+00> : vector<16x64xf32>
    %146 = tpu.matmul %144, %145, %cst_63 {dimension_numbers = #tpu.dot_dimension_numbers<[1], [0], [0], [1], [0, 0, 1, 1], [], []>} : vector<16x16xbf16>, vector<16x64xbf16>, vector<16x64xf32> -> vector<16x64xf32>
    %147 = vector.extract_strided_slice %129 {offsets = [0, 64], sizes = [16, 64], strides = [1, 1]} : vector<16x128xf32> to vector<16x64xf32>
    %cst_64 = arith.constant dense<0.000000e+00> : vector<16xf32>
    %148 = vector.multi_reduction <add>, %147, %cst_64 [1] : vector<16x64xf32> to vector<16xf32>
    %149 = vector.shape_cast %148 : vector<16xf32> to vector<16x1xf32>
    %cst_65 = arith.constant 1.250000e-01 : f32
    %150 = vector.broadcast %cst_65 : f32 to vector<16x1xf32>
    %151 = arith.divf %150, %149 : vector<16x1xf32>
    %152 = vector.broadcast %151 : vector<16x1xf32> to vector<16x64xf32>
    %153 = arith.mulf %147, %152 : vector<16x64xf32>
    %154 = vector.extract_strided_slice %130 {offsets = [0, 64], sizes = [16, 64], strides = [1, 1]} : vector<16x128xf32> to vector<16x64xf32>
    %155 = vector.extract_strided_slice %131 {offsets = [0, 64], sizes = [16, 64], strides = [1, 1]} : vector<16x128xf32> to vector<16x64xf32>
    %156 = arith.truncf %153 : vector<16x64xf32> to vector<16x64xbf16>
    %157 = arith.truncf %154 : vector<16x64xf32> to vector<16x64xbf16>
    %cst_66 = arith.constant dense<0.000000e+00> : vector<16x16xf32>
    %158 = tpu.matmul %156, %157, %cst_66 {dimension_numbers = #tpu.dot_dimension_numbers<[1], [1], [0], [0], [0, 0, 1, 0], [], []>} : vector<16x64xbf16>, vector<16x64xbf16>, vector<16x16xf32> -> vector<16x16xf32>
    %159 = arith.truncf %158 : vector<16x16xf32> to vector<16x16xbf16>
    %160 = arith.truncf %155 : vector<16x64xf32> to vector<16x64xbf16>
    %cst_67 = arith.constant dense<0.000000e+00> : vector<16x64xf32>
    %161 = tpu.matmul %159, %160, %cst_67 {dimension_numbers = #tpu.dot_dimension_numbers<[1], [0], [0], [1], [0, 0, 1, 1], [], []>} : vector<16x16xbf16>, vector<16x64xbf16>, vector<16x64xf32> -> vector<16x64xf32>
    %162 = tpu.concatenate %146, %161 in 1 : vector<16x64xf32>, vector<16x64xf32> -> vector<16x128xf32>
    %c0_68 = arith.constant 0 : index
    %c384_69 = arith.constant 384 : index
    %163 = vector.load %arg9[%c0_68, %c384_69] : memref<16x768xf32, #tpu.memory_space<vmem>>, vector<16x128xf32>
    tpu.vector_store %arg9[%c0_68, %c384_69], %162 {strides = array<i32>} : memref<16x768xf32, #tpu.memory_space<vmem>>, vector<16x128xf32>,
    %c0_70 = arith.constant 0 : index
    %c512 = arith.constant 512 : index
    %164 = vector.load %arg8[%c0_70, %c512] : memref<16x2304xf32, #tpu.memory_space<vmem>>, vector<16x128xf32>
    %c0_71 = arith.constant 0 : index
    %c1280 = arith.constant 1280 : index
    %165 = vector.load %arg8[%c0_71, %c1280] : memref<16x2304xf32, #tpu.memory_space<vmem>>, vector<16x128xf32>
    %c0_72 = arith.constant 0 : index
    %c2048 = arith.constant 2048 : index
    %166 = vector.load %arg8[%c0_72, %c2048] : memref<16x2304xf32, #tpu.memory_space<vmem>>, vector<16x128xf32>
    %167 = vector.extract_strided_slice %164 {offsets = [0, 0], sizes = [16, 64], strides = [1, 1]} : vector<16x128xf32> to vector<16x64xf32>
    %cst_73 = arith.constant dense<0.000000e+00> : vector<16xf32>
    %168 = vector.multi_reduction <add>, %167, %cst_73 [1] : vector<16x64xf32> to vector<16xf32>
    %169 = vector.shape_cast %168 : vector<16xf32> to vector<16x1xf32>
    %cst_74 = arith.constant 1.250000e-01 : f32
    %170 = vector.broadcast %cst_74 : f32 to vector<16x1xf32>
    %171 = arith.divf %170, %169 : vector<16x1xf32>
    %172 = vector.broadcast %171 : vector<16x1xf32> to vector<16x64xf32>
    %173 = arith.mulf %167, %172 : vector<16x64xf32>
    %174 = vector.extract_strided_slice %165 {offsets = [0, 0], sizes = [16, 64], strides = [1, 1]} : vector<16x128xf32> to vector<16x64xf32>
    %175 = vector.extract_strided_slice %166 {offsets = [0, 0], sizes = [16, 64], strides = [1, 1]} : vector<16x128xf32> to vector<16x64xf32>
    %176 = arith.truncf %173 : vector<16x64xf32> to vector<16x64xbf16>
    %177 = arith.truncf %174 : vector<16x64xf32> to vector<16x64xbf16>
    %cst_75 = arith.constant dense<0.000000e+00> : vector<16x16xf32>
    %178 = tpu.matmul %176, %177, %cst_75 {dimension_numbers = #tpu.dot_dimension_numbers<[1], [1], [0], [0], [0, 0, 1, 0], [], []>} : vector<16x64xbf16>, vector<16x64xbf16>, vector<16x16xf32> -> vector<16x16xf32>
    %179 = arith.truncf %178 : vector<16x16xf32> to vector<16x16xbf16>
    %180 = arith.truncf %175 : vector<16x64xf32> to vector<16x64xbf16>
    %cst_76 = arith.constant dense<0.000000e+00> : vector<16x64xf32>
    %181 = tpu.matmul %179, %180, %cst_76 {dimension_numbers = #tpu.dot_dimension_numbers<[1], [0], [0], [1], [0, 0, 1, 1], [], []>} : vector<16x16xbf16>, vector<16x64xbf16>, vector<16x64xf32> -> vector<16x64xf32>
    %182 = vector.extract_strided_slice %164 {offsets = [0, 64], sizes = [16, 64], strides = [1, 1]} : vector<16x128xf32> to vector<16x64xf32>
    %cst_77 = arith.constant dense<0.000000e+00> : vector<16xf32>
    %183 = vector.multi_reduction <add>, %182, %cst_77 [1] : vector<16x64xf32> to vector<16xf32>
    %184 = vector.shape_cast %183 : vector<16xf32> to vector<16x1xf32>
    %cst_78 = arith.constant 1.250000e-01 : f32
    %185 = vector.broadcast %cst_78 : f32 to vector<16x1xf32>
    %186 = arith.divf %185, %184 : vector<16x1xf32>
    %187 = vector.broadcast %186 : vector<16x1xf32> to vector<16x64xf32>
    %188 = arith.mulf %182, %187 : vector<16x64xf32>
    %189 = vector.extract_strided_slice %165 {offsets = [0, 64], sizes = [16, 64], strides = [1, 1]} : vector<16x128xf32> to vector<16x64xf32>
    %190 = vector.extract_strided_slice %166 {offsets = [0, 64], sizes = [16, 64], strides = [1, 1]} : vector<16x128xf32> to vector<16x64xf32>
    %191 = arith.truncf %188 : vector<16x64xf32> to vector<16x64xbf16>
    %192 = arith.truncf %189 : vector<16x64xf32> to vector<16x64xbf16>
    %cst_79 = arith.constant dense<0.000000e+00> : vector<16x16xf32>
    %193 = tpu.matmul %191, %192, %cst_79 {dimension_numbers = #tpu.dot_dimension_numbers<[1], [1], [0], [0], [0, 0, 1, 0], [], []>} : vector<16x64xbf16>, vector<16x64xbf16>, vector<16x16xf32> -> vector<16x16xf32>
    %194 = arith.truncf %193 : vector<16x16xf32> to vector<16x16xbf16>
    %195 = arith.truncf %190 : vector<16x64xf32> to vector<16x64xbf16>
    %cst_80 = arith.constant dense<0.000000e+00> : vector<16x64xf32>
    %196 = tpu.matmul %194, %195, %cst_80 {dimension_numbers = #tpu.dot_dimension_numbers<[1], [0], [0], [1], [0, 0, 1, 1], [], []>} : vector<16x16xbf16>, vector<16x64xbf16>, vector<16x64xf32> -> vector<16x64xf32>
    %197 = tpu.concatenate %181, %196 in 1 : vector<16x64xf32>, vector<16x64xf32> -> vector<16x128xf32>
    %c0_81 = arith.constant 0 : index
    %c512_82 = arith.constant 512 : index
    %198 = vector.load %arg9[%c0_81, %c512_82] : memref<16x768xf32, #tpu.memory_space<vmem>>, vector<16x128xf32>
    tpu.vector_store %arg9[%c0_81, %c512_82], %197 {strides = array<i32>} : memref<16x768xf32, #tpu.memory_space<vmem>>, vector<16x128xf32>,
    %c0_83 = arith.constant 0 : index
    %c640 = arith.constant 640 : index
    %199 = vector.load %arg8[%c0_83, %c640] : memref<16x2304xf32, #tpu.memory_space<vmem>>, vector<16x128xf32>
    %c0_84 = arith.constant 0 : index
    %c1408 = arith.constant 1408 : index
    %200 = vector.load %arg8[%c0_84, %c1408] : memref<16x2304xf32, #tpu.memory_space<vmem>>, vector<16x128xf32>
    %c0_85 = arith.constant 0 : index
    %c2176 = arith.constant 2176 : index
    %201 = vector.load %arg8[%c0_85, %c2176] : memref<16x2304xf32, #tpu.memory_space<vmem>>, vector<16x128xf32>
    %202 = vector.extract_strided_slice %199 {offsets = [0, 0], sizes = [16, 64], strides = [1, 1]} : vector<16x128xf32> to vector<16x64xf32>
    %cst_86 = arith.constant dense<0.000000e+00> : vector<16xf32>
    %203 = vector.multi_reduction <add>, %202, %cst_86 [1] : vector<16x64xf32> to vector<16xf32>
    %204 = vector.shape_cast %203 : vector<16xf32> to vector<16x1xf32>
    %cst_87 = arith.constant 1.250000e-01 : f32
    %205 = vector.broadcast %cst_87 : f32 to vector<16x1xf32>
    %206 = arith.divf %205, %204 : vector<16x1xf32>
    %207 = vector.broadcast %206 : vector<16x1xf32> to vector<16x64xf32>
    %208 = arith.mulf %202, %207 : vector<16x64xf32>
    %209 = vector.extract_strided_slice %200 {offsets = [0, 0], sizes = [16, 64], strides = [1, 1]} : vector<16x128xf32> to vector<16x64xf32>
    %210 = vector.extract_strided_slice %201 {offsets = [0, 0], sizes = [16, 64], strides = [1, 1]} : vector<16x128xf32> to vector<16x64xf32>
    %211 = arith.truncf %208 : vector<16x64xf32> to vector<16x64xbf16>
    %212 = arith.truncf %209 : vector<16x64xf32> to vector<16x64xbf16>
    %cst_88 = arith.constant dense<0.000000e+00> : vector<16x16xf32>
    %213 = tpu.matmul %211, %212, %cst_88 {dimension_numbers = #tpu.dot_dimension_numbers<[1], [1], [0], [0], [0, 0, 1, 0], [], []>} : vector<16x64xbf16>, vector<16x64xbf16>, vector<16x16xf32> -> vector<16x16xf32>
    %214 = arith.truncf %213 : vector<16x16xf32> to vector<16x16xbf16>
    %215 = arith.truncf %210 : vector<16x64xf32> to vector<16x64xbf16>
    %cst_89 = arith.constant dense<0.000000e+00> : vector<16x64xf32>
    %216 = tpu.matmul %214, %215, %cst_89 {dimension_numbers = #tpu.dot_dimension_numbers<[1], [0], [0], [1], [0, 0, 1, 1], [], []>} : vector<16x16xbf16>, vector<16x64xbf16>, vector<16x64xf32> -> vector<16x64xf32>
    %217 = vector.extract_strided_slice %199 {offsets = [0, 64], sizes = [16, 64], strides = [1, 1]} : vector<16x128xf32> to vector<16x64xf32>
    %cst_90 = arith.constant dense<0.000000e+00> : vector<16xf32>
    %218 = vector.multi_reduction <add>, %217, %cst_90 [1] : vector<16x64xf32> to vector<16xf32>
    %219 = vector.shape_cast %218 : vector<16xf32> to vector<16x1xf32>
    %cst_91 = arith.constant 1.250000e-01 : f32
    %220 = vector.broadcast %cst_91 : f32 to vector<16x1xf32>
    %221 = arith.divf %220, %219 : vector<16x1xf32>
    %222 = vector.broadcast %221 : vector<16x1xf32> to vector<16x64xf32>
    %223 = arith.mulf %217, %222 : vector<16x64xf32>
    %224 = vector.extract_strided_slice %200 {offsets = [0, 64], sizes = [16, 64], strides = [1, 1]} : vector<16x128xf32> to vector<16x64xf32>
    %225 = vector.extract_strided_slice %201 {offsets = [0, 64], sizes = [16, 64], strides = [1, 1]} : vector<16x128xf32> to vector<16x64xf32>
    %226 = arith.truncf %223 : vector<16x64xf32> to vector<16x64xbf16>
    %227 = arith.truncf %224 : vector<16x64xf32> to vector<16x64xbf16>
    %cst_92 = arith.constant dense<0.000000e+00> : vector<16x16xf32>
    %228 = tpu.matmul %226, %227, %cst_92 {dimension_numbers = #tpu.dot_dimension_numbers<[1], [1], [0], [0], [0, 0, 1, 0], [], []>} : vector<16x64xbf16>, vector<16x64xbf16>, vector<16x16xf32> -> vector<16x16xf32>
    %229 = arith.truncf %228 : vector<16x16xf32> to vector<16x16xbf16>
    %230 = arith.truncf %225 : vector<16x64xf32> to vector<16x64xbf16>
    %cst_93 = arith.constant dense<0.000000e+00> : vector<16x64xf32>
    %231 = tpu.matmul %229, %230, %cst_93 {dimension_numbers = #tpu.dot_dimension_numbers<[1], [0], [0], [1], [0, 0, 1, 1], [], []>} : vector<16x16xbf16>, vector<16x64xbf16>, vector<16x64xf32> -> vector<16x64xf32>
    %232 = tpu.concatenate %216, %231 in 1 : vector<16x64xf32>, vector<16x64xf32> -> vector<16x128xf32>
    %c0_94 = arith.constant 0 : index
    %c640_95 = arith.constant 640 : index
    %233 = vector.load %arg9[%c0_94, %c640_95] : memref<16x768xf32, #tpu.memory_space<vmem>>, vector<16x128xf32>
    tpu.vector_store %arg9[%c0_94, %c640_95], %232 {strides = array<i32>} : memref<16x768xf32, #tpu.memory_space<vmem>>, vector<16x128xf32>,
    %c0_96 = arith.constant 0 : index
    %c0_97 = arith.constant 0 : index
    %234 = vector.load %arg9[%c0_96, %c0_97] : memref<16x768xf32, #tpu.memory_space<vmem>>, vector<16x768xf32>
    %235 = arith.truncf %234 : vector<16x768xf32> to vector<16x768xbf16>
    %c0_98 = arith.constant 0 : index
    %c0_99 = arith.constant 0 : index
    %236 = vector.load %arg3[%c0_98, %c0_99] : memref<768x32xbf16, #tpu.memory_space<vmem>>, vector<768x32xbf16>
    %cst_100 = arith.constant dense<0.000000e+00> : vector<16x32xf32>
    %237 = tpu.matmul %235, %236, %cst_100 {dimension_numbers = #tpu.dot_dimension_numbers<[1], [0], [0], [1], [0, 0, 1, 1], [], []>} : vector<16x768xbf16>, vector<768x32xbf16>, vector<16x32xf32> -> vector<16x32xf32>
    %c0_101 = arith.constant 0 : index
    %c0_102 = arith.constant 0 : index
    %238 = vector.load %arg4[%c0_101, %c0_102] : memref<1x32xf32, #tpu.memory_space<vmem>>, vector<1x32xf32>
    %239 = vector.broadcast %238 : vector<1x32xf32> to vector<16x32xf32>
    %240 = arith.addf %237, %239 : vector<16x32xf32>
    %241 = vector.shape_cast %240 : vector<16x32xf32> to vector<1x16x32xf32>
    %cst_103 = arith.constant dense<0.000000e+00> : vector<1xf32>
    %242 = vector.multi_reduction <add>, %241, %cst_103 [1, 2] : vector<1x16x32xf32> to vector<1xf32>
    %243 = vector.shape_cast %242 : vector<1xf32> to vector<1x1x1xf32>
    %244 = vector.extract %243[0, 0, 0] : f32 from vector<1x1x1xf32>
    %245 = vector.broadcast %244 : f32 to vector<1x1xf32>
    %cst_104 = arith.constant 5.120000e+02 : f32
    %246 = vector.broadcast %cst_104 : f32 to vector<1x1xf32>
    %247 = arith.divf %245, %246 : vector<1x1xf32>
    %248 = vector.broadcast %247 : vector<1x1xf32> to vector<16x32xf32>
    %249 = arith.subf %240, %248 : vector<16x32xf32>
    %250 = arith.mulf %249, %249 : vector<16x32xf32>
    %251 = vector.shape_cast %250 : vector<16x32xf32> to vector<1x16x32xf32>
    %cst_105 = arith.constant dense<0.000000e+00> : vector<1xf32>
    %252 = vector.multi_reduction <add>, %251, %cst_105 [1, 2] : vector<1x16x32xf32> to vector<1xf32>
    %253 = vector.shape_cast %252 : vector<1xf32> to vector<1x1x1xf32>
    %254 = vector.extract %253[0, 0, 0] : f32 from vector<1x1x1xf32>
    %255 = vector.broadcast %254 : f32 to vector<1x1xf32>
    %cst_106 = arith.constant 5.120000e+02 : f32
    %256 = vector.broadcast %cst_106 : f32 to vector<1x1xf32>
    %257 = arith.divf %255, %256 : vector<1x1xf32>
    %258 = vector.broadcast %247 : vector<1x1xf32> to vector<16x32xf32>
    %259 = arith.subf %240, %258 : vector<16x32xf32>
    %cst_107 = arith.constant 9.99999974E-6 : f32
    %260 = vector.broadcast %cst_107 : f32 to vector<1x1xf32>
    %261 = arith.addf %257, %260 : vector<1x1xf32>
    %262 = math.rsqrt %261 : vector<1x1xf32>
    %263 = vector.broadcast %262 : vector<1x1xf32> to vector<16x32xf32>
    %264 = arith.mulf %259, %263 : vector<16x32xf32>
    %c0_108 = arith.constant 0 : index
    %c0_109 = arith.constant 0 : index
    %265 = vector.load %arg5[%c0_108, %c0_109] : memref<1x32xf32, #tpu.memory_space<vmem>>, vector<1x32xf32>
    %266 = vector.broadcast %265 : vector<1x32xf32> to vector<16x32xf32>
    %267 = arith.mulf %264, %266 : vector<16x32xf32>
    %c0_110 = arith.constant 0 : index
    %c0_111 = arith.constant 0 : index
    %268 = vector.load %arg6[%c0_110, %c0_111] : memref<1x32xf32, #tpu.memory_space<vmem>>, vector<1x32xf32>
    %269 = vector.broadcast %268 : vector<1x32xf32> to vector<16x32xf32>
    %270 = arith.addf %267, %269 : vector<16x32xf32>
    %cst_112 = arith.constant 0.000000e+00 : f32
    %271 = vector.broadcast %cst_112 : f32 to vector<16x32xf32>
    %272 = arith.maximumf %270, %271 : vector<16x32xf32>
    %c0_113 = arith.constant 0 : index
    %c0_114 = arith.constant 0 : index
    %c0_115 = arith.constant 0 : index
    %273 = vector.load %arg7[%c0_113, %c0_114, %c0_115] : memref<1x16x32xf32, #tpu.memory_space<vmem>>, vector<1x16x32xf32>
    %274 = vector.shape_cast %273 : vector<1x16x32xf32> to vector<16x32xf32>
    %275 = vector.shape_cast %272 : vector<16x32xf32> to vector<1x16x32xf32>
    tpu.vector_store %arg7[%c0_113, %c0_114, %c0_115], %275 {strides = array<i32>} : memref<1x16x32xf32, #tpu.memory_space<vmem>>, vector<1x16x32xf32>,
    return
  }
  func.func @transform_0(%arg0: i32) -> (i32, i32, i32) {
    %c0_i32 = arith.constant 0 : i32
    %c0_i32_0 = arith.constant 0 : i32
    %c0_i32_1 = arith.constant 0 : i32
    return %arg0, %c0_i32, %c0_i32_0 : i32, i32, i32
  }
  func.func @transform_1(%arg0: i32) -> (i32, i32) {
    %c0_i32 = arith.constant 0 : i32
    %c0_i32_0 = arith.constant 0 : i32
    %c0_i32_1 = arith.constant 0 : i32
    return %c0_i32, %c0_i32_0 : i32, i32
  }
  func.func @transform_2(%arg0: i32) -> (i32, i32) {
    %c0_i32 = arith.constant 0 : i32
    %c0_i32_0 = arith.constant 0 : i32
    %c0_i32_1 = arith.constant 0 : i32
    return %c0_i32, %c0_i32_0 : i32, i32
  }
  func.func @transform_3(%arg0: i32) -> (i32, i32) {
    %c0_i32 = arith.constant 0 : i32
    %c0_i32_0 = arith.constant 0 : i32
    %c0_i32_1 = arith.constant 0 : i32
    return %c0_i32, %c0_i32_0 : i32, i32
  }
  func.func @transform_4(%arg0: i32) -> (i32, i32) {
    %c0_i32 = arith.constant 0 : i32
    %c0_i32_0 = arith.constant 0 : i32
    %c0_i32_1 = arith.constant 0 : i32
    return %c0_i32, %c0_i32_0 : i32, i32
  }
  func.func @transform_5(%arg0: i32) -> (i32, i32) {
    %c0_i32 = arith.constant 0 : i32
    %c0_i32_0 = arith.constant 0 : i32
    %c0_i32_1 = arith.constant 0 : i32
    return %c0_i32, %c0_i32_0 : i32, i32
  }
  func.func @transform_6(%arg0: i32) -> (i32, i32, i32) {
    %c0_i32 = arith.constant 0 : i32
    %c0_i32_0 = arith.constant 0 : i32
    %c0_i32_1 = arith.constant 0 : i32
    return %arg0, %c0_i32, %c0_i32_0 : i32, i32, i32
  }
}

</mosaic_0001>

<llo_original>
// kernel: encoder_forward.6
$region0: #{encoder_forward.6}
  #allocation0 [shape = 'u32[]', space=smem, size = 0x4, offset = 0x4, fixed_abs, tag = 'smem constant byte address 0x4 - core index']
  #allocation1 [shape = 'u32[144,128]{1,0:T(1,128)}', space=vmem, size = 0x12000, scoped, tag = 'internal scratch']
  %s0 = inlined_call_operand.vmem [shape: f32[512,48], index: 0, kind: input, shape index: {}]
  %s1 = inlined_call_operand.vmem [shape: bf16[48,16], index: 1, kind: input, shape index: {}]
  %s2 = inlined_call_operand.vmem [shape: f32[1,16], index: 2, kind: input, shape index: {}]
  %s3 = inlined_call_operand.vmem [shape: f32[512,16], index: 3, kind: output, shape index: {}]
  %s4 = sld [smem:[#allocation0]]
  $region45: #{encoder_forward.6} parent=0
    _
  %s6 = ssub.s32 1, %s4
  %s7 = scalar_select 0, %s6, %s4
  loop: start=0, step=1, limit=4
  $region2: #{encoder_forward.6} parent=0 // loop_pre_header
    _
  $region3: #{encoder_forward.6} parent=0 // loop_header
    %s9 = sphi 0, %s13
    %p10 = scmp.ge.s32.totalorder %s9, 4
    %s19 = sphi 0, %s21
    %s22 = sphi 0, %s19
    %s23 = sphi 0, %s22
    %s39 = sphi 0, %s23
    %s43 = sphi 0, %s43
    %s45 = sphi 0, %s43
    %s46 = sphi 0, %s45
    %s60 = sphi 0, %s46
    %s64 = sphi 0, %s64
    %s66 = sphi 0, %s64
    %s67 = sphi 0, %s66
    %s81 = sphi 0, %s67
    %s87 = sphi 0, %s89
    %s90 = sphi 0, %s87
    %s91 = sphi 0, %s90
    %s107 = sphi 0, %s91
  $region4: #{encoder_forward.6} parent=0 // loop_header_branch
    %12 = sbr.rel (%p10) target = $region8
  $region5: #{encoder_forward.6} parent=0 // loop_body
    %s14 = ssub.s32 %s9, 1
    %s15 = ssub.s32 %s9, 2
    %s16 = sadd.s32 %s9, 1
    %s17 = ssub.s32 %s9, %s16
    %p18 = scmp.eq.s32.totalorder %s17, 0
    %s20 = sadd.s32 %s19, 1
    %s21 = scalar_select %p18, %s19, %s20
    %p24 = pneg %p18
    %p25 = scmp.eq.s32.totalorder %s9, 1
    %p26 = por %p24, %p25
    %p27 = scmp.ne.s32.totalorder %s19, %s22
    %p28 = scmp.eq.s32.totalorder %s9, 0
    %p29 = por %p27, %p28
    %p30 = scmp.ne.s32.totalorder %s19, %s22
    %p31 = scmp.eq.s32.totalorder %s14, 1
    %p32 = por %p30, %p31
    %p33 = scmp.ne.s32.totalorder %s22, %s23
    %p34 = scmp.eq.s32.totalorder %s14, 0
    %p35 = por %p33, %p34
    %p36 = scmp.ne.s32.totalorder %s22, %s23
    %p37 = scmp.eq.s32.totalorder %s15, 1
    %p38 = por %p36, %p37
    %p40 = scmp.ne.s32.totalorder %s23, %s39
    %p41 = scmp.eq.s32.totalorder %s15, 0
    %p42 = por %p40, %p41
    %s44 = sadd.s32 %s43, 1
    %p47 = scmp.eq.s32.totalorder %s9, 1
    %p48 = scmp.ne.s32.totalorder %s43, %s45
    %p49 = scmp.eq.s32.totalorder %s9, 0
    %p50 = por %p48, %p49
    %p51 = scmp.ne.s32.totalorder %s43, %s45
    %p52 = scmp.eq.s32.totalorder %s14, 1
    %p53 = por %p51, %p52
    %p54 = scmp.ne.s32.totalorder %s45, %s46
    %p55 = scmp.eq.s32.totalorder %s14, 0
    %p56 = por %p54, %p55
    %p57 = scmp.ne.s32.totalorder %s45, %s46
    %p58 = scmp.eq.s32.totalorder %s15, 1
    %p59 = por %p57, %p58
    %p61 = scmp.ne.s32.totalorder %s46, %s60
    %p62 = scmp.eq.s32.totalorder %s15, 0
    %p63 = por %p61, %p62
    %s65 = sadd.s32 %s64, 1
    %p68 = scmp.eq.s32.totalorder %s9, 1
    %p69 = scmp.ne.s32.totalorder %s64, %s66
    %p70 = scmp.eq.s32.totalorder %s9, 0
    %p71 = por %p69, %p70
    %p72 = scmp.ne.s32.totalorder %s64, %s66
    %p73 = scmp.eq.s32.totalorder %s14, 1
    %p74 = por %p72, %p73
    %p75 = scmp.ne.s32.totalorder %s66, %s67
    %p76 = scmp.eq.s32.totalorder %s14, 0
    %p77 = por %p75, %p76
    %p78 = scmp.ne.s32.totalorder %s66, %s67
    %p79 = scmp.eq.s32.totalorder %s15, 1
    %p80 = por %p78, %p79
    %p82 = scmp.ne.s32.totalorder %s67, %s81
    %p83 = scmp.eq.s32.totalorder %s15, 0
    %p84 = por %p82, %p83
    %s85 = ssub.s32 %s9, %s16
    %p86 = scmp.eq.s32.totalorder %s85, 0
    %s88 = sadd.s32 %s87, 1
    %s89 = scalar_select %p86, %s87, %s88
    %p92 = pneg %p86
    %p93 = scmp.eq.s32.totalorder %s9, 1
    %p94 = por %p92, %p93
    %p95 = scmp.ne.s32.totalorder %s87, %s90
    %p96 = scmp.eq.s32.totalorder %s9, 0
    %p97 = por %p95, %p96
    %p98 = scmp.ne.s32.totalorder %s87, %s90
    %p99 = scmp.eq.s32.totalorder %s14, 1
    %p100 = por %p98, %p99
    %p101 = scmp.ne.s32.totalorder %s90, %s91
    %p102 = scmp.eq.s32.totalorder %s14, 0
    %p103 = por %p101, %p102
    %p104 = scmp.ne.s32.totalorder %s90, %s91
    %p105 = scmp.eq.s32.totalorder %s15, 1
    %p106 = por %p104, %p105
    %p108 = scmp.ne.s32.totalorder %s91, %s107
    %p109 = scmp.eq.s32.totalorder %s15, 0
    %p110 = por %p108, %p109
    %p111 = scmp.le.s32.totalorder 1, %s9
    %p112 = scmp.lt.s32.totalorder %s9, 3
    %p113 = pnand %p111, %p112
    %p114 = pneg %p113
    // Predicated region
    $region9: #{encoder_forward.6} parent=5 // pred_check
      _
    $region10: #{encoder_forward.6} parent=5 // pred_check_branch
      %116 = sbr.rel (%p113) target = $region12
    $region11: #{encoder_forward.6} parent=5 // pred_region
      %s117 = ssub.s32 %s9, 1
      // Predicated region
      $region13: #{encoder_forward.6} parent=11 // pred_check
        %p118 = pneg %p56
      $region14: #{encoder_forward.6} parent=11 // pred_check_branch
        %120 = sbr.rel (%p118) target = $region16
      $region15: #{encoder_forward.6} parent=11 // pred_region
        _
      $region16: #{encoder_forward.6} parent=11 // pred_fallthru
        _
      // Predicated region
      $region17: #{encoder_forward.6} parent=11 // pred_check
        %p121 = pneg %p77
      $region18: #{encoder_forward.6} parent=11 // pred_check_branch
        %123 = sbr.rel (%p121) target = $region20
      $region19: #{encoder_forward.6} parent=11 // pred_region
        _
      $region20: #{encoder_forward.6} parent=11 // pred_fallthru
        _
    $region12: #{encoder_forward.6} parent=5 // pred_fallthru
      _
    %p124 = scmp.lt.s32.totalorder %s9, 2
    // Predicated region
    $region21: #{encoder_forward.6} parent=5 // pred_check
      %p125 = pneg %p124
    $region22: #{encoder_forward.6} parent=5 // pred_check_branch
      %127 = sbr.rel (%p125) target = $region24
    $region23: #{encoder_forward.6} parent=5 // pred_region
      // Predicated region
      $region25: #{encoder_forward.6} parent=23 // pred_check
        %p128 = pneg %p29
      $region26: #{encoder_forward.6} parent=23 // pred_check_branch
        %130 = sbr.rel (%p128) target = $region28
      $region27: #{encoder_forward.6} parent=23 // pred_region
        %s131 = smul.u32 32, %s9
        %p132 = scmp.lt.s32.totalorder %s131, 63
        %s133 = scalar_select %p132, %s131, 63
        %s134 = smul.addr %s133, 8
        %s135 = scalar_lea.vmem %s0, %s134
        %s136 = smul.u32 32, %s9
      $region28: #{encoder_forward.6} parent=23 // pred_fallthru
        _
    $region24: #{encoder_forward.6} parent=5 // pred_fallthru
      _
    %p137 = scmp.le.s32.totalorder 1, %s9
    %p138 = scmp.lt.s32.totalorder %s9, 3
    %p139 = pnand %p137, %p138
    %p140 = pneg %p139
    // Predicated region
    $region29: #{encoder_forward.6} parent=5 // pred_check
      _
    $region30: #{encoder_forward.6} parent=5 // pred_check_branch
      %142 = sbr.rel (%p139) target = $region32
    $region31: #{encoder_forward.6} parent=5 // pred_region
      %s143 = ssub.s32 %s9, 1
      %s144 = smul.u32 32, %s14
      %p145 = scmp.lt.s32.totalorder %s144, 63
      %s146 = scalar_select %p145, %s144, 63
      %s147 = smul.addr %s146, 8
      %s148 = scalar_lea.vmem %s0, %s147
      %p149 = pneg %p35
      %p150 = pneg %p32
      %p151 = pneg %p56
      %p152 = pneg %p53
      %p153 = pneg %p77
      %p154 = pneg %p74
      %p155 = pneg %p103
      %p156 = pneg %p100
      %s157 = smul.u32 32, %s14
      %p158 = scmp.lt.s32.totalorder %s157, 63
      %s159 = scalar_select %p158, %s157, 63
      %s160 = smul.addr %s159, 8
      %s161 = scalar_lea.vmem %s3, %s160
      %s162 = smul.u32 32, %s14
      %p163 = scmp.lt.s32.totalorder %s162, 63
      %s164 = scalar_select %p163, %s162, 63
      %s165 = smul.addr %s164, 8
      %s166 = scalar_lea.vmem %s0, %s165
      %s167 = smul.u32 32, %s14
      %s168 = smul.u32 32, %s14
      %p169 = scmp.lt.s32.totalorder %s168, 63
      %s170 = scalar_select %p169, %s168, 63
      %s171 = smul.addr %s170, 8
      %s172 = scalar_lea.vmem %s3, %s171
      %s173 = smul.u32 32, %s14
      %v175 = vld [vmem:[%s166] sm:$0xff]
      %v176 = vld [vmem:[%s166 + $0x8] sm:$0xff]
      %v177 = vld [vmem:[%s166 + $0x10] sm:$0xff]
      %v178 = vld [vmem:[%s166 + $0x18] sm:$0xff]
      %v179 = vld [vmem:[%s166 + $0x20] sm:$0xff]
      %v180 = vld [vmem:[%s166 + $0x28] sm:$0xff]
      %v181 = vld [vmem:[%s166 + $0x30] sm:$0xff]
      %v182 = vld [vmem:[%s166 + $0x38] sm:$0xff]
      %v183 = vld [vmem:[%s166 + $0x40] sm:$0xff]
      %v184 = vld [vmem:[%s166 + $0x48] sm:$0xff]
      %v185 = vld [vmem:[%s166 + $0x50] sm:$0xff]
      %v186 = vld [vmem:[%s166 + $0x58] sm:$0xff]
      %v187 = vld [vmem:[%s166 + $0x60] sm:$0xff]
      %v188 = vld [vmem:[%s166 + $0x68] sm:$0xff]
      %v189 = vld [vmem:[%s166 + $0x70] sm:$0xff]
      %v190 = vld [vmem:[%s166 + $0x78] sm:$0xff]
      %v191 = vld [vmem:[%s166 + $0x80] sm:$0xff]
      %v192 = vld [vmem:[%s166 + $0x88] sm:$0xff]
      %v193 = vld [vmem:[%s166 + $0x90] sm:$0xff]
      %v194 = vld [vmem:[%s166 + $0x98] sm:$0xff]
      %v195 = vld [vmem:[%s166 + $0xa0] sm:$0xff]
      %v196 = vld [vmem:[%s166 + $0xa8] sm:$0xff]
      %v197 = vld [vmem:[%s166 + $0xb0] sm:$0xff]
      %v198 = vld [vmem:[%s166 + $0xb8] sm:$0xff]
      %v199 = vld [vmem:[%s166 + $0xc0] sm:$0xff]
      %v200 = vld [vmem:[%s166 + $0xc8] sm:$0xff]
      %v201 = vld [vmem:[%s166 + $0xd0] sm:$0xff]
      %v202 = vld [vmem:[%s166 + $0xd8] sm:$0xff]
      %v203 = vld [vmem:[%s166 + $0xe0] sm:$0xff]
      %v204 = vld [vmem:[%s166 + $0xe8] sm:$0xff]
      %v205 = vld [vmem:[%s166 + $0xf0] sm:$0xff]
      %v206 = vld [vmem:[%s166 + $0xf8] sm:$0xff]
      %v207 = vpack.c.bf16 %v176, %v175
      %v208 = vpack.c.bf16 %v178, %v177
      %v209 = vpack.c.bf16 %v180, %v179
      %v210 = vpack.c.bf16 %v182, %v181
      %v211 = vpack.c.bf16 %v184, %v183
      %v212 = vpack.c.bf16 %v186, %v185
      %v213 = vpack.c.bf16 %v188, %v187
      %v214 = vpack.c.bf16 %v190, %v189
      %v215 = vpack.c.bf16 %v192, %v191
      %v216 = vpack.c.bf16 %v194, %v193
      %v217 = vpack.c.bf16 %v196, %v195
      %v218 = vpack.c.bf16 %v198, %v197
      %v219 = vpack.c.bf16 %v200, %v199
      %v220 = vpack.c.bf16 %v202, %v201
      %v221 = vpack.c.bf16 %v204, %v203
      %v222 = vpack.c.bf16 %v206, %v205
      %v223 = vld [vmem:[%s1] sm:$0xf]
      %v224 = vld [vmem:[%s1 + $0x4] sm:$0xf]
      %v225 = vld [vmem:[%s1 + $0x8] sm:$0xf]
      %v226 = vld [vmem:[%s1 + $0xc] sm:$0xf]
      %v227 = vld [vmem:[%s1 + $0x10] sm:$0xf]
      %v228 = vld [vmem:[%s1 + $0x14] sm:$0xf]
      %v229 = vld [vmem:[%s2] sm:$0x1]
      %v231 = vlaneseq
      %v232 = vshrl.u32 %v231, 7
      %v233 = vsub.s32 0, %v232
      %v234 = vrot.slane %v229, %v233
      %v242 = vunpack.c.l.b16 %v223
      %v243 = vunpack.c.l.b16 %v224
      %v244 = vunpack.c.l.b16 %v225
      %v245 = vunpack.c.l.b16 %v226
      %v246 = vunpack.c.l.b16 %v227
      %v247 = vunpack.c.l.b16 %v228
      %v248 = vpack.c.b16 %v243, %v242
      %v249 = vpack.c.b16 %v245, %v244
      %v250 = vpack.c.b16 %v247, %v246
      %vm254 = vcmask 392192
      %v256 = vsel %vm254, %v207, 0
      %v259 = vsel %vm254, %v208, 0
      %v262 = vsel %vm254, %v209, 0
      %v265 = vsel %vm254, %v210, 0
      %v268 = vsel %vm254, %v211, 0
      %v271 = vsel %vm254, %v212, 0
      %v274 = vsel %vm254, %v213, 0
      %v277 = vsel %vm254, %v214, 0
      %v280 = vsel %vm254, %v215, 0
      %v283 = vsel %vm254, %v216, 0
      %v286 = vsel %vm254, %v217, 0
      %v289 = vsel %vm254, %v218, 0
      %v292 = vsel %vm254, %v219, 0
      %v295 = vsel %vm254, %v220, 0
      %v298 = vsel %vm254, %v221, 0
      %v301 = vsel %vm254, %v222, 0
      %303 = vmatprep.subr.bf16.mxu0 0
      %304 = vmatpush1.bf16.msra.mxu0 %v248
      %305 = vmatprep.subr.bf16.mxu0 0
      %306 = vmatpush1.bf16.msra.mxu0 %v249
      %307 = vmatprep.subr.bf16.mxu0 0
      %308 = vmatpush1.bf16.msra.mxu0 %v250
      %309 = vmatprep.subr.bf16.mxu0 0
      %310 = vmatpush1.bf16.msra.mxu0 0
      %311 = vmatprep.subr.bf16.mxu0 0
      %312 = vmatpush1.bf16.msra.mxu0 0
      %313 = vmatprep.subr.bf16.mxu0 0
      %314 = vmatpush1.bf16.msra.mxu0 0
      %315 = vmatprep.subr.bf16.mxu0 0
      %316 = vmatpush1.bf16.msra.mxu0 0
      %317 = vmatprep.subr.bf16.mxu0 0
      %318 = vmatpush1.bf16.msra.mxu0 0
      %319 = vmatprep.subr.bf16.mxu0 0
      %320 = vmatpush1.bf16.msra.mxu0 0
      %321 = vmatprep.subr.bf16.mxu0 0
      %322 = vmatpush1.bf16.msra.mxu0 0
      %323 = vmatprep.subr.bf16.mxu0 0
      %324 = vmatpush1.bf16.msra.mxu0 0
      %325 = vmatprep.subr.bf16.mxu0 0
      %326 = vmatpush1.bf16.msra.mxu0 0
      %327 = vmatprep.subr.bf16.mxu0 0
      %328 = vmatpush1.bf16.msra.mxu0 0
      %329 = vmatprep.subr.bf16.mxu0 0
      %330 = vmatpush1.bf16.msra.mxu0 0
      %331 = vmatprep.subr.bf16.mxu0 0
      %332 = vmatpush1.bf16.msra.mxu0 0
      %333 = vmatprep.subr.bf16.mxu0 0
      %334 = vmatpush1.bf16.msra.mxu0 0
      %335 = vmatprep.mubr.bf16.mxu0 0
      %336 = vmatmul.mubr.bf16.gmra.mrb[0].mxu0 %v256
      %v337 = vpop.f32.mrb[0].mxu0
      %v338 = vadd.f32 %v234, %v337
      %v339 = vpop.f32.mrb[0].mxu0
      %v340 = vpop.f32.mrb[0].mxu0
      %v341 = vadd.f32 %v234, %v340
      %v342 = vpop.f32.mrb[0].mxu0
      %343 = vmatprep.mubr.bf16.mxu0 0
      %344 = vmatmul.mubr.bf16.gmra.mrb[0].mxu0 %v259
      %v345 = vpop.f32.mrb[0].mxu0
      %v346 = vadd.f32 %v234, %v345
      %v347 = vpop.f32.mrb[0].mxu0
      %v348 = vpop.f32.mrb[0].mxu0
      %v349 = vadd.f32 %v234, %v348
      %v350 = vpop.f32.mrb[0].mxu0
      %351 = vmatprep.mubr.bf16.mxu0 0
      %352 = vmatmul.mubr.bf16.gmra.mrb[0].mxu0 %v262
      %v353 = vpop.f32.mrb[0].mxu0
      %v354 = vadd.f32 %v234, %v353
      %v355 = vpop.f32.mrb[0].mxu0
      %v356 = vpop.f32.mrb[0].mxu0
      %v357 = vadd.f32 %v234, %v356
      %v358 = vpop.f32.mrb[0].mxu0
      %359 = vmatprep.mubr.bf16.mxu0 0
      %360 = vmatmul.mubr.bf16.gmra.mrb[0].mxu0 %v265
      %v361 = vpop.f32.mrb[0].mxu0
      %v362 = vadd.f32 %v234, %v361
      %v363 = vpop.f32.mrb[0].mxu0
      %v364 = vpop.f32.mrb[0].mxu0
      %v365 = vadd.f32 %v234, %v364
      %v366 = vpop.f32.mrb[0].mxu0
      %367 = vmatprep.mubr.bf16.mxu0 0
      %368 = vmatmul.mubr.bf16.gmra.mrb[0].mxu0 %v268
      %v369 = vpop.f32.mrb[0].mxu0
      %v370 = vadd.f32 %v234, %v369
      %v371 = vpop.f32.mrb[0].mxu0
      %v372 = vpop.f32.mrb[0].mxu0
      %v373 = vadd.f32 %v234, %v372
      %v374 = vpop.f32.mrb[0].mxu0
      %375 = vmatprep.mubr.bf16.mxu0 0
      %376 = vmatmul.mubr.bf16.gmra.mrb[0].mxu0 %v271
      %v377 = vpop.f32.mrb[0].mxu0
      %v378 = vadd.f32 %v234, %v377
      %v379 = vpop.f32.mrb[0].mxu0
      %v380 = vpop.f32.mrb[0].mxu0
      %v381 = vadd.f32 %v234, %v380
      %v382 = vpop.f32.mrb[0].mxu0
      %383 = vmatprep.mubr.bf16.mxu0 0
      %384 = vmatmul.mubr.bf16.gmra.mrb[0].mxu0 %v274
      %v385 = vpop.f32.mrb[0].mxu0
      %v386 = vadd.f32 %v234, %v385
      %v387 = vpop.f32.mrb[0].mxu0
      %v388 = vpop.f32.mrb[0].mxu0
      %v389 = vadd.f32 %v234, %v388
      %v390 = vpop.f32.mrb[0].mxu0
      %391 = vmatprep.mubr.bf16.mxu0 0
      %392 = vmatmul.mubr.bf16.gmra.mrb[0].mxu0 %v277
      %v393 = vpop.f32.mrb[0].mxu0
      %v394 = vadd.f32 %v234, %v393
      %v395 = vpop.f32.mrb[0].mxu0
      %v396 = vpop.f32.mrb[0].mxu0
      %v397 = vadd.f32 %v234, %v396
      %v398 = vpop.f32.mrb[0].mxu0
      %399 = vmatprep.mubr.bf16.mxu0 0
      %400 = vmatmul.mubr.bf16.gmra.mrb[0].mxu0 %v280
      %v401 = vpop.f32.mrb[0].mxu0
      %v402 = vadd.f32 %v234, %v401
      %v403 = vpop.f32.mrb[0].mxu0
      %v404 = vpop.f32.mrb[0].mxu0
      %v405 = vadd.f32 %v234, %v404
      %v406 = vpop.f32.mrb[0].mxu0
      %407 = vmatprep.mubr.bf16.mxu0 0
      %408 = vmatmul.mubr.bf16.gmra.mrb[0].mxu0 %v283
      %v409 = vpop.f32.mrb[0].mxu0
      %v410 = vadd.f32 %v234, %v409
      %v411 = vpop.f32.mrb[0].mxu0
      %v412 = vpop.f32.mrb[0].mxu0
      %v413 = vadd.f32 %v234, %v412
      %v414 = vpop.f32.mrb[0].mxu0
      %415 = vmatprep.mubr.bf16.mxu0 0
      %416 = vmatmul.mubr.bf16.gmra.mrb[0].mxu0 %v286
      %v417 = vpop.f32.mrb[0].mxu0
      %v418 = vadd.f32 %v234, %v417
      %v419 = vpop.f32.mrb[0].mxu0
      %v420 = vpop.f32.mrb[0].mxu0
      %v421 = vadd.f32 %v234, %v420
      %v422 = vpop.f32.mrb[0].mxu0
      %423 = vmatprep.mubr.bf16.mxu0 0
      %424 = vmatmul.mubr.bf16.gmra.mrb[0].mxu0 %v289
      %v425 = vpop.f32.mrb[0].mxu0
      %v426 = vadd.f32 %v234, %v425
      %v427 = vpop.f32.mrb[0].mxu0
      %v428 = vpop.f32.mrb[0].mxu0
      %v429 = vadd.f32 %v234, %v428
      %v430 = vpop.f32.mrb[0].mxu0
      %431 = vmatprep.mubr.bf16.mxu0 0
      %432 = vmatmul.mubr.bf16.gmra.mrb[0].mxu0 %v292
      %v433 = vpop.f32.mrb[0].mxu0
      %v434 = vadd.f32 %v234, %v433
      %v435 = vpop.f32.mrb[0].mxu0
      %v436 = vpop.f32.mrb[0].mxu0
      %v437 = vadd.f32 %v234, %v436
      %v438 = vpop.f32.mrb[0].mxu0
      %439 = vmatprep.mubr.bf16.mxu0 0
      %440 = vmatmul.mubr.bf16.gmra.mrb[0].mxu0 %v295
      %v441 = vpop.f32.mrb[0].mxu0
      %v442 = vadd.f32 %v234, %v441
      %v443 = vpop.f32.mrb[0].mxu0
      %v444 = vpop.f32.mrb[0].mxu0
      %v445 = vadd.f32 %v234, %v444
      %v446 = vpop.f32.mrb[0].mxu0
      %447 = vmatprep.mubr.bf16.mxu0 0
      %448 = vmatmul.mubr.bf16.gmra.mrb[0].mxu0 %v298
      %v449 = vpop.f32.mrb[0].mxu0
      %v450 = vadd.f32 %v234, %v449
      %v451 = vpop.f32.mrb[0].mxu0
      %v452 = vpop.f32.mrb[0].mxu0
      %v453 = vadd.f32 %v234, %v452
      %v454 = vpop.f32.mrb[0].mxu0
      %455 = vmatprep.mubr.bf16.mxu0 0
      %456 = vmatmul.mubr.bf16.gmra.mrb[0].mxu0 %v301
      %v457 = vpop.f32.mrb[0].mxu0
      %v458 = vadd.f32 %v234, %v457
      %v459 = vpop.f32.mrb[0].mxu0
      %v460 = vpop.f32.mrb[0].mxu0
      %v461 = vadd.f32 %v234, %v460
      %v462 = vpop.f32.mrb[0].mxu0
      %463 = vdwg.mxu0
      %v464 = vmax.f32 %v338, 0.0
      %v465 = vmax.f32 %v341, 0.0
      %v466 = vmax.f32 %v346, 0.0
      %v467 = vmax.f32 %v349, 0.0
      %v468 = vmax.f32 %v354, 0.0
      %v469 = vmax.f32 %v357, 0.0
      %v470 = vmax.f32 %v362, 0.0
      %v471 = vmax.f32 %v365, 0.0
      %v472 = vmax.f32 %v370, 0.0
      %v473 = vmax.f32 %v373, 0.0
      %v474 = vmax.f32 %v378, 0.0
      %v475 = vmax.f32 %v381, 0.0
      %v476 = vmax.f32 %v386, 0.0
      %v477 = vmax.f32 %v389, 0.0
      %v478 = vmax.f32 %v394, 0.0
      %v479 = vmax.f32 %v397, 0.0
      %v480 = vmax.f32 %v402, 0.0
      %v481 = vmax.f32 %v405, 0.0
      %v482 = vmax.f32 %v410, 0.0
      %v483 = vmax.f32 %v413, 0.0
      %v484 = vmax.f32 %v418, 0.0
      %v485 = vmax.f32 %v421, 0.0
      %v486 = vmax.f32 %v426, 0.0
      %v487 = vmax.f32 %v429, 0.0
      %v488 = vmax.f32 %v434, 0.0
      %v489 = vmax.f32 %v437, 0.0
      %v490 = vmax.f32 %v442, 0.0
      %v491 = vmax.f32 %v445, 0.0
      %v492 = vmax.f32 %v450, 0.0
      %v493 = vmax.f32 %v453, 0.0
      %v494 = vmax.f32 %v458, 0.0
      %v495 = vmax.f32 %v461, 0.0
      %vm496 = vcmask 130048
      %497 = vst.msk [vmem:[%s172] sm:$0xff] %vm496, %v464
      %498 = vst.msk [vmem:[%s172 + $0x8] sm:$0xff] %vm496, %v465
      %499 = vst.msk [vmem:[%s172 + $0x10] sm:$0xff] %vm496, %v466
      %500 = vst.msk [vmem:[%s172 + $0x18] sm:$0xff] %vm496, %v467
      %501 = vst.msk [vmem:[%s172 + $0x20] sm:$0xff] %vm496, %v468
      %502 = vst.msk [vmem:[%s172 + $0x28] sm:$0xff] %vm496, %v469
      %503 = vst.msk [vmem:[%s172 + $0x30] sm:$0xff] %vm496, %v470
      %504 = vst.msk [vmem:[%s172 + $0x38] sm:$0xff] %vm496, %v471
      %505 = vst.msk [vmem:[%s172 + $0x40] sm:$0xff] %vm496, %v472
      %506 = vst.msk [vmem:[%s172 + $0x48] sm:$0xff] %vm496, %v473
      %507 = vst.msk [vmem:[%s172 + $0x50] sm:$0xff] %vm496, %v474
      %508 = vst.msk [vmem:[%s172 + $0x58] sm:$0xff] %vm496, %v475
      %509 = vst.msk [vmem:[%s172 + $0x60] sm:$0xff] %vm496, %v476
      %510 = vst.msk [vmem:[%s172 + $0x68] sm:$0xff] %vm496, %v477
      %511 = vst.msk [vmem:[%s172 + $0x70] sm:$0xff] %vm496, %v478
      %512 = vst.msk [vmem:[%s172 + $0x78] sm:$0xff] %vm496, %v479
      %513 = vst.msk [vmem:[%s172 + $0x80] sm:$0xff] %vm496, %v480
      %514 = vst.msk [vmem:[%s172 + $0x88] sm:$0xff] %vm496, %v481
      %515 = vst.msk [vmem:[%s172 + $0x90] sm:$0xff] %vm496, %v482
      %516 = vst.msk [vmem:[%s172 + $0x98] sm:$0xff] %vm496, %v483
      %517 = vst.msk [vmem:[%s172 + $0xa0] sm:$0xff] %vm496, %v484
      %518 = vst.msk [vmem:[%s172 + $0xa8] sm:$0xff] %vm496, %v485
      %519 = vst.msk [vmem:[%s172 + $0xb0] sm:$0xff] %vm496, %v486
      %520 = vst.msk [vmem:[%s172 + $0xb8] sm:$0xff] %vm496, %v487
      %521 = vst.msk [vmem:[%s172 + $0xc0] sm:$0xff] %vm496, %v488
      %522 = vst.msk [vmem:[%s172 + $0xc8] sm:$0xff] %vm496, %v489
      %523 = vst.msk [vmem:[%s172 + $0xd0] sm:$0xff] %vm496, %v490
      %524 = vst.msk [vmem:[%s172 + $0xd8] sm:$0xff] %vm496, %v491
      %525 = vst.msk [vmem:[%s172 + $0xe0] sm:$0xff] %vm496, %v492
      %526 = vst.msk [vmem:[%s172 + $0xe8] sm:$0xff] %vm496, %v493
      %527 = vst.msk [vmem:[%s172 + $0xf0] sm:$0xff] %vm496, %v494
      %528 = vst.msk [vmem:[%s172 + $0xf8] sm:$0xff] %vm496, %v495
      %s529 = smul.u32 32, %s14
      %p530 = scmp.lt.s32.totalorder %s529, 63
      %s531 = scalar_select %p530, %s529, 63
      %s532 = smul.addr %s531, 8
      %s533 = scalar_lea.vmem %s3, %s532
      // Predicated region
      $region33: #{encoder_forward.6} parent=31 // pred_check
        %p534 = pneg %p100
      $region34: #{encoder_forward.6} parent=31 // pred_check_branch
        %536 = sbr.rel (%p534) target = $region36
      $region35: #{encoder_forward.6} parent=31 // pred_region
        %s537 = smul.u32 32, %s14
      $region36: #{encoder_forward.6} parent=31 // pred_fallthru
        _
    $region32: #{encoder_forward.6} parent=5 // pred_fallthru
      _
    %p538 = scmp.le.s32.totalorder 2, %s9
    // Predicated region
    $region37: #{encoder_forward.6} parent=5 // pred_check
      %p539 = pneg %p538
    $region38: #{encoder_forward.6} parent=5 // pred_check_branch
      %541 = sbr.rel (%p539) target = $region40
    $region39: #{encoder_forward.6} parent=5 // pred_region
      %s542 = ssub.s32 %s9, 2
      // Predicated region
      $region41: #{encoder_forward.6} parent=39 // pred_check
        %p543 = pneg %p106
      $region42: #{encoder_forward.6} parent=39 // pred_check_branch
        %545 = sbr.rel (%p543) target = $region44
      $region43: #{encoder_forward.6} parent=39 // pred_region
        %s546 = smul.u32 32, %s15
        %p547 = scmp.lt.s32.totalorder %s546, 63
        %s548 = scalar_select %p547, %s546, 63
        %s549 = smul.addr %s548, 8
        %s550 = scalar_lea.vmem %s3, %s549
      $region44: #{encoder_forward.6} parent=39 // pred_fallthru
        _
    $region40: #{encoder_forward.6} parent=5 // pred_fallthru
      _
  $region6: #{encoder_forward.6} parent=0 // loop_footer
    %s13 = sadd.s32 1, %s9
  $region7: #{encoder_forward.6} parent=0 // loop_footer_branch
    %8 = sbr.rel target = $region3
  $region8: #{encoder_forward.6} parent=0 // loop_exit
    _

// kernel: encoder_forward.7
$region0: #{encoder_forward.7}
  #allocation0 [shape = 'u32[]', space=smem, size = 0x4, offset = 0x4, fixed_abs, tag = 'smem constant byte address 0x4 - core index']
  #allocation1 [shape = 'u32[144,128]{1,0:T(1,128)}', space=vmem, size = 0x12000, scoped, tag = 'internal scratch']
  %s0 = inlined_call_operand.vmem [shape: f32[128,256], index: 0, kind: input, shape index: {}]
  %s1 = inlined_call_operand.vmem [shape: bf16[256,32], index: 1, kind: input, shape index: {}]
  %s2 = inlined_call_operand.vmem [shape: f32[1,32], index: 2, kind: input, shape index: {}]
  %s3 = inlined_call_operand.vmem [shape: f32[128,32], index: 3, kind: output, shape index: {}]
  %s4 = sld [smem:[#allocation0]]
  $region22: #{encoder_forward.7} parent=0
    _
  %s6 = ssub.s32 1, %s4
  %s7 = scalar_select 0, %s6, %s4
  // Predicated region
  $region2: #{encoder_forward.7} parent=0 // pred_check
    _
  $region3: #{encoder_forward.7} parent=0 // pred_check_branch
    %9 = sbr.rel (0) target = $region5
  $region4: #{encoder_forward.7} parent=0 // pred_region
    _
  $region5: #{encoder_forward.7} parent=0 // pred_fallthru
    _
  // Predicated region
  $region6: #{encoder_forward.7} parent=0 // pred_check
    _
  $region7: #{encoder_forward.7} parent=0 // pred_check_branch
    %11 = sbr.rel (0) target = $region9
  $region8: #{encoder_forward.7} parent=0 // pred_region
    _
  $region9: #{encoder_forward.7} parent=0 // pred_fallthru
    _
  // Predicated region
  $region10: #{encoder_forward.7} parent=0 // pred_check
    _
  $region11: #{encoder_forward.7} parent=0 // pred_check_branch
    %13 = sbr.rel (0) target = $region13
  $region12: #{encoder_forward.7} parent=0 // pred_region
    _
  $region13: #{encoder_forward.7} parent=0 // pred_fallthru
    _
  %v15 = vld [vmem:[%s0] sm:$0xff]
  %v16 = vld [vmem:[%s0 + $0x8] sm:$0xff]
  %v17 = vld [vmem:[%s0 + $0x10] sm:$0xff]
  %v18 = vld [vmem:[%s0 + $0x18] sm:$0xff]
  %v19 = vld [vmem:[%s0 + $0x20] sm:$0xff]
  %v20 = vld [vmem:[%s0 + $0x28] sm:$0xff]
  %v21 = vld [vmem:[%s0 + $0x30] sm:$0xff]
  %v22 = vld [vmem:[%s0 + $0x38] sm:$0xff]
  %v23 = vld [vmem:[%s0 + $0x40] sm:$0xff]
  %v24 = vld [vmem:[%s0 + $0x48] sm:$0xff]
  %v25 = vld [vmem:[%s0 + $0x50] sm:$0xff]
  %v26 = vld [vmem:[%s0 + $0x58] sm:$0xff]
  %v27 = vld [vmem:[%s0 + $0x60] sm:$0xff]
  %v28 = vld [vmem:[%s0 + $0x68] sm:$0xff]
  %v29 = vld [vmem:[%s0 + $0x70] sm:$0xff]
  %v30 = vld [vmem:[%s0 + $0x78] sm:$0xff]
  %v31 = vld [vmem:[%s0 + $0x80] sm:$0xff]
  %v32 = vld [vmem:[%s0 + $0x88] sm:$0xff]
  %v33 = vld [vmem:[%s0 + $0x90] sm:$0xff]
  %v34 = vld [vmem:[%s0 + $0x98] sm:$0xff]
  %v35 = vld [vmem:[%s0 + $0xa0] sm:$0xff]
  %v36 = vld [vmem:[%s0 + $0xa8] sm:$0xff]
  %v37 = vld [vmem:[%s0 + $0xb0] sm:$0xff]
  %v38 = vld [vmem:[%s0 + $0xb8] sm:$0xff]
  %v39 = vld [vmem:[%s0 + $0xc0] sm:$0xff]
  %v40 = vld [vmem:[%s0 + $0xc8] sm:$0xff]
  %v41 = vld [vmem:[%s0 + $0xd0] sm:$0xff]
  %v42 = vld [vmem:[%s0 + $0xd8] sm:$0xff]
  %v43 = vld [vmem:[%s0 + $0xe0] sm:$0xff]
  %v44 = vld [vmem:[%s0 + $0xe8] sm:$0xff]
  %v45 = vld [vmem:[%s0 + $0xf0] sm:$0xff]
  %v46 = vld [vmem:[%s0 + $0xf8] sm:$0xff]
  %v47 = vpack.c.bf16 %v17, %v15
  %v48 = vpack.c.bf16 %v18, %v16
  %v49 = vpack.c.bf16 %v21, %v19
  %v50 = vpack.c.bf16 %v22, %v20
  %v51 = vpack.c.bf16 %v25, %v23
  %v52 = vpack.c.bf16 %v26, %v24
  %v53 = vpack.c.bf16 %v29, %v27
  %v54 = vpack.c.bf16 %v30, %v28
  %v55 = vpack.c.bf16 %v33, %v31
  %v56 = vpack.c.bf16 %v34, %v32
  %v57 = vpack.c.bf16 %v37, %v35
  %v58 = vpack.c.bf16 %v38, %v36
  %v59 = vpack.c.bf16 %v41, %v39
  %v60 = vpack.c.bf16 %v42, %v40
  %v61 = vpack.c.bf16 %v45, %v43
  %v62 = vpack.c.bf16 %v46, %v44
  %v63 = vld [vmem:[%s1] sm:$0xf]
  %v64 = vld [vmem:[%s1 + $0x4] sm:$0xf]
  %v65 = vld [vmem:[%s1 + $0x8] sm:$0xf]
  %v66 = vld [vmem:[%s1 + $0xc] sm:$0xf]
  %v67 = vld [vmem:[%s1 + $0x10] sm:$0xf]
  %v68 = vld [vmem:[%s1 + $0x14] sm:$0xf]
  %v69 = vld [vmem:[%s1 + $0x18] sm:$0xf]
  %v70 = vld [vmem:[%s1 + $0x1c] sm:$0xf]
  %v71 = vld [vmem:[%s1 + $0x20] sm:$0xf]
  %v72 = vld [vmem:[%s1 + $0x24] sm:$0xf]
  %v73 = vld [vmem:[%s1 + $0x28] sm:$0xf]
  %v74 = vld [vmem:[%s1 + $0x2c] sm:$0xf]
  %v75 = vld [vmem:[%s1 + $0x30] sm:$0xf]
  %v76 = vld [vmem:[%s1 + $0x34] sm:$0xf]
  %v77 = vld [vmem:[%s1 + $0x38] sm:$0xf]
  %v78 = vld [vmem:[%s1 + $0x3c] sm:$0xf]
  %v79 = vld [vmem:[%s1 + $0x40] sm:$0xf]
  %v80 = vld [vmem:[%s1 + $0x44] sm:$0xf]
  %v81 = vld [vmem:[%s1 + $0x48] sm:$0xf]
  %v82 = vld [vmem:[%s1 + $0x4c] sm:$0xf]
  %v83 = vld [vmem:[%s1 + $0x50] sm:$0xf]
  %v84 = vld [vmem:[%s1 + $0x54] sm:$0xf]
  %v85 = vld [vmem:[%s1 + $0x58] sm:$0xf]
  %v86 = vld [vmem:[%s1 + $0x5c] sm:$0xf]
  %v87 = vld [vmem:[%s1 + $0x60] sm:$0xf]
  %v88 = vld [vmem:[%s1 + $0x64] sm:$0xf]
  %v89 = vld [vmem:[%s1 + $0x68] sm:$0xf]
  %v90 = vld [vmem:[%s1 + $0x6c] sm:$0xf]
  %v91 = vld [vmem:[%s1 + $0x70] sm:$0xf]
  %v92 = vld [vmem:[%s1 + $0x74] sm:$0xf]
  %v93 = vld [vmem:[%s1 + $0x78] sm:$0xf]
  %v94 = vld [vmem:[%s1 + $0x7c] sm:$0xf]
  %v95 = vld [vmem:[%s2] sm:$0x1]
  %v97 = vlaneseq
  %v98 = vshrl.u32 %v97, 7
  %v99 = vsub.s32 0, %v98
  %v100 = vrot.slane %v95, %v99
  %v134 = vunpack.c.l.b16 %v63
  %v135 = vunpack.c.l.b16 %v64
  %v136 = vunpack.c.l.b16 %v65
  %v137 = vunpack.c.l.b16 %v66
  %v138 = vunpack.c.l.b16 %v67
  %v139 = vunpack.c.l.b16 %v68
  %v140 = vunpack.c.l.b16 %v69
  %v141 = vunpack.c.l.b16 %v70
  %v142 = vunpack.c.l.b16 %v71
  %v143 = vunpack.c.l.b16 %v72
  %v144 = vunpack.c.l.b16 %v73
  %v145 = vunpack.c.l.b16 %v74
  %v146 = vunpack.c.l.b16 %v75
  %v147 = vunpack.c.l.b16 %v76
  %v148 = vunpack.c.l.b16 %v77
  %v149 = vunpack.c.l.b16 %v78
  %v150 = vunpack.c.l.b16 %v79
  %v151 = vunpack.c.l.b16 %v80
  %v152 = vunpack.c.l.b16 %v81
  %v153 = vunpack.c.l.b16 %v82
  %v154 = vunpack.c.l.b16 %v83
  %v155 = vunpack.c.l.b16 %v84
  %v156 = vunpack.c.l.b16 %v85
  %v157 = vunpack.c.l.b16 %v86
  %v158 = vunpack.c.l.b16 %v87
  %v159 = vunpack.c.l.b16 %v88
  %v160 = vunpack.c.l.b16 %v89
  %v161 = vunpack.c.l.b16 %v90
  %v162 = vunpack.c.l.b16 %v91
  %v163 = vunpack.c.l.b16 %v92
  %v164 = vunpack.c.l.b16 %v93
  %v165 = vunpack.c.l.b16 %v94
  %v166 = vpack.c.b16 %v135, %v134
  %v167 = vpack.c.b16 %v137, %v136
  %v168 = vpack.c.b16 %v139, %v138
  %v169 = vpack.c.b16 %v141, %v140
  %v170 = vpack.c.b16 %v143, %v142
  %v171 = vpack.c.b16 %v145, %v144
  %v172 = vpack.c.b16 %v147, %v146
  %v173 = vpack.c.b16 %v149, %v148
  %v174 = vpack.c.b16 %v151, %v150
  %v175 = vpack.c.b16 %v153, %v152
  %v176 = vpack.c.b16 %v155, %v154
  %v177 = vpack.c.b16 %v157, %v156
  %v178 = vpack.c.b16 %v159, %v158
  %v179 = vpack.c.b16 %v161, %v160
  %v180 = vpack.c.b16 %v163, %v162
  %v181 = vpack.c.b16 %v165, %v164
  %198 = vmatprep.subr.bf16.mxu0 0
  %199 = vmatpush1.bf16.msra.mxu0 %v166
  %200 = vmatprep.subr.bf16.mxu0 0
  %201 = vmatpush1.bf16.msra.mxu0 %v167
  %202 = vmatprep.subr.bf16.mxu0 0
  %203 = vmatpush1.bf16.msra.mxu0 %v168
  %204 = vmatprep.subr.bf16.mxu0 0
  %205 = vmatpush1.bf16.msra.mxu0 %v169
  %206 = vmatprep.subr.bf16.mxu0 0
  %207 = vmatpush1.bf16.msra.mxu0 %v170
  %208 = vmatprep.subr.bf16.mxu0 0
  %209 = vmatpush1.bf16.msra.mxu0 %v171
  %210 = vmatprep.subr.bf16.mxu0 0
  %211 = vmatpush1.bf16.msra.mxu0 %v172
  %212 = vmatprep.subr.bf16.mxu0 0
  %213 = vmatpush1.bf16.msra.mxu0 %v173
  %214 = vmatprep.subr.bf16.mxu0 0
  %215 = vmatpush1.bf16.msra.mxu0 %v174
  %216 = vmatprep.subr.bf16.mxu0 0
  %217 = vmatpush1.bf16.msra.mxu0 %v175
  %218 = vmatprep.subr.bf16.mxu0 0
  %219 = vmatpush1.bf16.msra.mxu0 %v176
  %220 = vmatprep.subr.bf16.mxu0 0
  %221 = vmatpush1.bf16.msra.mxu0 %v177
  %222 = vmatprep.subr.bf16.mxu0 0
  %223 = vmatpush1.bf16.msra.mxu0 %v178
  %224 = vmatprep.subr.bf16.mxu0 0
  %225 = vmatpush1.bf16.msra.mxu0 %v179
  %226 = vmatprep.subr.bf16.mxu0 0
  %227 = vmatpush1.bf16.msra.mxu0 %v180
  %228 = vmatprep.subr.bf16.mxu0 0
  %229 = vmatpush1.bf16.msra.mxu0 %v181
  %230 = vmatprep.mubr.bf16.mxu0 %v48
  %231 = vmatmul.mubr.bf16.gmra.mrb[0].mxu0 %v47
  %v232 = vpop.f32.mrb[0].mxu0
  %v233 = vadd.f32 %v100, %v232
  %v234 = vpop.f32.mrb[0].mxu0
  %v235 = vpop.f32.mrb[0].mxu0
  %v236 = vadd.f32 %v100, %v235
  %v237 = vpop.f32.mrb[0].mxu0
  %238 = vmatprep.mubr.bf16.mxu0 %v50
  %239 = vmatmul.mubr.bf16.gmra.mrb[0].mxu0 %v49
  %v240 = vpop.f32.mrb[0].mxu0
  %v241 = vadd.f32 %v100, %v240
  %v242 = vpop.f32.mrb[0].mxu0
  %v243 = vpop.f32.mrb[0].mxu0
  %v244 = vadd.f32 %v100, %v243
  %v245 = vpop.f32.mrb[0].mxu0
  %246 = vmatprep.mubr.bf16.mxu0 %v52
  %247 = vmatmul.mubr.bf16.gmra.mrb[0].mxu0 %v51
  %v248 = vpop.f32.mrb[0].mxu0
  %v249 = vadd.f32 %v100, %v248
  %v250 = vpop.f32.mrb[0].mxu0
  %v251 = vpop.f32.mrb[0].mxu0
  %v252 = vadd.f32 %v100, %v251
  %v253 = vpop.f32.mrb[0].mxu0
  %254 = vmatprep.mubr.bf16.mxu0 %v54
  %255 = vmatmul.mubr.bf16.gmra.mrb[0].mxu0 %v53
  %v256 = vpop.f32.mrb[0].mxu0
  %v257 = vadd.f32 %v100, %v256
  %v258 = vpop.f32.mrb[0].mxu0
  %v259 = vpop.f32.mrb[0].mxu0
  %v260 = vadd.f32 %v100, %v259
  %v261 = vpop.f32.mrb[0].mxu0
  %262 = vmatprep.mubr.bf16.mxu0 %v56
  %263 = vmatmul.mubr.bf16.gmra.mrb[0].mxu0 %v55
  %v264 = vpop.f32.mrb[0].mxu0
  %v265 = vadd.f32 %v100, %v264
  %v266 = vpop.f32.mrb[0].mxu0
  %v267 = vpop.f32.mrb[0].mxu0
  %v268 = vadd.f32 %v100, %v267
  %v269 = vpop.f32.mrb[0].mxu0
  %270 = vmatprep.mubr.bf16.mxu0 %v58
  %271 = vmatmul.mubr.bf16.gmra.mrb[0].mxu0 %v57
  %v272 = vpop.f32.mrb[0].mxu0
  %v273 = vadd.f32 %v100, %v272
  %v274 = vpop.f32.mrb[0].mxu0
  %v275 = vpop.f32.mrb[0].mxu0
  %v276 = vadd.f32 %v100, %v275
  %v277 = vpop.f32.mrb[0].mxu0
  %278 = vmatprep.mubr.bf16.mxu0 %v60
  %279 = vmatmul.mubr.bf16.gmra.mrb[0].mxu0 %v59
  %v280 = vpop.f32.mrb[0].mxu0
  %v281 = vadd.f32 %v100, %v280
  %v282 = vpop.f32.mrb[0].mxu0
  %v283 = vpop.f32.mrb[0].mxu0
  %v284 = vadd.f32 %v100, %v283
  %v285 = vpop.f32.mrb[0].mxu0
  %286 = vmatprep.mubr.bf16.mxu0 %v62
  %287 = vmatmul.mubr.bf16.gmra.mrb[0].mxu0 %v61
  %v288 = vpop.f32.mrb[0].mxu0
  %v289 = vadd.f32 %v100, %v288
  %v290 = vpop.f32.mrb[0].mxu0
  %v291 = vpop.f32.mrb[0].mxu0
  %v292 = vadd.f32 %v100, %v291
  %v293 = vpop.f32.mrb[0].mxu0
  %294 = vdwg.mxu0
  %v295 = vmax.f32 %v233, 0.0
  %v296 = vmax.f32 %v236, 0.0
  %v297 = vmax.f32 %v241, 0.0
  %v298 = vmax.f32 %v244, 0.0
  %v299 = vmax.f32 %v249, 0.0
  %v300 = vmax.f32 %v252, 0.0
  %v301 = vmax.f32 %v257, 0.0
  %v302 = vmax.f32 %v260, 0.0
  %v303 = vmax.f32 %v265, 0.0
  %v304 = vmax.f32 %v268, 0.0
  %v305 = vmax.f32 %v273, 0.0
  %v306 = vmax.f32 %v276, 0.0
  %v307 = vmax.f32 %v281, 0.0
  %v308 = vmax.f32 %v284, 0.0
  %v309 = vmax.f32 %v289, 0.0
  %v310 = vmax.f32 %v292, 0.0
  %vm311 = vcmask 261120
  %312 = vst.msk [vmem:[%s3] sm:$0xff] %vm311, %v295
  %313 = vst.msk [vmem:[%s3 + $0x8] sm:$0xff] %vm311, %v296
  %314 = vst.msk [vmem:[%s3 + $0x10] sm:$0xff] %vm311, %v297
  %315 = vst.msk [vmem:[%s3 + $0x18] sm:$0xff] %vm311, %v298
  %316 = vst.msk [vmem:[%s3 + $0x20] sm:$0xff] %vm311, %v299
  %317 = vst.msk [vmem:[%s3 + $0x28] sm:$0xff] %vm311, %v300
  %318 = vst.msk [vmem:[%s3 + $0x30] sm:$0xff] %vm311, %v301
  %319 = vst.msk [vmem:[%s3 + $0x38] sm:$0xff] %vm311, %v302
  %320 = vst.msk [vmem:[%s3 + $0x40] sm:$0xff] %vm311, %v303
  %321 = vst.msk [vmem:[%s3 + $0x48] sm:$0xff] %vm311, %v304
  %322 = vst.msk [vmem:[%s3 + $0x50] sm:$0xff] %vm311, %v305
  %323 = vst.msk [vmem:[%s3 + $0x58] sm:$0xff] %vm311, %v306
  %324 = vst.msk [vmem:[%s3 + $0x60] sm:$0xff] %vm311, %v307
  %325 = vst.msk [vmem:[%s3 + $0x68] sm:$0xff] %vm311, %v308
  %326 = vst.msk [vmem:[%s3 + $0x70] sm:$0xff] %vm311, %v309
  %327 = vst.msk [vmem:[%s3 + $0x78] sm:$0xff] %vm311, %v310
  // Predicated region
  $region14: #{encoder_forward.7} parent=0 // pred_check
    _
  $region15: #{encoder_forward.7} parent=0 // pred_check_branch
    %329 = sbr.rel (0) target = $region17
  $region16: #{encoder_forward.7} parent=0 // pred_region
    _
  $region17: #{encoder_forward.7} parent=0 // pred_fallthru
    _
  // Predicated region
  $region18: #{encoder_forward.7} parent=0 // pred_check
    _
  $region19: #{encoder_forward.7} parent=0 // pred_check_branch
    %331 = sbr.rel (0) target = $region21
  $region20: #{encoder_forward.7} parent=0 // pred_region
    _
  $region21: #{encoder_forward.7} parent=0 // pred_fallthru
    _

// kernel: encoder_forward.8
$region0: #{encoder_forward.8}
  #allocation0 [shape = 'u32[]', space=smem, size = 0x4, offset = 0x4, fixed_abs, tag = 'smem constant byte address 0x4 - core index']
  #allocation1 [shape = 'u32[144,128]{1,0:T(1,128)}', space=vmem, size = 0x12000, scoped, tag = 'internal scratch']
  %s0 = inlined_call_operand.vmem [shape: f32[32,512], index: 0, kind: input, shape index: {}]
  %s1 = inlined_call_operand.vmem [shape: bf16[512,32], index: 1, kind: input, shape index: {}]
  %s2 = inlined_call_operand.vmem [shape: f32[1,32], index: 2, kind: input, shape index: {}]
  %s3 = inlined_call_operand.vmem [shape: f32[32,32], index: 3, kind: output, shape index: {}]
  %s4 = sld [smem:[#allocation0]]
  $region22: #{encoder_forward.8} parent=0
    _
  %s6 = ssub.s32 1, %s4
  %s7 = scalar_select 0, %s6, %s4
  // Predicated region
  $region2: #{encoder_forward.8} parent=0 // pred_check
    _
  $region3: #{encoder_forward.8} parent=0 // pred_check_branch
    %9 = sbr.rel (0) target = $region5
  $region4: #{encoder_forward.8} parent=0 // pred_region
    _
  $region5: #{encoder_forward.8} parent=0 // pred_fallthru
    _
  // Predicated region
  $region6: #{encoder_forward.8} parent=0 // pred_check
    _
  $region7: #{encoder_forward.8} parent=0 // pred_check_branch
    %11 = sbr.rel (0) target = $region9
  $region8: #{encoder_forward.8} parent=0 // pred_region
    _
  $region9: #{encoder_forward.8} parent=0 // pred_fallthru
    _
  // Predicated region
  $region10: #{encoder_forward.8} parent=0 // pred_check
    _
  $region11: #{encoder_forward.8} parent=0 // pred_check_branch
    %13 = sbr.rel (0) target = $region13
  $region12: #{encoder_forward.8} parent=0 // pred_region
    _
  $region13: #{encoder_forward.8} parent=0 // pred_fallthru
    _
  %v15 = vld [vmem:[%s0] sm:$0xff]
  %v16 = vld [vmem:[%s0 + $0x8] sm:$0xff]
  %v17 = vld [vmem:[%s0 + $0x10] sm:$0xff]
  %v18 = vld [vmem:[%s0 + $0x18] sm:$0xff]
  %v19 = vld [vmem:[%s0 + $0x20] sm:$0xff]
  %v20 = vld [vmem:[%s0 + $0x28] sm:$0xff]
  %v21 = vld [vmem:[%s0 + $0x30] sm:$0xff]
  %v22 = vld [vmem:[%s0 + $0x38] sm:$0xff]
  %v23 = vld [vmem:[%s0 + $0x40] sm:$0xff]
  %v24 = vld [vmem:[%s0 + $0x48] sm:$0xff]
  %v25 = vld [vmem:[%s0 + $0x50] sm:$0xff]
  %v26 = vld [vmem:[%s0 + $0x58] sm:$0xff]
  %v27 = vld [vmem:[%s0 + $0x60] sm:$0xff]
  %v28 = vld [vmem:[%s0 + $0x68] sm:$0xff]
  %v29 = vld [vmem:[%s0 + $0x70] sm:$0xff]
  %v30 = vld [vmem:[%s0 + $0x78] sm:$0xff]
  %v31 = vpack.c.bf16 %v19, %v15
  %v32 = vpack.c.bf16 %v20, %v16
  %v33 = vpack.c.bf16 %v21, %v17
  %v34 = vpack.c.bf16 %v22, %v18
  %v35 = vpack.c.bf16 %v27, %v23
  %v36 = vpack.c.bf16 %v28, %v24
  %v37 = vpack.c.bf16 %v29, %v25
  %v38 = vpack.c.bf16 %v30, %v26
  %v39 = vld [vmem:[%s1] sm:$0xf]
  %v40 = vld [vmem:[%s1 + $0x4] sm:$0xf]
  %v41 = vld [vmem:[%s1 + $0x8] sm:$0xf]
  %v42 = vld [vmem:[%s1 + $0xc] sm:$0xf]
  %v43 = vld [vmem:[%s1 + $0x10] sm:$0xf]
  %v44 = vld [vmem:[%s1 + $0x14] sm:$0xf]
  %v45 = vld [vmem:[%s1 + $0x18] sm:$0xf]
  %v46 = vld [vmem:[%s1 + $0x1c] sm:$0xf]
  %v47 = vld [vmem:[%s1 + $0x20] sm:$0xf]
  %v48 = vld [vmem:[%s1 + $0x24] sm:$0xf]
  %v49 = vld [vmem:[%s1 + $0x28] sm:$0xf]
  %v50 = vld [vmem:[%s1 + $0x2c] sm:$0xf]
  %v51 = vld [vmem:[%s1 + $0x30] sm:$0xf]
  %v52 = vld [vmem:[%s1 + $0x34] sm:$0xf]
  %v53 = vld [vmem:[%s1 + $0x38] sm:$0xf]
  %v54 = vld [vmem:[%s1 + $0x3c] sm:$0xf]
  %v55 = vld [vmem:[%s1 + $0x40] sm:$0xf]
  %v56 = vld [vmem:[%s1 + $0x44] sm:$0xf]
  %v57 = vld [vmem:[%s1 + $0x48] sm:$0xf]
  %v58 = vld [vmem:[%s1 + $0x4c] sm:$0xf]
  %v59 = vld [vmem:[%s1 + $0x50] sm:$0xf]
  %v60 = vld [vmem:[%s1 + $0x54] sm:$0xf]
  %v61 = vld [vmem:[%s1 + $0x58] sm:$0xf]
  %v62 = vld [vmem:[%s1 + $0x5c] sm:$0xf]
  %v63 = vld [vmem:[%s1 + $0x60] sm:$0xf]
  %v64 = vld [vmem:[%s1 + $0x64] sm:$0xf]
  %v65 = vld [vmem:[%s1 + $0x68] sm:$0xf]
  %v66 = vld [vmem:[%s1 + $0x6c] sm:$0xf]
  %v67 = vld [vmem:[%s1 + $0x70] sm:$0xf]
  %v68 = vld [vmem:[%s1 + $0x74] sm:$0xf]
  %v69 = vld [vmem:[%s1 + $0x78] sm:$0xf]
  %v70 = vld [vmem:[%s1 + $0x7c] sm:$0xf]
  %v71 = vld [vmem:[%s1 + $0x80] sm:$0xf]
  %v72 = vld [vmem:[%s1 + $0x84] sm:$0xf]
  %v73 = vld [vmem:[%s1 + $0x88] sm:$0xf]
  %v74 = vld [vmem:[%s1 + $0x8c] sm:$0xf]
  %v75 = vld [vmem:[%s1 + $0x90] sm:$0xf]
  %v76 = vld [vmem:[%s1 + $0x94] sm:$0xf]
  %v77 = vld [vmem:[%s1 + $0x98] sm:$0xf]
  %v78 = vld [vmem:[%s1 + $0x9c] sm:$0xf]
  %v79 = vld [vmem:[%s1 + $0xa0] sm:$0xf]
  %v80 = vld [vmem:[%s1 + $0xa4] sm:$0xf]
  %v81 = vld [vmem:[%s1 + $0xa8] sm:$0xf]
  %v82 = vld [vmem:[%s1 + $0xac] sm:$0xf]
  %v83 = vld [vmem:[%s1 + $0xb0] sm:$0xf]
  %v84 = vld [vmem:[%s1 + $0xb4] sm:$0xf]
  %v85 = vld [vmem:[%s1 + $0xb8] sm:$0xf]
  %v86 = vld [vmem:[%s1 + $0xbc] sm:$0xf]
  %v87 = vld [vmem:[%s1 + $0xc0] sm:$0xf]
  %v88 = vld [vmem:[%s1 + $0xc4] sm:$0xf]
  %v89 = vld [vmem:[%s1 + $0xc8] sm:$0xf]
  %v90 = vld [vmem:[%s1 + $0xcc] sm:$0xf]
  %v91 = vld [vmem:[%s1 + $0xd0] sm:$0xf]
  %v92 = vld [vmem:[%s1 + $0xd4] sm:$0xf]
  %v93 = vld [vmem:[%s1 + $0xd8] sm:$0xf]
  %v94 = vld [vmem:[%s1 + $0xdc] sm:$0xf]
  %v95 = vld [vmem:[%s1 + $0xe0] sm:$0xf]
  %v96 = vld [vmem:[%s1 + $0xe4] sm:$0xf]
  %v97 = vld [vmem:[%s1 + $0xe8] sm:$0xf]
  %v98 = vld [vmem:[%s1 + $0xec] sm:$0xf]
  %v99 = vld [vmem:[%s1 + $0xf0] sm:$0xf]
  %v100 = vld [vmem:[%s1 + $0xf4] sm:$0xf]
  %v101 = vld [vmem:[%s1 + $0xf8] sm:$0xf]
  %v102 = vld [vmem:[%s1 + $0xfc] sm:$0xf]
  %v103 = vld [vmem:[%s2] sm:$0x1]
  %v105 = vlaneseq
  %v106 = vshrl.u32 %v105, 7
  %v107 = vsub.s32 0, %v106
  %v108 = vrot.slane %v103, %v107
  %v174 = vunpack.c.l.b16 %v39
  %v175 = vunpack.c.l.b16 %v40
  %v176 = vunpack.c.l.b16 %v41
  %v177 = vunpack.c.l.b16 %v42
  %v178 = vunpack.c.l.b16 %v43
  %v179 = vunpack.c.l.b16 %v44
  %v180 = vunpack.c.l.b16 %v45
  %v181 = vunpack.c.l.b16 %v46
  %v182 = vunpack.c.l.b16 %v47
  %v183 = vunpack.c.l.b16 %v48
  %v184 = vunpack.c.l.b16 %v49
  %v185 = vunpack.c.l.b16 %v50
  %v186 = vunpack.c.l.b16 %v51
  %v187 = vunpack.c.l.b16 %v52
  %v188 = vunpack.c.l.b16 %v53
  %v189 = vunpack.c.l.b16 %v54
  %v190 = vunpack.c.l.b16 %v55
  %v191 = vunpack.c.l.b16 %v56
  %v192 = vunpack.c.l.b16 %v57
  %v193 = vunpack.c.l.b16 %v58
  %v194 = vunpack.c.l.b16 %v59
  %v195 = vunpack.c.l.b16 %v60
  %v196 = vunpack.c.l.b16 %v61
  %v197 = vunpack.c.l.b16 %v62
  %v198 = vunpack.c.l.b16 %v63
  %v199 = vunpack.c.l.b16 %v64
  %v200 = vunpack.c.l.b16 %v65
  %v201 = vunpack.c.l.b16 %v66
  %v202 = vunpack.c.l.b16 %v67
  %v203 = vunpack.c.l.b16 %v68
  %v204 = vunpack.c.l.b16 %v69
  %v205 = vunpack.c.l.b16 %v70
  %v206 = vunpack.c.l.b16 %v71
  %v207 = vunpack.c.l.b16 %v72
  %v208 = vunpack.c.l.b16 %v73
  %v209 = vunpack.c.l.b16 %v74
  %v210 = vunpack.c.l.b16 %v75
  %v211 = vunpack.c.l.b16 %v76
  %v212 = vunpack.c.l.b16 %v77
  %v213 = vunpack.c.l.b16 %v78
  %v214 = vunpack.c.l.b16 %v79
  %v215 = vunpack.c.l.b16 %v80
  %v216 = vunpack.c.l.b16 %v81
  %v217 = vunpack.c.l.b16 %v82
  %v218 = vunpack.c.l.b16 %v83
  %v219 = vunpack.c.l.b16 %v84
  %v220 = vunpack.c.l.b16 %v85
  %v221 = vunpack.c.l.b16 %v86
  %v222 = vunpack.c.l.b16 %v87
  %v223 = vunpack.c.l.b16 %v88
  %v224 = vunpack.c.l.b16 %v89
  %v225 = vunpack.c.l.b16 %v90
  %v226 = vunpack.c.l.b16 %v91
  %v227 = vunpack.c.l.b16 %v92
  %v228 = vunpack.c.l.b16 %v93
  %v229 = vunpack.c.l.b16 %v94
  %v230 = vunpack.c.l.b16 %v95
  %v231 = vunpack.c.l.b16 %v96
  %v232 = vunpack.c.l.b16 %v97
  %v233 = vunpack.c.l.b16 %v98
  %v234 = vunpack.c.l.b16 %v99
  %v235 = vunpack.c.l.b16 %v100
  %v236 = vunpack.c.l.b16 %v101
  %v237 = vunpack.c.l.b16 %v102
  %v238 = vpack.c.b16 %v175, %v174
  %v239 = vpack.c.b16 %v177, %v176
  %v240 = vpack.c.b16 %v179, %v178
  %v241 = vpack.c.b16 %v181, %v180
  %v242 = vpack.c.b16 %v183, %v182
  %v243 = vpack.c.b16 %v185, %v184
  %v244 = vpack.c.b16 %v187, %v186
  %v245 = vpack.c.b16 %v189, %v188
  %v246 = vpack.c.b16 %v191, %v190
  %v247 = vpack.c.b16 %v193, %v192
  %v248 = vpack.c.b16 %v195, %v194
  %v249 = vpack.c.b16 %v197, %v196
  %v250 = vpack.c.b16 %v199, %v198
  %v251 = vpack.c.b16 %v201, %v200
  %v252 = vpack.c.b16 %v203, %v202
  %v253 = vpack.c.b16 %v205, %v204
  %v254 = vpack.c.b16 %v207, %v206
  %v255 = vpack.c.b16 %v209, %v208
  %v256 = vpack.c.b16 %v211, %v210
  %v257 = vpack.c.b16 %v213, %v212
  %v258 = vpack.c.b16 %v215, %v214
  %v259 = vpack.c.b16 %v217, %v216
  %v260 = vpack.c.b16 %v219, %v218
  %v261 = vpack.c.b16 %v221, %v220
  %v262 = vpack.c.b16 %v223, %v222
  %v263 = vpack.c.b16 %v225, %v224
  %v264 = vpack.c.b16 %v227, %v226
  %v265 = vpack.c.b16 %v229, %v228
  %v266 = vpack.c.b16 %v231, %v230
  %v267 = vpack.c.b16 %v233, %v232
  %v268 = vpack.c.b16 %v235, %v234
  %v269 = vpack.c.b16 %v237, %v236
  %302 = vmatprep.subr.bf16.mxu0 0
  %303 = vmatpush1.bf16.msra.mxu0 %v238
  %304 = vmatprep.subr.bf16.mxu0 0
  %305 = vmatpush1.bf16.msra.mxu0 %v239
  %306 = vmatprep.subr.bf16.mxu0 0
  %307 = vmatpush1.bf16.msra.mxu0 %v240
  %308 = vmatprep.subr.bf16.mxu0 0
  %309 = vmatpush1.bf16.msra.mxu0 %v241
  %310 = vmatprep.subr.bf16.mxu0 0
  %311 = vmatpush1.bf16.msra.mxu0 %v242
  %312 = vmatprep.subr.bf16.mxu0 0
  %313 = vmatpush1.bf16.msra.mxu0 %v243
  %314 = vmatprep.subr.bf16.mxu0 0
  %315 = vmatpush1.bf16.msra.mxu0 %v244
  %316 = vmatprep.subr.bf16.mxu0 0
  %317 = vmatpush1.bf16.msra.mxu0 %v245
  %318 = vmatprep.subr.bf16.mxu0 0
  %319 = vmatpush1.bf16.msra.mxu0 %v246
  %320 = vmatprep.subr.bf16.mxu0 0
  %321 = vmatpush1.bf16.msra.mxu0 %v247
  %322 = vmatprep.subr.bf16.mxu0 0
  %323 = vmatpush1.bf16.msra.mxu0 %v248
  %324 = vmatprep.subr.bf16.mxu0 0
  %325 = vmatpush1.bf16.msra.mxu0 %v249
  %326 = vmatprep.subr.bf16.mxu0 0
  %327 = vmatpush1.bf16.msra.mxu0 %v250
  %328 = vmatprep.subr.bf16.mxu0 0
  %329 = vmatpush1.bf16.msra.mxu0 %v251
  %330 = vmatprep.subr.bf16.mxu0 0
  %331 = vmatpush1.bf16.msra.mxu0 %v252
  %332 = vmatprep.subr.bf16.mxu0 0
  %333 = vmatpush1.bf16.msra.mxu0 %v253
  %334 = vmatprep.mubr.bf16.mxu0 %v32
  %335 = vmatmul.mubr.bf16.gmra.mrb[0].mxu0 %v31
  %v336 = vpop.f32.mrb[0].mxu0
  %v337 = vadd.f32 %v108, %v336
  %v338 = vpop.f32.mrb[0].mxu0
  %v339 = vpop.f32.mrb[0].mxu0
  %v340 = vadd.f32 %v108, %v339
  %v341 = vpop.f32.mrb[0].mxu0
  %342 = vmatprep.mubr.bf16.mxu0 %v36
  %343 = vmatmul.mubr.bf16.gmra.mrb[0].mxu0 %v35
  %v344 = vpop.f32.mrb[0].mxu0
  %v345 = vadd.f32 %v108, %v344
  %v346 = vpop.f32.mrb[0].mxu0
  %v347 = vpop.f32.mrb[0].mxu0
  %v348 = vadd.f32 %v108, %v347
  %v349 = vpop.f32.mrb[0].mxu0
  %350 = vdwg.mxu0
  %351 = vmatprep.subr.bf16.mxu0 0
  %352 = vmatpush1.bf16.msra.mxu0 %v254
  %353 = vmatprep.subr.bf16.mxu0 0
  %354 = vmatpush1.bf16.msra.mxu0 %v255
  %355 = vmatprep.subr.bf16.mxu0 0
  %356 = vmatpush1.bf16.msra.mxu0 %v256
  %357 = vmatprep.subr.bf16.mxu0 0
  %358 = vmatpush1.bf16.msra.mxu0 %v257
  %359 = vmatprep.subr.bf16.mxu0 0
  %360 = vmatpush1.bf16.msra.mxu0 %v258
  %361 = vmatprep.subr.bf16.mxu0 0
  %362 = vmatpush1.bf16.msra.mxu0 %v259
  %363 = vmatprep.subr.bf16.mxu0 0
  %364 = vmatpush1.bf16.msra.mxu0 %v260
  %365 = vmatprep.subr.bf16.mxu0 0
  %366 = vmatpush1.bf16.msra.mxu0 %v261
  %367 = vmatprep.subr.bf16.mxu0 0
  %368 = vmatpush1.bf16.msra.mxu0 %v262
  %369 = vmatprep.subr.bf16.mxu0 0
  %370 = vmatpush1.bf16.msra.mxu0 %v263
  %371 = vmatprep.subr.bf16.mxu0 0
  %372 = vmatpush1.bf16.msra.mxu0 %v264
  %373 = vmatprep.subr.bf16.mxu0 0
  %374 = vmatpush1.bf16.msra.mxu0 %v265
  %375 = vmatprep.subr.bf16.mxu0 0
  %376 = vmatpush1.bf16.msra.mxu0 %v266
  %377 = vmatprep.subr.bf16.mxu0 0
  %378 = vmatpush1.bf16.msra.mxu0 %v267
  %379 = vmatprep.subr.bf16.mxu0 0
  %380 = vmatpush1.bf16.msra.mxu0 %v268
  %381 = vmatprep.subr.bf16.mxu0 0
  %382 = vmatpush1.bf16.msra.mxu0 %v269
  %383 = vmatprep.mubr.bf16.mxu0 %v34
  %384 = vmatmul.mubr.bf16.gmra.mrb[0].mxu0 %v33
  %v385 = vpop.f32.mrb[0].mxu0
  %v386 = vadd.f32 %v337, %v385
  %v387 = vpop.f32.mrb[0].mxu0
  %v388 = vpop.f32.mrb[0].mxu0
  %v389 = vadd.f32 %v340, %v388
  %v390 = vpop.f32.mrb[0].mxu0
  %391 = vmatprep.mubr.bf16.mxu0 %v38
  %392 = vmatmul.mubr.bf16.gmra.mrb[0].mxu0 %v37
  %v393 = vpop.f32.mrb[0].mxu0
  %v394 = vadd.f32 %v345, %v393
  %v395 = vpop.f32.mrb[0].mxu0
  %v396 = vpop.f32.mrb[0].mxu0
  %v397 = vadd.f32 %v348, %v396
  %v398 = vpop.f32.mrb[0].mxu0
  %399 = vdwg.mxu0
  %v400 = vmax.f32 %v386, 0.0
  %v401 = vmax.f32 %v389, 0.0
  %v402 = vmax.f32 %v394, 0.0
  %v403 = vmax.f32 %v397, 0.0
  %vm404 = vcmask 261120
  %405 = vst.msk [vmem:[%s3] sm:$0xff] %vm404, %v400
  %406 = vst.msk [vmem:[%s3 + $0x8] sm:$0xff] %vm404, %v401
  %407 = vst.msk [vmem:[%s3 + $0x10] sm:$0xff] %vm404, %v402
  %408 = vst.msk [vmem:[%s3 + $0x18] sm:$0xff] %vm404, %v403
  // Predicated region
  $region14: #{encoder_forward.8} parent=0 // pred_check
    _
  $region15: #{encoder_forward.8} parent=0 // pred_check_branch
    %410 = sbr.rel (0) target = $region17
  $region16: #{encoder_forward.8} parent=0 // pred_region
    _
  $region17: #{encoder_forward.8} parent=0 // pred_fallthru
    _
  // Predicated region
  $region18: #{encoder_forward.8} parent=0 // pred_check
    _
  $region19: #{encoder_forward.8} parent=0 // pred_check_branch
    %412 = sbr.rel (0) target = $region21
  $region20: #{encoder_forward.8} parent=0 // pred_region
    _
  $region21: #{encoder_forward.8} parent=0 // pred_fallthru
    _

// kernel: encoder_forward.9
$region0: #{encoder_forward.9}
  #allocation0 [shape = 'u32[]', space=smem, size = 0x4, offset = 0x4, fixed_abs, tag = 'smem constant byte address 0x4 - core index']
  #allocation1 [shape = 'u32[144,128]{1,0:T(1,128)}', space=vmem, size = 0x12000, scoped, tag = 'internal scratch']
  %s0 = inlined_call_operand.vmem [shape: f32[32,288], index: 0, kind: input, shape index: {}]
  %s1 = inlined_call_operand.vmem [shape: bf16[288,32], index: 1, kind: input, shape index: {}]
  %s2 = inlined_call_operand.vmem [shape: f32[1,32], index: 2, kind: input, shape index: {}]
  %s3 = inlined_call_operand.vmem [shape: f32[32,32], index: 3, kind: output, shape index: {}]
  %s4 = sld [smem:[#allocation0]]
  $region22: #{encoder_forward.9} parent=0
    _
  %s6 = ssub.s32 1, %s4
  %s7 = scalar_select 0, %s6, %s4
  // Predicated region
  $region2: #{encoder_forward.9} parent=0 // pred_check
    _
  $region3: #{encoder_forward.9} parent=0 // pred_check_branch
    %9 = sbr.rel (0) target = $region5
  $region4: #{encoder_forward.9} parent=0 // pred_region
    _
  $region5: #{encoder_forward.9} parent=0 // pred_fallthru
    _
  // Predicated region
  $region6: #{encoder_forward.9} parent=0 // pred_check
    _
  $region7: #{encoder_forward.9} parent=0 // pred_check_branch
    %11 = sbr.rel (0) target = $region9
  $region8: #{encoder_forward.9} parent=0 // pred_region
    _
  $region9: #{encoder_forward.9} parent=0 // pred_fallthru
    _
  // Predicated region
  $region10: #{encoder_forward.9} parent=0 // pred_check
    _
  $region11: #{encoder_forward.9} parent=0 // pred_check_branch
    %13 = sbr.rel (0) target = $region13
  $region12: #{encoder_forward.9} parent=0 // pred_region
    _
  $region13: #{encoder_forward.9} parent=0 // pred_fallthru
    _
  %v15 = vld [vmem:[%s0] sm:$0xff]
  %v16 = vld [vmem:[%s0 + $0x8] sm:$0xff]
  %v17 = vld [vmem:[%s0 + $0x10] sm:$0xff]
  %v18 = vld [vmem:[%s0 + $0x18] sm:$0xff]
  %v19 = vld [vmem:[%s0 + $0x20] sm:$0xff]
  %v20 = vld [vmem:[%s0 + $0x28] sm:$0xff]
  %v21 = vld [vmem:[%s0 + $0x30] sm:$0xff]
  %v22 = vld [vmem:[%s0 + $0x38] sm:$0xff]
  %v23 = vld [vmem:[%s0 + $0x40] sm:$0xff]
  %v24 = vld [vmem:[%s0 + $0x48] sm:$0xff]
  %v25 = vld [vmem:[%s0 + $0x50] sm:$0xff]
  %v26 = vld [vmem:[%s0 + $0x58] sm:$0xff]
  %v27 = vpack.c.bf16 %v18, %v15
  %v28 = vpack.c.bf16 %v19, %v16
  %v29 = vpack.c.bf16 %v20, %v17
  %v30 = vpack.c.bf16 %v24, %v21
  %v31 = vpack.c.bf16 %v25, %v22
  %v32 = vpack.c.bf16 %v26, %v23
  %v33 = vld [vmem:[%s1] sm:$0xf]
  %v34 = vld [vmem:[%s1 + $0x4] sm:$0xf]
  %v35 = vld [vmem:[%s1 + $0x8] sm:$0xf]
  %v36 = vld [vmem:[%s1 + $0xc] sm:$0xf]
  %v37 = vld [vmem:[%s1 + $0x10] sm:$0xf]
  %v38 = vld [vmem:[%s1 + $0x14] sm:$0xf]
  %v39 = vld [vmem:[%s1 + $0x18] sm:$0xf]
  %v40 = vld [vmem:[%s1 + $0x1c] sm:$0xf]
  %v41 = vld [vmem:[%s1 + $0x20] sm:$0xf]
  %v42 = vld [vmem:[%s1 + $0x24] sm:$0xf]
  %v43 = vld [vmem:[%s1 + $0x28] sm:$0xf]
  %v44 = vld [vmem:[%s1 + $0x2c] sm:$0xf]
  %v45 = vld [vmem:[%s1 + $0x30] sm:$0xf]
  %v46 = vld [vmem:[%s1 + $0x34] sm:$0xf]
  %v47 = vld [vmem:[%s1 + $0x38] sm:$0xf]
  %v48 = vld [vmem:[%s1 + $0x3c] sm:$0xf]
  %v49 = vld [vmem:[%s1 + $0x40] sm:$0xf]
  %v50 = vld [vmem:[%s1 + $0x44] sm:$0xf]
  %v51 = vld [vmem:[%s1 + $0x48] sm:$0xf]
  %v52 = vld [vmem:[%s1 + $0x4c] sm:$0xf]
  %v53 = vld [vmem:[%s1 + $0x50] sm:$0xf]
  %v54 = vld [vmem:[%s1 + $0x54] sm:$0xf]
  %v55 = vld [vmem:[%s1 + $0x58] sm:$0xf]
  %v56 = vld [vmem:[%s1 + $0x5c] sm:$0xf]
  %v57 = vld [vmem:[%s1 + $0x60] sm:$0xf]
  %v58 = vld [vmem:[%s1 + $0x64] sm:$0xf]
  %v59 = vld [vmem:[%s1 + $0x68] sm:$0xf]
  %v60 = vld [vmem:[%s1 + $0x6c] sm:$0xf]
  %v61 = vld [vmem:[%s1 + $0x70] sm:$0xf]
  %v62 = vld [vmem:[%s1 + $0x74] sm:$0xf]
  %v63 = vld [vmem:[%s1 + $0x78] sm:$0xf]
  %v64 = vld [vmem:[%s1 + $0x7c] sm:$0xf]
  %v65 = vld [vmem:[%s1 + $0x80] sm:$0xf]
  %v66 = vld [vmem:[%s1 + $0x84] sm:$0xf]
  %v67 = vld [vmem:[%s1 + $0x88] sm:$0xf]
  %v68 = vld [vmem:[%s1 + $0x8c] sm:$0xf]
  %v69 = vld [vmem:[%s2] sm:$0x1]
  %v71 = vlaneseq
  %v72 = vshrl.u32 %v71, 7
  %v73 = vsub.s32 0, %v72
  %v74 = vrot.slane %v69, %v73
  %v112 = vunpack.c.l.b16 %v33
  %v113 = vunpack.c.l.b16 %v34
  %v114 = vunpack.c.l.b16 %v35
  %v115 = vunpack.c.l.b16 %v36
  %v116 = vunpack.c.l.b16 %v37
  %v117 = vunpack.c.l.b16 %v38
  %v118 = vunpack.c.l.b16 %v39
  %v119 = vunpack.c.l.b16 %v40
  %v120 = vunpack.c.l.b16 %v41
  %v121 = vunpack.c.l.b16 %v42
  %v122 = vunpack.c.l.b16 %v43
  %v123 = vunpack.c.l.b16 %v44
  %v124 = vunpack.c.l.b16 %v45
  %v125 = vunpack.c.l.b16 %v46
  %v126 = vunpack.c.l.b16 %v47
  %v127 = vunpack.c.l.b16 %v48
  %v128 = vunpack.c.l.b16 %v49
  %v129 = vunpack.c.l.b16 %v50
  %v130 = vunpack.c.l.b16 %v51
  %v131 = vunpack.c.l.b16 %v52
  %v132 = vunpack.c.l.b16 %v53
  %v133 = vunpack.c.l.b16 %v54
  %v134 = vunpack.c.l.b16 %v55
  %v135 = vunpack.c.l.b16 %v56
  %v136 = vunpack.c.l.b16 %v57
  %v137 = vunpack.c.l.b16 %v58
  %v138 = vunpack.c.l.b16 %v59
  %v139 = vunpack.c.l.b16 %v60
  %v140 = vunpack.c.l.b16 %v61
  %v141 = vunpack.c.l.b16 %v62
  %v142 = vunpack.c.l.b16 %v63
  %v143 = vunpack.c.l.b16 %v64
  %v144 = vunpack.c.l.b16 %v65
  %v145 = vunpack.c.l.b16 %v66
  %v146 = vunpack.c.l.b16 %v67
  %v147 = vunpack.c.l.b16 %v68
  %v148 = vpack.c.b16 %v113, %v112
  %v149 = vpack.c.b16 %v115, %v114
  %v150 = vpack.c.b16 %v117, %v116
  %v151 = vpack.c.b16 %v119, %v118
  %v152 = vpack.c.b16 %v121, %v120
  %v153 = vpack.c.b16 %v123, %v122
  %v154 = vpack.c.b16 %v125, %v124
  %v155 = vpack.c.b16 %v127, %v126
  %v156 = vpack.c.b16 %v129, %v128
  %v157 = vpack.c.b16 %v131, %v130
  %v158 = vpack.c.b16 %v133, %v132
  %v159 = vpack.c.b16 %v135, %v134
  %v160 = vpack.c.b16 %v137, %v136
  %v161 = vpack.c.b16 %v139, %v138
  %v162 = vpack.c.b16 %v141, %v140
  %v163 = vpack.c.b16 %v143, %v142
  %v164 = vpack.c.b16 %v145, %v144
  %v165 = vpack.c.b16 %v147, %v146
  %vm184 = vcmask 261120
  %v186 = vsel %vm184, %v29, 0
  %v189 = vsel %vm184, %v32, 0
  %191 = vmatprep.subr.bf16.mxu0 0
  %192 = vmatpush1.bf16.msra.mxu0 %v148
  %193 = vmatprep.subr.bf16.mxu0 0
  %194 = vmatpush1.bf16.msra.mxu0 %v149
  %195 = vmatprep.subr.bf16.mxu0 0
  %196 = vmatpush1.bf16.msra.mxu0 %v150
  %197 = vmatprep.subr.bf16.mxu0 0
  %198 = vmatpush1.bf16.msra.mxu0 %v151
  %199 = vmatprep.subr.bf16.mxu0 0
  %200 = vmatpush1.bf16.msra.mxu0 %v152
  %201 = vmatprep.subr.bf16.mxu0 0
  %202 = vmatpush1.bf16.msra.mxu0 %v153
  %203 = vmatprep.subr.bf16.mxu0 0
  %204 = vmatpush1.bf16.msra.mxu0 %v154
  %205 = vmatprep.subr.bf16.mxu0 0
  %206 = vmatpush1.bf16.msra.mxu0 %v155
  %207 = vmatprep.subr.bf16.mxu0 0
  %208 = vmatpush1.bf16.msra.mxu0 %v156
  %209 = vmatprep.subr.bf16.mxu0 0
  %210 = vmatpush1.bf16.msra.mxu0 %v157
  %211 = vmatprep.subr.bf16.mxu0 0
  %212 = vmatpush1.bf16.msra.mxu0 %v158
  %213 = vmatprep.subr.bf16.mxu0 0
  %214 = vmatpush1.bf16.msra.mxu0 %v159
  %215 = vmatprep.subr.bf16.mxu0 0
  %216 = vmatpush1.bf16.msra.mxu0 %v160
  %217 = vmatprep.subr.bf16.mxu0 0
  %218 = vmatpush1.bf16.msra.mxu0 %v161
  %219 = vmatprep.subr.bf16.mxu0 0
  %220 = vmatpush1.bf16.msra.mxu0 %v162
  %221 = vmatprep.subr.bf16.mxu0 0
  %222 = vmatpush1.bf16.msra.mxu0 %v163
  %223 = vmatprep.mubr.bf16.mxu0 %v28
  %224 = vmatmul.mubr.bf16.gmra.mrb[0].mxu0 %v27
  %v225 = vpop.f32.mrb[0].mxu0
  %v226 = vadd.f32 %v74, %v225
  %v227 = vpop.f32.mrb[0].mxu0
  %v228 = vpop.f32.mrb[0].mxu0
  %v229 = vadd.f32 %v74, %v228
  %v230 = vpop.f32.mrb[0].mxu0
  %231 = vmatprep.mubr.bf16.mxu0 %v31
  %232 = vmatmul.mubr.bf16.gmra.mrb[0].mxu0 %v30
  %v233 = vpop.f32.mrb[0].mxu0
  %v234 = vadd.f32 %v74, %v233
  %v235 = vpop.f32.mrb[0].mxu0
  %v236 = vpop.f32.mrb[0].mxu0
  %v237 = vadd.f32 %v74, %v236
  %v238 = vpop.f32.mrb[0].mxu0
  %239 = vdwg.mxu0
  %240 = vmatprep.subr.bf16.mxu0 0
  %241 = vmatpush1.bf16.msra.mxu0 %v164
  %242 = vmatprep.subr.bf16.mxu0 0
  %243 = vmatpush1.bf16.msra.mxu0 %v165
  %244 = vmatprep.subr.bf16.mxu0 0
  %245 = vmatpush1.bf16.msra.mxu0 0
  %246 = vmatprep.subr.bf16.mxu0 0
  %247 = vmatpush1.bf16.msra.mxu0 0
  %248 = vmatprep.subr.bf16.mxu0 0
  %249 = vmatpush1.bf16.msra.mxu0 0
  %250 = vmatprep.subr.bf16.mxu0 0
  %251 = vmatpush1.bf16.msra.mxu0 0
  %252 = vmatprep.subr.bf16.mxu0 0
  %253 = vmatpush1.bf16.msra.mxu0 0
  %254 = vmatprep.subr.bf16.mxu0 0
  %255 = vmatpush1.bf16.msra.mxu0 0
  %256 = vmatprep.subr.bf16.mxu0 0
  %257 = vmatpush1.bf16.msra.mxu0 0
  %258 = vmatprep.subr.bf16.mxu0 0
  %259 = vmatpush1.bf16.msra.mxu0 0
  %260 = vmatprep.subr.bf16.mxu0 0
  %261 = vmatpush1.bf16.msra.mxu0 0
  %262 = vmatprep.subr.bf16.mxu0 0
  %263 = vmatpush1.bf16.msra.mxu0 0
  %264 = vmatprep.subr.bf16.mxu0 0
  %265 = vmatpush1.bf16.msra.mxu0 0
  %266 = vmatprep.subr.bf16.mxu0 0
  %267 = vmatpush1.bf16.msra.mxu0 0
  %268 = vmatprep.subr.bf16.mxu0 0
  %269 = vmatpush1.bf16.msra.mxu0 0
  %270 = vmatprep.subr.bf16.mxu0 0
  %271 = vmatpush1.bf16.msra.mxu0 0
  %272 = vmatprep.mubr.bf16.mxu0 0
  %273 = vmatmul.mubr.bf16.gmra.mrb[0].mxu0 %v186
  %v274 = vpop.f32.mrb[0].mxu0
  %v275 = vadd.f32 %v226, %v274
  %v276 = vpop.f32.mrb[0].mxu0
  %v277 = vpop.f32.mrb[0].mxu0
  %v278 = vadd.f32 %v229, %v277
  %v279 = vpop.f32.mrb[0].mxu0
  %280 = vmatprep.mubr.bf16.mxu0 0
  %281 = vmatmul.mubr.bf16.gmra.mrb[0].mxu0 %v189
  %v282 = vpop.f32.mrb[0].mxu0
  %v283 = vadd.f32 %v234, %v282
  %v284 = vpop.f32.mrb[0].mxu0
  %v285 = vpop.f32.mrb[0].mxu0
  %v286 = vadd.f32 %v237, %v285
  %v287 = vpop.f32.mrb[0].mxu0
  %288 = vdwg.mxu0
  %289 = vst.msk [vmem:[%s3] sm:$0xff] %vm184, %v275
  %290 = vst.msk [vmem:[%s3 + $0x8] sm:$0xff] %vm184, %v278
  %291 = vst.msk [vmem:[%s3 + $0x10] sm:$0xff] %vm184, %v283
  %292 = vst.msk [vmem:[%s3 + $0x18] sm:$0xff] %vm184, %v286
  // Predicated region
  $region14: #{encoder_forward.9} parent=0 // pred_check
    _
  $region15: #{encoder_forward.9} parent=0 // pred_check_branch
    %294 = sbr.rel (0) target = $region17
  $region16: #{encoder_forward.9} parent=0 // pred_region
    _
  $region17: #{encoder_forward.9} parent=0 // pred_fallthru
    _
  // Predicated region
  $region18: #{encoder_forward.9} parent=0 // pred_check
    _
  $region19: #{encoder_forward.9} parent=0 // pred_check_branch
    %296 = sbr.rel (0) target = $region21
  $region20: #{encoder_forward.9} parent=0 // pred_region
    _
  $region21: #{encoder_forward.9} parent=0 // pred_fallthru
    _

// kernel: encoder_forward.10
$region0: #{encoder_forward.10}
  #allocation0 [shape = 'u32[]', space=smem, size = 0x4, offset = 0x4, fixed_abs, tag = 'smem constant byte address 0x4 - core index']
  #allocation1 [shape = 'u32[144,128]{1,0:T(1,128)}', space=vmem, size = 0x12000, scoped, tag = 'internal scratch']
  #allocation2 [shape = 'f32[16,32]{1,0:T(8,128)}', space=vmem, size = 0x2000, scoped, tag = 'scratch operand']
  %s0 = inlined_call_operand.vmem [shape: f32[2,16,32], index: 0, kind: input, shape index: {}]
  %s1 = inlined_call_operand.vmem [shape: f32[16,288], index: 1, kind: input, shape index: {}]
  %s2 = inlined_call_operand.vmem [shape: bf16[10,288,64], index: 2, kind: input, shape index: {}]
  %s3 = inlined_call_operand.vmem [shape: f32[10,2,64], index: 3, kind: input, shape index: {}]
  %s4 = inlined_call_operand.vmem [shape: bf16[10,64,32], index: 4, kind: input, shape index: {}]
  %s5 = inlined_call_operand.vmem [shape: f32[10,2,32], index: 5, kind: input, shape index: {}]
  %s6 = inlined_call_operand.vmem [shape: f32[2,16,32], index: 6, kind: output, shape index: {}]
  %s7 = sld [smem:[#allocation0]]
  $region65: #{encoder_forward.10} parent=0
    _
  %s9 = ssub.s32 1, %s7
  %s10 = scalar_select 0, %s9, %s7
  loop: start=0, step=1, limit=22
  $region2: #{encoder_forward.10} parent=0 // loop_pre_header
    _
  $region3: #{encoder_forward.10} parent=0 // loop_header
    %s12 = sphi 0, %s16
    %p13 = scmp.ge.s32.totalorder %s12, 22
    %s19 = sphi 0, %s31
    %s20 = sphi 0, %s27
    %s21 = sphi 0, %s19
    %s22 = sphi 0, %s20
    %s23 = sphi 0, %s21
    %s24 = sphi 0, %s22
    %s34 = sphi 0, %s36
    %s37 = sphi 0, %s34
    %s38 = sphi 0, %s37
    %s54 = sphi 0, %s38
    %s58 = sphi 0, %s58
    %s60 = sphi 0, %s58
    %s61 = sphi 0, %s60
    %s75 = sphi 0, %s61
    %s79 = sphi 0, %s79
    %s81 = sphi 0, %s79
    %s82 = sphi 0, %s81
    %s96 = sphi 0, %s82
    %s100 = sphi 0, %s100
    %s102 = sphi 0, %s100
    %s103 = sphi 0, %s102
    %s117 = sphi 0, %s103
    %s121 = sphi 0, %s121
    %s123 = sphi 0, %s121
    %s124 = sphi 0, %s123
    %s138 = sphi 0, %s124
    %s142 = sphi 0, %s142
    %s144 = sphi 0, %s142
    %s145 = sphi 0, %s144
    %s159 = sphi 0, %s145
    %s165 = sphi 0, %s167
    %s168 = sphi 0, %s165
    %s169 = sphi 0, %s168
    %s185 = sphi 0, %s169
  $region4: #{encoder_forward.10} parent=0 // loop_header_branch
    %15 = sbr.rel (%p13) target = $region8
  $region5: #{encoder_forward.10} parent=0 // loop_body
    %s17 = ssub.s32 %s12, 1
    %s18 = ssub.s32 %s12, 2
    %s25 = sadd.s32 1, %s20
    %p26 = scmp.ge.s32.totalorder %s25, 10
    %s27 = scalar_select %p26, 0, %s25
    %s28 = sadd.s32 1, %s19
    %s29 = scalar_select %p26, %s28, %s19
    %p30 = scmp.ge.s32.totalorder %s29, 2
    %s31 = scalar_select %p30, 0, %s29
    %s32 = ssub.s32 %s19, %s31
    %p33 = scmp.eq.s32.totalorder %s32, 0
    %s35 = sadd.s32 %s34, 1
    %s36 = scalar_select %p33, %s34, %s35
    %p39 = pneg %p33
    %p40 = scmp.eq.s32.totalorder %s12, 19
    %p41 = por %p39, %p40
    %p42 = scmp.ne.s32.totalorder %s34, %s37
    %p43 = scmp.eq.s32.totalorder %s12, 0
    %p44 = por %p42, %p43
    %p45 = scmp.ne.s32.totalorder %s34, %s37
    %p46 = scmp.eq.s32.totalorder %s17, 19
    %p47 = por %p45, %p46
    %p48 = scmp.ne.s32.totalorder %s37, %s38
    %p49 = scmp.eq.s32.totalorder %s17, 0
    %p50 = por %p48, %p49
    %p51 = scmp.ne.s32.totalorder %s37, %s38
    %p52 = scmp.eq.s32.totalorder %s18, 19
    %p53 = por %p51, %p52
    %p55 = scmp.ne.s32.totalorder %s38, %s54
    %p56 = scmp.eq.s32.totalorder %s18, 0
    %p57 = por %p55, %p56
    %s59 = sadd.s32 %s58, 1
    %p62 = scmp.eq.s32.totalorder %s12, 19
    %p63 = scmp.ne.s32.totalorder %s58, %s60
    %p64 = scmp.eq.s32.totalorder %s12, 0
    %p65 = por %p63, %p64
    %p66 = scmp.ne.s32.totalorder %s58, %s60
    %p67 = scmp.eq.s32.totalorder %s17, 19
    %p68 = por %p66, %p67
    %p69 = scmp.ne.s32.totalorder %s60, %s61
    %p70 = scmp.eq.s32.totalorder %s17, 0
    %p71 = por %p69, %p70
    %p72 = scmp.ne.s32.totalorder %s60, %s61
    %p73 = scmp.eq.s32.totalorder %s18, 19
    %p74 = por %p72, %p73
    %p76 = scmp.ne.s32.totalorder %s61, %s75
    %p77 = scmp.eq.s32.totalorder %s18, 0
    %p78 = por %p76, %p77
    %s80 = sadd.s32 %s79, 1
    %p83 = scmp.eq.s32.totalorder %s12, 19
    %p84 = scmp.ne.s32.totalorder %s79, %s81
    %p85 = scmp.eq.s32.totalorder %s12, 0
    %p86 = por %p84, %p85
    %p87 = scmp.ne.s32.totalorder %s79, %s81
    %p88 = scmp.eq.s32.totalorder %s17, 19
    %p89 = por %p87, %p88
    %p90 = scmp.ne.s32.totalorder %s81, %s82
    %p91 = scmp.eq.s32.totalorder %s17, 0
    %p92 = por %p90, %p91
    %p93 = scmp.ne.s32.totalorder %s81, %s82
    %p94 = scmp.eq.s32.totalorder %s18, 19
    %p95 = por %p93, %p94
    %p97 = scmp.ne.s32.totalorder %s82, %s96
    %p98 = scmp.eq.s32.totalorder %s18, 0
    %p99 = por %p97, %p98
    %s101 = sadd.s32 %s100, 1
    %p104 = scmp.eq.s32.totalorder %s12, 19
    %p105 = scmp.ne.s32.totalorder %s100, %s102
    %p106 = scmp.eq.s32.totalorder %s12, 0
    %p107 = por %p105, %p106
    %p108 = scmp.ne.s32.totalorder %s100, %s102
    %p109 = scmp.eq.s32.totalorder %s17, 19
    %p110 = por %p108, %p109
    %p111 = scmp.ne.s32.totalorder %s102, %s103
    %p112 = scmp.eq.s32.totalorder %s17, 0
    %p113 = por %p111, %p112
    %p114 = scmp.ne.s32.totalorder %s102, %s103
    %p115 = scmp.eq.s32.totalorder %s18, 19
    %p116 = por %p114, %p115
    %p118 = scmp.ne.s32.totalorder %s103, %s117
    %p119 = scmp.eq.s32.totalorder %s18, 0
    %p120 = por %p118, %p119
    %s122 = sadd.s32 %s121, 1
    %p125 = scmp.eq.s32.totalorder %s12, 19
    %p126 = scmp.ne.s32.totalorder %s121, %s123
    %p127 = scmp.eq.s32.totalorder %s12, 0
    %p128 = por %p126, %p127
    %p129 = scmp.ne.s32.totalorder %s121, %s123
    %p130 = scmp.eq.s32.totalorder %s17, 19
    %p131 = por %p129, %p130
    %p132 = scmp.ne.s32.totalorder %s123, %s124
    %p133 = scmp.eq.s32.totalorder %s17, 0
    %p134 = por %p132, %p133
    %p135 = scmp.ne.s32.totalorder %s123, %s124
    %p136 = scmp.eq.s32.totalorder %s18, 19
    %p137 = por %p135, %p136
    %p139 = scmp.ne.s32.totalorder %s124, %s138
    %p140 = scmp.eq.s32.totalorder %s18, 0
    %p141 = por %p139, %p140
    %s143 = sadd.s32 %s142, 1
    %p146 = scmp.eq.s32.totalorder %s12, 19
    %p147 = scmp.ne.s32.totalorder %s142, %s144
    %p148 = scmp.eq.s32.totalorder %s12, 0
    %p149 = por %p147, %p148
    %p150 = scmp.ne.s32.totalorder %s142, %s144
    %p151 = scmp.eq.s32.totalorder %s17, 19
    %p152 = por %p150, %p151
    %p153 = scmp.ne.s32.totalorder %s144, %s145
    %p154 = scmp.eq.s32.totalorder %s17, 0
    %p155 = por %p153, %p154
    %p156 = scmp.ne.s32.totalorder %s144, %s145
    %p157 = scmp.eq.s32.totalorder %s18, 19
    %p158 = por %p156, %p157
    %p160 = scmp.ne.s32.totalorder %s145, %s159
    %p161 = scmp.eq.s32.totalorder %s18, 0
    %p162 = por %p160, %p161
    %s163 = ssub.s32 %s19, %s31
    %p164 = scmp.eq.s32.totalorder %s163, 0
    %s166 = sadd.s32 %s165, 1
    %s167 = scalar_select %p164, %s165, %s166
    %p170 = pneg %p164
    %p171 = scmp.eq.s32.totalorder %s12, 19
    %p172 = por %p170, %p171
    %p173 = scmp.ne.s32.totalorder %s165, %s168
    %p174 = scmp.eq.s32.totalorder %s12, 0
    %p175 = por %p173, %p174
    %p176 = scmp.ne.s32.totalorder %s165, %s168
    %p177 = scmp.eq.s32.totalorder %s17, 19
    %p178 = por %p176, %p177
    %p179 = scmp.ne.s32.totalorder %s168, %s169
    %p180 = scmp.eq.s32.totalorder %s17, 0
    %p181 = por %p179, %p180
    %p182 = scmp.ne.s32.totalorder %s168, %s169
    %p183 = scmp.eq.s32.totalorder %s18, 19
    %p184 = por %p182, %p183
    %p186 = scmp.ne.s32.totalorder %s169, %s185
    %p187 = scmp.eq.s32.totalorder %s18, 0
    %p188 = por %p186, %p187
    %p189 = scmp.le.s32.totalorder 1, %s12
    %p190 = scmp.lt.s32.totalorder %s12, 21
    %p191 = pnand %p189, %p190
    %p192 = pneg %p191
    // Predicated region
    $region9: #{encoder_forward.10} parent=5 // pred_check
      _
    $region10: #{encoder_forward.10} parent=5 // pred_check_branch
      %194 = sbr.rel (%p191) target = $region12
    $region11: #{encoder_forward.10} parent=5 // pred_region
      %s195 = ssub.s32 %s12, 1
      // Predicated region
      $region13: #{encoder_forward.10} parent=11 // pred_check
        %p196 = pneg %p71
      $region14: #{encoder_forward.10} parent=11 // pred_check_branch
        %198 = sbr.rel (%p196) target = $region16
      $region15: #{encoder_forward.10} parent=11 // pred_region
        _
      $region16: #{encoder_forward.10} parent=11 // pred_fallthru
        _
      // Predicated region
      $region17: #{encoder_forward.10} parent=11 // pred_check
        %p199 = pneg %p92
      $region18: #{encoder_forward.10} parent=11 // pred_check_branch
        %201 = sbr.rel (%p199) target = $region20
      $region19: #{encoder_forward.10} parent=11 // pred_region
        _
      $region20: #{encoder_forward.10} parent=11 // pred_fallthru
        _
      // Predicated region
      $region21: #{encoder_forward.10} parent=11 // pred_check
        %p202 = pneg %p113
      $region22: #{encoder_forward.10} parent=11 // pred_check_branch
        %204 = sbr.rel (%p202) target = $region24
      $region23: #{encoder_forward.10} parent=11 // pred_region
        _
      $region24: #{encoder_forward.10} parent=11 // pred_fallthru
        _
      // Predicated region
      $region25: #{encoder_forward.10} parent=11 // pred_check
        %p205 = pneg %p134
      $region26: #{encoder_forward.10} parent=11 // pred_check_branch
        %207 = sbr.rel (%p205) target = $region28
      $region27: #{encoder_forward.10} parent=11 // pred_region
        _
      $region28: #{encoder_forward.10} parent=11 // pred_fallthru
        _
      // Predicated region
      $region29: #{encoder_forward.10} parent=11 // pred_check
        %p208 = pneg %p155
      $region30: #{encoder_forward.10} parent=11 // pred_check_branch
        %210 = sbr.rel (%p208) target = $region32
      $region31: #{encoder_forward.10} parent=11 // pred_region
        _
      $region32: #{encoder_forward.10} parent=11 // pred_fallthru
        _
    $region12: #{encoder_forward.10} parent=5 // pred_fallthru
      _
    %p211 = scmp.lt.s32.totalorder %s12, 20
    // Predicated region
    $region33: #{encoder_forward.10} parent=5 // pred_check
      %p212 = pneg %p211
    $region34: #{encoder_forward.10} parent=5 // pred_check_branch
      %214 = sbr.rel (%p212) target = $region36
    $region35: #{encoder_forward.10} parent=5 // pred_region
      // Predicated region
      $region37: #{encoder_forward.10} parent=35 // pred_check
        %p215 = pneg %p44
      $region38: #{encoder_forward.10} parent=35 // pred_check_branch
        %217 = sbr.rel (%p215) target = $region40
      $region39: #{encoder_forward.10} parent=35 // pred_region
        %p218 = scmp.lt.s32.totalorder %s19, 1
        %s219 = scalar_select %p218, %s19, 1
        %s220 = smul.addr %s219, 2
        %s221 = smul.addr %s220, 8
        %s222 = scalar_lea.vmem %s0, %s221
      $region40: #{encoder_forward.10} parent=35 // pred_fallthru
        _
    $region36: #{encoder_forward.10} parent=5 // pred_fallthru
      _
    %p223 = scmp.le.s32.totalorder 1, %s12
    %p224 = scmp.lt.s32.totalorder %s12, 21
    %p225 = pnand %p223, %p224
    %p226 = pneg %p225
    // Predicated region
    $region41: #{encoder_forward.10} parent=5 // pred_check
      _
    $region42: #{encoder_forward.10} parent=5 // pred_check_branch
      %228 = sbr.rel (%p225) target = $region44
    $region43: #{encoder_forward.10} parent=5 // pred_region
      %s229 = ssub.s32 %s12, 1
      %p230 = scmp.lt.s32.totalorder %s21, 1
      %s231 = scalar_select %p230, %s21, 1
      %s232 = smul.addr %s231, 2
      %s233 = smul.addr %s232, 8
      %s234 = scalar_lea.vmem %s0, %s233
      %p235 = pneg %p50
      %p236 = pneg %p47
      %p237 = pneg %p71
      %p238 = pneg %p68
      %p239 = pneg %p92
      %p240 = pneg %p89
      %p241 = pneg %p113
      %p242 = pneg %p110
      %p243 = pneg %p134
      %p244 = pneg %p131
      %p245 = pneg %p155
      %p246 = pneg %p152
      %p247 = pneg %p181
      %p248 = pneg %p178
      %p249 = scmp.lt.s32.totalorder %s21, 1
      %s250 = scalar_select %p249, %s21, 1
      %s251 = smul.addr %s250, 2
      %s252 = smul.addr %s251, 8
      %s253 = scalar_lea.vmem %s6, %s252
      %p254 = scmp.lt.s32.totalorder %s21, 1
      %s255 = scalar_select %p254, %s21, 1
      %s256 = smul.addr %s255, 2
      %s257 = smul.addr %s256, 8
      %s258 = scalar_lea.vmem %s0, %s257
      %p259 = scmp.lt.s32.totalorder %s21, 1
      %s260 = scalar_select %p259, %s21, 1
      %s261 = smul.addr %s260, 2
      %s262 = smul.addr %s261, 8
      %s263 = scalar_lea.vmem %s6, %s262
      %p265 = scmp.eq.s32.totalorder %s22, 0
      // Predicated region
      $region45: #{encoder_forward.10} parent=43 // pred_check
        %p266 = pneg %p265
      $region46: #{encoder_forward.10} parent=43 // pred_check_branch
        %268 = sbr.rel (%p266) target = $region48
      $region47: #{encoder_forward.10} parent=43 // pred_region
        %v269 = vld [vmem:[%s258] sm:$0xff]
        %v270 = vld [vmem:[%s258 + $0x8] sm:$0xff]
        %vm271 = vcmask 261120
        %272 = vst.msk [vmem:[#allocation2] sm:$0xff] %vm271, %v269
        %273 = vst.msk [vmem:[#allocation2 + $0x8] sm:$0xff] %vm271, %v270
      $region48: #{encoder_forward.10} parent=43 // pred_fallthru
        _
      %v274 = vld [vmem:[#allocation2] sm:$0xff]
      %v275 = vld [vmem:[#allocation2 + $0x8] sm:$0xff]
      %v276 = vmax.f32 %v274, 0.0
      %v277 = vmax.f32 %v275, 0.0
      %v278 = vrot.slane %v276, 3
      %v279 = vrot.slane %v277, 3
      %v280 = vlaneseq
      %v281 = vshrl.u32 %v280, 7
      %vm282 = vcmp.lt.s32.totalorder %v281, 5
      %v283 = vsel %vm282, %v278, %v279
      %v284 = vsel %vm282, %v279, %v278
      %v285 = vrot.slane %v276, 4
      %v286 = vrot.slane %v277, 4
      %vm287 = vcmp.lt.s32.totalorder %v281, 4
      %v288 = vsel %vm287, %v285, %v286
      %v289 = vsel %vm287, %v286, %v285
      %v290 = vrot.slane %v276, 5
      %v291 = vrot.slane %v277, 5
      %vm292 = vcmp.lt.s32.totalorder %v281, 3
      %v293 = vsel %vm292, %v290, %v291
      %v294 = vsel %vm292, %v291, %v290
      %v295 = vrot.slane %v276, 7
      %v296 = vrot.slane %v277, 7
      %vm297 = vcmp.lt.s32.totalorder %v281, 1
      %v298 = vsel %vm297, %v295, %v296
      %v299 = vsel %vm297, %v296, %v295
      %v300 = vrot.slane %v276, 1
      %v301 = vrot.slane %v277, 1
      %vm302 = vcmp.lt.s32.totalorder %v281, 7
      %v303 = vsel %vm302, %v300, %v301
      %v304 = vsel %vm302, %v301, %v300
      %307 = vrot.lane.b32.xlu0 %v289, 32
      %v308 = vpop.permute.xlu0 %307
      %309 = vrot.lane.b32.xlu0 %v288, 32
      %v310 = vpop.permute.xlu0 %309
      %315 = vrot.lane.b32.xlu0 %v294, 64
      %v316 = vpop.permute.xlu0 %315
      %317 = vrot.lane.b32.xlu0 %v293, 64
      %v318 = vpop.permute.xlu0 %317
      %323 = vrot.lane.b32.xlu0 %v299, 96
      %v324 = vpop.permute.xlu0 %323
      %325 = vrot.lane.b32.xlu0 %v298, 96
      %v326 = vpop.permute.xlu0 %325
      %331 = vrot.lane.b32.xlu0 %v303, 32
      %v332 = vpop.permute.xlu0 %331
      %333 = vrot.lane.b32.xlu0 %v304, 32
      %v334 = vpop.permute.xlu0 %333
      %339 = vrot.lane.b32.xlu0 %v283, 64
      %v340 = vpop.permute.xlu0 %339
      %341 = vrot.lane.b32.xlu0 %v284, 64
      %v342 = vpop.permute.xlu0 %341
      %345 = vrot.lane.b32.xlu0 %v288, 96
      %v346 = vpop.permute.xlu0 %345
      %347 = vrot.lane.b32.xlu0 %v289, 96
      %v348 = vpop.permute.xlu0 %347
      %vm351 = vcmask 261120
      %v352 = vsel %vm351, %v284, %v308
      %v353 = vsel %vm351, %v283, %v310
      %vm354 = vcmask 523264
      %v355 = vsel %vm354, %v352, %v316
      %v356 = vsel %vm354, %v353, %v318
      %vm357 = vcmask 785408
      %v358 = vsel %vm357, %v355, %v324
      %v359 = vsel %vm357, %v356, %v326
      %v360 = vsel %vm351, %v276, %v332
      %v361 = vsel %vm351, %v277, %v334
      %v362 = vsel %vm354, %v360, %v340
      %v363 = vsel %vm354, %v361, %v342
      %v364 = vsel %vm357, %v362, %v346
      %v365 = vsel %vm357, %v363, %v348
      %v366 = vld [vmem:[%s1] sm:$0xff]
      %v367 = vld [vmem:[%s1 + $0x8] sm:$0xff]
      %v368 = vld [vmem:[%s1 + $0x10] sm:$0xff]
      %v369 = vld [vmem:[%s1 + $0x18] sm:$0xff]
      %v370 = vld [vmem:[%s1 + $0x20] sm:$0xff]
      %v371 = vld [vmem:[%s1 + $0x28] sm:$0xff]
      %v372 = vmul.f32 %v358, %v366
      %v373 = vmul.f32 %v364, %v367
      %v374 = vmul.f32 %v293, %v368
      %v375 = vmul.f32 %v359, %v369
      %v376 = vmul.f32 %v365, %v370
      %v377 = vmul.f32 %v294, %v371
      %v378 = vpack.c.bf16 %v375, %v372
      %v379 = vpack.c.bf16 %v376, %v373
      %v380 = vpack.c.bf16 %v377, %v374
      %s381 = smul.u32 %s22, 36
      %s382 = smul.addr %s381, 4
      %s383 = scalar_lea.vmem %s2, %s382
      %v384 = vld [vmem:[%s383] sm:$0xf]
      %v385 = vld [vmem:[%s383 + $0x4] sm:$0xf]
      %v386 = vld [vmem:[%s383 + $0x8] sm:$0xf]
      %v387 = vld [vmem:[%s383 + $0xc] sm:$0xf]
      %v388 = vld [vmem:[%s383 + $0x10] sm:$0xf]
      %v389 = vld [vmem:[%s383 + $0x14] sm:$0xf]
      %v390 = vld [vmem:[%s383 + $0x18] sm:$0xf]
      %v391 = vld [vmem:[%s383 + $0x1c] sm:$0xf]
      %v392 = vld [vmem:[%s383 + $0x20] sm:$0xf]
      %v393 = vld [vmem:[%s383 + $0x24] sm:$0xf]
      %v394 = vld [vmem:[%s383 + $0x28] sm:$0xf]
      %v395 = vld [vmem:[%s383 + $0x2c] sm:$0xf]
      %v396 = vld [vmem:[%s383 + $0x30] sm:$0xf]
      %v397 = vld [vmem:[%s383 + $0x34] sm:$0xf]
      %v398 = vld [vmem:[%s383 + $0x38] sm:$0xf]
      %v399 = vld [vmem:[%s383 + $0x3c] sm:$0xf]
      %v400 = vld [vmem:[%s383 + $0x40] sm:$0xf]
      %v401 = vld [vmem:[%s383 + $0x44] sm:$0xf]
      %v402 = vld [vmem:[%s383 + $0x48] sm:$0xf]
      %v403 = vld [vmem:[%s383 + $0x4c] sm:$0xf]
      %v404 = vld [vmem:[%s383 + $0x50] sm:$0xf]
      %v405 = vld [vmem:[%s383 + $0x54] sm:$0xf]
      %v406 = vld [vmem:[%s383 + $0x58] sm:$0xf]
      %v407 = vld [vmem:[%s383 + $0x5c] sm:$0xf]
      %v408 = vld [vmem:[%s383 + $0x60] sm:$0xf]
      %v409 = vld [vmem:[%s383 + $0x64] sm:$0xf]
      %v410 = vld [vmem:[%s383 + $0x68] sm:$0xf]
      %v411 = vld [vmem:[%s383 + $0x6c] sm:$0xf]
      %v412 = vld [vmem:[%s383 + $0x70] sm:$0xf]
      %v413 = vld [vmem:[%s383 + $0x74] sm:$0xf]
      %v414 = vld [vmem:[%s383 + $0x78] sm:$0xf]
      %v415 = vld [vmem:[%s383 + $0x7c] sm:$0xf]
      %v416 = vld [vmem:[%s383 + $0x80] sm:$0xf]
      %v417 = vld [vmem:[%s383 + $0x84] sm:$0xf]
      %v418 = vld [vmem:[%s383 + $0x88] sm:$0xf]
      %v419 = vld [vmem:[%s383 + $0x8c] sm:$0xf]
      %v456 = vunpack.c.l.b16 %v384
      %v457 = vunpack.c.l.b16 %v385
      %v458 = vunpack.c.l.b16 %v386
      %v459 = vunpack.c.l.b16 %v387
      %v460 = vunpack.c.l.b16 %v388
      %v461 = vunpack.c.l.b16 %v389
      %v462 = vunpack.c.l.b16 %v390
      %v463 = vunpack.c.l.b16 %v391
      %v464 = vunpack.c.l.b16 %v392
      %v465 = vunpack.c.l.b16 %v393
      %v466 = vunpack.c.l.b16 %v394
      %v467 = vunpack.c.l.b16 %v395
      %v468 = vunpack.c.l.b16 %v396
      %v469 = vunpack.c.l.b16 %v397
      %v470 = vunpack.c.l.b16 %v398
      %v471 = vunpack.c.l.b16 %v399
      %v472 = vunpack.c.l.b16 %v400
      %v473 = vunpack.c.l.b16 %v401
      %v474 = vunpack.c.l.b16 %v402
      %v475 = vunpack.c.l.b16 %v403
      %v476 = vunpack.c.l.b16 %v404
      %v477 = vunpack.c.l.b16 %v405
      %v478 = vunpack.c.l.b16 %v406
      %v479 = vunpack.c.l.b16 %v407
      %v480 = vunpack.c.l.b16 %v408
      %v481 = vunpack.c.l.b16 %v409
      %v482 = vunpack.c.l.b16 %v410
      %v483 = vunpack.c.l.b16 %v411
      %v484 = vunpack.c.l.b16 %v412
      %v485 = vunpack.c.l.b16 %v413
      %v486 = vunpack.c.l.b16 %v414
      %v487 = vunpack.c.l.b16 %v415
      %v488 = vunpack.c.l.b16 %v416
      %v489 = vunpack.c.l.b16 %v417
      %v490 = vunpack.c.l.b16 %v418
      %v491 = vunpack.c.l.b16 %v419
      %v492 = vpack.c.b16 %v457, %v456
      %v493 = vpack.c.b16 %v459, %v458
      %v494 = vpack.c.b16 %v461, %v460
      %v495 = vpack.c.b16 %v463, %v462
      %v496 = vpack.c.b16 %v465, %v464
      %v497 = vpack.c.b16 %v467, %v466
      %v498 = vpack.c.b16 %v469, %v468
      %v499 = vpack.c.b16 %v471, %v470
      %v500 = vpack.c.b16 %v473, %v472
      %v501 = vpack.c.b16 %v475, %v474
      %v502 = vpack.c.b16 %v477, %v476
      %v503 = vpack.c.b16 %v479, %v478
      %v504 = vpack.c.b16 %v481, %v480
      %v505 = vpack.c.b16 %v483, %v482
      %v506 = vpack.c.b16 %v485, %v484
      %v507 = vpack.c.b16 %v487, %v486
      %v508 = vpack.c.b16 %v489, %v488
      %v509 = vpack.c.b16 %v491, %v490
      %v529 = vsel %vm351, %v380, 0
      %531 = vmatprep.subr.bf16.mxu0 0
      %532 = vmatpush1.bf16.msra.mxu0 %v492
      %533 = vmatprep.subr.bf16.mxu0 0
      %534 = vmatpush1.bf16.msra.mxu0 %v493
      %535 = vmatprep.subr.bf16.mxu0 0
      %536 = vmatpush1.bf16.msra.mxu0 %v494
      %537 = vmatprep.subr.bf16.mxu0 0
      %538 = vmatpush1.bf16.msra.mxu0 %v495
      %539 = vmatprep.subr.bf16.mxu0 0
      %540 = vmatpush1.bf16.msra.mxu0 %v496
      %541 = vmatprep.subr.bf16.mxu0 0
      %542 = vmatpush1.bf16.msra.mxu0 %v497
      %543 = vmatprep.subr.bf16.mxu0 0
      %544 = vmatpush1.bf16.msra.mxu0 %v498
      %545 = vmatprep.subr.bf16.mxu0 0
      %546 = vmatpush1.bf16.msra.mxu0 %v499
      %547 = vmatprep.subr.bf16.mxu0 0
      %548 = vmatpush1.bf16.msra.mxu0 %v500
      %549 = vmatprep.subr.bf16.mxu0 0
      %550 = vmatpush1.bf16.msra.mxu0 %v501
      %551 = vmatprep.subr.bf16.mxu0 0
      %552 = vmatpush1.bf16.msra.mxu0 %v502
      %553 = vmatprep.subr.bf16.mxu0 0
      %554 = vmatpush1.bf16.msra.mxu0 %v503
      %555 = vmatprep.subr.bf16.mxu0 0
      %556 = vmatpush1.bf16.msra.mxu0 %v504
      %557 = vmatprep.subr.bf16.mxu0 0
      %558 = vmatpush1.bf16.msra.mxu0 %v505
      %559 = vmatprep.subr.bf16.mxu0 0
      %560 = vmatpush1.bf16.msra.mxu0 %v506
      %561 = vmatprep.subr.bf16.mxu0 0
      %562 = vmatpush1.bf16.msra.mxu0 %v507
      %563 = vmatprep.mubr.bf16.mxu0 %v379
      %564 = vmatmul.mubr.bf16.gmra.mrb[0].mxu0 %v378
      %v565 = vpop.f32.mrb[0].mxu0
      %v566 = vadd.f32 0.0, %v565
      %v567 = vpop.f32.mrb[0].mxu0
      %v568 = vpop.f32.mrb[0].mxu0
      %v569 = vadd.f32 0.0, %v568
      %v570 = vpop.f32.mrb[0].mxu0
      %571 = vdwg.mxu0
      %572 = vmatprep.subr.bf16.mxu0 0
      %573 = vmatpush1.bf16.msra.mxu0 %v508
      %574 = vmatprep.subr.bf16.mxu0 0
      %575 = vmatpush1.bf16.msra.mxu0 %v509
      %576 = vmatprep.subr.bf16.mxu0 0
      %577 = vmatpush1.bf16.msra.mxu0 0
      %578 = vmatprep.subr.bf16.mxu0 0
      %579 = vmatpush1.bf16.msra.mxu0 0
      %580 = vmatprep.subr.bf16.mxu0 0
      %581 = vmatpush1.bf16.msra.mxu0 0
      %582 = vmatprep.subr.bf16.mxu0 0
      %583 = vmatpush1.bf16.msra.mxu0 0
      %584 = vmatprep.subr.bf16.mxu0 0
      %585 = vmatpush1.bf16.msra.mxu0 0
      %586 = vmatprep.subr.bf16.mxu0 0
      %587 = vmatpush1.bf16.msra.mxu0 0
      %588 = vmatprep.subr.bf16.mxu0 0
      %589 = vmatpush1.bf16.msra.mxu0 0
      %590 = vmatprep.subr.bf16.mxu0 0
      %591 = vmatpush1.bf16.msra.mxu0 0
      %592 = vmatprep.subr.bf16.mxu0 0
      %593 = vmatpush1.bf16.msra.mxu0 0
      %594 = vmatprep.subr.bf16.mxu0 0
      %595 = vmatpush1.bf16.msra.mxu0 0
      %596 = vmatprep.subr.bf16.mxu0 0
      %597 = vmatpush1.bf16.msra.mxu0 0
      %598 = vmatprep.subr.bf16.mxu0 0
      %599 = vmatpush1.bf16.msra.mxu0 0
      %600 = vmatprep.subr.bf16.mxu0 0
      %601 = vmatpush1.bf16.msra.mxu0 0
      %602 = vmatprep.subr.bf16.mxu0 0
      %603 = vmatpush1.bf16.msra.mxu0 0
      %604 = vmatprep.mubr.bf16.mxu0 0
      %605 = vmatmul.mubr.bf16.gmra.mrb[0].mxu0 %v529
      %v606 = vpop.f32.mrb[0].mxu0
      %v607 = vadd.f32 %v566, %v606
      %v608 = vpop.f32.mrb[0].mxu0
      %v609 = vpop.f32.mrb[0].mxu0
      %v610 = vadd.f32 %v569, %v609
      %v611 = vpop.f32.mrb[0].mxu0
      %612 = vdwg.mxu0
      %s613 = smul.u32 %s22, 2
      %s614 = scalar_lea.vmem %s3, %s613
      %v615 = vld [vmem:[%s614] sm:$0x3]
      %v616 = vlaneseq
      %v617 = vshrl.u32 %v616, 7
      %v618 = vsub.s32 0, %v617
      %v619 = vrot.slane %v615, %v618
      %v620 = vmul.f32 %v607, %v619
      %v621 = vmul.f32 %v610, %v619
      %v622 = vlaneseq
      %v623 = vshrl.u32 %v622, 7
      %v624 = vsub.s32 1, %v623
      %v625 = vrot.slane %v615, %v624
      %v626 = vadd.f32 %v620, %v625
      %v627 = vadd.f32 %v621, %v625
      %v628 = vmax.f32 %v626, 0.0
      %v629 = vmax.f32 %v627, 0.0
      %v630 = vpack.c.bf16 %v629, %v628
      %s631 = smul.u32 %s22, 8
      %s632 = smul.addr %s631, 4
      %s633 = scalar_lea.vmem %s4, %s632
      %v634 = vld [vmem:[%s633] sm:$0xf]
      %v635 = vld [vmem:[%s633 + $0x4] sm:$0xf]
      %v636 = vld [vmem:[%s633 + $0x8] sm:$0xf]
      %v637 = vld [vmem:[%s633 + $0xc] sm:$0xf]
      %v638 = vld [vmem:[%s633 + $0x10] sm:$0xf]
      %v639 = vld [vmem:[%s633 + $0x14] sm:$0xf]
      %v640 = vld [vmem:[%s633 + $0x18] sm:$0xf]
      %v641 = vld [vmem:[%s633 + $0x1c] sm:$0xf]
      %v650 = vunpack.c.l.b16 %v634
      %v651 = vunpack.c.l.b16 %v635
      %v652 = vunpack.c.l.b16 %v636
      %v653 = vunpack.c.l.b16 %v637
      %v654 = vunpack.c.l.b16 %v638
      %v655 = vunpack.c.l.b16 %v639
      %v656 = vunpack.c.l.b16 %v640
      %v657 = vunpack.c.l.b16 %v641
      %v658 = vpack.c.b16 %v651, %v650
      %v659 = vpack.c.b16 %v653, %v652
      %v660 = vpack.c.b16 %v655, %v654
      %v661 = vpack.c.b16 %v657, %v656
      %v667 = vsel %vm354, %v630, 0
      %669 = vmatprep.subr.bf16.mxu0 0
      %670 = vmatpush1.bf16.msra.mxu0 %v658
      %671 = vmatprep.subr.bf16.mxu0 0
      %672 = vmatpush1.bf16.msra.mxu0 %v659
      %673 = vmatprep.subr.bf16.mxu0 0
      %674 = vmatpush1.bf16.msra.mxu0 %v660
      %675 = vmatprep.subr.bf16.mxu0 0
      %676 = vmatpush1.bf16.msra.mxu0 %v661
      %677 = vmatprep.subr.bf16.mxu0 0
      %678 = vmatpush1.bf16.msra.mxu0 0
      %679 = vmatprep.subr.bf16.mxu0 0
      %680 = vmatpush1.bf16.msra.mxu0 0
      %681 = vmatprep.subr.bf16.mxu0 0
      %682 = vmatpush1.bf16.msra.mxu0 0
      %683 = vmatprep.subr.bf16.mxu0 0
      %684 = vmatpush1.bf16.msra.mxu0 0
      %685 = vmatprep.subr.bf16.mxu0 0
      %686 = vmatpush1.bf16.msra.mxu0 0
      %687 = vmatprep.subr.bf16.mxu0 0
      %688 = vmatpush1.bf16.msra.mxu0 0
      %689 = vmatprep.subr.bf16.mxu0 0
      %690 = vmatpush1.bf16.msra.mxu0 0
      %691 = vmatprep.subr.bf16.mxu0 0
      %692 = vmatpush1.bf16.msra.mxu0 0
      %693 = vmatprep.subr.bf16.mxu0 0
      %694 = vmatpush1.bf16.msra.mxu0 0
      %695 = vmatprep.subr.bf16.mxu0 0
      %696 = vmatpush1.bf16.msra.mxu0 0
      %697 = vmatprep.subr.bf16.mxu0 0
      %698 = vmatpush1.bf16.msra.mxu0 0
      %699 = vmatprep.subr.bf16.mxu0 0
      %700 = vmatpush1.bf16.msra.mxu0 0
      %701 = vmatprep.mubr.bf16.mxu0 0
      %702 = vmatmul.mubr.bf16.gmra.mrb[0].mxu0 %v667
      %v703 = vpop.f32.mrb[0].mxu0
      %v704 = vadd.f32 0.0, %v703
      %v705 = vpop.f32.mrb[0].mxu0
      %v706 = vpop.f32.mrb[0].mxu0
      %v707 = vadd.f32 0.0, %v706
      %v708 = vpop.f32.mrb[0].mxu0
      %709 = vdwg.mxu0
      %s710 = scalar_lea.vmem %s5, %s613
      %v711 = vld [vmem:[%s710] sm:$0x3]
      %v712 = vlaneseq
      %v713 = vshrl.u32 %v712, 7
      %v714 = vsub.s32 0, %v713
      %v715 = vrot.slane %v711, %v714
      %v716 = vmul.f32 %v704, %v715
      %v717 = vmul.f32 %v707, %v715
      %v718 = vlaneseq
      %v719 = vshrl.u32 %v718, 7
      %v720 = vsub.s32 1, %v719
      %v721 = vrot.slane %v711, %v720
      %v722 = vadd.f32 %v716, %v721
      %v723 = vadd.f32 %v717, %v721
      %v724 = vadd.f32 %v274, %v722
      %v725 = vadd.f32 %v275, %v723
      %726 = vst.msk [vmem:[#allocation2] sm:$0xff] %vm351, %v724
      %727 = vst.msk [vmem:[#allocation2 + $0x8] sm:$0xff] %vm351, %v725
      %p728 = scmp.eq.s32.totalorder %s22, 9
      // Predicated region
      $region49: #{encoder_forward.10} parent=43 // pred_check
        %p729 = pneg %p728
      $region50: #{encoder_forward.10} parent=43 // pred_check_branch
        %731 = sbr.rel (%p729) target = $region52
      $region51: #{encoder_forward.10} parent=43 // pred_region
        %732 = vst.msk [vmem:[%s263] sm:$0xff] %vm351, %v724
        %733 = vst.msk [vmem:[%s263 + $0x8] sm:$0xff] %vm351, %v725
      $region52: #{encoder_forward.10} parent=43 // pred_fallthru
        _
      %p734 = scmp.lt.s32.totalorder %s21, 1
      %s735 = scalar_select %p734, %s21, 1
      %s736 = smul.addr %s735, 2
      %s737 = smul.addr %s736, 8
      %s738 = scalar_lea.vmem %s6, %s737
      // Predicated region
      $region53: #{encoder_forward.10} parent=43 // pred_check
        %p739 = pneg %p178
      $region54: #{encoder_forward.10} parent=43 // pred_check_branch
        %741 = sbr.rel (%p739) target = $region56
      $region55: #{encoder_forward.10} parent=43 // pred_region
        _
      $region56: #{encoder_forward.10} parent=43 // pred_fallthru
        _
    $region44: #{encoder_forward.10} parent=5 // pred_fallthru
      _
    %p742 = scmp.le.s32.totalorder 2, %s12
    // Predicated region
    $region57: #{encoder_forward.10} parent=5 // pred_check
      %p743 = pneg %p742
    $region58: #{encoder_forward.10} parent=5 // pred_check_branch
      %745 = sbr.rel (%p743) target = $region60
    $region59: #{encoder_forward.10} parent=5 // pred_region
      %s746 = ssub.s32 %s12, 2
      // Predicated region
      $region61: #{encoder_forward.10} parent=59 // pred_check
        %p747 = pneg %p184
      $region62: #{encoder_forward.10} parent=59 // pred_check_branch
        %749 = sbr.rel (%p747) target = $region64
      $region63: #{encoder_forward.10} parent=59 // pred_region
        %p750 = scmp.lt.s32.totalorder %s23, 1
        %s751 = scalar_select %p750, %s23, 1
        %s752 = smul.addr %s751, 2
        %s753 = smul.addr %s752, 8
        %s754 = scalar_lea.vmem %s6, %s753
      $region64: #{encoder_forward.10} parent=59 // pred_fallthru
        _
    $region60: #{encoder_forward.10} parent=5 // pred_fallthru
      _
  $region6: #{encoder_forward.10} parent=0 // loop_footer
    %s16 = sadd.s32 1, %s12
  $region7: #{encoder_forward.10} parent=0 // loop_footer_branch
    %11 = sbr.rel target = $region3
  $region8: #{encoder_forward.10} parent=0 // loop_exit
    _

// kernel: encoder_forward.11
$region0: #{encoder_forward.11}
  #allocation0 [shape = 'u32[]', space=smem, size = 0x4, offset = 0x4, fixed_abs, tag = 'smem constant byte address 0x4 - core index']
  #allocation1 [shape = 'u32[144,128]{1,0:T(1,128)}', space=vmem, size = 0x12000, scoped, tag = 'internal scratch']
  #allocation2 [shape = 'f32[16,2304]{1,0:T(8,128)}', space=vmem, size = 0x24000, scoped, tag = 'scratch operand']
  #allocation3 [shape = 'f32[16,768]{1,0:T(8,128)}', space=vmem, size = 0xc000, scoped, tag = 'scratch operand']
  %s0 = inlined_call_operand.vmem [shape: f32[2,16,32], index: 0, kind: input, shape index: {}]
  %s1 = inlined_call_operand.vmem [shape: bf16[32,2304], index: 1, kind: input, shape index: {}]
  %s2 = inlined_call_operand.vmem [shape: bf16[768,32], index: 2, kind: input, shape index: {}]
  %s3 = inlined_call_operand.vmem [shape: f32[1,32], index: 3, kind: input, shape index: {}]
  %s4 = inlined_call_operand.vmem [shape: f32[1,32], index: 4, kind: input, shape index: {}]
  %s5 = inlined_call_operand.vmem [shape: f32[1,32], index: 5, kind: input, shape index: {}]
  %s6 = inlined_call_operand.hbm [shape: f32[2,16,32], index: 6, kind: output, shape index: {}]
  %s7 = sld [smem:[#allocation0]]
  $region57: #{encoder_forward.11} parent=0
    _
  %s9 = ssub.s32 1, %s7
  %s10 = scalar_select 0, %s9, %s7
  $region1: #{encoder_forward.11} parent=0
    #allocation4 [shape = 'u8[16384]{0}', space=vmem, size = 0x4000, scoped, tag = 'output window, operand 0']
    #allocation5 [shape = 's32[2]{0}', space=sflag, size = 0x8, scoped, tag = 'scoped memory for encoder_forward.11']
    %11 = vsyncpa [#allocation5], 0
    %s12 = scalar_lea.sflag [#allocation5], 1
    %13 = vsyncpa %s12, 0
    loop: start=0, step=1, limit=4
    $region2: #{encoder_forward.11} parent=1 // loop_pre_header
      _
    $region3: #{encoder_forward.11} parent=1 // loop_header
      %s15 = sphi 0, %s19
      %p16 = scmp.ge.s32.totalorder %s15, 4
      %s25 = sphi 0, %s27
      %s28 = sphi 0, %s25
      %s29 = sphi 0, %s28
      %s45 = sphi 0, %s29
      %s49 = sphi 0, %s49
      %s51 = sphi 0, %s49
      %s52 = sphi 0, %s51
      %s66 = sphi 0, %s52
      %s70 = sphi 0, %s70
      %s72 = sphi 0, %s70
      %s73 = sphi 0, %s72
      %s87 = sphi 0, %s73
      %s91 = sphi 0, %s91
      %s93 = sphi 0, %s91
      %s94 = sphi 0, %s93
      %s108 = sphi 0, %s94
      %s112 = sphi 0, %s112
      %s114 = sphi 0, %s112
      %s115 = sphi 0, %s114
      %s129 = sphi 0, %s115
      %s133 = sphi 0, %s133
      %s135 = sphi 0, %s133
      %s136 = sphi 0, %s135
      %s150 = sphi 0, %s136
      %s156 = sphi 0, %s158
      %s159 = sphi 0, %s156
      %s160 = sphi 0, %s159
      %s176 = sphi 0, %s160
    $region4: #{encoder_forward.11} parent=1 // loop_header_branch
      %18 = sbr.rel (%p16) target = $region8
    $region5: #{encoder_forward.11} parent=1 // loop_body
      %s20 = ssub.s32 %s15, 1
      %s21 = ssub.s32 %s15, 2
      %s22 = sadd.s32 %s15, 1
      %s23 = ssub.s32 %s15, %s22
      %p24 = scmp.eq.s32.totalorder %s23, 0
      %s26 = sadd.s32 %s25, 1
      %s27 = scalar_select %p24, %s25, %s26
      %p30 = pneg %p24
      %p31 = scmp.eq.s32.totalorder %s15, 1
      %p32 = por %p30, %p31
      %p33 = scmp.ne.s32.totalorder %s25, %s28
      %p34 = scmp.eq.s32.totalorder %s15, 0
      %p35 = por %p33, %p34
      %p36 = scmp.ne.s32.totalorder %s25, %s28
      %p37 = scmp.eq.s32.totalorder %s20, 1
      %p38 = por %p36, %p37
      %p39 = scmp.ne.s32.totalorder %s28, %s29
      %p40 = scmp.eq.s32.totalorder %s20, 0
      %p41 = por %p39, %p40
      %p42 = scmp.ne.s32.totalorder %s28, %s29
      %p43 = scmp.eq.s32.totalorder %s21, 1
      %p44 = por %p42, %p43
      %p46 = scmp.ne.s32.totalorder %s29, %s45
      %p47 = scmp.eq.s32.totalorder %s21, 0
      %p48 = por %p46, %p47
      %s50 = sadd.s32 %s49, 1
      %p53 = scmp.eq.s32.totalorder %s15, 1
      %p54 = scmp.ne.s32.totalorder %s49, %s51
      %p55 = scmp.eq.s32.totalorder %s15, 0
      %p56 = por %p54, %p55
      %p57 = scmp.ne.s32.totalorder %s49, %s51
      %p58 = scmp.eq.s32.totalorder %s20, 1
      %p59 = por %p57, %p58
      %p60 = scmp.ne.s32.totalorder %s51, %s52
      %p61 = scmp.eq.s32.totalorder %s20, 0
      %p62 = por %p60, %p61
      %p63 = scmp.ne.s32.totalorder %s51, %s52
      %p64 = scmp.eq.s32.totalorder %s21, 1
      %p65 = por %p63, %p64
      %p67 = scmp.ne.s32.totalorder %s52, %s66
      %p68 = scmp.eq.s32.totalorder %s21, 0
      %p69 = por %p67, %p68
      %s71 = sadd.s32 %s70, 1
      %p74 = scmp.eq.s32.totalorder %s15, 1
      %p75 = scmp.ne.s32.totalorder %s70, %s72
      %p76 = scmp.eq.s32.totalorder %s15, 0
      %p77 = por %p75, %p76
      %p78 = scmp.ne.s32.totalorder %s70, %s72
      %p79 = scmp.eq.s32.totalorder %s20, 1
      %p80 = por %p78, %p79
      %p81 = scmp.ne.s32.totalorder %s72, %s73
      %p82 = scmp.eq.s32.totalorder %s20, 0
      %p83 = por %p81, %p82
      %p84 = scmp.ne.s32.totalorder %s72, %s73
      %p85 = scmp.eq.s32.totalorder %s21, 1
      %p86 = por %p84, %p85
      %p88 = scmp.ne.s32.totalorder %s73, %s87
      %p89 = scmp.eq.s32.totalorder %s21, 0
      %p90 = por %p88, %p89
      %s92 = sadd.s32 %s91, 1
      %p95 = scmp.eq.s32.totalorder %s15, 1
      %p96 = scmp.ne.s32.totalorder %s91, %s93
      %p97 = scmp.eq.s32.totalorder %s15, 0
      %p98 = por %p96, %p97
      %p99 = scmp.ne.s32.totalorder %s91, %s93
      %p100 = scmp.eq.s32.totalorder %s20, 1
      %p101 = por %p99, %p100
      %p102 = scmp.ne.s32.totalorder %s93, %s94
      %p103 = scmp.eq.s32.totalorder %s20, 0
      %p104 = por %p102, %p103
      %p105 = scmp.ne.s32.totalorder %s93, %s94
      %p106 = scmp.eq.s32.totalorder %s21, 1
      %p107 = por %p105, %p106
      %p109 = scmp.ne.s32.totalorder %s94, %s108
      %p110 = scmp.eq.s32.totalorder %s21, 0
      %p111 = por %p109, %p110
      %s113 = sadd.s32 %s112, 1
      %p116 = scmp.eq.s32.totalorder %s15, 1
      %p117 = scmp.ne.s32.totalorder %s112, %s114
      %p118 = scmp.eq.s32.totalorder %s15, 0
      %p119 = por %p117, %p118
      %p120 = scmp.ne.s32.totalorder %s112, %s114
      %p121 = scmp.eq.s32.totalorder %s20, 1
      %p122 = por %p120, %p121
      %p123 = scmp.ne.s32.totalorder %s114, %s115
      %p124 = scmp.eq.s32.totalorder %s20, 0
      %p125 = por %p123, %p124
      %p126 = scmp.ne.s32.totalorder %s114, %s115
      %p127 = scmp.eq.s32.totalorder %s21, 1
      %p128 = por %p126, %p127
      %p130 = scmp.ne.s32.totalorder %s115, %s129
      %p131 = scmp.eq.s32.totalorder %s21, 0
      %p132 = por %p130, %p131
      %s134 = sadd.s32 %s133, 1
      %p137 = scmp.eq.s32.totalorder %s15, 1
      %p138 = scmp.ne.s32.totalorder %s133, %s135
      %p139 = scmp.eq.s32.totalorder %s15, 0
      %p140 = por %p138, %p139
      %p141 = scmp.ne.s32.totalorder %s133, %s135
      %p142 = scmp.eq.s32.totalorder %s20, 1
      %p143 = por %p141, %p142
      %p144 = scmp.ne.s32.totalorder %s135, %s136
      %p145 = scmp.eq.s32.totalorder %s20, 0
      %p146 = por %p144, %p145
      %p147 = scmp.ne.s32.totalorder %s135, %s136
      %p148 = scmp.eq.s32.totalorder %s21, 1
      %p149 = por %p147, %p148
      %p151 = scmp.ne.s32.totalorder %s136, %s150
      %p152 = scmp.eq.s32.totalorder %s21, 0
      %p153 = por %p151, %p152
      %s154 = ssub.s32 %s15, %s22
      %p155 = scmp.eq.s32.totalorder %s154, 0
      %s157 = sadd.s32 %s156, 1
      %s158 = scalar_select %p155, %s156, %s157
      %p161 = pneg %p155
      %p162 = scmp.eq.s32.totalorder %s15, 1
      %p163 = por %p161, %p162
      %p164 = scmp.ne.s32.totalorder %s156, %s159
      %p165 = scmp.eq.s32.totalorder %s15, 0
      %p166 = por %p164, %p165
      %p167 = scmp.ne.s32.totalorder %s156, %s159
      %p168 = scmp.eq.s32.totalorder %s20, 1
      %p169 = por %p167, %p168
      %p170 = scmp.ne.s32.totalorder %s159, %s160
      %p171 = scmp.eq.s32.totalorder %s20, 0
      %p172 = por %p170, %p171
      %p173 = scmp.ne.s32.totalorder %s159, %s160
      %p174 = scmp.eq.s32.totalorder %s21, 1
      %p175 = por %p173, %p174
      %p177 = scmp.ne.s32.totalorder %s160, %s176
      %p178 = scmp.eq.s32.totalorder %s21, 0
      %p179 = por %p177, %p178
      %p180 = scmp.le.s32.totalorder 1, %s15
      %p181 = scmp.lt.s32.totalorder %s15, 3
      %p182 = pnand %p180, %p181
      %p183 = pneg %p182
      // Predicated region
      $region9: #{encoder_forward.11} parent=5 // pred_check
        _
      $region10: #{encoder_forward.11} parent=5 // pred_check_branch
        %185 = sbr.rel (%p182) target = $region12
      $region11: #{encoder_forward.11} parent=5 // pred_region
        %s186 = ssub.s32 %s15, 1
        // Predicated region
        $region13: #{encoder_forward.11} parent=11 // pred_check
          %p187 = pneg %p62
        $region14: #{encoder_forward.11} parent=11 // pred_check_branch
          %189 = sbr.rel (%p187) target = $region16
        $region15: #{encoder_forward.11} parent=11 // pred_region
          _
        $region16: #{encoder_forward.11} parent=11 // pred_fallthru
          _
        // Predicated region
        $region17: #{encoder_forward.11} parent=11 // pred_check
          %p190 = pneg %p83
        $region18: #{encoder_forward.11} parent=11 // pred_check_branch
          %192 = sbr.rel (%p190) target = $region20
        $region19: #{encoder_forward.11} parent=11 // pred_region
          _
        $region20: #{encoder_forward.11} parent=11 // pred_fallthru
          _
        // Predicated region
        $region21: #{encoder_forward.11} parent=11 // pred_check
          %p193 = pneg %p104
        $region22: #{encoder_forward.11} parent=11 // pred_check_branch
          %195 = sbr.rel (%p193) target = $region24
        $region23: #{encoder_forward.11} parent=11 // pred_region
          _
        $region24: #{encoder_forward.11} parent=11 // pred_fallthru
          _
        // Predicated region
        $region25: #{encoder_forward.11} parent=11 // pred_check
          %p196 = pneg %p125
        $region26: #{encoder_forward.11} parent=11 // pred_check_branch
          %198 = sbr.rel (%p196) target = $region28
        $region27: #{encoder_forward.11} parent=11 // pred_region
          _
        $region28: #{encoder_forward.11} parent=11 // pred_fallthru
          _
        // Predicated region
        $region29: #{encoder_forward.11} parent=11 // pred_check
          %p199 = pneg %p146
        $region30: #{encoder_forward.11} parent=11 // pred_check_branch
          %201 = sbr.rel (%p199) target = $region32
        $region31: #{encoder_forward.11} parent=11 // pred_region
          _
        $region32: #{encoder_forward.11} parent=11 // pred_fallthru
          _
      $region12: #{encoder_forward.11} parent=5 // pred_fallthru
        _
      %p202 = scmp.lt.s32.totalorder %s15, 2
      // Predicated region
      $region33: #{encoder_forward.11} parent=5 // pred_check
        %p203 = pneg %p202
      $region34: #{encoder_forward.11} parent=5 // pred_check_branch
        %205 = sbr.rel (%p203) target = $region36
      $region35: #{encoder_forward.11} parent=5 // pred_region
        // Predicated region
        $region37: #{encoder_forward.11} parent=35 // pred_check
          %p206 = pneg %p35
        $region38: #{encoder_forward.11} parent=35 // pred_check_branch
          %208 = sbr.rel (%p206) target = $region40
        $region39: #{encoder_forward.11} parent=35 // pred_region
          %p209 = scmp.lt.s32.totalorder %s15, 1
          %s210 = scalar_select %p209, %s15, 1
          %s211 = smul.addr %s210, 2
          %s212 = smul.addr %s211, 8
          %s213 = scalar_lea.vmem %s0, %s212
        $region40: #{encoder_forward.11} parent=35 // pred_fallthru
          _
      $region36: #{encoder_forward.11} parent=5 // pred_fallthru
        _
      %p214 = scmp.le.s32.totalorder 1, %s15
      %p215 = scmp.lt.s32.totalorder %s15, 3
      %p216 = pnand %p214, %p215
      %p217 = pneg %p216
      // Predicated region
      $region41: #{encoder_forward.11} parent=5 // pred_check
        _
      $region42: #{encoder_forward.11} parent=5 // pred_check_branch
        %219 = sbr.rel (%p216) target = $region44
      $region43: #{encoder_forward.11} parent=5 // pred_region
        %s220 = ssub.s32 %s15, 1
        %p221 = scmp.lt.s32.totalorder %s20, 1
        %s222 = scalar_select %p221, %s20, 1
        %s223 = smul.addr %s222, 2
        %s224 = smul.addr %s223, 8
        %s225 = scalar_lea.vmem %s0, %s224
        %p226 = pneg %p41
        %p227 = pneg %p38
        %p228 = pneg %p62
        %p229 = pneg %p59
        %p230 = pneg %p83
        %p231 = pneg %p80
        %p232 = pneg %p104
        %p233 = pneg %p101
        %p234 = pneg %p125
        %p235 = pneg %p122
        %p236 = pneg %p146
        %p237 = pneg %p143
        %p238 = pneg %p172
        %p239 = pneg %p169
        %s240 = sand.u32 %s159, 1
        %s241 = scalar_lea.sflag [#allocation5], %s240
        %s242 = sand.u32 %s159, 1
        %s243 = smul.addr %s242, 16
        %s244 = scalar_lea.vmem [#allocation4], %s243
        %p245 = scmp.lt.s32.totalorder %s20, 1
        %s246 = scalar_select %p245, %s20, 1
        %s247 = smul.addr %s246, 2
        %s248 = smul.addr %s247, 8
        %s249 = scalar_lea.vmem %s0, %s248
        %v251 = vld [vmem:[%s249] sm:$0xff]
        %v252 = vld [vmem:[%s249 + $0x8] sm:$0xff]
        %v253 = vpack.c.bf16 %v252, %v251
        %v254 = vld [vmem:[%s1] sm:$0xff]
        %v255 = vld [vmem:[%s1 + $0x8] sm:$0xff]
        %v256 = vld [vmem:[%s1 + $0x10] sm:$0xff]
        %v257 = vld [vmem:[%s1 + $0x18] sm:$0xff]
        %v258 = vld [vmem:[%s1 + $0x20] sm:$0xff]
        %v259 = vld [vmem:[%s1 + $0x28] sm:$0xff]
        %v260 = vld [vmem:[%s1 + $0x30] sm:$0xff]
        %v261 = vld [vmem:[%s1 + $0x38] sm:$0xff]
        %v262 = vld [vmem:[%s1 + $0x40] sm:$0xff]
        %v263 = vld [vmem:[%s1 + $0x48] sm:$0xff]
        %v264 = vld [vmem:[%s1 + $0x50] sm:$0xff]
        %v265 = vld [vmem:[%s1 + $0x58] sm:$0xff]
        %v266 = vld [vmem:[%s1 + $0x60] sm:$0xff]
        %v267 = vld [vmem:[%s1 + $0x68] sm:$0xff]
        %v268 = vld [vmem:[%s1 + $0x70] sm:$0xff]
        %v269 = vld [vmem:[%s1 + $0x78] sm:$0xff]
        %v270 = vld [vmem:[%s1 + $0x80] sm:$0xff]
        %v271 = vld [vmem:[%s1 + $0x88] sm:$0xff]
        %v272 = vld [vmem:[%s1 + $0x90] sm:$0xff]
        %v273 = vld [vmem:[%s1 + $0x98] sm:$0xff]
        %v274 = vld [vmem:[%s1 + $0xa0] sm:$0xff]
        %v275 = vld [vmem:[%s1 + $0xa8] sm:$0xff]
        %v276 = vld [vmem:[%s1 + $0xb0] sm:$0xff]
        %v277 = vld [vmem:[%s1 + $0xb8] sm:$0xff]
        %v278 = vld [vmem:[%s1 + $0xc0] sm:$0xff]
        %v279 = vld [vmem:[%s1 + $0xc8] sm:$0xff]
        %v280 = vld [vmem:[%s1 + $0xd0] sm:$0xff]
        %v281 = vld [vmem:[%s1 + $0xd8] sm:$0xff]
        %v282 = vld [vmem:[%s1 + $0xe0] sm:$0xff]
        %v283 = vld [vmem:[%s1 + $0xe8] sm:$0xff]
        %v284 = vld [vmem:[%s1 + $0xf0] sm:$0xff]
        %v285 = vld [vmem:[%s1 + $0xf8] sm:$0xff]
        %v286 = vld [vmem:[%s1 + $0x100] sm:$0xff]
        %v287 = vld [vmem:[%s1 + $0x108] sm:$0xff]
        %v288 = vld [vmem:[%s1 + $0x110] sm:$0xff]
        %v289 = vld [vmem:[%s1 + $0x118] sm:$0xff]
        %v326 = vunpack.c.l.b16 %v254
        %v327 = vunpack.c.h.b16 %v254
        %v328 = vunpack.c.l.b16 %v255
        %v329 = vunpack.c.h.b16 %v255
        %v330 = vunpack.c.l.b16 %v256
        %v331 = vunpack.c.h.b16 %v256
        %v332 = vunpack.c.l.b16 %v257
        %v333 = vunpack.c.h.b16 %v257
        %v334 = vunpack.c.l.b16 %v258
        %v335 = vunpack.c.h.b16 %v258
        %v336 = vunpack.c.l.b16 %v259
        %v337 = vunpack.c.h.b16 %v259
        %v338 = vunpack.c.l.b16 %v260
        %v339 = vunpack.c.h.b16 %v260
        %v340 = vunpack.c.l.b16 %v261
        %v341 = vunpack.c.h.b16 %v261
        %v342 = vunpack.c.l.b16 %v262
        %v343 = vunpack.c.h.b16 %v262
        %v344 = vunpack.c.l.b16 %v263
        %v345 = vunpack.c.h.b16 %v263
        %v346 = vunpack.c.l.b16 %v264
        %v347 = vunpack.c.h.b16 %v264
        %v348 = vunpack.c.l.b16 %v265
        %v349 = vunpack.c.h.b16 %v265
        %v350 = vunpack.c.l.b16 %v266
        %v351 = vunpack.c.h.b16 %v266
        %v352 = vunpack.c.l.b16 %v267
        %v353 = vunpack.c.h.b16 %v267
        %v354 = vunpack.c.l.b16 %v268
        %v355 = vunpack.c.h.b16 %v268
        %v356 = vunpack.c.l.b16 %v269
        %v357 = vunpack.c.h.b16 %v269
        %v358 = vunpack.c.l.b16 %v270
        %v359 = vunpack.c.h.b16 %v270
        %v360 = vunpack.c.l.b16 %v271
        %v361 = vunpack.c.h.b16 %v271
        %v362 = vunpack.c.l.b16 %v272
        %v363 = vunpack.c.h.b16 %v272
        %v364 = vunpack.c.l.b16 %v273
        %v365 = vunpack.c.h.b16 %v273
        %v366 = vunpack.c.l.b16 %v274
        %v367 = vunpack.c.h.b16 %v274
        %v368 = vunpack.c.l.b16 %v275
        %v369 = vunpack.c.h.b16 %v275
        %v370 = vunpack.c.l.b16 %v276
        %v371 = vunpack.c.h.b16 %v276
        %v372 = vunpack.c.l.b16 %v277
        %v373 = vunpack.c.h.b16 %v277
        %v374 = vunpack.c.l.b16 %v278
        %v375 = vunpack.c.h.b16 %v278
        %v376 = vunpack.c.l.b16 %v279
        %v377 = vunpack.c.h.b16 %v279
        %v378 = vunpack.c.l.b16 %v280
        %v379 = vunpack.c.h.b16 %v280
        %v380 = vunpack.c.l.b16 %v281
        %v381 = vunpack.c.h.b16 %v281
        %v382 = vunpack.c.l.b16 %v282
        %v383 = vunpack.c.h.b16 %v282
        %v384 = vunpack.c.l.b16 %v283
        %v385 = vunpack.c.h.b16 %v283
        %v386 = vunpack.c.l.b16 %v284
        %v387 = vunpack.c.h.b16 %v284
        %v388 = vunpack.c.l.b16 %v285
        %v389 = vunpack.c.h.b16 %v285
        %v390 = vunpack.c.l.b16 %v286
        %v391 = vunpack.c.h.b16 %v286
        %v392 = vunpack.c.l.b16 %v287
        %v393 = vunpack.c.h.b16 %v287
        %v394 = vunpack.c.l.b16 %v288
        %v395 = vunpack.c.h.b16 %v288
        %v396 = vunpack.c.l.b16 %v289
        %v397 = vunpack.c.h.b16 %v289
        %v398 = vpack.c.b16 %v344, %v326
        %v399 = vpack.c.b16 %v345, %v327
        %v400 = vpack.c.b16 %v346, %v328
        %v401 = vpack.c.b16 %v347, %v329
        %v402 = vpack.c.b16 %v348, %v330
        %v403 = vpack.c.b16 %v349, %v331
        %v404 = vpack.c.b16 %v350, %v332
        %v405 = vpack.c.b16 %v351, %v333
        %v406 = vpack.c.b16 %v352, %v334
        %v407 = vpack.c.b16 %v353, %v335
        %v408 = vpack.c.b16 %v354, %v336
        %v409 = vpack.c.b16 %v355, %v337
        %v410 = vpack.c.b16 %v356, %v338
        %v411 = vpack.c.b16 %v357, %v339
        %v412 = vpack.c.b16 %v358, %v340
        %v413 = vpack.c.b16 %v359, %v341
        %v414 = vpack.c.b16 %v360, %v342
        %v415 = vpack.c.b16 %v361, %v343
        %v416 = vpack.c.b16 %v380, %v362
        %v417 = vpack.c.b16 %v381, %v363
        %v418 = vpack.c.b16 %v382, %v364
        %v419 = vpack.c.b16 %v383, %v365
        %v420 = vpack.c.b16 %v384, %v366
        %v421 = vpack.c.b16 %v385, %v367
        %v422 = vpack.c.b16 %v386, %v368
        %v423 = vpack.c.b16 %v387, %v369
        %v424 = vpack.c.b16 %v388, %v370
        %v425 = vpack.c.b16 %v389, %v371
        %v426 = vpack.c.b16 %v390, %v372
        %v427 = vpack.c.b16 %v391, %v373
        %v428 = vpack.c.b16 %v392, %v374
        %v429 = vpack.c.b16 %v393, %v375
        %v430 = vpack.c.b16 %v394, %v376
        %v431 = vpack.c.b16 %v395, %v377
        %v432 = vpack.c.b16 %v396, %v378
        %v433 = vpack.c.b16 %v397, %v379
        %vm470 = vcmask 261120
        %v472 = vsel %vm470, %v253, 0
        %474 = vmatprep.subr.bf16.mxu0 %v399
        %475 = vmatpush1.bf16.msra.mxu0 %v398
        %476 = vmatprep.subr.bf16.mxu0 %v417
        %477 = vmatpush1.bf16.msra.mxu0 %v416
        %478 = vmatprep.subr.bf16.mxu0 0
        %479 = vmatpush1.bf16.msra.mxu0 0
        %480 = vmatprep.subr.bf16.mxu0 0
        %481 = vmatpush1.bf16.msra.mxu0 0
        %482 = vmatprep.subr.bf16.mxu0 0
        %483 = vmatpush1.bf16.msra.mxu0 0
        %484 = vmatprep.subr.bf16.mxu0 0
        %485 = vmatpush1.bf16.msra.mxu0 0
        %486 = vmatprep.subr.bf16.mxu0 0
        %487 = vmatpush1.bf16.msra.mxu0 0
        %488 = vmatprep.subr.bf16.mxu0 0
        %489 = vmatpush1.bf16.msra.mxu0 0
        %490 = vmatprep.subr.bf16.mxu0 0
        %491 = vmatpush1.bf16.msra.mxu0 0
        %492 = vmatprep.subr.bf16.mxu0 0
        %493 = vmatpush1.bf16.msra.mxu0 0
        %494 = vmatprep.subr.bf16.mxu0 0
        %495 = vmatpush1.bf16.msra.mxu0 0
        %496 = vmatprep.subr.bf16.mxu0 0
        %497 = vmatpush1.bf16.msra.mxu0 0
        %498 = vmatprep.subr.bf16.mxu0 0
        %499 = vmatpush1.bf16.msra.mxu0 0
        %500 = vmatprep.subr.bf16.mxu0 0
        %501 = vmatpush1.bf16.msra.mxu0 0
        %502 = vmatprep.subr.bf16.mxu0 0
        %503 = vmatpush1.bf16.msra.mxu0 0
        %504 = vmatprep.subr.bf16.mxu0 0
        %505 = vmatpush1.bf16.msra.mxu0 0
        %506 = vmatprep.mubr.bf16.mxu0 0
        %507 = vmatmul.mubr.bf16.gmra.mrb[0].mxu0 %v472
        %v508 = vpop.f32.mrb[0].mxu0
        %v509 = vadd.f32 0.0, %v508
        %v510 = vpop.f32.mrb[0].mxu0
        %v511 = vadd.f32 0.0, %v510
        %v512 = vpop.f32.mrb[0].mxu0
        %v513 = vadd.f32 0.0, %v512
        %v514 = vpop.f32.mrb[0].mxu0
        %v515 = vadd.f32 0.0, %v514
        %516 = vdwg.mxu0
        %517 = vmatprep.subr.bf16.mxu0 %v401
        %518 = vmatpush1.bf16.msra.mxu0 %v400
        %519 = vmatprep.subr.bf16.mxu0 %v419
        %520 = vmatpush1.bf16.msra.mxu0 %v418
        %521 = vmatprep.subr.bf16.mxu0 0
        %522 = vmatpush1.bf16.msra.mxu0 0
        %523 = vmatprep.subr.bf16.mxu0 0
        %524 = vmatpush1.bf16.msra.mxu0 0
        %525 = vmatprep.subr.bf16.mxu0 0
        %526 = vmatpush1.bf16.msra.mxu0 0
        %527 = vmatprep.subr.bf16.mxu0 0
        %528 = vmatpush1.bf16.msra.mxu0 0
        %529 = vmatprep.subr.bf16.mxu0 0
        %530 = vmatpush1.bf16.msra.mxu0 0
        %531 = vmatprep.subr.bf16.mxu0 0
        %532 = vmatpush1.bf16.msra.mxu0 0
        %533 = vmatprep.subr.bf16.mxu0 0
        %534 = vmatpush1.bf16.msra.mxu0 0
        %535 = vmatprep.subr.bf16.mxu0 0
        %536 = vmatpush1.bf16.msra.mxu0 0
        %537 = vmatprep.subr.bf16.mxu0 0
        %538 = vmatpush1.bf16.msra.mxu0 0
        %539 = vmatprep.subr.bf16.mxu0 0
        %540 = vmatpush1.bf16.msra.mxu0 0
        %541 = vmatprep.subr.bf16.mxu0 0
        %542 = vmatpush1.bf16.msra.mxu0 0
        %543 = vmatprep.subr.bf16.mxu0 0
        %544 = vmatpush1.bf16.msra.mxu0 0
        %545 = vmatprep.subr.bf16.mxu0 0
        %546 = vmatpush1.bf16.msra.mxu0 0
        %547 = vmatprep.subr.bf16.mxu0 0
        %548 = vmatpush1.bf16.msra.mxu0 0
        %549 = vmatprep.mubr.bf16.mxu0 0
        %550 = vmatmul.mubr.bf16.gmra.mrb[0].mxu0 %v472
        %v551 = vpop.f32.mrb[0].mxu0
        %v552 = vadd.f32 0.0, %v551
        %v553 = vpop.f32.mrb[0].mxu0
        %v554 = vadd.f32 0.0, %v553
        %v555 = vpop.f32.mrb[0].mxu0
        %v556 = vadd.f32 0.0, %v555
        %v557 = vpop.f32.mrb[0].mxu0
        %v558 = vadd.f32 0.0, %v557
        %559 = vdwg.mxu0
        %560 = vmatprep.subr.bf16.mxu0 %v403
        %561 = vmatpush1.bf16.msra.mxu0 %v402
        %562 = vmatprep.subr.bf16.mxu0 %v421
        %563 = vmatpush1.bf16.msra.mxu0 %v420
        %564 = vmatprep.subr.bf16.mxu0 0
        %565 = vmatpush1.bf16.msra.mxu0 0
        %566 = vmatprep.subr.bf16.mxu0 0
        %567 = vmatpush1.bf16.msra.mxu0 0
        %568 = vmatprep.subr.bf16.mxu0 0
        %569 = vmatpush1.bf16.msra.mxu0 0
        %570 = vmatprep.subr.bf16.mxu0 0
        %571 = vmatpush1.bf16.msra.mxu0 0
        %572 = vmatprep.subr.bf16.mxu0 0
        %573 = vmatpush1.bf16.msra.mxu0 0
        %574 = vmatprep.subr.bf16.mxu0 0
        %575 = vmatpush1.bf16.msra.mxu0 0
        %576 = vmatprep.subr.bf16.mxu0 0
        %577 = vmatpush1.bf16.msra.mxu0 0
        %578 = vmatprep.subr.bf16.mxu0 0
        %579 = vmatpush1.bf16.msra.mxu0 0
        %580 = vmatprep.subr.bf16.mxu0 0
        %581 = vmatpush1.bf16.msra.mxu0 0
        %582 = vmatprep.subr.bf16.mxu0 0
        %583 = vmatpush1.bf16.msra.mxu0 0
        %584 = vmatprep.subr.bf16.mxu0 0
        %585 = vmatpush1.bf16.msra.mxu0 0
        %586 = vmatprep.subr.bf16.mxu0 0
        %587 = vmatpush1.bf16.msra.mxu0 0
        %588 = vmatprep.subr.bf16.mxu0 0
        %589 = vmatpush1.bf16.msra.mxu0 0
        %590 = vmatprep.subr.bf16.mxu0 0
        %591 = vmatpush1.bf16.msra.mxu0 0
        %592 = vmatprep.mubr.bf16.mxu0 0
        %593 = vmatmul.mubr.bf16.gmra.mrb[0].mxu0 %v472
        %v594 = vpop.f32.mrb[0].mxu0
        %v595 = vadd.f32 0.0, %v594
        %v596 = vpop.f32.mrb[0].mxu0
        %v597 = vadd.f32 0.0, %v596
        %v598 = vpop.f32.mrb[0].mxu0
        %v599 = vadd.f32 0.0, %v598
        %v600 = vpop.f32.mrb[0].mxu0
        %v601 = vadd.f32 0.0, %v600
        %602 = vdwg.mxu0
        %603 = vmatprep.subr.bf16.mxu0 %v405
        %604 = vmatpush1.bf16.msra.mxu0 %v404
        %605 = vmatprep.subr.bf16.mxu0 %v423
        %606 = vmatpush1.bf16.msra.mxu0 %v422
        %607 = vmatprep.subr.bf16.mxu0 0
        %608 = vmatpush1.bf16.msra.mxu0 0
        %609 = vmatprep.subr.bf16.mxu0 0
        %610 = vmatpush1.bf16.msra.mxu0 0
        %611 = vmatprep.subr.bf16.mxu0 0
        %612 = vmatpush1.bf16.msra.mxu0 0
        %613 = vmatprep.subr.bf16.mxu0 0
        %614 = vmatpush1.bf16.msra.mxu0 0
        %615 = vmatprep.subr.bf16.mxu0 0
        %616 = vmatpush1.bf16.msra.mxu0 0
        %617 = vmatprep.subr.bf16.mxu0 0
        %618 = vmatpush1.bf16.msra.mxu0 0
        %619 = vmatprep.subr.bf16.mxu0 0
        %620 = vmatpush1.bf16.msra.mxu0 0
        %621 = vmatprep.subr.bf16.mxu0 0
        %622 = vmatpush1.bf16.msra.mxu0 0
        %623 = vmatprep.subr.bf16.mxu0 0
        %624 = vmatpush1.bf16.msra.mxu0 0
        %625 = vmatprep.subr.bf16.mxu0 0
        %626 = vmatpush1.bf16.msra.mxu0 0
        %627 = vmatprep.subr.bf16.mxu0 0
        %628 = vmatpush1.bf16.msra.mxu0 0
        %629 = vmatprep.subr.bf16.mxu0 0
        %630 = vmatpush1.bf16.msra.mxu0 0
        %631 = vmatprep.subr.bf16.mxu0 0
        %632 = vmatpush1.bf16.msra.mxu0 0
        %633 = vmatprep.subr.bf16.mxu0 0
        %634 = vmatpush1.bf16.msra.mxu0 0
        %635 = vmatprep.mubr.bf16.mxu0 0
        %636 = vmatmul.mubr.bf16.gmra.mrb[0].mxu0 %v472
        %v637 = vpop.f32.mrb[0].mxu0
        %v638 = vadd.f32 0.0, %v637
        %v639 = vpop.f32.mrb[0].mxu0
        %v640 = vadd.f32 0.0, %v639
        %v641 = vpop.f32.mrb[0].mxu0
        %v642 = vadd.f32 0.0, %v641
        %v643 = vpop.f32.mrb[0].mxu0
        %v644 = vadd.f32 0.0, %v643
        %645 = vdwg.mxu0
        %646 = vmatprep.subr.bf16.mxu0 %v407
        %647 = vmatpush1.bf16.msra.mxu0 %v406
        %648 = vmatprep.subr.bf16.mxu0 %v425
        %649 = vmatpush1.bf16.msra.mxu0 %v424
        %650 = vmatprep.subr.bf16.mxu0 0
        %651 = vmatpush1.bf16.msra.mxu0 0
        %652 = vmatprep.subr.bf16.mxu0 0
        %653 = vmatpush1.bf16.msra.mxu0 0
        %654 = vmatprep.subr.bf16.mxu0 0
        %655 = vmatpush1.bf16.msra.mxu0 0
        %656 = vmatprep.subr.bf16.mxu0 0
        %657 = vmatpush1.bf16.msra.mxu0 0
        %658 = vmatprep.subr.bf16.mxu0 0
        %659 = vmatpush1.bf16.msra.mxu0 0
        %660 = vmatprep.subr.bf16.mxu0 0
        %661 = vmatpush1.bf16.msra.mxu0 0
        %662 = vmatprep.subr.bf16.mxu0 0
        %663 = vmatpush1.bf16.msra.mxu0 0
        %664 = vmatprep.subr.bf16.mxu0 0
        %665 = vmatpush1.bf16.msra.mxu0 0
        %666 = vmatprep.subr.bf16.mxu0 0
        %667 = vmatpush1.bf16.msra.mxu0 0
        %668 = vmatprep.subr.bf16.mxu0 0
        %669 = vmatpush1.bf16.msra.mxu0 0
        %670 = vmatprep.subr.bf16.mxu0 0
        %671 = vmatpush1.bf16.msra.mxu0 0
        %672 = vmatprep.subr.bf16.mxu0 0
        %673 = vmatpush1.bf16.msra.mxu0 0
        %674 = vmatprep.subr.bf16.mxu0 0
        %675 = vmatpush1.bf16.msra.mxu0 0
        %676 = vmatprep.subr.bf16.mxu0 0
        %677 = vmatpush1.bf16.msra.mxu0 0
        %678 = vmatprep.mubr.bf16.mxu0 0
        %679 = vmatmul.mubr.bf16.gmra.mrb[0].mxu0 %v472
        %v680 = vpop.f32.mrb[0].mxu0
        %v681 = vadd.f32 0.0, %v680
        %v682 = vpop.f32.mrb[0].mxu0
        %v683 = vadd.f32 0.0, %v682
        %v684 = vpop.f32.mrb[0].mxu0
        %v685 = vadd.f32 0.0, %v684
        %v686 = vpop.f32.mrb[0].mxu0
        %v687 = vadd.f32 0.0, %v686
        %688 = vdwg.mxu0
        %689 = vmatprep.subr.bf16.mxu0 %v409
        %690 = vmatpush1.bf16.msra.mxu0 %v408
        %691 = vmatprep.subr.bf16.mxu0 %v427
        %692 = vmatpush1.bf16.msra.mxu0 %v426
        %693 = vmatprep.subr.bf16.mxu0 0
        %694 = vmatpush1.bf16.msra.mxu0 0
        %695 = vmatprep.subr.bf16.mxu0 0
        %696 = vmatpush1.bf16.msra.mxu0 0
        %697 = vmatprep.subr.bf16.mxu0 0
        %698 = vmatpush1.bf16.msra.mxu0 0
        %699 = vmatprep.subr.bf16.mxu0 0
        %700 = vmatpush1.bf16.msra.mxu0 0
        %701 = vmatprep.subr.bf16.mxu0 0
        %702 = vmatpush1.bf16.msra.mxu0 0
        %703 = vmatprep.subr.bf16.mxu0 0
        %704 = vmatpush1.bf16.msra.mxu0 0
        %705 = vmatprep.subr.bf16.mxu0 0
        %706 = vmatpush1.bf16.msra.mxu0 0
        %707 = vmatprep.subr.bf16.mxu0 0
        %708 = vmatpush1.bf16.msra.mxu0 0
        %709 = vmatprep.subr.bf16.mxu0 0
        %710 = vmatpush1.bf16.msra.mxu0 0
        %711 = vmatprep.subr.bf16.mxu0 0
        %712 = vmatpush1.bf16.msra.mxu0 0
        %713 = vmatprep.subr.bf16.mxu0 0
        %714 = vmatpush1.bf16.msra.mxu0 0
        %715 = vmatprep.subr.bf16.mxu0 0
        %716 = vmatpush1.bf16.msra.mxu0 0
        %717 = vmatprep.subr.bf16.mxu0 0
        %718 = vmatpush1.bf16.msra.mxu0 0
        %719 = vmatprep.subr.bf16.mxu0 0
        %720 = vmatpush1.bf16.msra.mxu0 0
        %721 = vmatprep.mubr.bf16.mxu0 0
        %722 = vmatmul.mubr.bf16.gmra.mrb[0].mxu0 %v472
        %v723 = vpop.f32.mrb[0].mxu0
        %v724 = vadd.f32 0.0, %v723
        %v725 = vpop.f32.mrb[0].mxu0
        %v726 = vadd.f32 0.0, %v725
        %v727 = vpop.f32.mrb[0].mxu0
        %v728 = vadd.f32 0.0, %v727
        %v729 = vpop.f32.mrb[0].mxu0
        %v730 = vadd.f32 0.0, %v729
        %731 = vdwg.mxu0
        %732 = vmatprep.subr.bf16.mxu0 %v411
        %733 = vmatpush1.bf16.msra.mxu0 %v410
        %734 = vmatprep.subr.bf16.mxu0 %v429
        %735 = vmatpush1.bf16.msra.mxu0 %v428
        %736 = vmatprep.subr.bf16.mxu0 0
        %737 = vmatpush1.bf16.msra.mxu0 0
        %738 = vmatprep.subr.bf16.mxu0 0
        %739 = vmatpush1.bf16.msra.mxu0 0
        %740 = vmatprep.subr.bf16.mxu0 0
        %741 = vmatpush1.bf16.msra.mxu0 0
        %742 = vmatprep.subr.bf16.mxu0 0
        %743 = vmatpush1.bf16.msra.mxu0 0
        %744 = vmatprep.subr.bf16.mxu0 0
        %745 = vmatpush1.bf16.msra.mxu0 0
        %746 = vmatprep.subr.bf16.mxu0 0
        %747 = vmatpush1.bf16.msra.mxu0 0
        %748 = vmatprep.subr.bf16.mxu0 0
        %749 = vmatpush1.bf16.msra.mxu0 0
        %750 = vmatprep.subr.bf16.mxu0 0
        %751 = vmatpush1.bf16.msra.mxu0 0
        %752 = vmatprep.subr.bf16.mxu0 0
        %753 = vmatpush1.bf16.msra.mxu0 0
        %754 = vmatprep.subr.bf16.mxu0 0
        %755 = vmatpush1.bf16.msra.mxu0 0
        %756 = vmatprep.subr.bf16.mxu0 0
        %757 = vmatpush1.bf16.msra.mxu0 0
        %758 = vmatprep.subr.bf16.mxu0 0
        %759 = vmatpush1.bf16.msra.mxu0 0
        %760 = vmatprep.subr.bf16.mxu0 0
        %761 = vmatpush1.bf16.msra.mxu0 0
        %762 = vmatprep.subr.bf16.mxu0 0
        %763 = vmatpush1.bf16.msra.mxu0 0
        %764 = vmatprep.mubr.bf16.mxu0 0
        %765 = vmatmul.mubr.bf16.gmra.mrb[0].mxu0 %v472
        %v766 = vpop.f32.mrb[0].mxu0
        %v767 = vadd.f32 0.0, %v766
        %v768 = vpop.f32.mrb[0].mxu0
        %v769 = vadd.f32 0.0, %v768
        %v770 = vpop.f32.mrb[0].mxu0
        %v771 = vadd.f32 0.0, %v770
        %v772 = vpop.f32.mrb[0].mxu0
        %v773 = vadd.f32 0.0, %v772
        %774 = vdwg.mxu0
        %775 = vmatprep.subr.bf16.mxu0 %v413
        %776 = vmatpush1.bf16.msra.mxu0 %v412
        %777 = vmatprep.subr.bf16.mxu0 %v431
        %778 = vmatpush1.bf16.msra.mxu0 %v430
        %779 = vmatprep.subr.bf16.mxu0 0
        %780 = vmatpush1.bf16.msra.mxu0 0
        %781 = vmatprep.subr.bf16.mxu0 0
        %782 = vmatpush1.bf16.msra.mxu0 0
        %783 = vmatprep.subr.bf16.mxu0 0
        %784 = vmatpush1.bf16.msra.mxu0 0
        %785 = vmatprep.subr.bf16.mxu0 0
        %786 = vmatpush1.bf16.msra.mxu0 0
        %787 = vmatprep.subr.bf16.mxu0 0
        %788 = vmatpush1.bf16.msra.mxu0 0
        %789 = vmatprep.subr.bf16.mxu0 0
        %790 = vmatpush1.bf16.msra.mxu0 0
        %791 = vmatprep.subr.bf16.mxu0 0
        %792 = vmatpush1.bf16.msra.mxu0 0
        %793 = vmatprep.subr.bf16.mxu0 0
        %794 = vmatpush1.bf16.msra.mxu0 0
        %795 = vmatprep.subr.bf16.mxu0 0
        %796 = vmatpush1.bf16.msra.mxu0 0
        %797 = vmatprep.subr.bf16.mxu0 0
        %798 = vmatpush1.bf16.msra.mxu0 0
        %799 = vmatprep.subr.bf16.mxu0 0
        %800 = vmatpush1.bf16.msra.mxu0 0
        %801 = vmatprep.subr.bf16.mxu0 0
        %802 = vmatpush1.bf16.msra.mxu0 0
        %803 = vmatprep.subr.bf16.mxu0 0
        %804 = vmatpush1.bf16.msra.mxu0 0
        %805 = vmatprep.subr.bf16.mxu0 0
        %806 = vmatpush1.bf16.msra.mxu0 0
        %807 = vmatprep.mubr.bf16.mxu0 0
        %808 = vmatmul.mubr.bf16.gmra.mrb[0].mxu0 %v472
        %v809 = vpop.f32.mrb[0].mxu0
        %v810 = vadd.f32 0.0, %v809
        %v811 = vpop.f32.mrb[0].mxu0
        %v812 = vadd.f32 0.0, %v811
        %v813 = vpop.f32.mrb[0].mxu0
        %v814 = vadd.f32 0.0, %v813
        %v815 = vpop.f32.mrb[0].mxu0
        %v816 = vadd.f32 0.0, %v815
        %817 = vdwg.mxu0
        %818 = vmatprep.subr.bf16.mxu0 %v415
        %819 = vmatpush1.bf16.msra.mxu0 %v414
        %820 = vmatprep.subr.bf16.mxu0 %v433
        %821 = vmatpush1.bf16.msra.mxu0 %v432
        %822 = vmatprep.subr.bf16.mxu0 0
        %823 = vmatpush1.bf16.msra.mxu0 0
        %824 = vmatprep.subr.bf16.mxu0 0
        %825 = vmatpush1.bf16.msra.mxu0 0
        %826 = vmatprep.subr.bf16.mxu0 0
        %827 = vmatpush1.bf16.msra.mxu0 0
        %828 = vmatprep.subr.bf16.mxu0 0
        %829 = vmatpush1.bf16.msra.mxu0 0
        %830 = vmatprep.subr.bf16.mxu0 0
        %831 = vmatpush1.bf16.msra.mxu0 0
        %832 = vmatprep.subr.bf16.mxu0 0
        %833 = vmatpush1.bf16.msra.mxu0 0
        %834 = vmatprep.subr.bf16.mxu0 0
        %835 = vmatpush1.bf16.msra.mxu0 0
        %836 = vmatprep.subr.bf16.mxu0 0
        %837 = vmatpush1.bf16.msra.mxu0 0
        %838 = vmatprep.subr.bf16.mxu0 0
        %839 = vmatpush1.bf16.msra.mxu0 0
        %840 = vmatprep.subr.bf16.mxu0 0
        %841 = vmatpush1.bf16.msra.mxu0 0
        %842 = vmatprep.subr.bf16.mxu0 0
        %843 = vmatpush1.bf16.msra.mxu0 0
        %844 = vmatprep.subr.bf16.mxu0 0
        %845 = vmatpush1.bf16.msra.mxu0 0
        %846 = vmatprep.subr.bf16.mxu0 0
        %847 = vmatpush1.bf16.msra.mxu0 0
        %848 = vmatprep.subr.bf16.mxu0 0
        %849 = vmatpush1.bf16.msra.mxu0 0
        %850 = vmatprep.mubr.bf16.mxu0 0
        %851 = vmatmul.mubr.bf16.gmra.mrb[0].mxu0 %v472
        %v852 = vpop.f32.mrb[0].mxu0
        %v853 = vadd.f32 0.0, %v852
        %v854 = vpop.f32.mrb[0].mxu0
        %v855 = vadd.f32 0.0, %v854
        %v856 = vpop.f32.mrb[0].mxu0
        %v857 = vadd.f32 0.0, %v856
        %v858 = vpop.f32.mrb[0].mxu0
        %v859 = vadd.f32 0.0, %v858
        %860 = vdwg.mxu0
        %861 = vst [vmem:[#allocation2] sm:$0xff] %v509
        %862 = vst [vmem:[#allocation2 + $0x8] sm:$0xff] %v511
        %863 = vst [vmem:[#allocation2 + $0x10] sm:$0xff] %v552
        %864 = vst [vmem:[#allocation2 + $0x18] sm:$0xff] %v554
        %865 = vst [vmem:[#allocation2 + $0x20] sm:$0xff] %v595
        %866 = vst [vmem:[#allocation2 + $0x28] sm:$0xff] %v597
        %867 = vst [vmem:[#allocation2 + $0x30] sm:$0xff] %v638
        %868 = vst [vmem:[#allocation2 + $0x38] sm:$0xff] %v640
        %869 = vst [vmem:[#allocation2 + $0x40] sm:$0xff] %v681
        %870 = vst [vmem:[#allocation2 + $0x48] sm:$0xff] %v683
        %871 = vst [vmem:[#allocation2 + $0x50] sm:$0xff] %v724
        %872 = vst [vmem:[#allocation2 + $0x58] sm:$0xff] %v726
        %873 = vst [vmem:[#allocation2 + $0x60] sm:$0xff] %v767
        %874 = vst [vmem:[#allocation2 + $0x68] sm:$0xff] %v769
        %875 = vst [vmem:[#allocation2 + $0x70] sm:$0xff] %v810
        %876 = vst [vmem:[#allocation2 + $0x78] sm:$0xff] %v812
        %877 = vst [vmem:[#allocation2 + $0x80] sm:$0xff] %v853
        %878 = vst [vmem:[#allocation2 + $0x88] sm:$0xff] %v855
        %879 = vst [vmem:[#allocation2 + $0x90] sm:$0xff] %v513
        %880 = vst [vmem:[#allocation2 + $0x98] sm:$0xff] %v515
        %881 = vst [vmem:[#allocation2 + $0xa0] sm:$0xff] %v556
        %882 = vst [vmem:[#allocation2 + $0xa8] sm:$0xff] %v558
        %883 = vst [vmem:[#allocation2 + $0xb0] sm:$0xff] %v599
        %884 = vst [vmem:[#allocation2 + $0xb8] sm:$0xff] %v601
        %885 = vst [vmem:[#allocation2 + $0xc0] sm:$0xff] %v642
        %886 = vst [vmem:[#allocation2 + $0xc8] sm:$0xff] %v644
        %887 = vst [vmem:[#allocation2 + $0xd0] sm:$0xff] %v685
        %888 = vst [vmem:[#allocation2 + $0xd8] sm:$0xff] %v687
        %889 = vst [vmem:[#allocation2 + $0xe0] sm:$0xff] %v728
        %890 = vst [vmem:[#allocation2 + $0xe8] sm:$0xff] %v730
        %891 = vst [vmem:[#allocation2 + $0xf0] sm:$0xff] %v771
        %892 = vst [vmem:[#allocation2 + $0xf8] sm:$0xff] %v773
        %893 = vst [vmem:[#allocation2 + $0x100] sm:$0xff] %v814
        %894 = vst [vmem:[#allocation2 + $0x108] sm:$0xff] %v816
        %895 = vst [vmem:[#allocation2 + $0x110] sm:$0xff] %v857
        %896 = vst [vmem:[#allocation2 + $0x118] sm:$0xff] %v859
        %v897 = vld [vmem:[#allocation2 + $0x30] sm:$0xff]
        %v898 = vld [vmem:[#allocation2 + $0x38] sm:$0xff]
        %v899 = vld [vmem:[#allocation2 + $0x40] sm:$0xff]
        %v900 = vld [vmem:[#allocation2 + $0x48] sm:$0xff]
        %v901 = vld [vmem:[#allocation2 + $0x50] sm:$0xff]
        %v902 = vld [vmem:[#allocation2 + $0x58] sm:$0xff]
        %v903 = vld [vmem:[#allocation2 + $0xc0] sm:$0xff]
        %v904 = vld [vmem:[#allocation2 + $0xc8] sm:$0xff]
        %v905 = vld [vmem:[#allocation2 + $0xd0] sm:$0xff]
        %v906 = vld [vmem:[#allocation2 + $0xd8] sm:$0xff]
        %v907 = vld [vmem:[#allocation2 + $0xe0] sm:$0xff]
        %v908 = vld [vmem:[#allocation2 + $0xe8] sm:$0xff]
        %v909 = vmax.f32 %v897, %v903
        %v910 = vrot.slane %v909, 4
        %v911 = vmax.f32 %v909, %v910
        %v912 = vrot.slane %v911, 2
        %v913 = vmax.f32 %v911, %v912
        %v914 = vrot.slane %v913, 1
        %v915 = vmax.f32 %v913, %v914
        %v916 = vmax.f32 %v898, %v904
        %v917 = vrot.slane %v916, 4
        %v918 = vmax.f32 %v916, %v917
        %v919 = vrot.slane %v918, 2
        %v920 = vmax.f32 %v918, %v919
        %v921 = vrot.slane %v920, 1
        %v922 = vmax.f32 %v920, %v921
        %v923 = vmax.f32 %v899, %v905
        %v924 = vrot.slane %v923, 4
        %v925 = vmax.f32 %v923, %v924
        %v926 = vrot.slane %v925, 2
        %v927 = vmax.f32 %v925, %v926
        %v928 = vrot.slane %v927, 1
        %v929 = vmax.f32 %v927, %v928
        %v930 = vmax.f32 %v900, %v906
        %v931 = vrot.slane %v930, 4
        %v932 = vmax.f32 %v930, %v931
        %v933 = vrot.slane %v932, 2
        %v934 = vmax.f32 %v932, %v933
        %v935 = vrot.slane %v934, 1
        %v936 = vmax.f32 %v934, %v935
        %v937 = vmax.f32 %v901, %v907
        %v938 = vrot.slane %v937, 4
        %v939 = vmax.f32 %v937, %v938
        %v940 = vrot.slane %v939, 2
        %v941 = vmax.f32 %v939, %v940
        %v942 = vrot.slane %v941, 1
        %v943 = vmax.f32 %v941, %v942
        %v944 = vmax.f32 %v902, %v908
        %v945 = vrot.slane %v944, 4
        %v946 = vmax.f32 %v944, %v945
        %v947 = vrot.slane %v946, 2
        %v948 = vmax.f32 %v946, %v947
        %v949 = vrot.slane %v948, 1
        %v950 = vmax.f32 %v948, %v949
        %v951 = vsub.f32 %v897, %v915
        %v952 = vsub.f32 %v898, %v922
        %v953 = vsub.f32 %v899, %v929
        %v954 = vsub.f32 %v900, %v936
        %v955 = vsub.f32 %v901, %v943
        %v956 = vsub.f32 %v902, %v950
        %v957 = vsub.f32 %v903, %v915
        %v958 = vsub.f32 %v904, %v922
        %v959 = vsub.f32 %v905, %v929
        %v960 = vsub.f32 %v906, %v936
        %v961 = vsub.f32 %v907, %v943
        %v962 = vsub.f32 %v908, %v950
        %v963 = vmul.f32 %v951, 1.442695
        %v964 = vpow.pop %v963
        %v965 = vmul.f32 %v952, 1.442695
        %v966 = vpow.pop %v965
        %v967 = vmul.f32 %v953, 1.442695
        %v968 = vpow.pop %v967
        %v969 = vmul.f32 %v954, 1.442695
        %v970 = vpow.pop %v969
        %v971 = vmul.f32 %v955, 1.442695
        %v972 = vpow.pop %v971
        %v973 = vmul.f32 %v956, 1.442695
        %v974 = vpow.pop %v973
        %v975 = vmul.f32 %v957, 1.442695
        %v976 = vpow.pop %v975
        %v977 = vmul.f32 %v958, 1.442695
        %v978 = vpow.pop %v977
        %v979 = vmul.f32 %v959, 1.442695
        %v980 = vpow.pop %v979
        %v981 = vmul.f32 %v960, 1.442695
        %v982 = vpow.pop %v981
        %v983 = vmul.f32 %v961, 1.442695
        %v984 = vpow.pop %v983
        %v985 = vmul.f32 %v962, 1.442695
        %v986 = vpow.pop %v985
        %v987 = vadd.f32 %v964, %v976
        %v988 = vrot.slane %v987, 4
        %v989 = vadd.f32 %v987, %v988
        %v990 = vrot.slane %v989, 2
        %v991 = vadd.f32 %v989, %v990
        %v992 = vrot.slane %v991, 1
        %v993 = vadd.f32 %v991, %v992
        %v994 = vadd.f32 %v966, %v978
        %v995 = vrot.slane %v994, 4
        %v996 = vadd.f32 %v994, %v995
        %v997 = vrot.slane %v996, 2
        %v998 = vadd.f32 %v996, %v997
        %v999 = vrot.slane %v998, 1
        %v1000 = vadd.f32 %v998, %v999
        %v1001 = vadd.f32 %v968, %v980
        %v1002 = vrot.slane %v1001, 4
        %v1003 = vadd.f32 %v1001, %v1002
        %v1004 = vrot.slane %v1003, 2
        %v1005 = vadd.f32 %v1003, %v1004
        %v1006 = vrot.slane %v1005, 1
        %v1007 = vadd.f32 %v1005, %v1006
        %v1008 = vadd.f32 %v970, %v982
        %v1009 = vrot.slane %v1008, 4
        %v1010 = vadd.f32 %v1008, %v1009
        %v1011 = vrot.slane %v1010, 2
        %v1012 = vadd.f32 %v1010, %v1011
        %v1013 = vrot.slane %v1012, 1
        %v1014 = vadd.f32 %v1012, %v1013
        %v1015 = vadd.f32 %v972, %v984
        %v1016 = vrot.slane %v1015, 4
        %v1017 = vadd.f32 %v1015, %v1016
        %v1018 = vrot.slane %v1017, 2
        %v1019 = vadd.f32 %v1017, %v1018
        %v1020 = vrot.slane %v1019, 1
        %v1021 = vadd.f32 %v1019, %v1020
        %v1022 = vadd.f32 %v974, %v986
        %v1023 = vrot.slane %v1022, 4
        %v1024 = vadd.f32 %v1022, %v1023
        %v1025 = vrot.slane %v1024, 2
        %v1026 = vadd.f32 %v1024, %v1025
        %v1027 = vrot.slane %v1026, 1
        %v1028 = vadd.f32 %v1026, %v1027
        %v1029 = vrcp.pop %v993
        %v1030 = vmul.f32 %v964, %v1029
        %v1031 = vrcp.pop %v1000
        %v1032 = vmul.f32 %v966, %v1031
        %v1033 = vrcp.pop %v1007
        %v1034 = vmul.f32 %v968, %v1033
        %v1035 = vrcp.pop %v1014
        %v1036 = vmul.f32 %v970, %v1035
        %v1037 = vrcp.pop %v1021
        %v1038 = vmul.f32 %v972, %v1037
        %v1039 = vrcp.pop %v1028
        %v1040 = vmul.f32 %v974, %v1039
        %v1041 = vmul.f32 %v976, %v1029
        %v1042 = vmul.f32 %v978, %v1031
        %v1043 = vmul.f32 %v980, %v1033
        %v1044 = vmul.f32 %v982, %v1035
        %v1045 = vmul.f32 %v984, %v1037
        %v1046 = vmul.f32 %v986, %v1039
        %1047 = vst [vmem:[#allocation2 + $0x30] sm:$0xff] %v1030
        %1048 = vst [vmem:[#allocation2 + $0x38] sm:$0xff] %v1032
        %1049 = vst [vmem:[#allocation2 + $0x40] sm:$0xff] %v1034
        %1050 = vst [vmem:[#allocation2 + $0x48] sm:$0xff] %v1036
        %1051 = vst [vmem:[#allocation2 + $0x50] sm:$0xff] %v1038
        %1052 = vst [vmem:[#allocation2 + $0x58] sm:$0xff] %v1040
        %1053 = vst [vmem:[#allocation2 + $0xc0] sm:$0xff] %v1041
        %1054 = vst [vmem:[#allocation2 + $0xc8] sm:$0xff] %v1042
        %1055 = vst [vmem:[#allocation2 + $0xd0] sm:$0xff] %v1043
        %1056 = vst [vmem:[#allocation2 + $0xd8] sm:$0xff] %v1044
        %1057 = vst [vmem:[#allocation2 + $0xe0] sm:$0xff] %v1045
        %1058 = vst [vmem:[#allocation2 + $0xe8] sm:$0xff] %v1046
        %v1059 = vld [vmem:[#allocation2] sm:$0xff]
        %v1060 = vld [vmem:[#allocation2 + $0x8] sm:$0xff]
        %v1061 = vld [vmem:[#allocation2 + $0x10] sm:$0xff]
        %v1062 = vld [vmem:[#allocation2 + $0x18] sm:$0xff]
        %v1063 = vld [vmem:[#allocation2 + $0x20] sm:$0xff]
        %v1064 = vld [vmem:[#allocation2 + $0x28] sm:$0xff]
        %v1065 = vld [vmem:[#allocation2 + $0x90] sm:$0xff]
        %v1066 = vld [vmem:[#allocation2 + $0x98] sm:$0xff]
        %v1067 = vld [vmem:[#allocation2 + $0xa0] sm:$0xff]
        %v1068 = vld [vmem:[#allocation2 + $0xa8] sm:$0xff]
        %v1069 = vld [vmem:[#allocation2 + $0xb0] sm:$0xff]
        %v1070 = vld [vmem:[#allocation2 + $0xb8] sm:$0xff]
        %v1071 = vmax.f32 %v1059, %v1061
        %v1072 = vmax.f32 %v1060, %v1062
        %v1073 = vmax.f32 %v1071, %v1063
        %v1074 = vmax.f32 %v1072, %v1064
        %v1075 = vmax.f32 %v1073, %v1074
        %1076 = vmax.xlane.f32.xlu0 %v1075
        %v1077 = vpop.xlane.xlu0 %1076
        %v1078 = vmax.f32 %v1065, %v1067
        %v1079 = vmax.f32 %v1066, %v1068
        %v1080 = vmax.f32 %v1078, %v1069
        %v1081 = vmax.f32 %v1079, %v1070
        %v1082 = vmax.f32 %v1080, %v1081
        %1083 = vmax.xlane.f32.xlu0 %v1082
        %v1084 = vpop.xlane.xlu0 %1083
        %v1085 = vsub.f32 %v1059, %v1077
        %v1086 = vsub.f32 %v1060, %v1077
        %v1087 = vsub.f32 %v1061, %v1077
        %v1088 = vsub.f32 %v1062, %v1077
        %v1089 = vsub.f32 %v1063, %v1077
        %v1090 = vsub.f32 %v1064, %v1077
        %v1091 = vsub.f32 %v1065, %v1084
        %v1092 = vsub.f32 %v1066, %v1084
        %v1093 = vsub.f32 %v1067, %v1084
        %v1094 = vsub.f32 %v1068, %v1084
        %v1095 = vsub.f32 %v1069, %v1084
        %v1096 = vsub.f32 %v1070, %v1084
        %v1097 = vmul.f32 %v1085, 1.442695
        %v1098 = vpow.pop %v1097
        %v1099 = vmul.f32 %v1086, 1.442695
        %v1100 = vpow.pop %v1099
        %v1101 = vmul.f32 %v1087, 1.442695
        %v1102 = vpow.pop %v1101
        %v1103 = vmul.f32 %v1088, 1.442695
        %v1104 = vpow.pop %v1103
        %v1105 = vmul.f32 %v1089, 1.442695
        %v1106 = vpow.pop %v1105
        %v1107 = vmul.f32 %v1090, 1.442695
        %v1108 = vpow.pop %v1107
        %v1109 = vmul.f32 %v1091, 1.442695
        %v1110 = vpow.pop %v1109
        %v1111 = vmul.f32 %v1092, 1.442695
        %v1112 = vpow.pop %v1111
        %v1113 = vmul.f32 %v1093, 1.442695
        %v1114 = vpow.pop %v1113
        %v1115 = vmul.f32 %v1094, 1.442695
        %v1116 = vpow.pop %v1115
        %v1117 = vmul.f32 %v1095, 1.442695
        %v1118 = vpow.pop %v1117
        %v1119 = vmul.f32 %v1096, 1.442695
        %v1120 = vpow.pop %v1119
        %1121 = vst [vmem:[#allocation2] sm:$0xff] %v1098
        %1122 = vst [vmem:[#allocation2 + $0x8] sm:$0xff] %v1100
        %1123 = vst [vmem:[#allocation2 + $0x10] sm:$0xff] %v1102
        %1124 = vst [vmem:[#allocation2 + $0x18] sm:$0xff] %v1104
        %1125 = vst [vmem:[#allocation2 + $0x20] sm:$0xff] %v1106
        %1126 = vst [vmem:[#allocation2 + $0x28] sm:$0xff] %v1108
        %1127 = vst [vmem:[#allocation2 + $0x90] sm:$0xff] %v1110
        %1128 = vst [vmem:[#allocation2 + $0x98] sm:$0xff] %v1112
        %1129 = vst [vmem:[#allocation2 + $0xa0] sm:$0xff] %v1114
        %1130 = vst [vmem:[#allocation2 + $0xa8] sm:$0xff] %v1116
        %1131 = vst [vmem:[#allocation2 + $0xb0] sm:$0xff] %v1118
        %1132 = vst [vmem:[#allocation2 + $0xb8] sm:$0xff] %v1120
        %v1133 = vld [vmem:[#allocation2] sm:$0xff]
        %v1134 = vld [vmem:[#allocation2 + $0x90] sm:$0xff]
        %v1135 = vld [vmem:[#allocation2 + $0x30] sm:$0xff]
        %v1136 = vld [vmem:[#allocation2 + $0xc0] sm:$0xff]
        %v1137 = vld [vmem:[#allocation2 + $0x60] sm:$0xff]
        %v1138 = vld [vmem:[#allocation2 + $0xf0] sm:$0xff]
        %vm1139 = vcmask 523264
        %v1140 = vsel %vm1139, %v1133, 0.0
        %1141 = vadd.xlane.f32.xlu0 %v1140
        %v1142 = vpop.xlane.xlu0 %1141
        %v1143 = vsel %vm1139, %v1134, 0.0
        %1144 = vadd.xlane.f32.xlu0 %v1143
        %v1145 = vpop.xlane.xlu0 %1144
        %v1146 = vrcp.pop %v1142
        %v1147 = vmul.f32 0.125, %v1146
        %v1148 = vrcp.pop %v1145
        %v1149 = vmul.f32 0.125, %v1148
        %v1150 = vmul.f32 %v1133, %v1147
        %v1151 = vmul.f32 %v1134, %v1149
        %v1152 = vpack.c.bf16 %v1151, %v1150
        %v1153 = vpack.c.bf16 %v1136, %v1135
        %v1155 = vsel %vm1139, %v1152, 0
        %v1158 = vsel %vm1139, %v1153, 0
        %1160 = vmatprep.subr.bf16.mxu0 0
        %1161 = vmatpush1.bf16.xpose.msra.mxu0 %v1158
        %1162 = vmatprep.subr.bf16.mxu0 0
        %1163 = vmatpush1.bf16.xpose.msra.mxu0 0
        %1164 = vmatprep.subr.bf16.mxu0 0
        %1165 = vmatpush1.bf16.xpose.msra.mxu0 0
        %1166 = vmatprep.subr.bf16.mxu0 0
        %1167 = vmatpush1.bf16.xpose.msra.mxu0 0
        %1168 = vmatprep.subr.bf16.mxu0 0
        %1169 = vmatpush1.bf16.xpose.msra.mxu0 0
        %1170 = vmatprep.subr.bf16.mxu0 0
        %1171 = vmatpush1.bf16.xpose.msra.mxu0 0
        %1172 = vmatprep.subr.bf16.mxu0 0
        %1173 = vmatpush1.bf16.xpose.msra.mxu0 0
        %1174 = vmatprep.subr.bf16.mxu0 0
        %1175 = vmatpush1.bf16.xpose.msra.mxu0 0
        %1176 = vmatprep.subr.bf16.mxu0 0
        %1177 = vmatpush1.bf16.xpose.msra.mxu0 0
        %1178 = vmatprep.subr.bf16.mxu0 0
        %1179 = vmatpush1.bf16.xpose.msra.mxu0 0
        %1180 = vmatprep.subr.bf16.mxu0 0
        %1181 = vmatpush1.bf16.xpose.msra.mxu0 0
        %1182 = vmatprep.subr.bf16.mxu0 0
        %1183 = vmatpush1.bf16.xpose.msra.mxu0 0
        %1184 = vmatprep.subr.bf16.mxu0 0
        %1185 = vmatpush1.bf16.xpose.msra.mxu0 0
        %1186 = vmatprep.subr.bf16.mxu0 0
        %1187 = vmatpush1.bf16.xpose.msra.mxu0 0
        %1188 = vmatprep.subr.bf16.mxu0 0
        %1189 = vmatpush1.bf16.xpose.msra.mxu0 0
        %1190 = vmatprep.subr.bf16.mxu0 0
        %1191 = vmatpush1.bf16.xpose.msra.mxu0 0
        %1192 = vmatprep.mubr.bf16.mxu0 0
        %1193 = vmatmul.mubr.bf16.gmra.mrb[0].mxu0 %v1155
        %v1194 = vpop.f32.mrb[0].mxu0
        %v1195 = vadd.f32 0.0, %v1194
        %v1196 = vpop.f32.mrb[0].mxu0
        %v1197 = vpop.f32.mrb[0].mxu0
        %v1198 = vadd.f32 0.0, %v1197
        %v1199 = vpop.f32.mrb[0].mxu0
        %1200 = vdwg.mxu0
        %v1201 = vpack.c.bf16 %v1198, %v1195
        %v1202 = vpack.c.bf16 %v1138, %v1137
        %vm1203 = vcmask 130048
        %v1205 = vsel %vm1203, %v1201, 0
        %1207 = vmatprep.subr.bf16.mxu0 0
        %1208 = vmatpush1.bf16.msra.mxu0 %v1202
        %1209 = vmatprep.subr.bf16.mxu0 0
        %1210 = vmatpush1.bf16.msra.mxu0 0
        %1211 = vmatprep.subr.bf16.mxu0 0
        %1212 = vmatpush1.bf16.msra.mxu0 0
        %1213 = vmatprep.subr.bf16.mxu0 0
        %1214 = vmatpush1.bf16.msra.mxu0 0
        %1215 = vmatprep.subr.bf16.mxu0 0
        %1216 = vmatpush1.bf16.msra.mxu0 0
        %1217 = vmatprep.subr.bf16.mxu0 0
        %1218 = vmatpush1.bf16.msra.mxu0 0
        %1219 = vmatprep.subr.bf16.mxu0 0
        %1220 = vmatpush1.bf16.msra.mxu0 0
        %1221 = vmatprep.subr.bf16.mxu0 0
        %1222 = vmatpush1.bf16.msra.mxu0 0
        %1223 = vmatprep.subr.bf16.mxu0 0
        %1224 = vmatpush1.bf16.msra.mxu0 0
        %1225 = vmatprep.subr.bf16.mxu0 0
        %1226 = vmatpush1.bf16.msra.mxu0 0
        %1227 = vmatprep.subr.bf16.mxu0 0
        %1228 = vmatpush1.bf16.msra.mxu0 0
        %1229 = vmatprep.subr.bf16.mxu0 0
        %1230 = vmatpush1.bf16.msra.mxu0 0
        %1231 = vmatprep.subr.bf16.mxu0 0
        %1232 = vmatpush1.bf16.msra.mxu0 0
        %1233 = vmatprep.subr.bf16.mxu0 0
        %1234 = vmatpush1.bf16.msra.mxu0 0
        %1235 = vmatprep.subr.bf16.mxu0 0
        %1236 = vmatpush1.bf16.msra.mxu0 0
        %1237 = vmatprep.subr.bf16.mxu0 0
        %1238 = vmatpush1.bf16.msra.mxu0 0
        %1239 = vmatprep.mubr.bf16.mxu0 0
        %1240 = vmatmul.mubr.bf16.gmra.mrb[0].mxu0 %v1205
        %v1241 = vpop.f32.mrb[0].mxu0
        %v1242 = vadd.f32 0.0, %v1241
        %v1243 = vpop.f32.mrb[0].mxu0
        %v1244 = vpop.f32.mrb[0].mxu0
        %v1245 = vadd.f32 0.0, %v1244
        %v1246 = vpop.f32.mrb[0].mxu0
        %1247 = vdwg.mxu0
        %1250 = vrot.lane.b32.xlu0 %v1133, 64
        %v1251 = vpop.permute.xlu0 %1250
        %1252 = vrot.lane.b32.xlu0 %v1134, 64
        %v1253 = vpop.permute.xlu0 %1252
        %v1256 = vsel %vm1139, %v1251, 0.0
        %1257 = vadd.xlane.f32.xlu0 %v1256
        %v1258 = vpop.xlane.xlu0 %1257
        %v1259 = vsel %vm1139, %v1253, 0.0
        %1260 = vadd.xlane.f32.xlu0 %v1259
        %v1261 = vpop.xlane.xlu0 %1260
        %v1262 = vrcp.pop %v1258
        %v1263 = vmul.f32 0.125, %v1262
        %v1264 = vrcp.pop %v1261
        %v1265 = vmul.f32 0.125, %v1264
        %v1266 = vmul.f32 %v1133, %v1263
        %v1267 = vmul.f32 %v1134, %v1265
        %v1268 = vpack.c.bf16 %v1267, %v1266
        %1270 = vrot.lane.b32.xlu0 %v1268, 64
        %v1271 = vpop.permute.xlu0 %1270
        %1273 = vrot.lane.b32.xlu0 %v1153, 64
        %v1274 = vpop.permute.xlu0 %1273
        %v1276 = vsel %vm1139, %v1271, 0
        %v1279 = vsel %vm1139, %v1274, 0
        %1281 = vmatprep.subr.bf16.mxu0 0
        %1282 = vmatpush1.bf16.xpose.msra.mxu0 %v1279
        %1283 = vmatprep.subr.bf16.mxu0 0
        %1284 = vmatpush1.bf16.xpose.msra.mxu0 0
        %1285 = vmatprep.subr.bf16.mxu0 0
        %1286 = vmatpush1.bf16.xpose.msra.mxu0 0
        %1287 = vmatprep.subr.bf16.mxu0 0
        %1288 = vmatpush1.bf16.xpose.msra.mxu0 0
        %1289 = vmatprep.subr.bf16.mxu0 0
        %1290 = vmatpush1.bf16.xpose.msra.mxu0 0
        %1291 = vmatprep.subr.bf16.mxu0 0
        %1292 = vmatpush1.bf16.xpose.msra.mxu0 0
        %1293 = vmatprep.subr.bf16.mxu0 0
        %1294 = vmatpush1.bf16.xpose.msra.mxu0 0
        %1295 = vmatprep.subr.bf16.mxu0 0
        %1296 = vmatpush1.bf16.xpose.msra.mxu0 0
        %1297 = vmatprep.subr.bf16.mxu0 0
        %1298 = vmatpush1.bf16.xpose.msra.mxu0 0
        %1299 = vmatprep.subr.bf16.mxu0 0
        %1300 = vmatpush1.bf16.xpose.msra.mxu0 0
        %1301 = vmatprep.subr.bf16.mxu0 0
        %1302 = vmatpush1.bf16.xpose.msra.mxu0 0
        %1303 = vmatprep.subr.bf16.mxu0 0
        %1304 = vmatpush1.bf16.xpose.msra.mxu0 0
        %1305 = vmatprep.subr.bf16.mxu0 0
        %1306 = vmatpush1.bf16.xpose.msra.mxu0 0
        %1307 = vmatprep.subr.bf16.mxu0 0
        %1308 = vmatpush1.bf16.xpose.msra.mxu0 0
        %1309 = vmatprep.subr.bf16.mxu0 0
        %1310 = vmatpush1.bf16.xpose.msra.mxu0 0
        %1311 = vmatprep.subr.bf16.mxu0 0
        %1312 = vmatpush1.bf16.xpose.msra.mxu0 0
        %1313 = vmatprep.mubr.bf16.mxu0 0
        %1314 = vmatmul.mubr.bf16.gmra.mrb[0].mxu0 %v1276
        %v1315 = vpop.f32.mrb[0].mxu0
        %v1316 = vadd.f32 0.0, %v1315
        %v1317 = vpop.f32.mrb[0].mxu0
        %v1318 = vpop.f32.mrb[0].mxu0
        %v1319 = vadd.f32 0.0, %v1318
        %v1320 = vpop.f32.mrb[0].mxu0
        %1321 = vdwg.mxu0
        %v1322 = vpack.c.bf16 %v1319, %v1316
        %1324 = vrot.lane.b32.xlu0 %v1202, 64
        %v1325 = vpop.permute.xlu0 %1324
        %v1328 = vsel %vm1203, %v1322, 0
        %1330 = vmatprep.subr.bf16.mxu0 0
        %1331 = vmatpush1.bf16.msra.mxu0 %v1325
        %1332 = vmatprep.subr.bf16.mxu0 0
        %1333 = vmatpush1.bf16.msra.mxu0 0
        %1334 = vmatprep.subr.bf16.mxu0 0
        %1335 = vmatpush1.bf16.msra.mxu0 0
        %1336 = vmatprep.subr.bf16.mxu0 0
        %1337 = vmatpush1.bf16.msra.mxu0 0
        %1338 = vmatprep.subr.bf16.mxu0 0
        %1339 = vmatpush1.bf16.msra.mxu0 0
        %1340 = vmatprep.subr.bf16.mxu0 0
        %1341 = vmatpush1.bf16.msra.mxu0 0
        %1342 = vmatprep.subr.bf16.mxu0 0
        %1343 = vmatpush1.bf16.msra.mxu0 0
        %1344 = vmatprep.subr.bf16.mxu0 0
        %1345 = vmatpush1.bf16.msra.mxu0 0
        %1346 = vmatprep.subr.bf16.mxu0 0
        %1347 = vmatpush1.bf16.msra.mxu0 0
        %1348 = vmatprep.subr.bf16.mxu0 0
        %1349 = vmatpush1.bf16.msra.mxu0 0
        %1350 = vmatprep.subr.bf16.mxu0 0
        %1351 = vmatpush1.bf16.msra.mxu0 0
        %1352 = vmatprep.subr.bf16.mxu0 0
        %1353 = vmatpush1.bf16.msra.mxu0 0
        %1354 = vmatprep.subr.bf16.mxu0 0
        %1355 = vmatpush1.bf16.msra.mxu0 0
        %1356 = vmatprep.subr.bf16.mxu0 0
        %1357 = vmatpush1.bf16.msra.mxu0 0
        %1358 = vmatprep.subr.bf16.mxu0 0
        %1359 = vmatpush1.bf16.msra.mxu0 0
        %1360 = vmatprep.subr.bf16.mxu0 0
        %1361 = vmatpush1.bf16.msra.mxu0 0
        %1362 = vmatprep.mubr.bf16.mxu0 0
        %1363 = vmatmul.mubr.bf16.gmra.mrb[0].mxu0 %v1328
        %v1364 = vpop.f32.mrb[0].mxu0
        %v1365 = vadd.f32 0.0, %v1364
        %v1366 = vpop.f32.mrb[0].mxu0
        %v1367 = vpop.f32.mrb[0].mxu0
        %v1368 = vadd.f32 0.0, %v1367
        %v1369 = vpop.f32.mrb[0].mxu0
        %1370 = vdwg.mxu0
        %1373 = vrot.lane.b32.xlu0 %v1365, 64
        %v1374 = vpop.permute.xlu0 %1373
        %1375 = vrot.lane.b32.xlu0 %v1368, 64
        %v1376 = vpop.permute.xlu0 %1375
        %v1379 = vsel %vm1139, %v1242, %v1374
        %v1380 = vsel %vm1139, %v1245, %v1376
        %1381 = vst [vmem:[#allocation3] sm:$0xff] %v1379
        %1382 = vst [vmem:[#allocation3 + $0x30] sm:$0xff] %v1380
        %v1383 = vld [vmem:[#allocation2 + $0x8] sm:$0xff]
        %v1384 = vld [vmem:[#allocation2 + $0x98] sm:$0xff]
        %v1385 = vld [vmem:[#allocation2 + $0x38] sm:$0xff]
        %v1386 = vld [vmem:[#allocation2 + $0xc8] sm:$0xff]
        %v1387 = vld [vmem:[#allocation2 + $0x68] sm:$0xff]
        %v1388 = vld [vmem:[#allocation2 + $0xf8] sm:$0xff]
        %v1389 = vsel %vm1139, %v1383, 0.0
        %1390 = vadd.xlane.f32.xlu0 %v1389
        %v1391 = vpop.xlane.xlu0 %1390
        %v1392 = vsel %vm1139, %v1384, 0.0
        %1393 = vadd.xlane.f32.xlu0 %v1392
        %v1394 = vpop.xlane.xlu0 %1393
        %v1395 = vrcp.pop %v1391
        %v1396 = vmul.f32 0.125, %v1395
        %v1397 = vrcp.pop %v1394
        %v1398 = vmul.f32 0.125, %v1397
        %v1399 = vmul.f32 %v1383, %v1396
        %v1400 = vmul.f32 %v1384, %v1398
        %v1401 = vpack.c.bf16 %v1400, %v1399
        %v1402 = vpack.c.bf16 %v1386, %v1385
        %v1404 = vsel %vm1139, %v1401, 0
        %v1407 = vsel %vm1139, %v1402, 0
        %1409 = vmatprep.subr.bf16.mxu0 0
        %1410 = vmatpush1.bf16.xpose.msra.mxu0 %v1407
        %1411 = vmatprep.subr.bf16.mxu0 0
        %1412 = vmatpush1.bf16.xpose.msra.mxu0 0
        %1413 = vmatprep.subr.bf16.mxu0 0
        %1414 = vmatpush1.bf16.xpose.msra.mxu0 0
        %1415 = vmatprep.subr.bf16.mxu0 0
        %1416 = vmatpush1.bf16.xpose.msra.mxu0 0
        %1417 = vmatprep.subr.bf16.mxu0 0
        %1418 = vmatpush1.bf16.xpose.msra.mxu0 0
        %1419 = vmatprep.subr.bf16.mxu0 0
        %1420 = vmatpush1.bf16.xpose.msra.mxu0 0
        %1421 = vmatprep.subr.bf16.mxu0 0
        %1422 = vmatpush1.bf16.xpose.msra.mxu0 0
        %1423 = vmatprep.subr.bf16.mxu0 0
        %1424 = vmatpush1.bf16.xpose.msra.mxu0 0
        %1425 = vmatprep.subr.bf16.mxu0 0
        %1426 = vmatpush1.bf16.xpose.msra.mxu0 0
        %1427 = vmatprep.subr.bf16.mxu0 0
        %1428 = vmatpush1.bf16.xpose.msra.mxu0 0
        %1429 = vmatprep.subr.bf16.mxu0 0
        %1430 = vmatpush1.bf16.xpose.msra.mxu0 0
        %1431 = vmatprep.subr.bf16.mxu0 0
        %1432 = vmatpush1.bf16.xpose.msra.mxu0 0
        %1433 = vmatprep.subr.bf16.mxu0 0
        %1434 = vmatpush1.bf16.xpose.msra.mxu0 0
        %1435 = vmatprep.subr.bf16.mxu0 0
        %1436 = vmatpush1.bf16.xpose.msra.mxu0 0
        %1437 = vmatprep.subr.bf16.mxu0 0
        %1438 = vmatpush1.bf16.xpose.msra.mxu0 0
        %1439 = vmatprep.subr.bf16.mxu0 0
        %1440 = vmatpush1.bf16.xpose.msra.mxu0 0
        %1441 = vmatprep.mubr.bf16.mxu0 0
        %1442 = vmatmul.mubr.bf16.gmra.mrb[0].mxu0 %v1404
        %v1443 = vpop.f32.mrb[0].mxu0
        %v1444 = vadd.f32 0.0, %v1443
        %v1445 = vpop.f32.mrb[0].mxu0
        %v1446 = vpop.f32.mrb[0].mxu0
        %v1447 = vadd.f32 0.0, %v1446
        %v1448 = vpop.f32.mrb[0].mxu0
        %1449 = vdwg.mxu0
        %v1450 = vpack.c.bf16 %v1447, %v1444
        %v1451 = vpack.c.bf16 %v1388, %v1387
        %v1453 = vsel %vm1203, %v1450, 0
        %1455 = vmatprep.subr.bf16.mxu0 0
        %1456 = vmatpush1.bf16.msra.mxu0 %v1451
        %1457 = vmatprep.subr.bf16.mxu0 0
        %1458 = vmatpush1.bf16.msra.mxu0 0
        %1459 = vmatprep.subr.bf16.mxu0 0
        %1460 = vmatpush1.bf16.msra.mxu0 0
        %1461 = vmatprep.subr.bf16.mxu0 0
        %1462 = vmatpush1.bf16.msra.mxu0 0
        %1463 = vmatprep.subr.bf16.mxu0 0
        %1464 = vmatpush1.bf16.msra.mxu0 0
        %1465 = vmatprep.subr.bf16.mxu0 0
        %1466 = vmatpush1.bf16.msra.mxu0 0
        %1467 = vmatprep.subr.bf16.mxu0 0
        %1468 = vmatpush1.bf16.msra.mxu0 0
        %1469 = vmatprep.subr.bf16.mxu0 0
        %1470 = vmatpush1.bf16.msra.mxu0 0
        %1471 = vmatprep.subr.bf16.mxu0 0
        %1472 = vmatpush1.bf16.msra.mxu0 0
        %1473 = vmatprep.subr.bf16.mxu0 0
        %1474 = vmatpush1.bf16.msra.mxu0 0
        %1475 = vmatprep.subr.bf16.mxu0 0
        %1476 = vmatpush1.bf16.msra.mxu0 0
        %1477 = vmatprep.subr.bf16.mxu0 0
        %1478 = vmatpush1.bf16.msra.mxu0 0
        %1479 = vmatprep.subr.bf16.mxu0 0
        %1480 = vmatpush1.bf16.msra.mxu0 0
        %1481 = vmatprep.subr.bf16.mxu0 0
        %1482 = vmatpush1.bf16.msra.mxu0 0
        %1483 = vmatprep.subr.bf16.mxu0 0
        %1484 = vmatpush1.bf16.msra.mxu0 0
        %1485 = vmatprep.subr.bf16.mxu0 0
        %1486 = vmatpush1.bf16.msra.mxu0 0
        %1487 = vmatprep.mubr.bf16.mxu0 0
        %1488 = vmatmul.mubr.bf16.gmra.mrb[0].mxu0 %v1453
        %v1489 = vpop.f32.mrb[0].mxu0
        %v1490 = vadd.f32 0.0, %v1489
        %v1491 = vpop.f32.mrb[0].mxu0
        %v1492 = vpop.f32.mrb[0].mxu0
        %v1493 = vadd.f32 0.0, %v1492
        %v1494 = vpop.f32.mrb[0].mxu0
        %1495 = vdwg.mxu0
        %1498 = vrot.lane.b32.xlu0 %v1383, 64
        %v1499 = vpop.permute.xlu0 %1498
        %1500 = vrot.lane.b32.xlu0 %v1384, 64
        %v1501 = vpop.permute.xlu0 %1500
        %v1504 = vsel %vm1139, %v1499, 0.0
        %1505 = vadd.xlane.f32.xlu0 %v1504
        %v1506 = vpop.xlane.xlu0 %1505
        %v1507 = vsel %vm1139, %v1501, 0.0
        %1508 = vadd.xlane.f32.xlu0 %v1507
        %v1509 = vpop.xlane.xlu0 %1508
        %v1510 = vrcp.pop %v1506
        %v1511 = vmul.f32 0.125, %v1510
        %v1512 = vrcp.pop %v1509
        %v1513 = vmul.f32 0.125, %v1512
        %v1514 = vmul.f32 %v1383, %v1511
        %v1515 = vmul.f32 %v1384, %v1513
        %v1516 = vpack.c.bf16 %v1515, %v1514
        %1518 = vrot.lane.b32.xlu0 %v1516, 64
        %v1519 = vpop.permute.xlu0 %1518
        %1521 = vrot.lane.b32.xlu0 %v1402, 64
        %v1522 = vpop.permute.xlu0 %1521
        %v1524 = vsel %vm1139, %v1519, 0
        %v1527 = vsel %vm1139, %v1522, 0
        %1529 = vmatprep.subr.bf16.mxu0 0
        %1530 = vmatpush1.bf16.xpose.msra.mxu0 %v1527
        %1531 = vmatprep.subr.bf16.mxu0 0
        %1532 = vmatpush1.bf16.xpose.msra.mxu0 0
        %1533 = vmatprep.subr.bf16.mxu0 0
        %1534 = vmatpush1.bf16.xpose.msra.mxu0 0
        %1535 = vmatprep.subr.bf16.mxu0 0
        %1536 = vmatpush1.bf16.xpose.msra.mxu0 0
        %1537 = vmatprep.subr.bf16.mxu0 0
        %1538 = vmatpush1.bf16.xpose.msra.mxu0 0
        %1539 = vmatprep.subr.bf16.mxu0 0
        %1540 = vmatpush1.bf16.xpose.msra.mxu0 0
        %1541 = vmatprep.subr.bf16.mxu0 0
        %1542 = vmatpush1.bf16.xpose.msra.mxu0 0
        %1543 = vmatprep.subr.bf16.mxu0 0
        %1544 = vmatpush1.bf16.xpose.msra.mxu0 0
        %1545 = vmatprep.subr.bf16.mxu0 0
        %1546 = vmatpush1.bf16.xpose.msra.mxu0 0
        %1547 = vmatprep.subr.bf16.mxu0 0
        %1548 = vmatpush1.bf16.xpose.msra.mxu0 0
        %1549 = vmatprep.subr.bf16.mxu0 0
        %1550 = vmatpush1.bf16.xpose.msra.mxu0 0
        %1551 = vmatprep.subr.bf16.mxu0 0
        %1552 = vmatpush1.bf16.xpose.msra.mxu0 0
        %1553 = vmatprep.subr.bf16.mxu0 0
        %1554 = vmatpush1.bf16.xpose.msra.mxu0 0
        %1555 = vmatprep.subr.bf16.mxu0 0
        %1556 = vmatpush1.bf16.xpose.msra.mxu0 0
        %1557 = vmatprep.subr.bf16.mxu0 0
        %1558 = vmatpush1.bf16.xpose.msra.mxu0 0
        %1559 = vmatprep.subr.bf16.mxu0 0
        %1560 = vmatpush1.bf16.xpose.msra.mxu0 0
        %1561 = vmatprep.mubr.bf16.mxu0 0
        %1562 = vmatmul.mubr.bf16.gmra.mrb[0].mxu0 %v1524
        %v1563 = vpop.f32.mrb[0].mxu0
        %v1564 = vadd.f32 0.0, %v1563
        %v1565 = vpop.f32.mrb[0].mxu0
        %v1566 = vpop.f32.mrb[0].mxu0
        %v1567 = vadd.f32 0.0, %v1566
        %v1568 = vpop.f32.mrb[0].mxu0
        %1569 = vdwg.mxu0
        %v1570 = vpack.c.bf16 %v1567, %v1564
        %1572 = vrot.lane.b32.xlu0 %v1451, 64
        %v1573 = vpop.permute.xlu0 %1572
        %v1576 = vsel %vm1203, %v1570, 0
        %1578 = vmatprep.subr.bf16.mxu0 0
        %1579 = vmatpush1.bf16.msra.mxu0 %v1573
        %1580 = vmatprep.subr.bf16.mxu0 0
        %1581 = vmatpush1.bf16.msra.mxu0 0
        %1582 = vmatprep.subr.bf16.mxu0 0
        %1583 = vmatpush1.bf16.msra.mxu0 0
        %1584 = vmatprep.subr.bf16.mxu0 0
        %1585 = vmatpush1.bf16.msra.mxu0 0
        %1586 = vmatprep.subr.bf16.mxu0 0
        %1587 = vmatpush1.bf16.msra.mxu0 0
        %1588 = vmatprep.subr.bf16.mxu0 0
        %1589 = vmatpush1.bf16.msra.mxu0 0
        %1590 = vmatprep.subr.bf16.mxu0 0
        %1591 = vmatpush1.bf16.msra.mxu0 0
        %1592 = vmatprep.subr.bf16.mxu0 0
        %1593 = vmatpush1.bf16.msra.mxu0 0
        %1594 = vmatprep.subr.bf16.mxu0 0
        %1595 = vmatpush1.bf16.msra.mxu0 0
        %1596 = vmatprep.subr.bf16.mxu0 0
        %1597 = vmatpush1.bf16.msra.mxu0 0
        %1598 = vmatprep.subr.bf16.mxu0 0
        %1599 = vmatpush1.bf16.msra.mxu0 0
        %1600 = vmatprep.subr.bf16.mxu0 0
        %1601 = vmatpush1.bf16.msra.mxu0 0
        %1602 = vmatprep.subr.bf16.mxu0 0
        %1603 = vmatpush1.bf16.msra.mxu0 0
        %1604 = vmatprep.subr.bf16.mxu0 0
        %1605 = vmatpush1.bf16.msra.mxu0 0
        %1606 = vmatprep.subr.bf16.mxu0 0
        %1607 = vmatpush1.bf16.msra.mxu0 0
        %1608 = vmatprep.subr.bf16.mxu0 0
        %1609 = vmatpush1.bf16.msra.mxu0 0
        %1610 = vmatprep.mubr.bf16.mxu0 0
        %1611 = vmatmul.mubr.bf16.gmra.mrb[0].mxu0 %v1576
        %v1612 = vpop.f32.mrb[0].mxu0
        %v1613 = vadd.f32 0.0, %v1612
        %v1614 = vpop.f32.mrb[0].mxu0
        %v1615 = vpop.f32.mrb[0].mxu0
        %v1616 = vadd.f32 0.0, %v1615
        %v1617 = vpop.f32.mrb[0].mxu0
        %1618 = vdwg.mxu0
        %1621 = vrot.lane.b32.xlu0 %v1613, 64
        %v1622 = vpop.permute.xlu0 %1621
        %1623 = vrot.lane.b32.xlu0 %v1616, 64
        %v1624 = vpop.permute.xlu0 %1623
        %v1627 = vsel %vm1139, %v1490, %v1622
        %v1628 = vsel %vm1139, %v1493, %v1624
        %1629 = vst [vmem:[#allocation3 + $0x8] sm:$0xff] %v1627
        %1630 = vst [vmem:[#allocation3 + $0x38] sm:$0xff] %v1628
        %v1631 = vld [vmem:[#allocation2 + $0x10] sm:$0xff]
        %v1632 = vld [vmem:[#allocation2 + $0xa0] sm:$0xff]
        %v1633 = vld [vmem:[#allocation2 + $0x40] sm:$0xff]
        %v1634 = vld [vmem:[#allocation2 + $0xd0] sm:$0xff]
        %v1635 = vld [vmem:[#allocation2 + $0x70] sm:$0xff]
        %v1636 = vld [vmem:[#allocation2 + $0x100] sm:$0xff]
        %v1637 = vsel %vm1139, %v1631, 0.0
        %1638 = vadd.xlane.f32.xlu0 %v1637
        %v1639 = vpop.xlane.xlu0 %1638
        %v1640 = vsel %vm1139, %v1632, 0.0
        %1641 = vadd.xlane.f32.xlu0 %v1640
        %v1642 = vpop.xlane.xlu0 %1641
        %v1643 = vrcp.pop %v1639
        %v1644 = vmul.f32 0.125, %v1643
        %v1645 = vrcp.pop %v1642
        %v1646 = vmul.f32 0.125, %v1645
        %v1647 = vmul.f32 %v1631, %v1644
        %v1648 = vmul.f32 %v1632, %v1646
        %v1649 = vpack.c.bf16 %v1648, %v1647
        %v1650 = vpack.c.bf16 %v1634, %v1633
        %v1652 = vsel %vm1139, %v1649, 0
        %v1655 = vsel %vm1139, %v1650, 0
        %1657 = vmatprep.subr.bf16.mxu0 0
        %1658 = vmatpush1.bf16.xpose.msra.mxu0 %v1655
        %1659 = vmatprep.subr.bf16.mxu0 0
        %1660 = vmatpush1.bf16.xpose.msra.mxu0 0
        %1661 = vmatprep.subr.bf16.mxu0 0
        %1662 = vmatpush1.bf16.xpose.msra.mxu0 0
        %1663 = vmatprep.subr.bf16.mxu0 0
        %1664 = vmatpush1.bf16.xpose.msra.mxu0 0
        %1665 = vmatprep.subr.bf16.mxu0 0
        %1666 = vmatpush1.bf16.xpose.msra.mxu0 0
        %1667 = vmatprep.subr.bf16.mxu0 0
        %1668 = vmatpush1.bf16.xpose.msra.mxu0 0
        %1669 = vmatprep.subr.bf16.mxu0 0
        %1670 = vmatpush1.bf16.xpose.msra.mxu0 0
        %1671 = vmatprep.subr.bf16.mxu0 0
        %1672 = vmatpush1.bf16.xpose.msra.mxu0 0
        %1673 = vmatprep.subr.bf16.mxu0 0
        %1674 = vmatpush1.bf16.xpose.msra.mxu0 0
        %1675 = vmatprep.subr.bf16.mxu0 0
        %1676 = vmatpush1.bf16.xpose.msra.mxu0 0
        %1677 = vmatprep.subr.bf16.mxu0 0
        %1678 = vmatpush1.bf16.xpose.msra.mxu0 0
        %1679 = vmatprep.subr.bf16.mxu0 0
        %1680 = vmatpush1.bf16.xpose.msra.mxu0 0
        %1681 = vmatprep.subr.bf16.mxu0 0
        %1682 = vmatpush1.bf16.xpose.msra.mxu0 0
        %1683 = vmatprep.subr.bf16.mxu0 0
        %1684 = vmatpush1.bf16.xpose.msra.mxu0 0
        %1685 = vmatprep.subr.bf16.mxu0 0
        %1686 = vmatpush1.bf16.xpose.msra.mxu0 0
        %1687 = vmatprep.subr.bf16.mxu0 0
        %1688 = vmatpush1.bf16.xpose.msra.mxu0 0
        %1689 = vmatprep.mubr.bf16.mxu0 0
        %1690 = vmatmul.mubr.bf16.gmra.mrb[0].mxu0 %v1652
        %v1691 = vpop.f32.mrb[0].mxu0
        %v1692 = vadd.f32 0.0, %v1691
        %v1693 = vpop.f32.mrb[0].mxu0
        %v1694 = vpop.f32.mrb[0].mxu0
        %v1695 = vadd.f32 0.0, %v1694
        %v1696 = vpop.f32.mrb[0].mxu0
        %1697 = vdwg.mxu0
        %v1698 = vpack.c.bf16 %v1695, %v1692
        %v1699 = vpack.c.bf16 %v1636, %v1635
        %v1701 = vsel %vm1203, %v1698, 0
        %1703 = vmatprep.subr.bf16.mxu0 0
        %1704 = vmatpush1.bf16.msra.mxu0 %v1699
        %1705 = vmatprep.subr.bf16.mxu0 0
        %1706 = vmatpush1.bf16.msra.mxu0 0
        %1707 = vmatprep.subr.bf16.mxu0 0
        %1708 = vmatpush1.bf16.msra.mxu0 0
        %1709 = vmatprep.subr.bf16.mxu0 0
        %1710 = vmatpush1.bf16.msra.mxu0 0
        %1711 = vmatprep.subr.bf16.mxu0 0
        %1712 = vmatpush1.bf16.msra.mxu0 0
        %1713 = vmatprep.subr.bf16.mxu0 0
        %1714 = vmatpush1.bf16.msra.mxu0 0
        %1715 = vmatprep.subr.bf16.mxu0 0
        %1716 = vmatpush1.bf16.msra.mxu0 0
        %1717 = vmatprep.subr.bf16.mxu0 0
        %1718 = vmatpush1.bf16.msra.mxu0 0
        %1719 = vmatprep.subr.bf16.mxu0 0
        %1720 = vmatpush1.bf16.msra.mxu0 0
        %1721 = vmatprep.subr.bf16.mxu0 0
        %1722 = vmatpush1.bf16.msra.mxu0 0
        %1723 = vmatprep.subr.bf16.mxu0 0
        %1724 = vmatpush1.bf16.msra.mxu0 0
        %1725 = vmatprep.subr.bf16.mxu0 0
        %1726 = vmatpush1.bf16.msra.mxu0 0
        %1727 = vmatprep.subr.bf16.mxu0 0
        %1728 = vmatpush1.bf16.msra.mxu0 0
        %1729 = vmatprep.subr.bf16.mxu0 0
        %1730 = vmatpush1.bf16.msra.mxu0 0
        %1731 = vmatprep.subr.bf16.mxu0 0
        %1732 = vmatpush1.bf16.msra.mxu0 0
        %1733 = vmatprep.subr.bf16.mxu0 0
        %1734 = vmatpush1.bf16.msra.mxu0 0
        %1735 = vmatprep.mubr.bf16.mxu0 0
        %1736 = vmatmul.mubr.bf16.gmra.mrb[0].mxu0 %v1701
        %v1737 = vpop.f32.mrb[0].mxu0
        %v1738 = vadd.f32 0.0, %v1737
        %v1739 = vpop.f32.mrb[0].mxu0
        %v1740 = vpop.f32.mrb[0].mxu0
        %v1741 = vadd.f32 0.0, %v1740
        %v1742 = vpop.f32.mrb[0].mxu0
        %1743 = vdwg.mxu0
        %1746 = vrot.lane.b32.xlu0 %v1631, 64
        %v1747 = vpop.permute.xlu0 %1746
        %1748 = vrot.lane.b32.xlu0 %v1632, 64
        %v1749 = vpop.permute.xlu0 %1748
        %v1752 = vsel %vm1139, %v1747, 0.0
        %1753 = vadd.xlane.f32.xlu0 %v1752
        %v1754 = vpop.xlane.xlu0 %1753
        %v1755 = vsel %vm1139, %v1749, 0.0
        %1756 = vadd.xlane.f32.xlu0 %v1755
        %v1757 = vpop.xlane.xlu0 %1756
        %v1758 = vrcp.pop %v1754
        %v1759 = vmul.f32 0.125, %v1758
        %v1760 = vrcp.pop %v1757
        %v1761 = vmul.f32 0.125, %v1760
        %v1762 = vmul.f32 %v1631, %v1759
        %v1763 = vmul.f32 %v1632, %v1761
        %v1764 = vpack.c.bf16 %v1763, %v1762
        %1766 = vrot.lane.b32.xlu0 %v1764, 64
        %v1767 = vpop.permute.xlu0 %1766
        %1769 = vrot.lane.b32.xlu0 %v1650, 64
        %v1770 = vpop.permute.xlu0 %1769
        %v1772 = vsel %vm1139, %v1767, 0
        %v1775 = vsel %vm1139, %v1770, 0
        %1777 = vmatprep.subr.bf16.mxu0 0
        %1778 = vmatpush1.bf16.xpose.msra.mxu0 %v1775
        %1779 = vmatprep.subr.bf16.mxu0 0
        %1780 = vmatpush1.bf16.xpose.msra.mxu0 0
        %1781 = vmatprep.subr.bf16.mxu0 0
        %1782 = vmatpush1.bf16.xpose.msra.mxu0 0
        %1783 = vmatprep.subr.bf16.mxu0 0
        %1784 = vmatpush1.bf16.xpose.msra.mxu0 0
        %1785 = vmatprep.subr.bf16.mxu0 0
        %1786 = vmatpush1.bf16.xpose.msra.mxu0 0
        %1787 = vmatprep.subr.bf16.mxu0 0
        %1788 = vmatpush1.bf16.xpose.msra.mxu0 0
        %1789 = vmatprep.subr.bf16.mxu0 0
        %1790 = vmatpush1.bf16.xpose.msra.mxu0 0
        %1791 = vmatprep.subr.bf16.mxu0 0
        %1792 = vmatpush1.bf16.xpose.msra.mxu0 0
        %1793 = vmatprep.subr.bf16.mxu0 0
        %1794 = vmatpush1.bf16.xpose.msra.mxu0 0
        %1795 = vmatprep.subr.bf16.mxu0 0
        %1796 = vmatpush1.bf16.xpose.msra.mxu0 0
        %1797 = vmatprep.subr.bf16.mxu0 0
        %1798 = vmatpush1.bf16.xpose.msra.mxu0 0
        %1799 = vmatprep.subr.bf16.mxu0 0
        %1800 = vmatpush1.bf16.xpose.msra.mxu0 0
        %1801 = vmatprep.subr.bf16.mxu0 0
        %1802 = vmatpush1.bf16.xpose.msra.mxu0 0
        %1803 = vmatprep.subr.bf16.mxu0 0
        %1804 = vmatpush1.bf16.xpose.msra.mxu0 0
        %1805 = vmatprep.subr.bf16.mxu0 0
        %1806 = vmatpush1.bf16.xpose.msra.mxu0 0
        %1807 = vmatprep.subr.bf16.mxu0 0
        %1808 = vmatpush1.bf16.xpose.msra.mxu0 0
        %1809 = vmatprep.mubr.bf16.mxu0 0
        %1810 = vmatmul.mubr.bf16.gmra.mrb[0].mxu0 %v1772
        %v1811 = vpop.f32.mrb[0].mxu0
        %v1812 = vadd.f32 0.0, %v1811
        %v1813 = vpop.f32.mrb[0].mxu0
        %v1814 = vpop.f32.mrb[0].mxu0
        %v1815 = vadd.f32 0.0, %v1814
        %v1816 = vpop.f32.mrb[0].mxu0
        %1817 = vdwg.mxu0
        %v1818 = vpack.c.bf16 %v1815, %v1812
        %1820 = vrot.lane.b32.xlu0 %v1699, 64
        %v1821 = vpop.permute.xlu0 %1820
        %v1824 = vsel %vm1203, %v1818, 0
        %1826 = vmatprep.subr.bf16.mxu0 0
        %1827 = vmatpush1.bf16.msra.mxu0 %v1821
        %1828 = vmatprep.subr.bf16.mxu0 0
        %1829 = vmatpush1.bf16.msra.mxu0 0
        %1830 = vmatprep.subr.bf16.mxu0 0
        %1831 = vmatpush1.bf16.msra.mxu0 0
        %1832 = vmatprep.subr.bf16.mxu0 0
        %1833 = vmatpush1.bf16.msra.mxu0 0
        %1834 = vmatprep.subr.bf16.mxu0 0
        %1835 = vmatpush1.bf16.msra.mxu0 0
        %1836 = vmatprep.subr.bf16.mxu0 0
        %1837 = vmatpush1.bf16.msra.mxu0 0
        %1838 = vmatprep.subr.bf16.mxu0 0
        %1839 = vmatpush1.bf16.msra.mxu0 0
        %1840 = vmatprep.subr.bf16.mxu0 0
        %1841 = vmatpush1.bf16.msra.mxu0 0
        %1842 = vmatprep.subr.bf16.mxu0 0
        %1843 = vmatpush1.bf16.msra.mxu0 0
        %1844 = vmatprep.subr.bf16.mxu0 0
        %1845 = vmatpush1.bf16.msra.mxu0 0
        %1846 = vmatprep.subr.bf16.mxu0 0
        %1847 = vmatpush1.bf16.msra.mxu0 0
        %1848 = vmatprep.subr.bf16.mxu0 0
        %1849 = vmatpush1.bf16.msra.mxu0 0
        %1850 = vmatprep.subr.bf16.mxu0 0
        %1851 = vmatpush1.bf16.msra.mxu0 0
        %1852 = vmatprep.subr.bf16.mxu0 0
        %1853 = vmatpush1.bf16.msra.mxu0 0
        %1854 = vmatprep.subr.bf16.mxu0 0
        %1855 = vmatpush1.bf16.msra.mxu0 0
        %1856 = vmatprep.subr.bf16.mxu0 0
        %1857 = vmatpush1.bf16.msra.mxu0 0
        %1858 = vmatprep.mubr.bf16.mxu0 0
        %1859 = vmatmul.mubr.bf16.gmra.mrb[0].mxu0 %v1824
        %v1860 = vpop.f32.mrb[0].mxu0
        %v1861 = vadd.f32 0.0, %v1860
        %v1862 = vpop.f32.mrb[0].mxu0
        %v1863 = vpop.f32.mrb[0].mxu0
        %v1864 = vadd.f32 0.0, %v1863
        %v1865 = vpop.f32.mrb[0].mxu0
        %1866 = vdwg.mxu0
        %1869 = vrot.lane.b32.xlu0 %v1861, 64
        %v1870 = vpop.permute.xlu0 %1869
        %1871 = vrot.lane.b32.xlu0 %v1864, 64
        %v1872 = vpop.permute.xlu0 %1871
        %v1875 = vsel %vm1139, %v1738, %v1870
        %v1876 = vsel %vm1139, %v1741, %v1872
        %1877 = vst [vmem:[#allocation3 + $0x10] sm:$0xff] %v1875
        %1878 = vst [vmem:[#allocation3 + $0x40] sm:$0xff] %v1876
        %v1879 = vld [vmem:[#allocation2 + $0x18] sm:$0xff]
        %v1880 = vld [vmem:[#allocation2 + $0xa8] sm:$0xff]
        %v1881 = vld [vmem:[#allocation2 + $0x48] sm:$0xff]
        %v1882 = vld [vmem:[#allocation2 + $0xd8] sm:$0xff]
        %v1883 = vld [vmem:[#allocation2 + $0x78] sm:$0xff]
        %v1884 = vld [vmem:[#allocation2 + $0x108] sm:$0xff]
        %v1885 = vsel %vm1139, %v1879, 0.0
        %1886 = vadd.xlane.f32.xlu0 %v1885
        %v1887 = vpop.xlane.xlu0 %1886
        %v1888 = vsel %vm1139, %v1880, 0.0
        %1889 = vadd.xlane.f32.xlu0 %v1888
        %v1890 = vpop.xlane.xlu0 %1889
        %v1891 = vrcp.pop %v1887
        %v1892 = vmul.f32 0.125, %v1891
        %v1893 = vrcp.pop %v1890
        %v1894 = vmul.f32 0.125, %v1893
        %v1895 = vmul.f32 %v1879, %v1892
        %v1896 = vmul.f32 %v1880, %v1894
        %v1897 = vpack.c.bf16 %v1896, %v1895
        %v1898 = vpack.c.bf16 %v1882, %v1881
        %v1900 = vsel %vm1139, %v1897, 0
        %v1903 = vsel %vm1139, %v1898, 0
        %1905 = vmatprep.subr.bf16.mxu0 0
        %1906 = vmatpush1.bf16.xpose.msra.mxu0 %v1903
        %1907 = vmatprep.subr.bf16.mxu0 0
        %1908 = vmatpush1.bf16.xpose.msra.mxu0 0
        %1909 = vmatprep.subr.bf16.mxu0 0
        %1910 = vmatpush1.bf16.xpose.msra.mxu0 0
        %1911 = vmatprep.subr.bf16.mxu0 0
        %1912 = vmatpush1.bf16.xpose.msra.mxu0 0
        %1913 = vmatprep.subr.bf16.mxu0 0
        %1914 = vmatpush1.bf16.xpose.msra.mxu0 0
        %1915 = vmatprep.subr.bf16.mxu0 0
        %1916 = vmatpush1.bf16.xpose.msra.mxu0 0
        %1917 = vmatprep.subr.bf16.mxu0 0
        %1918 = vmatpush1.bf16.xpose.msra.mxu0 0
        %1919 = vmatprep.subr.bf16.mxu0 0
        %1920 = vmatpush1.bf16.xpose.msra.mxu0 0
        %1921 = vmatprep.subr.bf16.mxu0 0
        %1922 = vmatpush1.bf16.xpose.msra.mxu0 0
        %1923 = vmatprep.subr.bf16.mxu0 0
        %1924 = vmatpush1.bf16.xpose.msra.mxu0 0
        %1925 = vmatprep.subr.bf16.mxu0 0
        %1926 = vmatpush1.bf16.xpose.msra.mxu0 0
        %1927 = vmatprep.subr.bf16.mxu0 0
        %1928 = vmatpush1.bf16.xpose.msra.mxu0 0
        %1929 = vmatprep.subr.bf16.mxu0 0
        %1930 = vmatpush1.bf16.xpose.msra.mxu0 0
        %1931 = vmatprep.subr.bf16.mxu0 0
        %1932 = vmatpush1.bf16.xpose.msra.mxu0 0
        %1933 = vmatprep.subr.bf16.mxu0 0
        %1934 = vmatpush1.bf16.xpose.msra.mxu0 0
        %1935 = vmatprep.subr.bf16.mxu0 0
        %1936 = vmatpush1.bf16.xpose.msra.mxu0 0
        %1937 = vmatprep.mubr.bf16.mxu0 0
        %1938 = vmatmul.mubr.bf16.gmra.mrb[0].mxu0 %v1900
        %v1939 = vpop.f32.mrb[0].mxu0
        %v1940 = vadd.f32 0.0, %v1939
        %v1941 = vpop.f32.mrb[0].mxu0
        %v1942 = vpop.f32.mrb[0].mxu0
        %v1943 = vadd.f32 0.0, %v1942
        %v1944 = vpop.f32.mrb[0].mxu0
        %1945 = vdwg.mxu0
        %v1946 = vpack.c.bf16 %v1943, %v1940
        %v1947 = vpack.c.bf16 %v1884, %v1883
        %v1949 = vsel %vm1203, %v1946, 0
        %1951 = vmatprep.subr.bf16.mxu0 0
        %1952 = vmatpush1.bf16.msra.mxu0 %v1947
        %1953 = vmatprep.subr.bf16.mxu0 0
        %1954 = vmatpush1.bf16.msra.mxu0 0
        %1955 = vmatprep.subr.bf16.mxu0 0
        %1956 = vmatpush1.bf16.msra.mxu0 0
        %1957 = vmatprep.subr.bf16.mxu0 0
        %1958 = vmatpush1.bf16.msra.mxu0 0
        %1959 = vmatprep.subr.bf16.mxu0 0
        %1960 = vmatpush1.bf16.msra.mxu0 0
        %1961 = vmatprep.subr.bf16.mxu0 0
        %1962 = vmatpush1.bf16.msra.mxu0 0
        %1963 = vmatprep.subr.bf16.mxu0 0
        %1964 = vmatpush1.bf16.msra.mxu0 0
        %1965 = vmatprep.subr.bf16.mxu0 0
        %1966 = vmatpush1.bf16.msra.mxu0 0
        %1967 = vmatprep.subr.bf16.mxu0 0
        %1968 = vmatpush1.bf16.msra.mxu0 0
        %1969 = vmatprep.subr.bf16.mxu0 0
        %1970 = vmatpush1.bf16.msra.mxu0 0
        %1971 = vmatprep.subr.bf16.mxu0 0
        %1972 = vmatpush1.bf16.msra.mxu0 0
        %1973 = vmatprep.subr.bf16.mxu0 0
        %1974 = vmatpush1.bf16.msra.mxu0 0
        %1975 = vmatprep.subr.bf16.mxu0 0
        %1976 = vmatpush1.bf16.msra.mxu0 0
        %1977 = vmatprep.subr.bf16.mxu0 0
        %1978 = vmatpush1.bf16.msra.mxu0 0
        %1979 = vmatprep.subr.bf16.mxu0 0
        %1980 = vmatpush1.bf16.msra.mxu0 0
        %1981 = vmatprep.subr.bf16.mxu0 0
        %1982 = vmatpush1.bf16.msra.mxu0 0
        %1983 = vmatprep.mubr.bf16.mxu0 0
        %1984 = vmatmul.mubr.bf16.gmra.mrb[0].mxu0 %v1949
        %v1985 = vpop.f32.mrb[0].mxu0
        %v1986 = vadd.f32 0.0, %v1985
        %v1987 = vpop.f32.mrb[0].mxu0
        %v1988 = vpop.f32.mrb[0].mxu0
        %v1989 = vadd.f32 0.0, %v1988
        %v1990 = vpop.f32.mrb[0].mxu0
        %1991 = vdwg.mxu0
        %1994 = vrot.lane.b32.xlu0 %v1879, 64
        %v1995 = vpop.permute.xlu0 %1994
        %1996 = vrot.lane.b32.xlu0 %v1880, 64
        %v1997 = vpop.permute.xlu0 %1996
        %v2000 = vsel %vm1139, %v1995, 0.0
        %2001 = vadd.xlane.f32.xlu0 %v2000
        %v2002 = vpop.xlane.xlu0 %2001
        %v2003 = vsel %vm1139, %v1997, 0.0
        %2004 = vadd.xlane.f32.xlu0 %v2003
        %v2005 = vpop.xlane.xlu0 %2004
        %v2006 = vrcp.pop %v2002
        %v2007 = vmul.f32 0.125, %v2006
        %v2008 = vrcp.pop %v2005
        %v2009 = vmul.f32 0.125, %v2008
        %v2010 = vmul.f32 %v1879, %v2007
        %v2011 = vmul.f32 %v1880, %v2009
        %v2012 = vpack.c.bf16 %v2011, %v2010
        %2014 = vrot.lane.b32.xlu0 %v2012, 64
        %v2015 = vpop.permute.xlu0 %2014
        %2017 = vrot.lane.b32.xlu0 %v1898, 64
        %v2018 = vpop.permute.xlu0 %2017
        %v2020 = vsel %vm1139, %v2015, 0
        %v2023 = vsel %vm1139, %v2018, 0
        %2025 = vmatprep.subr.bf16.mxu0 0
        %2026 = vmatpush1.bf16.xpose.msra.mxu0 %v2023
        %2027 = vmatprep.subr.bf16.mxu0 0
        %2028 = vmatpush1.bf16.xpose.msra.mxu0 0
        %2029 = vmatprep.subr.bf16.mxu0 0
        %2030 = vmatpush1.bf16.xpose.msra.mxu0 0
        %2031 = vmatprep.subr.bf16.mxu0 0
        %2032 = vmatpush1.bf16.xpose.msra.mxu0 0
        %2033 = vmatprep.subr.bf16.mxu0 0
        %2034 = vmatpush1.bf16.xpose.msra.mxu0 0
        %2035 = vmatprep.subr.bf16.mxu0 0
        %2036 = vmatpush1.bf16.xpose.msra.mxu0 0
        %2037 = vmatprep.subr.bf16.mxu0 0
        %2038 = vmatpush1.bf16.xpose.msra.mxu0 0
        %2039 = vmatprep.subr.bf16.mxu0 0
        %2040 = vmatpush1.bf16.xpose.msra.mxu0 0
        %2041 = vmatprep.subr.bf16.mxu0 0
        %2042 = vmatpush1.bf16.xpose.msra.mxu0 0
        %2043 = vmatprep.subr.bf16.mxu0 0
        %2044 = vmatpush1.bf16.xpose.msra.mxu0 0
        %2045 = vmatprep.subr.bf16.mxu0 0
        %2046 = vmatpush1.bf16.xpose.msra.mxu0 0
        %2047 = vmatprep.subr.bf16.mxu0 0
        %2048 = vmatpush1.bf16.xpose.msra.mxu0 0
        %2049 = vmatprep.subr.bf16.mxu0 0
        %2050 = vmatpush1.bf16.xpose.msra.mxu0 0
        %2051 = vmatprep.subr.bf16.mxu0 0
        %2052 = vmatpush1.bf16.xpose.msra.mxu0 0
        %2053 = vmatprep.subr.bf16.mxu0 0
        %2054 = vmatpush1.bf16.xpose.msra.mxu0 0
        %2055 = vmatprep.subr.bf16.mxu0 0
        %2056 = vmatpush1.bf16.xpose.msra.mxu0 0
        %2057 = vmatprep.mubr.bf16.mxu0 0
        %2058 = vmatmul.mubr.bf16.gmra.mrb[0].mxu0 %v2020
        %v2059 = vpop.f32.mrb[0].mxu0
        %v2060 = vadd.f32 0.0, %v2059
        %v2061 = vpop.f32.mrb[0].mxu0
        %v2062 = vpop.f32.mrb[0].mxu0
        %v2063 = vadd.f32 0.0, %v2062
        %v2064 = vpop.f32.mrb[0].mxu0
        %2065 = vdwg.mxu0
        %v2066 = vpack.c.bf16 %v2063, %v2060
        %2068 = vrot.lane.b32.xlu0 %v1947, 64
        %v2069 = vpop.permute.xlu0 %2068
        %v2072 = vsel %vm1203, %v2066, 0
        %2074 = vmatprep.subr.bf16.mxu0 0
        %2075 = vmatpush1.bf16.msra.mxu0 %v2069
        %2076 = vmatprep.subr.bf16.mxu0 0
        %2077 = vmatpush1.bf16.msra.mxu0 0
        %2078 = vmatprep.subr.bf16.mxu0 0
        %2079 = vmatpush1.bf16.msra.mxu0 0
        %2080 = vmatprep.subr.bf16.mxu0 0
        %2081 = vmatpush1.bf16.msra.mxu0 0
        %2082 = vmatprep.subr.bf16.mxu0 0
        %2083 = vmatpush1.bf16.msra.mxu0 0
        %2084 = vmatprep.subr.bf16.mxu0 0
        %2085 = vmatpush1.bf16.msra.mxu0 0
        %2086 = vmatprep.subr.bf16.mxu0 0
        %2087 = vmatpush1.bf16.msra.mxu0 0
        %2088 = vmatprep.subr.bf16.mxu0 0
        %2089 = vmatpush1.bf16.msra.mxu0 0
        %2090 = vmatprep.subr.bf16.mxu0 0
        %2091 = vmatpush1.bf16.msra.mxu0 0
        %2092 = vmatprep.subr.bf16.mxu0 0
        %2093 = vmatpush1.bf16.msra.mxu0 0
        %2094 = vmatprep.subr.bf16.mxu0 0
        %2095 = vmatpush1.bf16.msra.mxu0 0
        %2096 = vmatprep.subr.bf16.mxu0 0
        %2097 = vmatpush1.bf16.msra.mxu0 0
        %2098 = vmatprep.subr.bf16.mxu0 0
        %2099 = vmatpush1.bf16.msra.mxu0 0
        %2100 = vmatprep.subr.bf16.mxu0 0
        %2101 = vmatpush1.bf16.msra.mxu0 0
        %2102 = vmatprep.subr.bf16.mxu0 0
        %2103 = vmatpush1.bf16.msra.mxu0 0
        %2104 = vmatprep.subr.bf16.mxu0 0
        %2105 = vmatpush1.bf16.msra.mxu0 0
        %2106 = vmatprep.mubr.bf16.mxu0 0
        %2107 = vmatmul.mubr.bf16.gmra.mrb[0].mxu0 %v2072
        %v2108 = vpop.f32.mrb[0].mxu0
        %v2109 = vadd.f32 0.0, %v2108
        %v2110 = vpop.f32.mrb[0].mxu0
        %v2111 = vpop.f32.mrb[0].mxu0
        %v2112 = vadd.f32 0.0, %v2111
        %v2113 = vpop.f32.mrb[0].mxu0
        %2114 = vdwg.mxu0
        %2117 = vrot.lane.b32.xlu0 %v2109, 64
        %v2118 = vpop.permute.xlu0 %2117
        %2119 = vrot.lane.b32.xlu0 %v2112, 64
        %v2120 = vpop.permute.xlu0 %2119
        %v2123 = vsel %vm1139, %v1986, %v2118
        %v2124 = vsel %vm1139, %v1989, %v2120
        %2125 = vst [vmem:[#allocation3 + $0x18] sm:$0xff] %v2123
        %2126 = vst [vmem:[#allocation3 + $0x48] sm:$0xff] %v2124
        %v2127 = vld [vmem:[#allocation2 + $0x20] sm:$0xff]
        %v2128 = vld [vmem:[#allocation2 + $0xb0] sm:$0xff]
        %v2129 = vld [vmem:[#allocation2 + $0x50] sm:$0xff]
        %v2130 = vld [vmem:[#allocation2 + $0xe0] sm:$0xff]
        %v2131 = vld [vmem:[#allocation2 + $0x80] sm:$0xff]
        %v2132 = vld [vmem:[#allocation2 + $0x110] sm:$0xff]
        %v2133 = vsel %vm1139, %v2127, 0.0
        %2134 = vadd.xlane.f32.xlu0 %v2133
        %v2135 = vpop.xlane.xlu0 %2134
        %v2136 = vsel %vm1139, %v2128, 0.0
        %2137 = vadd.xlane.f32.xlu0 %v2136
        %v2138 = vpop.xlane.xlu0 %2137
        %v2139 = vrcp.pop %v2135
        %v2140 = vmul.f32 0.125, %v2139
        %v2141 = vrcp.pop %v2138
        %v2142 = vmul.f32 0.125, %v2141
        %v2143 = vmul.f32 %v2127, %v2140
        %v2144 = vmul.f32 %v2128, %v2142
        %v2145 = vpack.c.bf16 %v2144, %v2143
        %v2146 = vpack.c.bf16 %v2130, %v2129
        %v2148 = vsel %vm1139, %v2145, 0
        %v2151 = vsel %vm1139, %v2146, 0
        %2153 = vmatprep.subr.bf16.mxu0 0
        %2154 = vmatpush1.bf16.xpose.msra.mxu0 %v2151
        %2155 = vmatprep.subr.bf16.mxu0 0
        %2156 = vmatpush1.bf16.xpose.msra.mxu0 0
        %2157 = vmatprep.subr.bf16.mxu0 0
        %2158 = vmatpush1.bf16.xpose.msra.mxu0 0
        %2159 = vmatprep.subr.bf16.mxu0 0
        %2160 = vmatpush1.bf16.xpose.msra.mxu0 0
        %2161 = vmatprep.subr.bf16.mxu0 0
        %2162 = vmatpush1.bf16.xpose.msra.mxu0 0
        %2163 = vmatprep.subr.bf16.mxu0 0
        %2164 = vmatpush1.bf16.xpose.msra.mxu0 0
        %2165 = vmatprep.subr.bf16.mxu0 0
        %2166 = vmatpush1.bf16.xpose.msra.mxu0 0
        %2167 = vmatprep.subr.bf16.mxu0 0
        %2168 = vmatpush1.bf16.xpose.msra.mxu0 0
        %2169 = vmatprep.subr.bf16.mxu0 0
        %2170 = vmatpush1.bf16.xpose.msra.mxu0 0
        %2171 = vmatprep.subr.bf16.mxu0 0
        %2172 = vmatpush1.bf16.xpose.msra.mxu0 0
        %2173 = vmatprep.subr.bf16.mxu0 0
        %2174 = vmatpush1.bf16.xpose.msra.mxu0 0
        %2175 = vmatprep.subr.bf16.mxu0 0
        %2176 = vmatpush1.bf16.xpose.msra.mxu0 0
        %2177 = vmatprep.subr.bf16.mxu0 0
        %2178 = vmatpush1.bf16.xpose.msra.mxu0 0
        %2179 = vmatprep.subr.bf16.mxu0 0
        %2180 = vmatpush1.bf16.xpose.msra.mxu0 0
        %2181 = vmatprep.subr.bf16.mxu0 0
        %2182 = vmatpush1.bf16.xpose.msra.mxu0 0
        %2183 = vmatprep.subr.bf16.mxu0 0
        %2184 = vmatpush1.bf16.xpose.msra.mxu0 0
        %2185 = vmatprep.mubr.bf16.mxu0 0
        %2186 = vmatmul.mubr.bf16.gmra.mrb[0].mxu0 %v2148
        %v2187 = vpop.f32.mrb[0].mxu0
        %v2188 = vadd.f32 0.0, %v2187
        %v2189 = vpop.f32.mrb[0].mxu0
        %v2190 = vpop.f32.mrb[0].mxu0
        %v2191 = vadd.f32 0.0, %v2190
        %v2192 = vpop.f32.mrb[0].mxu0
        %2193 = vdwg.mxu0
        %v2194 = vpack.c.bf16 %v2191, %v2188
        %v2195 = vpack.c.bf16 %v2132, %v2131
        %v2197 = vsel %vm1203, %v2194, 0
        %2199 = vmatprep.subr.bf16.mxu0 0
        %2200 = vmatpush1.bf16.msra.mxu0 %v2195
        %2201 = vmatprep.subr.bf16.mxu0 0
        %2202 = vmatpush1.bf16.msra.mxu0 0
        %2203 = vmatprep.subr.bf16.mxu0 0
        %2204 = vmatpush1.bf16.msra.mxu0 0
        %2205 = vmatprep.subr.bf16.mxu0 0
        %2206 = vmatpush1.bf16.msra.mxu0 0
        %2207 = vmatprep.subr.bf16.mxu0 0
        %2208 = vmatpush1.bf16.msra.mxu0 0
        %2209 = vmatprep.subr.bf16.mxu0 0
        %2210 = vmatpush1.bf16.msra.mxu0 0
        %2211 = vmatprep.subr.bf16.mxu0 0
        %2212 = vmatpush1.bf16.msra.mxu0 0
        %2213 = vmatprep.subr.bf16.mxu0 0
        %2214 = vmatpush1.bf16.msra.mxu0 0
        %2215 = vmatprep.subr.bf16.mxu0 0
        %2216 = vmatpush1.bf16.msra.mxu0 0
        %2217 = vmatprep.subr.bf16.mxu0 0
        %2218 = vmatpush1.bf16.msra.mxu0 0
        %2219 = vmatprep.subr.bf16.mxu0 0
        %2220 = vmatpush1.bf16.msra.mxu0 0
        %2221 = vmatprep.subr.bf16.mxu0 0
        %2222 = vmatpush1.bf16.msra.mxu0 0
        %2223 = vmatprep.subr.bf16.mxu0 0
        %2224 = vmatpush1.bf16.msra.mxu0 0
        %2225 = vmatprep.subr.bf16.mxu0 0
        %2226 = vmatpush1.bf16.msra.mxu0 0
        %2227 = vmatprep.subr.bf16.mxu0 0
        %2228 = vmatpush1.bf16.msra.mxu0 0
        %2229 = vmatprep.subr.bf16.mxu0 0
        %2230 = vmatpush1.bf16.msra.mxu0 0
        %2231 = vmatprep.mubr.bf16.mxu0 0
        %2232 = vmatmul.mubr.bf16.gmra.mrb[0].mxu0 %v2197
        %v2233 = vpop.f32.mrb[0].mxu0
        %v2234 = vadd.f32 0.0, %v2233
        %v2235 = vpop.f32.mrb[0].mxu0
        %v2236 = vpop.f32.mrb[0].mxu0
        %v2237 = vadd.f32 0.0, %v2236
        %v2238 = vpop.f32.mrb[0].mxu0
        %2239 = vdwg.mxu0
        %2242 = vrot.lane.b32.xlu0 %v2127, 64
        %v2243 = vpop.permute.xlu0 %2242
        %2244 = vrot.lane.b32.xlu0 %v2128, 64
        %v2245 = vpop.permute.xlu0 %2244
        %v2248 = vsel %vm1139, %v2243, 0.0
        %2249 = vadd.xlane.f32.xlu0 %v2248
        %v2250 = vpop.xlane.xlu0 %2249
        %v2251 = vsel %vm1139, %v2245, 0.0
        %2252 = vadd.xlane.f32.xlu0 %v2251
        %v2253 = vpop.xlane.xlu0 %2252
        %v2254 = vrcp.pop %v2250
        %v2255 = vmul.f32 0.125, %v2254
        %v2256 = vrcp.pop %v2253
        %v2257 = vmul.f32 0.125, %v2256
        %v2258 = vmul.f32 %v2127, %v2255
        %v2259 = vmul.f32 %v2128, %v2257
        %v2260 = vpack.c.bf16 %v2259, %v2258
        %2262 = vrot.lane.b32.xlu0 %v2260, 64
        %v2263 = vpop.permute.xlu0 %2262
        %2265 = vrot.lane.b32.xlu0 %v2146, 64
        %v2266 = vpop.permute.xlu0 %2265
        %v2268 = vsel %vm1139, %v2263, 0
        %v2271 = vsel %vm1139, %v2266, 0
        %2273 = vmatprep.subr.bf16.mxu0 0
        %2274 = vmatpush1.bf16.xpose.msra.mxu0 %v2271
        %2275 = vmatprep.subr.bf16.mxu0 0
        %2276 = vmatpush1.bf16.xpose.msra.mxu0 0
        %2277 = vmatprep.subr.bf16.mxu0 0
        %2278 = vmatpush1.bf16.xpose.msra.mxu0 0
        %2279 = vmatprep.subr.bf16.mxu0 0
        %2280 = vmatpush1.bf16.xpose.msra.mxu0 0
        %2281 = vmatprep.subr.bf16.mxu0 0
        %2282 = vmatpush1.bf16.xpose.msra.mxu0 0
        %2283 = vmatprep.subr.bf16.mxu0 0
        %2284 = vmatpush1.bf16.xpose.msra.mxu0 0
        %2285 = vmatprep.subr.bf16.mxu0 0
        %2286 = vmatpush1.bf16.xpose.msra.mxu0 0
        %2287 = vmatprep.subr.bf16.mxu0 0
        %2288 = vmatpush1.bf16.xpose.msra.mxu0 0
        %2289 = vmatprep.subr.bf16.mxu0 0
        %2290 = vmatpush1.bf16.xpose.msra.mxu0 0
        %2291 = vmatprep.subr.bf16.mxu0 0
        %2292 = vmatpush1.bf16.xpose.msra.mxu0 0
        %2293 = vmatprep.subr.bf16.mxu0 0
        %2294 = vmatpush1.bf16.xpose.msra.mxu0 0
        %2295 = vmatprep.subr.bf16.mxu0 0
        %2296 = vmatpush1.bf16.xpose.msra.mxu0 0
        %2297 = vmatprep.subr.bf16.mxu0 0
        %2298 = vmatpush1.bf16.xpose.msra.mxu0 0
        %2299 = vmatprep.subr.bf16.mxu0 0
        %2300 = vmatpush1.bf16.xpose.msra.mxu0 0
        %2301 = vmatprep.subr.bf16.mxu0 0
        %2302 = vmatpush1.bf16.xpose.msra.mxu0 0
        %2303 = vmatprep.subr.bf16.mxu0 0
        %2304 = vmatpush1.bf16.xpose.msra.mxu0 0
        %2305 = vmatprep.mubr.bf16.mxu0 0
        %2306 = vmatmul.mubr.bf16.gmra.mrb[0].mxu0 %v2268
        %v2307 = vpop.f32.mrb[0].mxu0
        %v2308 = vadd.f32 0.0, %v2307
        %v2309 = vpop.f32.mrb[0].mxu0
        %v2310 = vpop.f32.mrb[0].mxu0
        %v2311 = vadd.f32 0.0, %v2310
        %v2312 = vpop.f32.mrb[0].mxu0
        %2313 = vdwg.mxu0
        %v2314 = vpack.c.bf16 %v2311, %v2308
        %2316 = vrot.lane.b32.xlu0 %v2195, 64
        %v2317 = vpop.permute.xlu0 %2316
        %v2320 = vsel %vm1203, %v2314, 0
        %2322 = vmatprep.subr.bf16.mxu0 0
        %2323 = vmatpush1.bf16.msra.mxu0 %v2317
        %2324 = vmatprep.subr.bf16.mxu0 0
        %2325 = vmatpush1.bf16.msra.mxu0 0
        %2326 = vmatprep.subr.bf16.mxu0 0
        %2327 = vmatpush1.bf16.msra.mxu0 0
        %2328 = vmatprep.subr.bf16.mxu0 0
        %2329 = vmatpush1.bf16.msra.mxu0 0
        %2330 = vmatprep.subr.bf16.mxu0 0
        %2331 = vmatpush1.bf16.msra.mxu0 0
        %2332 = vmatprep.subr.bf16.mxu0 0
        %2333 = vmatpush1.bf16.msra.mxu0 0
        %2334 = vmatprep.subr.bf16.mxu0 0
        %2335 = vmatpush1.bf16.msra.mxu0 0
        %2336 = vmatprep.subr.bf16.mxu0 0
        %2337 = vmatpush1.bf16.msra.mxu0 0
        %2338 = vmatprep.subr.bf16.mxu0 0
        %2339 = vmatpush1.bf16.msra.mxu0 0
        %2340 = vmatprep.subr.bf16.mxu0 0
        %2341 = vmatpush1.bf16.msra.mxu0 0
        %2342 = vmatprep.subr.bf16.mxu0 0
        %2343 = vmatpush1.bf16.msra.mxu0 0
        %2344 = vmatprep.subr.bf16.mxu0 0
        %2345 = vmatpush1.bf16.msra.mxu0 0
        %2346 = vmatprep.subr.bf16.mxu0 0
        %2347 = vmatpush1.bf16.msra.mxu0 0
        %2348 = vmatprep.subr.bf16.mxu0 0
        %2349 = vmatpush1.bf16.msra.mxu0 0
        %2350 = vmatprep.subr.bf16.mxu0 0
        %2351 = vmatpush1.bf16.msra.mxu0 0
        %2352 = vmatprep.subr.bf16.mxu0 0
        %2353 = vmatpush1.bf16.msra.mxu0 0
        %2354 = vmatprep.mubr.bf16.mxu0 0
        %2355 = vmatmul.mubr.bf16.gmra.mrb[0].mxu0 %v2320
        %v2356 = vpop.f32.mrb[0].mxu0
        %v2357 = vadd.f32 0.0, %v2356
        %v2358 = vpop.f32.mrb[0].mxu0
        %v2359 = vpop.f32.mrb[0].mxu0
        %v2360 = vadd.f32 0.0, %v2359
        %v2361 = vpop.f32.mrb[0].mxu0
        %2362 = vdwg.mxu0
        %2365 = vrot.lane.b32.xlu0 %v2357, 64
        %v2366 = vpop.permute.xlu0 %2365
        %2367 = vrot.lane.b32.xlu0 %v2360, 64
        %v2368 = vpop.permute.xlu0 %2367
        %v2371 = vsel %vm1139, %v2234, %v2366
        %v2372 = vsel %vm1139, %v2237, %v2368
        %2373 = vst [vmem:[#allocation3 + $0x20] sm:$0xff] %v2371
        %2374 = vst [vmem:[#allocation3 + $0x50] sm:$0xff] %v2372
        %v2375 = vld [vmem:[#allocation2 + $0x28] sm:$0xff]
        %v2376 = vld [vmem:[#allocation2 + $0xb8] sm:$0xff]
        %v2377 = vld [vmem:[#allocation2 + $0x58] sm:$0xff]
        %v2378 = vld [vmem:[#allocation2 + $0xe8] sm:$0xff]
        %v2379 = vld [vmem:[#allocation2 + $0x88] sm:$0xff]
        %v2380 = vld [vmem:[#allocation2 + $0x118] sm:$0xff]
        %v2381 = vsel %vm1139, %v2375, 0.0
        %2382 = vadd.xlane.f32.xlu0 %v2381
        %v2383 = vpop.xlane.xlu0 %2382
        %v2384 = vsel %vm1139, %v2376, 0.0
        %2385 = vadd.xlane.f32.xlu0 %v2384
        %v2386 = vpop.xlane.xlu0 %2385
        %v2387 = vrcp.pop %v2383
        %v2388 = vmul.f32 0.125, %v2387
        %v2389 = vrcp.pop %v2386
        %v2390 = vmul.f32 0.125, %v2389
        %v2391 = vmul.f32 %v2375, %v2388
        %v2392 = vmul.f32 %v2376, %v2390
        %v2393 = vpack.c.bf16 %v2392, %v2391
        %v2394 = vpack.c.bf16 %v2378, %v2377
        %v2396 = vsel %vm1139, %v2393, 0
        %v2399 = vsel %vm1139, %v2394, 0
        %2401 = vmatprep.subr.bf16.mxu0 0
        %2402 = vmatpush1.bf16.xpose.msra.mxu0 %v2399
        %2403 = vmatprep.subr.bf16.mxu0 0
        %2404 = vmatpush1.bf16.xpose.msra.mxu0 0
        %2405 = vmatprep.subr.bf16.mxu0 0
        %2406 = vmatpush1.bf16.xpose.msra.mxu0 0
        %2407 = vmatprep.subr.bf16.mxu0 0
        %2408 = vmatpush1.bf16.xpose.msra.mxu0 0
        %2409 = vmatprep.subr.bf16.mxu0 0
        %2410 = vmatpush1.bf16.xpose.msra.mxu0 0
        %2411 = vmatprep.subr.bf16.mxu0 0
        %2412 = vmatpush1.bf16.xpose.msra.mxu0 0
        %2413 = vmatprep.subr.bf16.mxu0 0
        %2414 = vmatpush1.bf16.xpose.msra.mxu0 0
        %2415 = vmatprep.subr.bf16.mxu0 0
        %2416 = vmatpush1.bf16.xpose.msra.mxu0 0
        %2417 = vmatprep.subr.bf16.mxu0 0
        %2418 = vmatpush1.bf16.xpose.msra.mxu0 0
        %2419 = vmatprep.subr.bf16.mxu0 0
        %2420 = vmatpush1.bf16.xpose.msra.mxu0 0
        %2421 = vmatprep.subr.bf16.mxu0 0
        %2422 = vmatpush1.bf16.xpose.msra.mxu0 0
        %2423 = vmatprep.subr.bf16.mxu0 0
        %2424 = vmatpush1.bf16.xpose.msra.mxu0 0
        %2425 = vmatprep.subr.bf16.mxu0 0
        %2426 = vmatpush1.bf16.xpose.msra.mxu0 0
        %2427 = vmatprep.subr.bf16.mxu0 0
        %2428 = vmatpush1.bf16.xpose.msra.mxu0 0
        %2429 = vmatprep.subr.bf16.mxu0 0
        %2430 = vmatpush1.bf16.xpose.msra.mxu0 0
        %2431 = vmatprep.subr.bf16.mxu0 0
        %2432 = vmatpush1.bf16.xpose.msra.mxu0 0
        %2433 = vmatprep.mubr.bf16.mxu0 0
        %2434 = vmatmul.mubr.bf16.gmra.mrb[0].mxu0 %v2396
        %v2435 = vpop.f32.mrb[0].mxu0
        %v2436 = vadd.f32 0.0, %v2435
        %v2437 = vpop.f32.mrb[0].mxu0
        %v2438 = vpop.f32.mrb[0].mxu0
        %v2439 = vadd.f32 0.0, %v2438
        %v2440 = vpop.f32.mrb[0].mxu0
        %2441 = vdwg.mxu0
        %v2442 = vpack.c.bf16 %v2439, %v2436
        %v2443 = vpack.c.bf16 %v2380, %v2379
        %v2445 = vsel %vm1203, %v2442, 0
        %2447 = vmatprep.subr.bf16.mxu0 0
        %2448 = vmatpush1.bf16.msra.mxu0 %v2443
        %2449 = vmatprep.subr.bf16.mxu0 0
        %2450 = vmatpush1.bf16.msra.mxu0 0
        %2451 = vmatprep.subr.bf16.mxu0 0
        %2452 = vmatpush1.bf16.msra.mxu0 0
        %2453 = vmatprep.subr.bf16.mxu0 0
        %2454 = vmatpush1.bf16.msra.mxu0 0
        %2455 = vmatprep.subr.bf16.mxu0 0
        %2456 = vmatpush1.bf16.msra.mxu0 0
        %2457 = vmatprep.subr.bf16.mxu0 0
        %2458 = vmatpush1.bf16.msra.mxu0 0
        %2459 = vmatprep.subr.bf16.mxu0 0
        %2460 = vmatpush1.bf16.msra.mxu0 0
        %2461 = vmatprep.subr.bf16.mxu0 0
        %2462 = vmatpush1.bf16.msra.mxu0 0
        %2463 = vmatprep.subr.bf16.mxu0 0
        %2464 = vmatpush1.bf16.msra.mxu0 0
        %2465 = vmatprep.subr.bf16.mxu0 0
        %2466 = vmatpush1.bf16.msra.mxu0 0
        %2467 = vmatprep.subr.bf16.mxu0 0
        %2468 = vmatpush1.bf16.msra.mxu0 0
        %2469 = vmatprep.subr.bf16.mxu0 0
        %2470 = vmatpush1.bf16.msra.mxu0 0
        %2471 = vmatprep.subr.bf16.mxu0 0
        %2472 = vmatpush1.bf16.msra.mxu0 0
        %2473 = vmatprep.subr.bf16.mxu0 0
        %2474 = vmatpush1.bf16.msra.mxu0 0
        %2475 = vmatprep.subr.bf16.mxu0 0
        %2476 = vmatpush1.bf16.msra.mxu0 0
        %2477 = vmatprep.subr.bf16.mxu0 0
        %2478 = vmatpush1.bf16.msra.mxu0 0
        %2479 = vmatprep.mubr.bf16.mxu0 0
        %2480 = vmatmul.mubr.bf16.gmra.mrb[0].mxu0 %v2445
        %v2481 = vpop.f32.mrb[0].mxu0
        %v2482 = vadd.f32 0.0, %v2481
        %v2483 = vpop.f32.mrb[0].mxu0
        %v2484 = vpop.f32.mrb[0].mxu0
        %v2485 = vadd.f32 0.0, %v2484
        %v2486 = vpop.f32.mrb[0].mxu0
        %2487 = vdwg.mxu0
        %2490 = vrot.lane.b32.xlu0 %v2375, 64
        %v2491 = vpop.permute.xlu0 %2490
        %2492 = vrot.lane.b32.xlu0 %v2376, 64
        %v2493 = vpop.permute.xlu0 %2492
        %v2496 = vsel %vm1139, %v2491, 0.0
        %2497 = vadd.xlane.f32.xlu0 %v2496
        %v2498 = vpop.xlane.xlu0 %2497
        %v2499 = vsel %vm1139, %v2493, 0.0
        %2500 = vadd.xlane.f32.xlu0 %v2499
        %v2501 = vpop.xlane.xlu0 %2500
        %v2502 = vrcp.pop %v2498
        %v2503 = vmul.f32 0.125, %v2502
        %v2504 = vrcp.pop %v2501
        %v2505 = vmul.f32 0.125, %v2504
        %v2506 = vmul.f32 %v2375, %v2503
        %v2507 = vmul.f32 %v2376, %v2505
        %v2508 = vpack.c.bf16 %v2507, %v2506
        %2510 = vrot.lane.b32.xlu0 %v2508, 64
        %v2511 = vpop.permute.xlu0 %2510
        %2513 = vrot.lane.b32.xlu0 %v2394, 64
        %v2514 = vpop.permute.xlu0 %2513
        %v2516 = vsel %vm1139, %v2511, 0
        %v2519 = vsel %vm1139, %v2514, 0
        %2521 = vmatprep.subr.bf16.mxu0 0
        %2522 = vmatpush1.bf16.xpose.msra.mxu0 %v2519
        %2523 = vmatprep.subr.bf16.mxu0 0
        %2524 = vmatpush1.bf16.xpose.msra.mxu0 0
        %2525 = vmatprep.subr.bf16.mxu0 0
        %2526 = vmatpush1.bf16.xpose.msra.mxu0 0
        %2527 = vmatprep.subr.bf16.mxu0 0
        %2528 = vmatpush1.bf16.xpose.msra.mxu0 0
        %2529 = vmatprep.subr.bf16.mxu0 0
        %2530 = vmatpush1.bf16.xpose.msra.mxu0 0
        %2531 = vmatprep.subr.bf16.mxu0 0
        %2532 = vmatpush1.bf16.xpose.msra.mxu0 0
        %2533 = vmatprep.subr.bf16.mxu0 0
        %2534 = vmatpush1.bf16.xpose.msra.mxu0 0
        %2535 = vmatprep.subr.bf16.mxu0 0
        %2536 = vmatpush1.bf16.xpose.msra.mxu0 0
        %2537 = vmatprep.subr.bf16.mxu0 0
        %2538 = vmatpush1.bf16.xpose.msra.mxu0 0
        %2539 = vmatprep.subr.bf16.mxu0 0
        %2540 = vmatpush1.bf16.xpose.msra.mxu0 0
        %2541 = vmatprep.subr.bf16.mxu0 0
        %2542 = vmatpush1.bf16.xpose.msra.mxu0 0
        %2543 = vmatprep.subr.bf16.mxu0 0
        %2544 = vmatpush1.bf16.xpose.msra.mxu0 0
        %2545 = vmatprep.subr.bf16.mxu0 0
        %2546 = vmatpush1.bf16.xpose.msra.mxu0 0
        %2547 = vmatprep.subr.bf16.mxu0 0
        %2548 = vmatpush1.bf16.xpose.msra.mxu0 0
        %2549 = vmatprep.subr.bf16.mxu0 0
        %2550 = vmatpush1.bf16.xpose.msra.mxu0 0
        %2551 = vmatprep.subr.bf16.mxu0 0
        %2552 = vmatpush1.bf16.xpose.msra.mxu0 0
        %2553 = vmatprep.mubr.bf16.mxu0 0
        %2554 = vmatmul.mubr.bf16.gmra.mrb[0].mxu0 %v2516
        %v2555 = vpop.f32.mrb[0].mxu0
        %v2556 = vadd.f32 0.0, %v2555
        %v2557 = vpop.f32.mrb[0].mxu0
        %v2558 = vpop.f32.mrb[0].mxu0
        %v2559 = vadd.f32 0.0, %v2558
        %v2560 = vpop.f32.mrb[0].mxu0
        %2561 = vdwg.mxu0
        %v2562 = vpack.c.bf16 %v2559, %v2556
        %2564 = vrot.lane.b32.xlu0 %v2443, 64
        %v2565 = vpop.permute.xlu0 %2564
        %v2568 = vsel %vm1203, %v2562, 0
        %2570 = vmatprep.subr.bf16.mxu0 0
        %2571 = vmatpush1.bf16.msra.mxu0 %v2565
        %2572 = vmatprep.subr.bf16.mxu0 0
        %2573 = vmatpush1.bf16.msra.mxu0 0
        %2574 = vmatprep.subr.bf16.mxu0 0
        %2575 = vmatpush1.bf16.msra.mxu0 0
        %2576 = vmatprep.subr.bf16.mxu0 0
        %2577 = vmatpush1.bf16.msra.mxu0 0
        %2578 = vmatprep.subr.bf16.mxu0 0
        %2579 = vmatpush1.bf16.msra.mxu0 0
        %2580 = vmatprep.subr.bf16.mxu0 0
        %2581 = vmatpush1.bf16.msra.mxu0 0
        %2582 = vmatprep.subr.bf16.mxu0 0
        %2583 = vmatpush1.bf16.msra.mxu0 0
        %2584 = vmatprep.subr.bf16.mxu0 0
        %2585 = vmatpush1.bf16.msra.mxu0 0
        %2586 = vmatprep.subr.bf16.mxu0 0
        %2587 = vmatpush1.bf16.msra.mxu0 0
        %2588 = vmatprep.subr.bf16.mxu0 0
        %2589 = vmatpush1.bf16.msra.mxu0 0
        %2590 = vmatprep.subr.bf16.mxu0 0
        %2591 = vmatpush1.bf16.msra.mxu0 0
        %2592 = vmatprep.subr.bf16.mxu0 0
        %2593 = vmatpush1.bf16.msra.mxu0 0
        %2594 = vmatprep.subr.bf16.mxu0 0
        %2595 = vmatpush1.bf16.msra.mxu0 0
        %2596 = vmatprep.subr.bf16.mxu0 0
        %2597 = vmatpush1.bf16.msra.mxu0 0
        %2598 = vmatprep.subr.bf16.mxu0 0
        %2599 = vmatpush1.bf16.msra.mxu0 0
        %2600 = vmatprep.subr.bf16.mxu0 0
        %2601 = vmatpush1.bf16.msra.mxu0 0
        %2602 = vmatprep.mubr.bf16.mxu0 0
        %2603 = vmatmul.mubr.bf16.gmra.mrb[0].mxu0 %v2568
        %v2604 = vpop.f32.mrb[0].mxu0
        %v2605 = vadd.f32 0.0, %v2604
        %v2606 = vpop.f32.mrb[0].mxu0
        %v2607 = vpop.f32.mrb[0].mxu0
        %v2608 = vadd.f32 0.0, %v2607
        %v2609 = vpop.f32.mrb[0].mxu0
        %2610 = vdwg.mxu0
        %2613 = vrot.lane.b32.xlu0 %v2605, 64
        %v2614 = vpop.permute.xlu0 %2613
        %2615 = vrot.lane.b32.xlu0 %v2608, 64
        %v2616 = vpop.permute.xlu0 %2615
        %v2619 = vsel %vm1139, %v2482, %v2614
        %v2620 = vsel %vm1139, %v2485, %v2616
        %2621 = vst [vmem:[#allocation3 + $0x28] sm:$0xff] %v2619
        %2622 = vst [vmem:[#allocation3 + $0x58] sm:$0xff] %v2620
        %v2623 = vld [vmem:[#allocation3] sm:$0xff]
        %v2624 = vld [vmem:[#allocation3 + $0x8] sm:$0xff]
        %v2625 = vld [vmem:[#allocation3 + $0x10] sm:$0xff]
        %v2626 = vld [vmem:[#allocation3 + $0x18] sm:$0xff]
        %v2627 = vld [vmem:[#allocation3 + $0x20] sm:$0xff]
        %v2628 = vld [vmem:[#allocation3 + $0x28] sm:$0xff]
        %v2629 = vld [vmem:[#allocation3 + $0x30] sm:$0xff]
        %v2630 = vld [vmem:[#allocation3 + $0x38] sm:$0xff]
        %v2631 = vld [vmem:[#allocation3 + $0x40] sm:$0xff]
        %v2632 = vld [vmem:[#allocation3 + $0x48] sm:$0xff]
        %v2633 = vld [vmem:[#allocation3 + $0x50] sm:$0xff]
        %v2634 = vld [vmem:[#allocation3 + $0x58] sm:$0xff]
        %v2635 = vpack.c.bf16 %v2629, %v2623
        %v2636 = vpack.c.bf16 %v2630, %v2624
        %v2637 = vpack.c.bf16 %v2631, %v2625
        %v2638 = vpack.c.bf16 %v2632, %v2626
        %v2639 = vpack.c.bf16 %v2633, %v2627
        %v2640 = vpack.c.bf16 %v2634, %v2628
        %v2641 = vld [vmem:[%s2] sm:$0xf]
        %v2642 = vld [vmem:[%s2 + $0x4] sm:$0xf]
        %v2643 = vld [vmem:[%s2 + $0x8] sm:$0xf]
        %v2644 = vld [vmem:[%s2 + $0xc] sm:$0xf]
        %v2645 = vld [vmem:[%s2 + $0x10] sm:$0xf]
        %v2646 = vld [vmem:[%s2 + $0x14] sm:$0xf]
        %v2647 = vld [vmem:[%s2 + $0x18] sm:$0xf]
        %v2648 = vld [vmem:[%s2 + $0x1c] sm:$0xf]
        %v2649 = vld [vmem:[%s2 + $0x20] sm:$0xf]
        %v2650 = vld [vmem:[%s2 + $0x24] sm:$0xf]
        %v2651 = vld [vmem:[%s2 + $0x28] sm:$0xf]
        %v2652 = vld [vmem:[%s2 + $0x2c] sm:$0xf]
        %v2653 = vld [vmem:[%s2 + $0x30] sm:$0xf]
        %v2654 = vld [vmem:[%s2 + $0x34] sm:$0xf]
        %v2655 = vld [vmem:[%s2 + $0x38] sm:$0xf]
        %v2656 = vld [vmem:[%s2 + $0x3c] sm:$0xf]
        %v2657 = vld [vmem:[%s2 + $0x40] sm:$0xf]
        %v2658 = vld [vmem:[%s2 + $0x44] sm:$0xf]
        %v2659 = vld [vmem:[%s2 + $0x48] sm:$0xf]
        %v2660 = vld [vmem:[%s2 + $0x4c] sm:$0xf]
        %v2661 = vld [vmem:[%s2 + $0x50] sm:$0xf]
        %v2662 = vld [vmem:[%s2 + $0x54] sm:$0xf]
        %v2663 = vld [vmem:[%s2 + $0x58] sm:$0xf]
        %v2664 = vld [vmem:[%s2 + $0x5c] sm:$0xf]
        %v2665 = vld [vmem:[%s2 + $0x60] sm:$0xf]
        %v2666 = vld [vmem:[%s2 + $0x64] sm:$0xf]
        %v2667 = vld [vmem:[%s2 + $0x68] sm:$0xf]
        %v2668 = vld [vmem:[%s2 + $0x6c] sm:$0xf]
        %v2669 = vld [vmem:[%s2 + $0x70] sm:$0xf]
        %v2670 = vld [vmem:[%s2 + $0x74] sm:$0xf]
        %v2671 = vld [vmem:[%s2 + $0x78] sm:$0xf]
        %v2672 = vld [vmem:[%s2 + $0x7c] sm:$0xf]
        %v2673 = vld [vmem:[%s2 + $0x80] sm:$0xf]
        %v2674 = vld [vmem:[%s2 + $0x84] sm:$0xf]
        %v2675 = vld [vmem:[%s2 + $0x88] sm:$0xf]
        %v2676 = vld [vmem:[%s2 + $0x8c] sm:$0xf]
        %v2677 = vld [vmem:[%s2 + $0x90] sm:$0xf]
        %v2678 = vld [vmem:[%s2 + $0x94] sm:$0xf]
        %v2679 = vld [vmem:[%s2 + $0x98] sm:$0xf]
        %v2680 = vld [vmem:[%s2 + $0x9c] sm:$0xf]
        %v2681 = vld [vmem:[%s2 + $0xa0] sm:$0xf]
        %v2682 = vld [vmem:[%s2 + $0xa4] sm:$0xf]
        %v2683 = vld [vmem:[%s2 + $0xa8] sm:$0xf]
        %v2684 = vld [vmem:[%s2 + $0xac] sm:$0xf]
        %v2685 = vld [vmem:[%s2 + $0xb0] sm:$0xf]
        %v2686 = vld [vmem:[%s2 + $0xb4] sm:$0xf]
        %v2687 = vld [vmem:[%s2 + $0xb8] sm:$0xf]
        %v2688 = vld [vmem:[%s2 + $0xbc] sm:$0xf]
        %v2689 = vld [vmem:[%s2 + $0xc0] sm:$0xf]
        %v2690 = vld [vmem:[%s2 + $0xc4] sm:$0xf]
        %v2691 = vld [vmem:[%s2 + $0xc8] sm:$0xf]
        %v2692 = vld [vmem:[%s2 + $0xcc] sm:$0xf]
        %v2693 = vld [vmem:[%s2 + $0xd0] sm:$0xf]
        %v2694 = vld [vmem:[%s2 + $0xd4] sm:$0xf]
        %v2695 = vld [vmem:[%s2 + $0xd8] sm:$0xf]
        %v2696 = vld [vmem:[%s2 + $0xdc] sm:$0xf]
        %v2697 = vld [vmem:[%s2 + $0xe0] sm:$0xf]
        %v2698 = vld [vmem:[%s2 + $0xe4] sm:$0xf]
        %v2699 = vld [vmem:[%s2 + $0xe8] sm:$0xf]
        %v2700 = vld [vmem:[%s2 + $0xec] sm:$0xf]
        %v2701 = vld [vmem:[%s2 + $0xf0] sm:$0xf]
        %v2702 = vld [vmem:[%s2 + $0xf4] sm:$0xf]
        %v2703 = vld [vmem:[%s2 + $0xf8] sm:$0xf]
        %v2704 = vld [vmem:[%s2 + $0xfc] sm:$0xf]
        %v2705 = vld [vmem:[%s2 + $0x100] sm:$0xf]
        %v2706 = vld [vmem:[%s2 + $0x104] sm:$0xf]
        %v2707 = vld [vmem:[%s2 + $0x108] sm:$0xf]
        %v2708 = vld [vmem:[%s2 + $0x10c] sm:$0xf]
        %v2709 = vld [vmem:[%s2 + $0x110] sm:$0xf]
        %v2710 = vld [vmem:[%s2 + $0x114] sm:$0xf]
        %v2711 = vld [vmem:[%s2 + $0x118] sm:$0xf]
        %v2712 = vld [vmem:[%s2 + $0x11c] sm:$0xf]
        %v2713 = vld [vmem:[%s2 + $0x120] sm:$0xf]
        %v2714 = vld [vmem:[%s2 + $0x124] sm:$0xf]
        %v2715 = vld [vmem:[%s2 + $0x128] sm:$0xf]
        %v2716 = vld [vmem:[%s2 + $0x12c] sm:$0xf]
        %v2717 = vld [vmem:[%s2 + $0x130] sm:$0xf]
        %v2718 = vld [vmem:[%s2 + $0x134] sm:$0xf]
        %v2719 = vld [vmem:[%s2 + $0x138] sm:$0xf]
        %v2720 = vld [vmem:[%s2 + $0x13c] sm:$0xf]
        %v2721 = vld [vmem:[%s2 + $0x140] sm:$0xf]
        %v2722 = vld [vmem:[%s2 + $0x144] sm:$0xf]
        %v2723 = vld [vmem:[%s2 + $0x148] sm:$0xf]
        %v2724 = vld [vmem:[%s2 + $0x14c] sm:$0xf]
        %v2725 = vld [vmem:[%s2 + $0x150] sm:$0xf]
        %v2726 = vld [vmem:[%s2 + $0x154] sm:$0xf]
        %v2727 = vld [vmem:[%s2 + $0x158] sm:$0xf]
        %v2728 = vld [vmem:[%s2 + $0x15c] sm:$0xf]
        %v2729 = vld [vmem:[%s2 + $0x160] sm:$0xf]
        %v2730 = vld [vmem:[%s2 + $0x164] sm:$0xf]
        %v2731 = vld [vmem:[%s2 + $0x168] sm:$0xf]
        %v2732 = vld [vmem:[%s2 + $0x16c] sm:$0xf]
        %v2733 = vld [vmem:[%s2 + $0x170] sm:$0xf]
        %v2734 = vld [vmem:[%s2 + $0x174] sm:$0xf]
        %v2735 = vld [vmem:[%s2 + $0x178] sm:$0xf]
        %v2736 = vld [vmem:[%s2 + $0x17c] sm:$0xf]
        %v2737 = vld [vmem:[%s3] sm:$0x1]
        %v2739 = vlaneseq
        %v2740 = vshrl.u32 %v2739, 7
        %v2741 = vsub.s32 0, %v2740
        %v2742 = vrot.slane %v2737, %v2741
        %v2840 = vunpack.c.l.b16 %v2641
        %v2841 = vunpack.c.l.b16 %v2642
        %v2842 = vunpack.c.l.b16 %v2643
        %v2843 = vunpack.c.l.b16 %v2644
        %v2844 = vunpack.c.l.b16 %v2645
        %v2845 = vunpack.c.l.b16 %v2646
        %v2846 = vunpack.c.l.b16 %v2647
        %v2847 = vunpack.c.l.b16 %v2648
        %v2848 = vunpack.c.l.b16 %v2649
        %v2849 = vunpack.c.l.b16 %v2650
        %v2850 = vunpack.c.l.b16 %v2651
        %v2851 = vunpack.c.l.b16 %v2652
        %v2852 = vunpack.c.l.b16 %v2653
        %v2853 = vunpack.c.l.b16 %v2654
        %v2854 = vunpack.c.l.b16 %v2655
        %v2855 = vunpack.c.l.b16 %v2656
        %v2856 = vunpack.c.l.b16 %v2657
        %v2857 = vunpack.c.l.b16 %v2658
        %v2858 = vunpack.c.l.b16 %v2659
        %v2859 = vunpack.c.l.b16 %v2660
        %v2860 = vunpack.c.l.b16 %v2661
        %v2861 = vunpack.c.l.b16 %v2662
        %v2862 = vunpack.c.l.b16 %v2663
        %v2863 = vunpack.c.l.b16 %v2664
        %v2864 = vunpack.c.l.b16 %v2665
        %v2865 = vunpack.c.l.b16 %v2666
        %v2866 = vunpack.c.l.b16 %v2667
        %v2867 = vunpack.c.l.b16 %v2668
        %v2868 = vunpack.c.l.b16 %v2669
        %v2869 = vunpack.c.l.b16 %v2670
        %v2870 = vunpack.c.l.b16 %v2671
        %v2871 = vunpack.c.l.b16 %v2672
        %v2872 = vunpack.c.l.b16 %v2673
        %v2873 = vunpack.c.l.b16 %v2674
        %v2874 = vunpack.c.l.b16 %v2675
        %v2875 = vunpack.c.l.b16 %v2676
        %v2876 = vunpack.c.l.b16 %v2677
        %v2877 = vunpack.c.l.b16 %v2678
        %v2878 = vunpack.c.l.b16 %v2679
        %v2879 = vunpack.c.l.b16 %v2680
        %v2880 = vunpack.c.l.b16 %v2681
        %v2881 = vunpack.c.l.b16 %v2682
        %v2882 = vunpack.c.l.b16 %v2683
        %v2883 = vunpack.c.l.b16 %v2684
        %v2884 = vunpack.c.l.b16 %v2685
        %v2885 = vunpack.c.l.b16 %v2686
        %v2886 = vunpack.c.l.b16 %v2687
        %v2887 = vunpack.c.l.b16 %v2688
        %v2888 = vunpack.c.l.b16 %v2689
        %v2889 = vunpack.c.l.b16 %v2690
        %v2890 = vunpack.c.l.b16 %v2691
        %v2891 = vunpack.c.l.b16 %v2692
        %v2892 = vunpack.c.l.b16 %v2693
        %v2893 = vunpack.c.l.b16 %v2694
        %v2894 = vunpack.c.l.b16 %v2695
        %v2895 = vunpack.c.l.b16 %v2696
        %v2896 = vunpack.c.l.b16 %v2697
        %v2897 = vunpack.c.l.b16 %v2698
        %v2898 = vunpack.c.l.b16 %v2699
        %v2899 = vunpack.c.l.b16 %v2700
        %v2900 = vunpack.c.l.b16 %v2701
        %v2901 = vunpack.c.l.b16 %v2702
        %v2902 = vunpack.c.l.b16 %v2703
        %v2903 = vunpack.c.l.b16 %v2704
        %v2904 = vunpack.c.l.b16 %v2705
        %v2905 = vunpack.c.l.b16 %v2706
        %v2906 = vunpack.c.l.b16 %v2707
        %v2907 = vunpack.c.l.b16 %v2708
        %v2908 = vunpack.c.l.b16 %v2709
        %v2909 = vunpack.c.l.b16 %v2710
        %v2910 = vunpack.c.l.b16 %v2711
        %v2911 = vunpack.c.l.b16 %v2712
        %v2912 = vunpack.c.l.b16 %v2713
        %v2913 = vunpack.c.l.b16 %v2714
        %v2914 = vunpack.c.l.b16 %v2715
        %v2915 = vunpack.c.l.b16 %v2716
        %v2916 = vunpack.c.l.b16 %v2717
        %v2917 = vunpack.c.l.b16 %v2718
        %v2918 = vunpack.c.l.b16 %v2719
        %v2919 = vunpack.c.l.b16 %v2720
        %v2920 = vunpack.c.l.b16 %v2721
        %v2921 = vunpack.c.l.b16 %v2722
        %v2922 = vunpack.c.l.b16 %v2723
        %v2923 = vunpack.c.l.b16 %v2724
        %v2924 = vunpack.c.l.b16 %v2725
        %v2925 = vunpack.c.l.b16 %v2726
        %v2926 = vunpack.c.l.b16 %v2727
        %v2927 = vunpack.c.l.b16 %v2728
        %v2928 = vunpack.c.l.b16 %v2729
        %v2929 = vunpack.c.l.b16 %v2730
        %v2930 = vunpack.c.l.b16 %v2731
        %v2931 = vunpack.c.l.b16 %v2732
        %v2932 = vunpack.c.l.b16 %v2733
        %v2933 = vunpack.c.l.b16 %v2734
        %v2934 = vunpack.c.l.b16 %v2735
        %v2935 = vunpack.c.l.b16 %v2736
        %v2936 = vpack.c.b16 %v2841, %v2840
        %v2937 = vpack.c.b16 %v2843, %v2842
        %v2938 = vpack.c.b16 %v2845, %v2844
        %v2939 = vpack.c.b16 %v2847, %v2846
        %v2940 = vpack.c.b16 %v2849, %v2848
        %v2941 = vpack.c.b16 %v2851, %v2850
        %v2942 = vpack.c.b16 %v2853, %v2852
        %v2943 = vpack.c.b16 %v2855, %v2854
        %v2944 = vpack.c.b16 %v2857, %v2856
        %v2945 = vpack.c.b16 %v2859, %v2858
        %v2946 = vpack.c.b16 %v2861, %v2860
        %v2947 = vpack.c.b16 %v2863, %v2862
        %v2948 = vpack.c.b16 %v2865, %v2864
        %v2949 = vpack.c.b16 %v2867, %v2866
        %v2950 = vpack.c.b16 %v2869, %v2868
        %v2951 = vpack.c.b16 %v2871, %v2870
        %v2952 = vpack.c.b16 %v2873, %v2872
        %v2953 = vpack.c.b16 %v2875, %v2874
        %v2954 = vpack.c.b16 %v2877, %v2876
        %v2955 = vpack.c.b16 %v2879, %v2878
        %v2956 = vpack.c.b16 %v2881, %v2880
        %v2957 = vpack.c.b16 %v2883, %v2882
        %v2958 = vpack.c.b16 %v2885, %v2884
        %v2959 = vpack.c.b16 %v2887, %v2886
        %v2960 = vpack.c.b16 %v2889, %v2888
        %v2961 = vpack.c.b16 %v2891, %v2890
        %v2962 = vpack.c.b16 %v2893, %v2892
        %v2963 = vpack.c.b16 %v2895, %v2894
        %v2964 = vpack.c.b16 %v2897, %v2896
        %v2965 = vpack.c.b16 %v2899, %v2898
        %v2966 = vpack.c.b16 %v2901, %v2900
        %v2967 = vpack.c.b16 %v2903, %v2902
        %v2968 = vpack.c.b16 %v2905, %v2904
        %v2969 = vpack.c.b16 %v2907, %v2906
        %v2970 = vpack.c.b16 %v2909, %v2908
        %v2971 = vpack.c.b16 %v2911, %v2910
        %v2972 = vpack.c.b16 %v2913, %v2912
        %v2973 = vpack.c.b16 %v2915, %v2914
        %v2974 = vpack.c.b16 %v2917, %v2916
        %v2975 = vpack.c.b16 %v2919, %v2918
        %v2976 = vpack.c.b16 %v2921, %v2920
        %v2977 = vpack.c.b16 %v2923, %v2922
        %v2978 = vpack.c.b16 %v2925, %v2924
        %v2979 = vpack.c.b16 %v2927, %v2926
        %v2980 = vpack.c.b16 %v2929, %v2928
        %v2981 = vpack.c.b16 %v2931, %v2930
        %v2982 = vpack.c.b16 %v2933, %v2932
        %v2983 = vpack.c.b16 %v2935, %v2934
        %3032 = vmatprep.subr.bf16.mxu0 0
        %3033 = vmatpush1.bf16.msra.mxu0 %v2936
        %3034 = vmatprep.subr.bf16.mxu0 0
        %3035 = vmatpush1.bf16.msra.mxu0 %v2937
        %3036 = vmatprep.subr.bf16.mxu0 0
        %3037 = vmatpush1.bf16.msra.mxu0 %v2938
        %3038 = vmatprep.subr.bf16.mxu0 0
        %3039 = vmatpush1.bf16.msra.mxu0 %v2939
        %3040 = vmatprep.subr.bf16.mxu0 0
        %3041 = vmatpush1.bf16.msra.mxu0 %v2940
        %3042 = vmatprep.subr.bf16.mxu0 0
        %3043 = vmatpush1.bf16.msra.mxu0 %v2941
        %3044 = vmatprep.subr.bf16.mxu0 0
        %3045 = vmatpush1.bf16.msra.mxu0 %v2942
        %3046 = vmatprep.subr.bf16.mxu0 0
        %3047 = vmatpush1.bf16.msra.mxu0 %v2943
        %3048 = vmatprep.subr.bf16.mxu0 0
        %3049 = vmatpush1.bf16.msra.mxu0 %v2944
        %3050 = vmatprep.subr.bf16.mxu0 0
        %3051 = vmatpush1.bf16.msra.mxu0 %v2945
        %3052 = vmatprep.subr.bf16.mxu0 0
        %3053 = vmatpush1.bf16.msra.mxu0 %v2946
        %3054 = vmatprep.subr.bf16.mxu0 0
        %3055 = vmatpush1.bf16.msra.mxu0 %v2947
        %3056 = vmatprep.subr.bf16.mxu0 0
        %3057 = vmatpush1.bf16.msra.mxu0 %v2948
        %3058 = vmatprep.subr.bf16.mxu0 0
        %3059 = vmatpush1.bf16.msra.mxu0 %v2949
        %3060 = vmatprep.subr.bf16.mxu0 0
        %3061 = vmatpush1.bf16.msra.mxu0 %v2950
        %3062 = vmatprep.subr.bf16.mxu0 0
        %3063 = vmatpush1.bf16.msra.mxu0 %v2951
        %3064 = vmatprep.mubr.bf16.mxu0 %v2636
        %3065 = vmatmul.mubr.bf16.gmra.mrb[0].mxu0 %v2635
        %v3066 = vpop.f32.mrb[0].mxu0
        %v3067 = vadd.f32 %v2742, %v3066
        %v3068 = vpop.f32.mrb[0].mxu0
        %v3069 = vpop.f32.mrb[0].mxu0
        %v3070 = vadd.f32 %v2742, %v3069
        %v3071 = vpop.f32.mrb[0].mxu0
        %3072 = vdwg.mxu0
        %3073 = vmatprep.subr.bf16.mxu0 0
        %3074 = vmatpush1.bf16.msra.mxu0 %v2952
        %3075 = vmatprep.subr.bf16.mxu0 0
        %3076 = vmatpush1.bf16.msra.mxu0 %v2953
        %3077 = vmatprep.subr.bf16.mxu0 0
        %3078 = vmatpush1.bf16.msra.mxu0 %v2954
        %3079 = vmatprep.subr.bf16.mxu0 0
        %3080 = vmatpush1.bf16.msra.mxu0 %v2955
        %3081 = vmatprep.subr.bf16.mxu0 0
        %3082 = vmatpush1.bf16.msra.mxu0 %v2956
        %3083 = vmatprep.subr.bf16.mxu0 0
        %3084 = vmatpush1.bf16.msra.mxu0 %v2957
        %3085 = vmatprep.subr.bf16.mxu0 0
        %3086 = vmatpush1.bf16.msra.mxu0 %v2958
        %3087 = vmatprep.subr.bf16.mxu0 0
        %3088 = vmatpush1.bf16.msra.mxu0 %v2959
        %3089 = vmatprep.subr.bf16.mxu0 0
        %3090 = vmatpush1.bf16.msra.mxu0 %v2960
        %3091 = vmatprep.subr.bf16.mxu0 0
        %3092 = vmatpush1.bf16.msra.mxu0 %v2961
        %3093 = vmatprep.subr.bf16.mxu0 0
        %3094 = vmatpush1.bf16.msra.mxu0 %v2962
        %3095 = vmatprep.subr.bf16.mxu0 0
        %3096 = vmatpush1.bf16.msra.mxu0 %v2963
        %3097 = vmatprep.subr.bf16.mxu0 0
        %3098 = vmatpush1.bf16.msra.mxu0 %v2964
        %3099 = vmatprep.subr.bf16.mxu0 0
        %3100 = vmatpush1.bf16.msra.mxu0 %v2965
        %3101 = vmatprep.subr.bf16.mxu0 0
        %3102 = vmatpush1.bf16.msra.mxu0 %v2966
        %3103 = vmatprep.subr.bf16.mxu0 0
        %3104 = vmatpush1.bf16.msra.mxu0 %v2967
        %3105 = vmatprep.mubr.bf16.mxu0 %v2638
        %3106 = vmatmul.mubr.bf16.gmra.mrb[0].mxu0 %v2637
        %v3107 = vpop.f32.mrb[0].mxu0
        %v3108 = vadd.f32 %v3067, %v3107
        %v3109 = vpop.f32.mrb[0].mxu0
        %v3110 = vpop.f32.mrb[0].mxu0
        %v3111 = vadd.f32 %v3070, %v3110
        %v3112 = vpop.f32.mrb[0].mxu0
        %3113 = vdwg.mxu0
        %3114 = vmatprep.subr.bf16.mxu0 0
        %3115 = vmatpush1.bf16.msra.mxu0 %v2968
        %3116 = vmatprep.subr.bf16.mxu0 0
        %3117 = vmatpush1.bf16.msra.mxu0 %v2969
        %3118 = vmatprep.subr.bf16.mxu0 0
        %3119 = vmatpush1.bf16.msra.mxu0 %v2970
        %3120 = vmatprep.subr.bf16.mxu0 0
        %3121 = vmatpush1.bf16.msra.mxu0 %v2971
        %3122 = vmatprep.subr.bf16.mxu0 0
        %3123 = vmatpush1.bf16.msra.mxu0 %v2972
        %3124 = vmatprep.subr.bf16.mxu0 0
        %3125 = vmatpush1.bf16.msra.mxu0 %v2973
        %3126 = vmatprep.subr.bf16.mxu0 0
        %3127 = vmatpush1.bf16.msra.mxu0 %v2974
        %3128 = vmatprep.subr.bf16.mxu0 0
        %3129 = vmatpush1.bf16.msra.mxu0 %v2975
        %3130 = vmatprep.subr.bf16.mxu0 0
        %3131 = vmatpush1.bf16.msra.mxu0 %v2976
        %3132 = vmatprep.subr.bf16.mxu0 0
        %3133 = vmatpush1.bf16.msra.mxu0 %v2977
        %3134 = vmatprep.subr.bf16.mxu0 0
        %3135 = vmatpush1.bf16.msra.mxu0 %v2978
        %3136 = vmatprep.subr.bf16.mxu0 0
        %3137 = vmatpush1.bf16.msra.mxu0 %v2979
        %3138 = vmatprep.subr.bf16.mxu0 0
        %3139 = vmatpush1.bf16.msra.mxu0 %v2980
        %3140 = vmatprep.subr.bf16.mxu0 0
        %3141 = vmatpush1.bf16.msra.mxu0 %v2981
        %3142 = vmatprep.subr.bf16.mxu0 0
        %3143 = vmatpush1.bf16.msra.mxu0 %v2982
        %3144 = vmatprep.subr.bf16.mxu0 0
        %3145 = vmatpush1.bf16.msra.mxu0 %v2983
        %3146 = vmatprep.mubr.bf16.mxu0 %v2640
        %3147 = vmatmul.mubr.bf16.gmra.mrb[0].mxu0 %v2639
        %v3148 = vpop.f32.mrb[0].mxu0
        %v3149 = vadd.f32 %v3108, %v3148
        %v3150 = vpop.f32.mrb[0].mxu0
        %v3151 = vpop.f32.mrb[0].mxu0
        %v3152 = vadd.f32 %v3111, %v3151
        %v3153 = vpop.f32.mrb[0].mxu0
        %3154 = vdwg.mxu0
        %v3155 = vsel %vm470, %v3149, 0.0
        %v3156 = vsel %vm470, %v3152, 0.0
        %v3157 = vadd.f32 %v3155, %v3156
        %3158 = vadd.xlane.f32.xlu0 %v3157
        %v3159 = vpop.xlane.xlu0 %3158
        %v3160 = vrot.slane %v3159, 4
        %v3161 = vadd.f32 %v3159, %v3160
        %v3162 = vrot.slane %v3161, 2
        %v3163 = vadd.f32 %v3161, %v3162
        %v3164 = vrot.slane %v3163, 1
        %v3165 = vadd.f32 %v3163, %v3164
        %s3166 = vtos %v3165
        %v3167 = vstv %s3166
        %v3168 = vrcp.pop 512.0
        %v3169 = vmul.f32 %v3167, %v3168
        %v3170 = vsub.f32 %v3149, %v3169
        %v3171 = vsub.f32 %v3152, %v3169
        %v3172 = vmul.f32 %v3170, %v3170
        %v3173 = vmul.f32 %v3171, %v3171
        %v3174 = vsel %vm470, %v3172, 0.0
        %v3175 = vsel %vm470, %v3173, 0.0
        %v3176 = vadd.f32 %v3174, %v3175
        %3177 = vadd.xlane.f32.xlu0 %v3176
        %v3178 = vpop.xlane.xlu0 %3177
        %v3179 = vrot.slane %v3178, 4
        %v3180 = vadd.f32 %v3178, %v3179
        %v3181 = vrot.slane %v3180, 2
        %v3182 = vadd.f32 %v3180, %v3181
        %v3183 = vrot.slane %v3182, 1
        %v3184 = vadd.f32 %v3182, %v3183
        %s3185 = vtos %v3184
        %v3186 = vstv %s3185
        %v3187 = vmul.f32 %v3186, %v3168
        %v3188 = vadd.f32 %v3187, 1e-05
        %v3189 = vrsqrt.pop %v3188
        %v3190 = vmul.f32 %v3170, %v3189
        %v3191 = vmul.f32 %v3171, %v3189
        %v3192 = vld [vmem:[%s4] sm:$0x1]
        %v3194 = vlaneseq
        %v3195 = vshrl.u32 %v3194, 7
        %v3196 = vsub.s32 0, %v3195
        %v3197 = vrot.slane %v3192, %v3196
        %v3199 = vmul.f32 %v3190, %v3197
        %v3200 = vmul.f32 %v3191, %v3197
        %v3201 = vld [vmem:[%s5] sm:$0x1]
        %v3203 = vlaneseq
        %v3204 = vshrl.u32 %v3203, 7
        %v3205 = vsub.s32 0, %v3204
        %v3206 = vrot.slane %v3201, %v3205
        %v3208 = vadd.f32 %v3199, %v3206
        %v3209 = vadd.f32 %v3200, %v3206
        %v3210 = vmax.f32 %v3208, 0.0
        %v3211 = vmax.f32 %v3209, 0.0
        %3212 = vst.msk [vmem:[%s244] sm:$0xff] %vm470, %v3210
        %3213 = vst.msk [vmem:[%s244 + $0x8] sm:$0xff] %vm470, %v3211
        %s3214 = sand.u32 %s159, 1
        %s3215 = scalar_lea.sflag [#allocation5], %s3214
        %s3216 = sand.u32 %s159, 1
        %s3217 = smul.addr %s3216, 16
        %s3218 = scalar_lea.vmem [#allocation4], %s3217
        // Predicated region
        $region45: #{encoder_forward.11} parent=43 // pred_check
          %p3219 = pneg %p169
        $region46: #{encoder_forward.11} parent=43 // pred_check_branch
          %3221 = sbr.rel (%p3219) target = $region48
        $region47: #{encoder_forward.11} parent=43 // pred_region
          %s3223 = ssub.s32 256, 256
          %3224 = vsyncadd %s3215, %s3223
          %s3225 = smul.addr %s20, 2
          %s3226 = smul.addr %s3225, 128
          %s3227 = scalar_lea.hbm %s6, %s3226
          %s3228 = sshll.u32 %s3218, 4
          %s3229 = int_to_ptr.vmem [resolvable:$true] %s3228
          %3234 = dma.vmem_to_hbm [thread:$0]  %s3229, 256, %s3227, %s3215, 128, 128, 8
        $region48: #{encoder_forward.11} parent=43 // pred_fallthru
          _
      $region44: #{encoder_forward.11} parent=5 // pred_fallthru
        _
      %p3235 = scmp.le.s32.totalorder 2, %s15
      // Predicated region
      $region49: #{encoder_forward.11} parent=5 // pred_check
        %p3236 = pneg %p3235
      $region50: #{encoder_forward.11} parent=5 // pred_check_branch
        %3238 = sbr.rel (%p3236) target = $region52
      $region51: #{encoder_forward.11} parent=5 // pred_region
        %s3239 = ssub.s32 %s15, 2
        // Predicated region
        $region53: #{encoder_forward.11} parent=51 // pred_check
          %p3240 = pneg %p175
        $region54: #{encoder_forward.11} parent=51 // pred_check_branch
          %3242 = sbr.rel (%p3240) target = $region56
        $region55: #{encoder_forward.11} parent=51 // pred_region
          %s3243 = sand.u32 %s160, 1
          %s3244 = scalar_lea.sflag [#allocation5], %s3243
          %s3245 = sand.u32 %s160, 1
          %s3246 = smul.addr %s3245, 16
          %s3247 = scalar_lea.vmem [#allocation4], %s3246
          %3248 = dma.done %s3244, 256
        $region56: #{encoder_forward.11} parent=51 // pred_fallthru
          _
      $region52: #{encoder_forward.11} parent=5 // pred_fallthru
        _
    $region6: #{encoder_forward.11} parent=1 // loop_footer
      %s19 = sadd.s32 1, %s15
    $region7: #{encoder_forward.11} parent=1 // loop_footer_branch
      %14 = sbr.rel target = $region3
    $region8: #{encoder_forward.11} parent=1 // loop_exit
      _
    %3249 = vsyncpa [#allocation5], 1
    %s3250 = scalar_lea.sflag [#allocation5], 1
    %3251 = vsyncpa %s3250, 1

</llo_original>
